<compile_context>
chip_gen: v7x
topology: tpu7x:2x2x1
jax: 0.10.0
libtpu: 0.0.40
codegen_flags: <defaults>
</compile_context>

<pallas_src>
import functools

import jax
import jax.numpy as jnp
from jax.experimental import pallas as pl
from jax.experimental.pallas import tpu as pltpu

CP = 128        # lane width: every conv channel dim is zero-padded to CP
N_LAYERS = 4    # enc: conv0, conv1 (ReLU); dec: conv2 (ReLU), conv3


# ------------------------------ Pallas kernel ------------------------------- #

def _fused_adain_kernel(c_ref, s_ref, w_ref, b_ref, o_ref, *,
                        H, W, c_out, eps, alpha):
    """Full AdaIN forward for one batch element, resident in VMEM.

    c_ref, s_ref : (1, H*W, CP) f32   content / style image (channels zero-padded)
    w_ref        : (N_LAYERS, 9*CP, CP) bf16  im2col-packed 3x3 conv weights
    b_ref        : (N_LAYERS, CP) f32         biases (zero-padded)
    o_ref        : (1, c_out, H*W) f32        stylized image, NC(HW) lane-dense
    """
    HW = H * W

    def reflect_pad(x):                            # (H, W, CP) -> (H+2, W+2, CP)
        x = jnp.concatenate([x[1:2], x, x[H - 2:H - 1]], axis=0)
        x = jnp.concatenate([x[:, 1:2], x, x[:, W - 2:W - 1]], axis=1)
        return x

    def conv3x3(x, layer, relu):                   # x: (HW, CP) f32 -> (HW, CP) f32
        xp = reflect_pad(x.reshape(H, W, CP))
        # im2col over the 9 taps: one lane-dense slab -> a single MXU matmul.
        cols = [xp[dy:dy + H, dx:dx + W, :].reshape(HW, CP).astype(jnp.bfloat16)
                for dy in range(3) for dx in range(3)]
        patches = jnp.concatenate(cols, axis=1)    # (HW, 9*CP) bf16
        y = jnp.dot(patches, w_ref[layer],
                    preferred_element_type=jnp.float32)        # (HW, CP) f32
        y = y + b_ref[layer:layer + 1, :]
        if relu:
            y = jnp.maximum(y, 0.0)
        return y

    def encode(img_ref):                           # shared encoder weights
        x = img_ref[0]                             # (HW, CP) f32
        x = conv3x3(x, 0, relu=True)
        x = conv3x3(x, 1, relu=True)
        return x

    c_feat = encode(c_ref)
    s_feat = encode(s_ref)

    # Adaptive instance norm: per-channel stats over HW, unbiased variance,
    # eps inside sqrt (matches torch calc_mean_std).  rsqrt -> EUP slot.
    c_mean = jnp.mean(c_feat, axis=0, keepdims=True)
    s_mean = jnp.mean(s_feat, axis=0, keepdims=True)
    c_var = jnp.sum((c_feat - c_mean) ** 2, axis=0, keepdims=True) / (HW - 1)
    s_var = jnp.sum((s_feat - s_mean) ** 2, axis=0, keepdims=True) / (HW - 1)
    t = (c_feat - c_mean) * jax.lax.rsqrt(c_var + eps) * jnp.sqrt(s_var + eps) + s_mean
    if alpha != 1.0:                               # fused alpha blend
        t = alpha * t + (1.0 - alpha) * c_feat

    # decoder
    h = conv3x3(t, 2, relu=True)
    h = conv3x3(h, 3, relu=False)

    # lane-dense output: (c_out, HW), last dim = HW = full 128-lane tiles.
    o_ref[0] = jnp.transpose(h)[:c_out, :].astype(o_ref.dtype)


# ------------------------------ JAX wrapper --------------------------------- #

def _pack_params(params):
    """Zero-pad all conv channels to CP, reshape to im2col (9*CP, CP), stack."""
    layers = list(params["enc"]) + list(params["dec"])
    assert len(layers) == N_LAYERS
    wmats, biases = [], []
    for w, b in layers:
        _, _, cin, cout = w.shape
        assert cin <= CP and cout <= CP
        wp = jnp.zeros((3, 3, CP, CP), jnp.float32).at[:, :, :cin, :cout].set(w)
        wmats.append(wp.reshape(9 * CP, CP))
        biases.append(jnp.zeros((CP,), jnp.float32).at[:cout].set(b))
    all_w = jnp.stack(wmats).astype(jnp.bfloat16)   # (N_LAYERS, 9*CP, CP)
    all_b = jnp.stack(biases)                       # (N_LAYERS, CP) f32
    return all_w, all_b


def _prep_image(img_nchw):
    """NCHW -> (N, H*W, CP) f32 with channels zero-padded (lane-dense layout)."""
    n, c, h, w = img_nchw.shape
    x = jnp.transpose(img_nchw, (0, 2, 3, 1)).astype(jnp.float32)   # NHWC
    x = x.reshape(n, h * w, c)
    return jnp.pad(x, ((0, 0), (0, 0), (0, CP - c)))


def adain_wrapper_forward(params, content_nchw, style_nchw, alpha: float = 1.0):
    """Equivalent of AdaINWrapper.forward(content_image, style_image)."""
    n, _, h, w = content_nchw.shape
    hw = h * w
    c_out = params["dec"][-1][0].shape[-1]

    c_img = _prep_image(content_nchw)
    s_img = _prep_image(style_nchw)
    all_w, all_b = _pack_params(params)

    kernel = functools.partial(_fused_adain_kernel, H=h, W=w, c_out=c_out,
                               eps=1e-5, alpha=float(alpha))

    out = pl.pallas_call(
        kernel,
        out_shape=jax.ShapeDtypeStruct((n, c_out, hw), jnp.float32),
        grid=(n,),
        in_specs=[
            pl.BlockSpec((1, hw, CP), lambda i: (i, 0, 0)),
            pl.BlockSpec((1, hw, CP), lambda i: (i, 0, 0)),
            pl.BlockSpec((N_LAYERS, 9 * CP, CP), lambda i: (0, 0, 0)),
            pl.BlockSpec((N_LAYERS, CP), lambda i: (0, 0)),
        ],
        out_specs=pl.BlockSpec((1, c_out, hw), lambda i: (i, 0, 0)),
        compiler_params=pltpu.CompilerParams(
            dimension_semantics=("parallel",)),
    )(c_img, s_img, all_w, all_b)

    return out.reshape(n, c_out, h, w)              # free contiguous reshape -> NCHW


# --------------------------- Deterministic params --------------------------- #

def init_params(key):
    """Small encoder/decoder: enc 3->16->32 (ReLU), dec 32->16 (ReLU) ->3."""
    def conv_init(k, cin, cout):
        kw, kb = jax.random.split(k)
        scale = 1.0 / jnp.sqrt(9.0 * cin)
        wgt = scale * jax.random.normal(kw, (3, 3, cin, cout), jnp.float32)
        bias = 0.01 * jax.random.normal(kb, (cout,), jnp.float32)
        return wgt, bias

    ks = jax.random.split(key, 4)
    enc = [conv_init(ks[0], 3, 16), conv_init(ks[1], 16, 32)]
    dec = [conv_init(ks[2], 32, 16), conv_init(ks[3], 16, 3)]
    return {"enc": enc, "dec": dec}


# ---------------------------------- Main ------------------------------------ #

if __name__ == "__main__":
    key = jax.random.PRNGKey(0)
    k_params, k_content, k_style = jax.random.split(key, 3)

    params = init_params(k_params)
    content_image = jax.random.uniform(k_content, (2, 3, 16, 16), jnp.float32)
    style_image = jax.random.uniform(k_style, (2, 3, 16, 16), jnp.float32)

    out = jax.jit(adain_wrapper_forward)(params, content_image, style_image)
    out = jax.block_until_ready(out)

    assert out.shape == (2, 3, 16, 16)
    assert bool(jnp.all(jnp.isfinite(out)))
    print("KERNEL_OK")
</pallas_src>

<mosaic_0001>
module attributes {stable_mosaic.version = 11 : i64} {
  func.func @_fused_adain_kernel(%arg0: i32, %arg1: memref<1x256x128xf32, #tpu.memory_space<vmem>>, %arg2: memref<1x256x128xf32, #tpu.memory_space<vmem>>, %arg3: memref<4x1152x128xbf16, #tpu.memory_space<vmem>>, %arg4: memref<4x128xf32, #tpu.memory_space<vmem>>, %arg5: memref<1x3x256xf32, #tpu.memory_space<vmem>>) attributes {dimension_semantics = [#tpu.dimension_semantics<parallel>], iteration_bounds = array<i64: 2>, scalar_prefetch = 0 : i64, scratch_operands = 0 : i64, tpu.core_type = #tpu.core_type<tc>, window_params = [{transform_indices = @transform_0, window_bounds = array<i64: 1, 256, 128>}, {transform_indices = @transform_1, window_bounds = array<i64: 1, 256, 128>}, {pipeline_mode = #tpu.pipeline_mode<synchronous>, transform_indices = @transform_2, window_bounds = array<i64: 4, 1152, 128>}, {pipeline_mode = #tpu.pipeline_mode<synchronous>, transform_indices = @transform_3, window_bounds = array<i64: 4, 128>}, {transform_indices = @transform_4, window_bounds = array<i64: 1, 3, 256>}]} {
    %c0 = arith.constant 0 : index
    %c0_0 = arith.constant 0 : index
    %c0_1 = arith.constant 0 : index
    %0 = vector.load %arg1[%c0, %c0_0, %c0_1] : memref<1x256x128xf32, #tpu.memory_space<vmem>>, vector<1x256x128xf32>
    %1 = vector.shape_cast %0 : vector<1x256x128xf32> to vector<256x128xf32>
    %2 = vector.shape_cast %1 : vector<256x128xf32> to vector<16x16x128xf32>
    %3 = vector.extract_strided_slice %2 {offsets = [1, 0, 0], sizes = [1, 16, 128], strides = [1, 1, 1]} : vector<16x16x128xf32> to vector<1x16x128xf32>
    %4 = vector.extract_strided_slice %2 {offsets = [14, 0, 0], sizes = [1, 16, 128], strides = [1, 1, 1]} : vector<16x16x128xf32> to vector<1x16x128xf32>
    %5 = tpu.concatenate %3, %2, %4 in 0 : vector<1x16x128xf32>, vector<16x16x128xf32>, vector<1x16x128xf32> -> vector<18x16x128xf32>
    %6 = vector.extract_strided_slice %5 {offsets = [0, 1, 0], sizes = [18, 1, 128], strides = [1, 1, 1]} : vector<18x16x128xf32> to vector<18x1x128xf32>
    %7 = vector.extract_strided_slice %5 {offsets = [0, 14, 0], sizes = [18, 1, 128], strides = [1, 1, 1]} : vector<18x16x128xf32> to vector<18x1x128xf32>
    %8 = tpu.concatenate %6, %5, %7 in 1 : vector<18x1x128xf32>, vector<18x16x128xf32>, vector<18x1x128xf32> -> vector<18x18x128xf32>
    %9 = vector.extract_strided_slice %8 {offsets = [0, 0, 0], sizes = [16, 16, 128], strides = [1, 1, 1]} : vector<18x18x128xf32> to vector<16x16x128xf32>
    %10 = vector.shape_cast %9 : vector<16x16x128xf32> to vector<256x128xf32>
    %11 = arith.truncf %10 : vector<256x128xf32> to vector<256x128xbf16>
    %12 = vector.extract_strided_slice %8 {offsets = [0, 1, 0], sizes = [16, 16, 128], strides = [1, 1, 1]} : vector<18x18x128xf32> to vector<16x16x128xf32>
    %13 = vector.shape_cast %12 : vector<16x16x128xf32> to vector<256x128xf32>
    %14 = arith.truncf %13 : vector<256x128xf32> to vector<256x128xbf16>
    %15 = vector.extract_strided_slice %8 {offsets = [0, 2, 0], sizes = [16, 16, 128], strides = [1, 1, 1]} : vector<18x18x128xf32> to vector<16x16x128xf32>
    %16 = vector.shape_cast %15 : vector<16x16x128xf32> to vector<256x128xf32>
    %17 = arith.truncf %16 : vector<256x128xf32> to vector<256x128xbf16>
    %18 = vector.extract_strided_slice %8 {offsets = [1, 0, 0], sizes = [16, 16, 128], strides = [1, 1, 1]} : vector<18x18x128xf32> to vector<16x16x128xf32>
    %19 = vector.shape_cast %18 : vector<16x16x128xf32> to vector<256x128xf32>
    %20 = arith.truncf %19 : vector<256x128xf32> to vector<256x128xbf16>
    %21 = vector.extract_strided_slice %8 {offsets = [1, 1, 0], sizes = [16, 16, 128], strides = [1, 1, 1]} : vector<18x18x128xf32> to vector<16x16x128xf32>
    %22 = vector.shape_cast %21 : vector<16x16x128xf32> to vector<256x128xf32>
    %23 = arith.truncf %22 : vector<256x128xf32> to vector<256x128xbf16>
    %24 = vector.extract_strided_slice %8 {offsets = [1, 2, 0], sizes = [16, 16, 128], strides = [1, 1, 1]} : vector<18x18x128xf32> to vector<16x16x128xf32>
    %25 = vector.shape_cast %24 : vector<16x16x128xf32> to vector<256x128xf32>
    %26 = arith.truncf %25 : vector<256x128xf32> to vector<256x128xbf16>
    %27 = vector.extract_strided_slice %8 {offsets = [2, 0, 0], sizes = [16, 16, 128], strides = [1, 1, 1]} : vector<18x18x128xf32> to vector<16x16x128xf32>
    %28 = vector.shape_cast %27 : vector<16x16x128xf32> to vector<256x128xf32>
    %29 = arith.truncf %28 : vector<256x128xf32> to vector<256x128xbf16>
    %30 = vector.extract_strided_slice %8 {offsets = [2, 1, 0], sizes = [16, 16, 128], strides = [1, 1, 1]} : vector<18x18x128xf32> to vector<16x16x128xf32>
    %31 = vector.shape_cast %30 : vector<16x16x128xf32> to vector<256x128xf32>
    %32 = arith.truncf %31 : vector<256x128xf32> to vector<256x128xbf16>
    %33 = vector.extract_strided_slice %8 {offsets = [2, 2, 0], sizes = [16, 16, 128], strides = [1, 1, 1]} : vector<18x18x128xf32> to vector<16x16x128xf32>
    %34 = vector.shape_cast %33 : vector<16x16x128xf32> to vector<256x128xf32>
    %35 = arith.truncf %34 : vector<256x128xf32> to vector<256x128xbf16>
    %36 = tpu.concatenate %11, %14, %17, %20, %23, %26, %29, %32, %35 in 1 : vector<256x128xbf16>, vector<256x128xbf16>, vector<256x128xbf16>, vector<256x128xbf16>, vector<256x128xbf16>, vector<256x128xbf16>, vector<256x128xbf16>, vector<256x128xbf16>, vector<256x128xbf16> -> vector<256x1152xbf16>
    %c0_2 = arith.constant 0 : index
    %c0_3 = arith.constant 0 : index
    %c0_4 = arith.constant 0 : index
    %37 = vector.load %arg3[%c0_2, %c0_3, %c0_4] : memref<4x1152x128xbf16, #tpu.memory_space<vmem>>, vector<1x1152x128xbf16>
    %38 = vector.shape_cast %37 : vector<1x1152x128xbf16> to vector<1152x128xbf16>
    %cst = arith.constant dense<0.000000e+00> : vector<256x128xf32>
    %39 = tpu.matmul %36, %38, %cst {dimension_numbers = #tpu.dot_dimension_numbers<[1], [0], [0], [1], [0, 0, 1, 1], [], []>} : vector<256x1152xbf16>, vector<1152x128xbf16>, vector<256x128xf32> -> vector<256x128xf32>
    %c0_5 = arith.constant 0 : index
    %c0_6 = arith.constant 0 : index
    %40 = vector.load %arg4[%c0_5, %c0_6] : memref<4x128xf32, #tpu.memory_space<vmem>>, vector<1x128xf32>
    %41 = vector.broadcast %40 : vector<1x128xf32> to vector<256x128xf32>
    %42 = arith.addf %39, %41 : vector<256x128xf32>
    %cst_7 = arith.constant 0.000000e+00 : f32
    %43 = vector.broadcast %cst_7 : f32 to vector<256x128xf32>
    %44 = arith.maximumf %42, %43 : vector<256x128xf32>
    %45 = vector.shape_cast %44 : vector<256x128xf32> to vector<16x16x128xf32>
    %46 = vector.extract_strided_slice %45 {offsets = [1, 0, 0], sizes = [1, 16, 128], strides = [1, 1, 1]} : vector<16x16x128xf32> to vector<1x16x128xf32>
    %47 = vector.extract_strided_slice %45 {offsets = [14, 0, 0], sizes = [1, 16, 128], strides = [1, 1, 1]} : vector<16x16x128xf32> to vector<1x16x128xf32>
    %48 = tpu.concatenate %46, %45, %47 in 0 : vector<1x16x128xf32>, vector<16x16x128xf32>, vector<1x16x128xf32> -> vector<18x16x128xf32>
    %49 = vector.extract_strided_slice %48 {offsets = [0, 1, 0], sizes = [18, 1, 128], strides = [1, 1, 1]} : vector<18x16x128xf32> to vector<18x1x128xf32>
    %50 = vector.extract_strided_slice %48 {offsets = [0, 14, 0], sizes = [18, 1, 128], strides = [1, 1, 1]} : vector<18x16x128xf32> to vector<18x1x128xf32>
    %51 = tpu.concatenate %49, %48, %50 in 1 : vector<18x1x128xf32>, vector<18x16x128xf32>, vector<18x1x128xf32> -> vector<18x18x128xf32>
    %52 = vector.extract_strided_slice %51 {offsets = [0, 0, 0], sizes = [16, 16, 128], strides = [1, 1, 1]} : vector<18x18x128xf32> to vector<16x16x128xf32>
    %53 = vector.shape_cast %52 : vector<16x16x128xf32> to vector<256x128xf32>
    %54 = arith.truncf %53 : vector<256x128xf32> to vector<256x128xbf16>
    %55 = vector.extract_strided_slice %51 {offsets = [0, 1, 0], sizes = [16, 16, 128], strides = [1, 1, 1]} : vector<18x18x128xf32> to vector<16x16x128xf32>
    %56 = vector.shape_cast %55 : vector<16x16x128xf32> to vector<256x128xf32>
    %57 = arith.truncf %56 : vector<256x128xf32> to vector<256x128xbf16>
    %58 = vector.extract_strided_slice %51 {offsets = [0, 2, 0], sizes = [16, 16, 128], strides = [1, 1, 1]} : vector<18x18x128xf32> to vector<16x16x128xf32>
    %59 = vector.shape_cast %58 : vector<16x16x128xf32> to vector<256x128xf32>
    %60 = arith.truncf %59 : vector<256x128xf32> to vector<256x128xbf16>
    %61 = vector.extract_strided_slice %51 {offsets = [1, 0, 0], sizes = [16, 16, 128], strides = [1, 1, 1]} : vector<18x18x128xf32> to vector<16x16x128xf32>
    %62 = vector.shape_cast %61 : vector<16x16x128xf32> to vector<256x128xf32>
    %63 = arith.truncf %62 : vector<256x128xf32> to vector<256x128xbf16>
    %64 = vector.extract_strided_slice %51 {offsets = [1, 1, 0], sizes = [16, 16, 128], strides = [1, 1, 1]} : vector<18x18x128xf32> to vector<16x16x128xf32>
    %65 = vector.shape_cast %64 : vector<16x16x128xf32> to vector<256x128xf32>
    %66 = arith.truncf %65 : vector<256x128xf32> to vector<256x128xbf16>
    %67 = vector.extract_strided_slice %51 {offsets = [1, 2, 0], sizes = [16, 16, 128], strides = [1, 1, 1]} : vector<18x18x128xf32> to vector<16x16x128xf32>
    %68 = vector.shape_cast %67 : vector<16x16x128xf32> to vector<256x128xf32>
    %69 = arith.truncf %68 : vector<256x128xf32> to vector<256x128xbf16>
    %70 = vector.extract_strided_slice %51 {offsets = [2, 0, 0], sizes = [16, 16, 128], strides = [1, 1, 1]} : vector<18x18x128xf32> to vector<16x16x128xf32>
    %71 = vector.shape_cast %70 : vector<16x16x128xf32> to vector<256x128xf32>
    %72 = arith.truncf %71 : vector<256x128xf32> to vector<256x128xbf16>
    %73 = vector.extract_strided_slice %51 {offsets = [2, 1, 0], sizes = [16, 16, 128], strides = [1, 1, 1]} : vector<18x18x128xf32> to vector<16x16x128xf32>
    %74 = vector.shape_cast %73 : vector<16x16x128xf32> to vector<256x128xf32>
    %75 = arith.truncf %74 : vector<256x128xf32> to vector<256x128xbf16>
    %76 = vector.extract_strided_slice %51 {offsets = [2, 2, 0], sizes = [16, 16, 128], strides = [1, 1, 1]} : vector<18x18x128xf32> to vector<16x16x128xf32>
    %77 = vector.shape_cast %76 : vector<16x16x128xf32> to vector<256x128xf32>
    %78 = arith.truncf %77 : vector<256x128xf32> to vector<256x128xbf16>
    %79 = tpu.concatenate %54, %57, %60, %63, %66, %69, %72, %75, %78 in 1 : vector<256x128xbf16>, vector<256x128xbf16>, vector<256x128xbf16>, vector<256x128xbf16>, vector<256x128xbf16>, vector<256x128xbf16>, vector<256x128xbf16>, vector<256x128xbf16>, vector<256x128xbf16> -> vector<256x1152xbf16>
    %c1 = arith.constant 1 : index
    %c0_8 = arith.constant 0 : index
    %c0_9 = arith.constant 0 : index
    %80 = vector.load %arg3[%c1, %c0_8, %c0_9] : memref<4x1152x128xbf16, #tpu.memory_space<vmem>>, vector<1x1152x128xbf16>
    %81 = vector.shape_cast %80 : vector<1x1152x128xbf16> to vector<1152x128xbf16>
    %cst_10 = arith.constant dense<0.000000e+00> : vector<256x128xf32>
    %82 = tpu.matmul %79, %81, %cst_10 {dimension_numbers = #tpu.dot_dimension_numbers<[1], [0], [0], [1], [0, 0, 1, 1], [], []>} : vector<256x1152xbf16>, vector<1152x128xbf16>, vector<256x128xf32> -> vector<256x128xf32>
    %c1_11 = arith.constant 1 : index
    %c0_12 = arith.constant 0 : index
    %83 = vector.load %arg4[%c1_11, %c0_12] : memref<4x128xf32, #tpu.memory_space<vmem>>, vector<1x128xf32>
    %84 = vector.broadcast %83 : vector<1x128xf32> to vector<256x128xf32>
    %85 = arith.addf %82, %84 : vector<256x128xf32>
    %cst_13 = arith.constant 0.000000e+00 : f32
    %86 = vector.broadcast %cst_13 : f32 to vector<256x128xf32>
    %87 = arith.maximumf %85, %86 : vector<256x128xf32>
    %c0_14 = arith.constant 0 : index
    %c0_15 = arith.constant 0 : index
    %c0_16 = arith.constant 0 : index
    %88 = vector.load %arg2[%c0_14, %c0_15, %c0_16] : memref<1x256x128xf32, #tpu.memory_space<vmem>>, vector<1x256x128xf32>
    %89 = vector.shape_cast %88 : vector<1x256x128xf32> to vector<256x128xf32>
    %90 = vector.shape_cast %89 : vector<256x128xf32> to vector<16x16x128xf32>
    %91 = vector.extract_strided_slice %90 {offsets = [1, 0, 0], sizes = [1, 16, 128], strides = [1, 1, 1]} : vector<16x16x128xf32> to vector<1x16x128xf32>
    %92 = vector.extract_strided_slice %90 {offsets = [14, 0, 0], sizes = [1, 16, 128], strides = [1, 1, 1]} : vector<16x16x128xf32> to vector<1x16x128xf32>
    %93 = tpu.concatenate %91, %90, %92 in 0 : vector<1x16x128xf32>, vector<16x16x128xf32>, vector<1x16x128xf32> -> vector<18x16x128xf32>
    %94 = vector.extract_strided_slice %93 {offsets = [0, 1, 0], sizes = [18, 1, 128], strides = [1, 1, 1]} : vector<18x16x128xf32> to vector<18x1x128xf32>
    %95 = vector.extract_strided_slice %93 {offsets = [0, 14, 0], sizes = [18, 1, 128], strides = [1, 1, 1]} : vector<18x16x128xf32> to vector<18x1x128xf32>
    %96 = tpu.concatenate %94, %93, %95 in 1 : vector<18x1x128xf32>, vector<18x16x128xf32>, vector<18x1x128xf32> -> vector<18x18x128xf32>
    %97 = vector.extract_strided_slice %96 {offsets = [0, 0, 0], sizes = [16, 16, 128], strides = [1, 1, 1]} : vector<18x18x128xf32> to vector<16x16x128xf32>
    %98 = vector.shape_cast %97 : vector<16x16x128xf32> to vector<256x128xf32>
    %99 = arith.truncf %98 : vector<256x128xf32> to vector<256x128xbf16>
    %100 = vector.extract_strided_slice %96 {offsets = [0, 1, 0], sizes = [16, 16, 128], strides = [1, 1, 1]} : vector<18x18x128xf32> to vector<16x16x128xf32>
    %101 = vector.shape_cast %100 : vector<16x16x128xf32> to vector<256x128xf32>
    %102 = arith.truncf %101 : vector<256x128xf32> to vector<256x128xbf16>
    %103 = vector.extract_strided_slice %96 {offsets = [0, 2, 0], sizes = [16, 16, 128], strides = [1, 1, 1]} : vector<18x18x128xf32> to vector<16x16x128xf32>
    %104 = vector.shape_cast %103 : vector<16x16x128xf32> to vector<256x128xf32>
    %105 = arith.truncf %104 : vector<256x128xf32> to vector<256x128xbf16>
    %106 = vector.extract_strided_slice %96 {offsets = [1, 0, 0], sizes = [16, 16, 128], strides = [1, 1, 1]} : vector<18x18x128xf32> to vector<16x16x128xf32>
    %107 = vector.shape_cast %106 : vector<16x16x128xf32> to vector<256x128xf32>
    %108 = arith.truncf %107 : vector<256x128xf32> to vector<256x128xbf16>
    %109 = vector.extract_strided_slice %96 {offsets = [1, 1, 0], sizes = [16, 16, 128], strides = [1, 1, 1]} : vector<18x18x128xf32> to vector<16x16x128xf32>
    %110 = vector.shape_cast %109 : vector<16x16x128xf32> to vector<256x128xf32>
    %111 = arith.truncf %110 : vector<256x128xf32> to vector<256x128xbf16>
    %112 = vector.extract_strided_slice %96 {offsets = [1, 2, 0], sizes = [16, 16, 128], strides = [1, 1, 1]} : vector<18x18x128xf32> to vector<16x16x128xf32>
    %113 = vector.shape_cast %112 : vector<16x16x128xf32> to vector<256x128xf32>
    %114 = arith.truncf %113 : vector<256x128xf32> to vector<256x128xbf16>
    %115 = vector.extract_strided_slice %96 {offsets = [2, 0, 0], sizes = [16, 16, 128], strides = [1, 1, 1]} : vector<18x18x128xf32> to vector<16x16x128xf32>
    %116 = vector.shape_cast %115 : vector<16x16x128xf32> to vector<256x128xf32>
    %117 = arith.truncf %116 : vector<256x128xf32> to vector<256x128xbf16>
    %118 = vector.extract_strided_slice %96 {offsets = [2, 1, 0], sizes = [16, 16, 128], strides = [1, 1, 1]} : vector<18x18x128xf32> to vector<16x16x128xf32>
    %119 = vector.shape_cast %118 : vector<16x16x128xf32> to vector<256x128xf32>
    %120 = arith.truncf %119 : vector<256x128xf32> to vector<256x128xbf16>
    %121 = vector.extract_strided_slice %96 {offsets = [2, 2, 0], sizes = [16, 16, 128], strides = [1, 1, 1]} : vector<18x18x128xf32> to vector<16x16x128xf32>
    %122 = vector.shape_cast %121 : vector<16x16x128xf32> to vector<256x128xf32>
    %123 = arith.truncf %122 : vector<256x128xf32> to vector<256x128xbf16>
    %124 = tpu.concatenate %99, %102, %105, %108, %111, %114, %117, %120, %123 in 1 : vector<256x128xbf16>, vector<256x128xbf16>, vector<256x128xbf16>, vector<256x128xbf16>, vector<256x128xbf16>, vector<256x128xbf16>, vector<256x128xbf16>, vector<256x128xbf16>, vector<256x128xbf16> -> vector<256x1152xbf16>
    %c0_17 = arith.constant 0 : index
    %c0_18 = arith.constant 0 : index
    %c0_19 = arith.constant 0 : index
    %125 = vector.load %arg3[%c0_17, %c0_18, %c0_19] : memref<4x1152x128xbf16, #tpu.memory_space<vmem>>, vector<1x1152x128xbf16>
    %126 = vector.shape_cast %125 : vector<1x1152x128xbf16> to vector<1152x128xbf16>
    %cst_20 = arith.constant dense<0.000000e+00> : vector<256x128xf32>
    %127 = tpu.matmul %124, %126, %cst_20 {dimension_numbers = #tpu.dot_dimension_numbers<[1], [0], [0], [1], [0, 0, 1, 1], [], []>} : vector<256x1152xbf16>, vector<1152x128xbf16>, vector<256x128xf32> -> vector<256x128xf32>
    %c0_21 = arith.constant 0 : index
    %c0_22 = arith.constant 0 : index
    %128 = vector.load %arg4[%c0_21, %c0_22] : memref<4x128xf32, #tpu.memory_space<vmem>>, vector<1x128xf32>
    %129 = vector.broadcast %128 : vector<1x128xf32> to vector<256x128xf32>
    %130 = arith.addf %127, %129 : vector<256x128xf32>
    %cst_23 = arith.constant 0.000000e+00 : f32
    %131 = vector.broadcast %cst_23 : f32 to vector<256x128xf32>
    %132 = arith.maximumf %130, %131 : vector<256x128xf32>
    %133 = vector.shape_cast %132 : vector<256x128xf32> to vector<16x16x128xf32>
    %134 = vector.extract_strided_slice %133 {offsets = [1, 0, 0], sizes = [1, 16, 128], strides = [1, 1, 1]} : vector<16x16x128xf32> to vector<1x16x128xf32>
    %135 = vector.extract_strided_slice %133 {offsets = [14, 0, 0], sizes = [1, 16, 128], strides = [1, 1, 1]} : vector<16x16x128xf32> to vector<1x16x128xf32>
    %136 = tpu.concatenate %134, %133, %135 in 0 : vector<1x16x128xf32>, vector<16x16x128xf32>, vector<1x16x128xf32> -> vector<18x16x128xf32>
    %137 = vector.extract_strided_slice %136 {offsets = [0, 1, 0], sizes = [18, 1, 128], strides = [1, 1, 1]} : vector<18x16x128xf32> to vector<18x1x128xf32>
    %138 = vector.extract_strided_slice %136 {offsets = [0, 14, 0], sizes = [18, 1, 128], strides = [1, 1, 1]} : vector<18x16x128xf32> to vector<18x1x128xf32>
    %139 = tpu.concatenate %137, %136, %138 in 1 : vector<18x1x128xf32>, vector<18x16x128xf32>, vector<18x1x128xf32> -> vector<18x18x128xf32>
    %140 = vector.extract_strided_slice %139 {offsets = [0, 0, 0], sizes = [16, 16, 128], strides = [1, 1, 1]} : vector<18x18x128xf32> to vector<16x16x128xf32>
    %141 = vector.shape_cast %140 : vector<16x16x128xf32> to vector<256x128xf32>
    %142 = arith.truncf %141 : vector<256x128xf32> to vector<256x128xbf16>
    %143 = vector.extract_strided_slice %139 {offsets = [0, 1, 0], sizes = [16, 16, 128], strides = [1, 1, 1]} : vector<18x18x128xf32> to vector<16x16x128xf32>
    %144 = vector.shape_cast %143 : vector<16x16x128xf32> to vector<256x128xf32>
    %145 = arith.truncf %144 : vector<256x128xf32> to vector<256x128xbf16>
    %146 = vector.extract_strided_slice %139 {offsets = [0, 2, 0], sizes = [16, 16, 128], strides = [1, 1, 1]} : vector<18x18x128xf32> to vector<16x16x128xf32>
    %147 = vector.shape_cast %146 : vector<16x16x128xf32> to vector<256x128xf32>
    %148 = arith.truncf %147 : vector<256x128xf32> to vector<256x128xbf16>
    %149 = vector.extract_strided_slice %139 {offsets = [1, 0, 0], sizes = [16, 16, 128], strides = [1, 1, 1]} : vector<18x18x128xf32> to vector<16x16x128xf32>
    %150 = vector.shape_cast %149 : vector<16x16x128xf32> to vector<256x128xf32>
    %151 = arith.truncf %150 : vector<256x128xf32> to vector<256x128xbf16>
    %152 = vector.extract_strided_slice %139 {offsets = [1, 1, 0], sizes = [16, 16, 128], strides = [1, 1, 1]} : vector<18x18x128xf32> to vector<16x16x128xf32>
    %153 = vector.shape_cast %152 : vector<16x16x128xf32> to vector<256x128xf32>
    %154 = arith.truncf %153 : vector<256x128xf32> to vector<256x128xbf16>
    %155 = vector.extract_strided_slice %139 {offsets = [1, 2, 0], sizes = [16, 16, 128], strides = [1, 1, 1]} : vector<18x18x128xf32> to vector<16x16x128xf32>
    %156 = vector.shape_cast %155 : vector<16x16x128xf32> to vector<256x128xf32>
    %157 = arith.truncf %156 : vector<256x128xf32> to vector<256x128xbf16>
    %158 = vector.extract_strided_slice %139 {offsets = [2, 0, 0], sizes = [16, 16, 128], strides = [1, 1, 1]} : vector<18x18x128xf32> to vector<16x16x128xf32>
    %159 = vector.shape_cast %158 : vector<16x16x128xf32> to vector<256x128xf32>
    %160 = arith.truncf %159 : vector<256x128xf32> to vector<256x128xbf16>
    %161 = vector.extract_strided_slice %139 {offsets = [2, 1, 0], sizes = [16, 16, 128], strides = [1, 1, 1]} : vector<18x18x128xf32> to vector<16x16x128xf32>
    %162 = vector.shape_cast %161 : vector<16x16x128xf32> to vector<256x128xf32>
    %163 = arith.truncf %162 : vector<256x128xf32> to vector<256x128xbf16>
    %164 = vector.extract_strided_slice %139 {offsets = [2, 2, 0], sizes = [16, 16, 128], strides = [1, 1, 1]} : vector<18x18x128xf32> to vector<16x16x128xf32>
    %165 = vector.shape_cast %164 : vector<16x16x128xf32> to vector<256x128xf32>
    %166 = arith.truncf %165 : vector<256x128xf32> to vector<256x128xbf16>
    %167 = tpu.concatenate %142, %145, %148, %151, %154, %157, %160, %163, %166 in 1 : vector<256x128xbf16>, vector<256x128xbf16>, vector<256x128xbf16>, vector<256x128xbf16>, vector<256x128xbf16>, vector<256x128xbf16>, vector<256x128xbf16>, vector<256x128xbf16>, vector<256x128xbf16> -> vector<256x1152xbf16>
    %c1_24 = arith.constant 1 : index
    %c0_25 = arith.constant 0 : index
    %c0_26 = arith.constant 0 : index
    %168 = vector.load %arg3[%c1_24, %c0_25, %c0_26] : memref<4x1152x128xbf16, #tpu.memory_space<vmem>>, vector<1x1152x128xbf16>
    %169 = vector.shape_cast %168 : vector<1x1152x128xbf16> to vector<1152x128xbf16>
    %cst_27 = arith.constant dense<0.000000e+00> : vector<256x128xf32>
    %170 = tpu.matmul %167, %169, %cst_27 {dimension_numbers = #tpu.dot_dimension_numbers<[1], [0], [0], [1], [0, 0, 1, 1], [], []>} : vector<256x1152xbf16>, vector<1152x128xbf16>, vector<256x128xf32> -> vector<256x128xf32>
    %c1_28 = arith.constant 1 : index
    %c0_29 = arith.constant 0 : index
    %171 = vector.load %arg4[%c1_28, %c0_29] : memref<4x128xf32, #tpu.memory_space<vmem>>, vector<1x128xf32>
    %172 = vector.broadcast %171 : vector<1x128xf32> to vector<256x128xf32>
    %173 = arith.addf %170, %172 : vector<256x128xf32>
    %cst_30 = arith.constant 0.000000e+00 : f32
    %174 = vector.broadcast %cst_30 : f32 to vector<256x128xf32>
    %175 = arith.maximumf %173, %174 : vector<256x128xf32>
    %cst_31 = arith.constant dense<0.000000e+00> : vector<128xf32>
    %176 = vector.multi_reduction <add>, %87, %cst_31 [0] : vector<256x128xf32> to vector<128xf32>
    %177 = vector.shape_cast %176 : vector<128xf32> to vector<1x128xf32>
    %cst_32 = arith.constant 2.560000e+02 : f32
    %178 = vector.broadcast %cst_32 : f32 to vector<1x128xf32>
    %179 = arith.divf %177, %178 : vector<1x128xf32>
    %cst_33 = arith.constant dense<0.000000e+00> : vector<128xf32>
    %180 = vector.multi_reduction <add>, %175, %cst_33 [0] : vector<256x128xf32> to vector<128xf32>
    %181 = vector.shape_cast %180 : vector<128xf32> to vector<1x128xf32>
    %cst_34 = arith.constant 2.560000e+02 : f32
    %182 = vector.broadcast %cst_34 : f32 to vector<1x128xf32>
    %183 = arith.divf %181, %182 : vector<1x128xf32>
    %184 = vector.broadcast %179 : vector<1x128xf32> to vector<256x128xf32>
    %185 = arith.subf %87, %184 : vector<256x128xf32>
    %186 = arith.mulf %185, %185 : vector<256x128xf32>
    %cst_35 = arith.constant dense<0.000000e+00> : vector<128xf32>
    %187 = vector.multi_reduction <add>, %186, %cst_35 [0] : vector<256x128xf32> to vector<128xf32>
    %188 = vector.shape_cast %187 : vector<128xf32> to vector<1x128xf32>
    %cst_36 = arith.constant 2.550000e+02 : f32
    %189 = vector.broadcast %cst_36 : f32 to vector<1x128xf32>
    %190 = arith.divf %188, %189 : vector<1x128xf32>
    %191 = vector.broadcast %183 : vector<1x128xf32> to vector<256x128xf32>
    %192 = arith.subf %175, %191 : vector<256x128xf32>
    %193 = arith.mulf %192, %192 : vector<256x128xf32>
    %cst_37 = arith.constant dense<0.000000e+00> : vector<128xf32>
    %194 = vector.multi_reduction <add>, %193, %cst_37 [0] : vector<256x128xf32> to vector<128xf32>
    %195 = vector.shape_cast %194 : vector<128xf32> to vector<1x128xf32>
    %cst_38 = arith.constant 2.550000e+02 : f32
    %196 = vector.broadcast %cst_38 : f32 to vector<1x128xf32>
    %197 = arith.divf %195, %196 : vector<1x128xf32>
    %198 = vector.broadcast %179 : vector<1x128xf32> to vector<256x128xf32>
    %199 = arith.subf %87, %198 : vector<256x128xf32>
    %cst_39 = arith.constant 9.99999974E-6 : f32
    %200 = vector.broadcast %cst_39 : f32 to vector<1x128xf32>
    %201 = arith.addf %190, %200 : vector<1x128xf32>
    %202 = math.rsqrt %201 : vector<1x128xf32>
    %203 = vector.broadcast %202 : vector<1x128xf32> to vector<256x128xf32>
    %204 = arith.mulf %199, %203 : vector<256x128xf32>
    %cst_40 = arith.constant 9.99999974E-6 : f32
    %205 = vector.broadcast %cst_40 : f32 to vector<1x128xf32>
    %206 = arith.addf %197, %205 : vector<1x128xf32>
    %207 = math.sqrt %206 : vector<1x128xf32>
    %208 = vector.broadcast %207 : vector<1x128xf32> to vector<256x128xf32>
    %209 = arith.mulf %204, %208 : vector<256x128xf32>
    %210 = vector.broadcast %183 : vector<1x128xf32> to vector<256x128xf32>
    %211 = arith.addf %209, %210 : vector<256x128xf32>
    %212 = vector.shape_cast %211 : vector<256x128xf32> to vector<16x16x128xf32>
    %213 = vector.extract_strided_slice %212 {offsets = [1, 0, 0], sizes = [1, 16, 128], strides = [1, 1, 1]} : vector<16x16x128xf32> to vector<1x16x128xf32>
    %214 = vector.extract_strided_slice %212 {offsets = [14, 0, 0], sizes = [1, 16, 128], strides = [1, 1, 1]} : vector<16x16x128xf32> to vector<1x16x128xf32>
    %215 = tpu.concatenate %213, %212, %214 in 0 : vector<1x16x128xf32>, vector<16x16x128xf32>, vector<1x16x128xf32> -> vector<18x16x128xf32>
    %216 = vector.extract_strided_slice %215 {offsets = [0, 1, 0], sizes = [18, 1, 128], strides = [1, 1, 1]} : vector<18x16x128xf32> to vector<18x1x128xf32>
    %217 = vector.extract_strided_slice %215 {offsets = [0, 14, 0], sizes = [18, 1, 128], strides = [1, 1, 1]} : vector<18x16x128xf32> to vector<18x1x128xf32>
    %218 = tpu.concatenate %216, %215, %217 in 1 : vector<18x1x128xf32>, vector<18x16x128xf32>, vector<18x1x128xf32> -> vector<18x18x128xf32>
    %219 = vector.extract_strided_slice %218 {offsets = [0, 0, 0], sizes = [16, 16, 128], strides = [1, 1, 1]} : vector<18x18x128xf32> to vector<16x16x128xf32>
    %220 = vector.shape_cast %219 : vector<16x16x128xf32> to vector<256x128xf32>
    %221 = arith.truncf %220 : vector<256x128xf32> to vector<256x128xbf16>
    %222 = vector.extract_strided_slice %218 {offsets = [0, 1, 0], sizes = [16, 16, 128], strides = [1, 1, 1]} : vector<18x18x128xf32> to vector<16x16x128xf32>
    %223 = vector.shape_cast %222 : vector<16x16x128xf32> to vector<256x128xf32>
    %224 = arith.truncf %223 : vector<256x128xf32> to vector<256x128xbf16>
    %225 = vector.extract_strided_slice %218 {offsets = [0, 2, 0], sizes = [16, 16, 128], strides = [1, 1, 1]} : vector<18x18x128xf32> to vector<16x16x128xf32>
    %226 = vector.shape_cast %225 : vector<16x16x128xf32> to vector<256x128xf32>
    %227 = arith.truncf %226 : vector<256x128xf32> to vector<256x128xbf16>
    %228 = vector.extract_strided_slice %218 {offsets = [1, 0, 0], sizes = [16, 16, 128], strides = [1, 1, 1]} : vector<18x18x128xf32> to vector<16x16x128xf32>
    %229 = vector.shape_cast %228 : vector<16x16x128xf32> to vector<256x128xf32>
    %230 = arith.truncf %229 : vector<256x128xf32> to vector<256x128xbf16>
    %231 = vector.extract_strided_slice %218 {offsets = [1, 1, 0], sizes = [16, 16, 128], strides = [1, 1, 1]} : vector<18x18x128xf32> to vector<16x16x128xf32>
    %232 = vector.shape_cast %231 : vector<16x16x128xf32> to vector<256x128xf32>
    %233 = arith.truncf %232 : vector<256x128xf32> to vector<256x128xbf16>
    %234 = vector.extract_strided_slice %218 {offsets = [1, 2, 0], sizes = [16, 16, 128], strides = [1, 1, 1]} : vector<18x18x128xf32> to vector<16x16x128xf32>
    %235 = vector.shape_cast %234 : vector<16x16x128xf32> to vector<256x128xf32>
    %236 = arith.truncf %235 : vector<256x128xf32> to vector<256x128xbf16>
    %237 = vector.extract_strided_slice %218 {offsets = [2, 0, 0], sizes = [16, 16, 128], strides = [1, 1, 1]} : vector<18x18x128xf32> to vector<16x16x128xf32>
    %238 = vector.shape_cast %237 : vector<16x16x128xf32> to vector<256x128xf32>
    %239 = arith.truncf %238 : vector<256x128xf32> to vector<256x128xbf16>
    %240 = vector.extract_strided_slice %218 {offsets = [2, 1, 0], sizes = [16, 16, 128], strides = [1, 1, 1]} : vector<18x18x128xf32> to vector<16x16x128xf32>
    %241 = vector.shape_cast %240 : vector<16x16x128xf32> to vector<256x128xf32>
    %242 = arith.truncf %241 : vector<256x128xf32> to vector<256x128xbf16>
    %243 = vector.extract_strided_slice %218 {offsets = [2, 2, 0], sizes = [16, 16, 128], strides = [1, 1, 1]} : vector<18x18x128xf32> to vector<16x16x128xf32>
    %244 = vector.shape_cast %243 : vector<16x16x128xf32> to vector<256x128xf32>
    %245 = arith.truncf %244 : vector<256x128xf32> to vector<256x128xbf16>
    %246 = tpu.concatenate %221, %224, %227, %230, %233, %236, %239, %242, %245 in 1 : vector<256x128xbf16>, vector<256x128xbf16>, vector<256x128xbf16>, vector<256x128xbf16>, vector<256x128xbf16>, vector<256x128xbf16>, vector<256x128xbf16>, vector<256x128xbf16>, vector<256x128xbf16> -> vector<256x1152xbf16>
    %c2 = arith.constant 2 : index
    %c0_41 = arith.constant 0 : index
    %c0_42 = arith.constant 0 : index
    %247 = vector.load %arg3[%c2, %c0_41, %c0_42] : memref<4x1152x128xbf16, #tpu.memory_space<vmem>>, vector<1x1152x128xbf16>
    %248 = vector.shape_cast %247 : vector<1x1152x128xbf16> to vector<1152x128xbf16>
    %cst_43 = arith.constant dense<0.000000e+00> : vector<256x128xf32>
    %249 = tpu.matmul %246, %248, %cst_43 {dimension_numbers = #tpu.dot_dimension_numbers<[1], [0], [0], [1], [0, 0, 1, 1], [], []>} : vector<256x1152xbf16>, vector<1152x128xbf16>, vector<256x128xf32> -> vector<256x128xf32>
    %c2_44 = arith.constant 2 : index
    %c0_45 = arith.constant 0 : index
    %250 = vector.load %arg4[%c2_44, %c0_45] : memref<4x128xf32, #tpu.memory_space<vmem>>, vector<1x128xf32>
    %251 = vector.broadcast %250 : vector<1x128xf32> to vector<256x128xf32>
    %252 = arith.addf %249, %251 : vector<256x128xf32>
    %cst_46 = arith.constant 0.000000e+00 : f32
    %253 = vector.broadcast %cst_46 : f32 to vector<256x128xf32>
    %254 = arith.maximumf %252, %253 : vector<256x128xf32>
    %255 = vector.shape_cast %254 : vector<256x128xf32> to vector<16x16x128xf32>
    %256 = vector.extract_strided_slice %255 {offsets = [1, 0, 0], sizes = [1, 16, 128], strides = [1, 1, 1]} : vector<16x16x128xf32> to vector<1x16x128xf32>
    %257 = vector.extract_strided_slice %255 {offsets = [14, 0, 0], sizes = [1, 16, 128], strides = [1, 1, 1]} : vector<16x16x128xf32> to vector<1x16x128xf32>
    %258 = tpu.concatenate %256, %255, %257 in 0 : vector<1x16x128xf32>, vector<16x16x128xf32>, vector<1x16x128xf32> -> vector<18x16x128xf32>
    %259 = vector.extract_strided_slice %258 {offsets = [0, 1, 0], sizes = [18, 1, 128], strides = [1, 1, 1]} : vector<18x16x128xf32> to vector<18x1x128xf32>
    %260 = vector.extract_strided_slice %258 {offsets = [0, 14, 0], sizes = [18, 1, 128], strides = [1, 1, 1]} : vector<18x16x128xf32> to vector<18x1x128xf32>
    %261 = tpu.concatenate %259, %258, %260 in 1 : vector<18x1x128xf32>, vector<18x16x128xf32>, vector<18x1x128xf32> -> vector<18x18x128xf32>
    %262 = vector.extract_strided_slice %261 {offsets = [0, 0, 0], sizes = [16, 16, 128], strides = [1, 1, 1]} : vector<18x18x128xf32> to vector<16x16x128xf32>
    %263 = vector.shape_cast %262 : vector<16x16x128xf32> to vector<256x128xf32>
    %264 = arith.truncf %263 : vector<256x128xf32> to vector<256x128xbf16>
    %265 = vector.extract_strided_slice %261 {offsets = [0, 1, 0], sizes = [16, 16, 128], strides = [1, 1, 1]} : vector<18x18x128xf32> to vector<16x16x128xf32>
    %266 = vector.shape_cast %265 : vector<16x16x128xf32> to vector<256x128xf32>
    %267 = arith.truncf %266 : vector<256x128xf32> to vector<256x128xbf16>
    %268 = vector.extract_strided_slice %261 {offsets = [0, 2, 0], sizes = [16, 16, 128], strides = [1, 1, 1]} : vector<18x18x128xf32> to vector<16x16x128xf32>
    %269 = vector.shape_cast %268 : vector<16x16x128xf32> to vector<256x128xf32>
    %270 = arith.truncf %269 : vector<256x128xf32> to vector<256x128xbf16>
    %271 = vector.extract_strided_slice %261 {offsets = [1, 0, 0], sizes = [16, 16, 128], strides = [1, 1, 1]} : vector<18x18x128xf32> to vector<16x16x128xf32>
    %272 = vector.shape_cast %271 : vector<16x16x128xf32> to vector<256x128xf32>
    %273 = arith.truncf %272 : vector<256x128xf32> to vector<256x128xbf16>
    %274 = vector.extract_strided_slice %261 {offsets = [1, 1, 0], sizes = [16, 16, 128], strides = [1, 1, 1]} : vector<18x18x128xf32> to vector<16x16x128xf32>
    %275 = vector.shape_cast %274 : vector<16x16x128xf32> to vector<256x128xf32>
    %276 = arith.truncf %275 : vector<256x128xf32> to vector<256x128xbf16>
    %277 = vector.extract_strided_slice %261 {offsets = [1, 2, 0], sizes = [16, 16, 128], strides = [1, 1, 1]} : vector<18x18x128xf32> to vector<16x16x128xf32>
    %278 = vector.shape_cast %277 : vector<16x16x128xf32> to vector<256x128xf32>
    %279 = arith.truncf %278 : vector<256x128xf32> to vector<256x128xbf16>
    %280 = vector.extract_strided_slice %261 {offsets = [2, 0, 0], sizes = [16, 16, 128], strides = [1, 1, 1]} : vector<18x18x128xf32> to vector<16x16x128xf32>
    %281 = vector.shape_cast %280 : vector<16x16x128xf32> to vector<256x128xf32>
    %282 = arith.truncf %281 : vector<256x128xf32> to vector<256x128xbf16>
    %283 = vector.extract_strided_slice %261 {offsets = [2, 1, 0], sizes = [16, 16, 128], strides = [1, 1, 1]} : vector<18x18x128xf32> to vector<16x16x128xf32>
    %284 = vector.shape_cast %283 : vector<16x16x128xf32> to vector<256x128xf32>
    %285 = arith.truncf %284 : vector<256x128xf32> to vector<256x128xbf16>
    %286 = vector.extract_strided_slice %261 {offsets = [2, 2, 0], sizes = [16, 16, 128], strides = [1, 1, 1]} : vector<18x18x128xf32> to vector<16x16x128xf32>
    %287 = vector.shape_cast %286 : vector<16x16x128xf32> to vector<256x128xf32>
    %288 = arith.truncf %287 : vector<256x128xf32> to vector<256x128xbf16>
    %289 = tpu.concatenate %264, %267, %270, %273, %276, %279, %282, %285, %288 in 1 : vector<256x128xbf16>, vector<256x128xbf16>, vector<256x128xbf16>, vector<256x128xbf16>, vector<256x128xbf16>, vector<256x128xbf16>, vector<256x128xbf16>, vector<256x128xbf16>, vector<256x128xbf16> -> vector<256x1152xbf16>
    %c3 = arith.constant 3 : index
    %c0_47 = arith.constant 0 : index
    %c0_48 = arith.constant 0 : index
    %290 = vector.load %arg3[%c3, %c0_47, %c0_48] : memref<4x1152x128xbf16, #tpu.memory_space<vmem>>, vector<1x1152x128xbf16>
    %291 = vector.shape_cast %290 : vector<1x1152x128xbf16> to vector<1152x128xbf16>
    %cst_49 = arith.constant dense<0.000000e+00> : vector<256x128xf32>
    %292 = tpu.matmul %289, %291, %cst_49 {dimension_numbers = #tpu.dot_dimension_numbers<[1], [0], [0], [1], [0, 0, 1, 1], [], []>} : vector<256x1152xbf16>, vector<1152x128xbf16>, vector<256x128xf32> -> vector<256x128xf32>
    %c3_50 = arith.constant 3 : index
    %c0_51 = arith.constant 0 : index
    %293 = vector.load %arg4[%c3_50, %c0_51] : memref<4x128xf32, #tpu.memory_space<vmem>>, vector<1x128xf32>
    %294 = vector.broadcast %293 : vector<1x128xf32> to vector<256x128xf32>
    %295 = arith.addf %292, %294 : vector<256x128xf32>
    %296 = tpu.transpose %295, [1, 0] : vector<256x128xf32> -> vector<128x256xf32>
    %297 = vector.extract_strided_slice %296 {offsets = [0, 0], sizes = [3, 256], strides = [1, 1]} : vector<128x256xf32> to vector<3x256xf32>
    %c0_52 = arith.constant 0 : index
    %c0_53 = arith.constant 0 : index
    %c0_54 = arith.constant 0 : index
    %298 = vector.load %arg5[%c0_52, %c0_53, %c0_54] : memref<1x3x256xf32, #tpu.memory_space<vmem>>, vector<1x3x256xf32>
    %299 = vector.shape_cast %298 : vector<1x3x256xf32> to vector<3x256xf32>
    %300 = vector.shape_cast %297 : vector<3x256xf32> to vector<1x3x256xf32>
    tpu.vector_store %arg5[%c0_52, %c0_53, %c0_54], %300 {strides = array<i32>} : memref<1x3x256xf32, #tpu.memory_space<vmem>>, vector<1x3x256xf32>,
    return
  }
  func.func @transform_0(%arg0: i32) -> (i32, i32, i32) {
    %c0_i32 = arith.constant 0 : i32
    %c0_i32_0 = arith.constant 0 : i32
    %c0_i32_1 = arith.constant 0 : i32
    return %arg0, %c0_i32, %c0_i32_0 : i32, i32, i32
  }
  func.func @transform_1(%arg0: i32) -> (i32, i32, i32) {
    %c0_i32 = arith.constant 0 : i32
    %c0_i32_0 = arith.constant 0 : i32
    %c0_i32_1 = arith.constant 0 : i32
    return %arg0, %c0_i32, %c0_i32_0 : i32, i32, i32
  }
  func.func @transform_2(%arg0: i32) -> (i32, i32, i32) {
    %c0_i32 = arith.constant 0 : i32
    %c0_i32_0 = arith.constant 0 : i32
    %c0_i32_1 = arith.constant 0 : i32
    %c0_i32_2 = arith.constant 0 : i32
    return %c0_i32, %c0_i32_0, %c0_i32_1 : i32, i32, i32
  }
  func.func @transform_3(%arg0: i32) -> (i32, i32) {
    %c0_i32 = arith.constant 0 : i32
    %c0_i32_0 = arith.constant 0 : i32
    %c0_i32_1 = arith.constant 0 : i32
    return %c0_i32, %c0_i32_0 : i32, i32
  }
  func.func @transform_4(%arg0: i32) -> (i32, i32, i32) {
    %c0_i32 = arith.constant 0 : i32
    %c0_i32_0 = arith.constant 0 : i32
    %c0_i32_1 = arith.constant 0 : i32
    return %arg0, %c0_i32, %c0_i32_0 : i32, i32, i32
  }
}

</mosaic_0001>

<llo_original>
// kernel: adain_wrapper_forward.1
$region0: #{adain_wrapper_forward.1}
  #allocation0 [shape = 'u32[]', space=smem, size = 0x4, offset = 0x4, fixed_abs, tag = 'smem constant byte address 0x4 - core index']
  #allocation1 [shape = 'u32[144,128]{1,0:T(1,128)}', space=vmem, size = 0x12000, scoped, tag = 'internal scratch']
  %s0 = inlined_call_operand.vmem [shape: f32[2,256,128], index: 0, kind: input, shape index: {}]
  %s1 = inlined_call_operand.vmem [shape: f32[2,256,128], index: 1, kind: input, shape index: {}]
  %s2 = inlined_call_operand.vmem [shape: bf16[4,1152,128], index: 2, kind: input, shape index: {}]
  %s3 = inlined_call_operand.vmem [shape: f32[4,128], index: 3, kind: input, shape index: {}]
  %s4 = inlined_call_operand.vmem [shape: f32[2,3,256], index: 4, kind: output, shape index: {}]
  %s5 = sld [smem:[#allocation0]]
  $region49: #{adain_wrapper_forward.1} parent=0
    _
  %s7 = ssub.s32 1, %s5
  %s8 = scalar_select 0, %s7, %s5
  loop: start=0, step=1, limit=4
  $region2: #{adain_wrapper_forward.1} parent=0 // loop_pre_header
    _
  $region3: #{adain_wrapper_forward.1} parent=0 // loop_header
    %s10 = sphi 0, %s14
    %p11 = scmp.ge.s32.totalorder %s10, 4
    %s20 = sphi 0, %s22
    %s23 = sphi 0, %s20
    %s24 = sphi 0, %s23
    %s40 = sphi 0, %s24
    %s46 = sphi 0, %s48
    %s49 = sphi 0, %s46
    %s50 = sphi 0, %s49
    %s66 = sphi 0, %s50
    %s70 = sphi 0, %s70
    %s72 = sphi 0, %s70
    %s73 = sphi 0, %s72
    %s87 = sphi 0, %s73
    %s91 = sphi 0, %s91
    %s93 = sphi 0, %s91
    %s94 = sphi 0, %s93
    %s108 = sphi 0, %s94
    %s114 = sphi 0, %s116
    %s117 = sphi 0, %s114
    %s118 = sphi 0, %s117
    %s134 = sphi 0, %s118
  $region4: #{adain_wrapper_forward.1} parent=0 // loop_header_branch
    %13 = sbr.rel (%p11) target = $region8
  $region5: #{adain_wrapper_forward.1} parent=0 // loop_body
    %s15 = ssub.s32 %s10, 1
    %s16 = ssub.s32 %s10, 2
    %s17 = sadd.s32 %s10, 1
    %s18 = ssub.s32 %s10, %s17
    %p19 = scmp.eq.s32.totalorder %s18, 0
    %s21 = sadd.s32 %s20, 1
    %s22 = scalar_select %p19, %s20, %s21
    %p25 = pneg %p19
    %p26 = scmp.eq.s32.totalorder %s10, 1
    %p27 = por %p25, %p26
    %p28 = scmp.ne.s32.totalorder %s20, %s23
    %p29 = scmp.eq.s32.totalorder %s10, 0
    %p30 = por %p28, %p29
    %p31 = scmp.ne.s32.totalorder %s20, %s23
    %p32 = scmp.eq.s32.totalorder %s15, 1
    %p33 = por %p31, %p32
    %p34 = scmp.ne.s32.totalorder %s23, %s24
    %p35 = scmp.eq.s32.totalorder %s15, 0
    %p36 = por %p34, %p35
    %p37 = scmp.ne.s32.totalorder %s23, %s24
    %p38 = scmp.eq.s32.totalorder %s16, 1
    %p39 = por %p37, %p38
    %p41 = scmp.ne.s32.totalorder %s24, %s40
    %p42 = scmp.eq.s32.totalorder %s16, 0
    %p43 = por %p41, %p42
    %s44 = ssub.s32 %s10, %s17
    %p45 = scmp.eq.s32.totalorder %s44, 0
    %s47 = sadd.s32 %s46, 1
    %s48 = scalar_select %p45, %s46, %s47
    %p51 = pneg %p45
    %p52 = scmp.eq.s32.totalorder %s10, 1
    %p53 = por %p51, %p52
    %p54 = scmp.ne.s32.totalorder %s46, %s49
    %p55 = scmp.eq.s32.totalorder %s10, 0
    %p56 = por %p54, %p55
    %p57 = scmp.ne.s32.totalorder %s46, %s49
    %p58 = scmp.eq.s32.totalorder %s15, 1
    %p59 = por %p57, %p58
    %p60 = scmp.ne.s32.totalorder %s49, %s50
    %p61 = scmp.eq.s32.totalorder %s15, 0
    %p62 = por %p60, %p61
    %p63 = scmp.ne.s32.totalorder %s49, %s50
    %p64 = scmp.eq.s32.totalorder %s16, 1
    %p65 = por %p63, %p64
    %p67 = scmp.ne.s32.totalorder %s50, %s66
    %p68 = scmp.eq.s32.totalorder %s16, 0
    %p69 = por %p67, %p68
    %s71 = sadd.s32 %s70, 1
    %p74 = scmp.eq.s32.totalorder %s10, 1
    %p75 = scmp.ne.s32.totalorder %s70, %s72
    %p76 = scmp.eq.s32.totalorder %s10, 0
    %p77 = por %p75, %p76
    %p78 = scmp.ne.s32.totalorder %s70, %s72
    %p79 = scmp.eq.s32.totalorder %s15, 1
    %p80 = por %p78, %p79
    %p81 = scmp.ne.s32.totalorder %s72, %s73
    %p82 = scmp.eq.s32.totalorder %s15, 0
    %p83 = por %p81, %p82
    %p84 = scmp.ne.s32.totalorder %s72, %s73
    %p85 = scmp.eq.s32.totalorder %s16, 1
    %p86 = por %p84, %p85
    %p88 = scmp.ne.s32.totalorder %s73, %s87
    %p89 = scmp.eq.s32.totalorder %s16, 0
    %p90 = por %p88, %p89
    %s92 = sadd.s32 %s91, 1
    %p95 = scmp.eq.s32.totalorder %s10, 1
    %p96 = scmp.ne.s32.totalorder %s91, %s93
    %p97 = scmp.eq.s32.totalorder %s10, 0
    %p98 = por %p96, %p97
    %p99 = scmp.ne.s32.totalorder %s91, %s93
    %p100 = scmp.eq.s32.totalorder %s15, 1
    %p101 = por %p99, %p100
    %p102 = scmp.ne.s32.totalorder %s93, %s94
    %p103 = scmp.eq.s32.totalorder %s15, 0
    %p104 = por %p102, %p103
    %p105 = scmp.ne.s32.totalorder %s93, %s94
    %p106 = scmp.eq.s32.totalorder %s16, 1
    %p107 = por %p105, %p106
    %p109 = scmp.ne.s32.totalorder %s94, %s108
    %p110 = scmp.eq.s32.totalorder %s16, 0
    %p111 = por %p109, %p110
    %s112 = ssub.s32 %s10, %s17
    %p113 = scmp.eq.s32.totalorder %s112, 0
    %s115 = sadd.s32 %s114, 1
    %s116 = scalar_select %p113, %s114, %s115
    %p119 = pneg %p113
    %p120 = scmp.eq.s32.totalorder %s10, 1
    %p121 = por %p119, %p120
    %p122 = scmp.ne.s32.totalorder %s114, %s117
    %p123 = scmp.eq.s32.totalorder %s10, 0
    %p124 = por %p122, %p123
    %p125 = scmp.ne.s32.totalorder %s114, %s117
    %p126 = scmp.eq.s32.totalorder %s15, 1
    %p127 = por %p125, %p126
    %p128 = scmp.ne.s32.totalorder %s117, %s118
    %p129 = scmp.eq.s32.totalorder %s15, 0
    %p130 = por %p128, %p129
    %p131 = scmp.ne.s32.totalorder %s117, %s118
    %p132 = scmp.eq.s32.totalorder %s16, 1
    %p133 = por %p131, %p132
    %p135 = scmp.ne.s32.totalorder %s118, %s134
    %p136 = scmp.eq.s32.totalorder %s16, 0
    %p137 = por %p135, %p136
    %p138 = scmp.le.s32.totalorder 1, %s10
    %p139 = scmp.lt.s32.totalorder %s10, 3
    %p140 = pnand %p138, %p139
    %p141 = pneg %p140
    // Predicated region
    $region9: #{adain_wrapper_forward.1} parent=5 // pred_check
      _
    $region10: #{adain_wrapper_forward.1} parent=5 // pred_check_branch
      %143 = sbr.rel (%p140) target = $region12
    $region11: #{adain_wrapper_forward.1} parent=5 // pred_region
      %s144 = ssub.s32 %s10, 1
      // Predicated region
      $region13: #{adain_wrapper_forward.1} parent=11 // pred_check
        %p145 = pneg %p83
      $region14: #{adain_wrapper_forward.1} parent=11 // pred_check_branch
        %147 = sbr.rel (%p145) target = $region16
      $region15: #{adain_wrapper_forward.1} parent=11 // pred_region
        _
      $region16: #{adain_wrapper_forward.1} parent=11 // pred_fallthru
        _
      // Predicated region
      $region17: #{adain_wrapper_forward.1} parent=11 // pred_check
        %p148 = pneg %p104
      $region18: #{adain_wrapper_forward.1} parent=11 // pred_check_branch
        %150 = sbr.rel (%p148) target = $region20
      $region19: #{adain_wrapper_forward.1} parent=11 // pred_region
        _
      $region20: #{adain_wrapper_forward.1} parent=11 // pred_fallthru
        _
    $region12: #{adain_wrapper_forward.1} parent=5 // pred_fallthru
      _
    %p151 = scmp.lt.s32.totalorder %s10, 2
    // Predicated region
    $region21: #{adain_wrapper_forward.1} parent=5 // pred_check
      %p152 = pneg %p151
    $region22: #{adain_wrapper_forward.1} parent=5 // pred_check_branch
      %154 = sbr.rel (%p152) target = $region24
    $region23: #{adain_wrapper_forward.1} parent=5 // pred_region
      // Predicated region
      $region25: #{adain_wrapper_forward.1} parent=23 // pred_check
        %p155 = pneg %p30
      $region26: #{adain_wrapper_forward.1} parent=23 // pred_check_branch
        %157 = sbr.rel (%p155) target = $region28
      $region27: #{adain_wrapper_forward.1} parent=23 // pred_region
        %p158 = scmp.lt.s32.totalorder %s10, 1
        %s159 = scalar_select %p158, %s10, 1
        %s160 = smul.addr %s159, 32
        %s161 = smul.addr %s160, 8
        %s162 = scalar_lea.vmem %s0, %s161
      $region28: #{adain_wrapper_forward.1} parent=23 // pred_fallthru
        _
      // Predicated region
      $region29: #{adain_wrapper_forward.1} parent=23 // pred_check
        %p163 = pneg %p56
      $region30: #{adain_wrapper_forward.1} parent=23 // pred_check_branch
        %165 = sbr.rel (%p163) target = $region32
      $region31: #{adain_wrapper_forward.1} parent=23 // pred_region
        %p166 = scmp.lt.s32.totalorder %s10, 1
        %s167 = scalar_select %p166, %s10, 1
        %s168 = smul.addr %s167, 32
        %s169 = smul.addr %s168, 8
        %s170 = scalar_lea.vmem %s1, %s169
      $region32: #{adain_wrapper_forward.1} parent=23 // pred_fallthru
        _
    $region24: #{adain_wrapper_forward.1} parent=5 // pred_fallthru
      _
    %p171 = scmp.le.s32.totalorder 1, %s10
    %p172 = scmp.lt.s32.totalorder %s10, 3
    %p173 = pnand %p171, %p172
    %p174 = pneg %p173
    // Predicated region
    $region33: #{adain_wrapper_forward.1} parent=5 // pred_check
      _
    $region34: #{adain_wrapper_forward.1} parent=5 // pred_check_branch
      %176 = sbr.rel (%p173) target = $region36
    $region35: #{adain_wrapper_forward.1} parent=5 // pred_region
      %s177 = ssub.s32 %s10, 1
      %p178 = scmp.lt.s32.totalorder %s15, 1
      %s179 = scalar_select %p178, %s15, 1
      %s180 = smul.addr %s179, 32
      %s181 = smul.addr %s180, 8
      %s182 = scalar_lea.vmem %s0, %s181
      %p183 = pneg %p36
      %p184 = pneg %p33
      %p185 = scmp.lt.s32.totalorder %s15, 1
      %s186 = scalar_select %p185, %s15, 1
      %s187 = smul.addr %s186, 32
      %s188 = smul.addr %s187, 8
      %s189 = scalar_lea.vmem %s1, %s188
      %p190 = pneg %p62
      %p191 = pneg %p59
      %p192 = pneg %p83
      %p193 = pneg %p80
      %p194 = pneg %p104
      %p195 = pneg %p101
      %p196 = pneg %p130
      %p197 = pneg %p127
      %p198 = scmp.lt.s32.totalorder %s15, 1
      %s199 = scalar_select %p198, %s15, 1
      %s200 = smul.addr %s199, 2
      %s201 = smul.addr %s200, 4
      %s202 = scalar_lea.vmem %s4, %s201
      %p203 = scmp.lt.s32.totalorder %s15, 1
      %s204 = scalar_select %p203, %s15, 1
      %s205 = smul.addr %s204, 32
      %s206 = smul.addr %s205, 8
      %s207 = scalar_lea.vmem %s0, %s206
      %p208 = scmp.lt.s32.totalorder %s15, 1
      %s209 = scalar_select %p208, %s15, 1
      %s210 = smul.addr %s209, 32
      %s211 = smul.addr %s210, 8
      %s212 = scalar_lea.vmem %s1, %s211
      %p213 = scmp.lt.s32.totalorder %s15, 1
      %s214 = scalar_select %p213, %s15, 1
      %s215 = smul.addr %s214, 2
      %s216 = smul.addr %s215, 4
      %s217 = scalar_lea.vmem %s4, %s216
      %v219 = vld [vmem:[%s207] sm:$0xff]
      %v220 = vld [vmem:[%s207 + $0x8] sm:$0xff]
      %v221 = vld [vmem:[%s207 + $0x10] sm:$0xff]
      %v222 = vld [vmem:[%s207 + $0x18] sm:$0xff]
      %v223 = vld [vmem:[%s207 + $0x20] sm:$0xff]
      %v224 = vld [vmem:[%s207 + $0x28] sm:$0xff]
      %v225 = vld [vmem:[%s207 + $0x30] sm:$0xff]
      %v226 = vld [vmem:[%s207 + $0x38] sm:$0xff]
      %v227 = vld [vmem:[%s207 + $0x40] sm:$0xff]
      %v228 = vld [vmem:[%s207 + $0x48] sm:$0xff]
      %v229 = vld [vmem:[%s207 + $0x50] sm:$0xff]
      %v230 = vld [vmem:[%s207 + $0x58] sm:$0xff]
      %v231 = vld [vmem:[%s207 + $0x60] sm:$0xff]
      %v232 = vld [vmem:[%s207 + $0x68] sm:$0xff]
      %v233 = vld [vmem:[%s207 + $0x70] sm:$0xff]
      %v234 = vld [vmem:[%s207 + $0x78] sm:$0xff]
      %v235 = vld [vmem:[%s207 + $0x80] sm:$0xff]
      %v236 = vld [vmem:[%s207 + $0x88] sm:$0xff]
      %v237 = vld [vmem:[%s207 + $0x90] sm:$0xff]
      %v238 = vld [vmem:[%s207 + $0x98] sm:$0xff]
      %v239 = vld [vmem:[%s207 + $0xa0] sm:$0xff]
      %v240 = vld [vmem:[%s207 + $0xa8] sm:$0xff]
      %v241 = vld [vmem:[%s207 + $0xb0] sm:$0xff]
      %v242 = vld [vmem:[%s207 + $0xb8] sm:$0xff]
      %v243 = vld [vmem:[%s207 + $0xc0] sm:$0xff]
      %v244 = vld [vmem:[%s207 + $0xc8] sm:$0xff]
      %v245 = vld [vmem:[%s207 + $0xd0] sm:$0xff]
      %v246 = vld [vmem:[%s207 + $0xd8] sm:$0xff]
      %v247 = vld [vmem:[%s207 + $0xe0] sm:$0xff]
      %v248 = vld [vmem:[%s207 + $0xe8] sm:$0xff]
      %v249 = vld [vmem:[%s207 + $0xf0] sm:$0xff]
      %v250 = vld [vmem:[%s207 + $0xf8] sm:$0xff]
      %v267 = vrot.slane %v221, 1
      %v268 = vrot.slane %v219, 1
      %v269 = vrot.slane %v223, 1
      %v270 = vrot.slane %v225, 1
      %v271 = vrot.slane %v227, 1
      %v272 = vrot.slane %v229, 1
      %v273 = vrot.slane %v231, 1
      %v274 = vrot.slane %v233, 1
      %v275 = vrot.slane %v235, 1
      %v276 = vrot.slane %v237, 1
      %v277 = vrot.slane %v239, 1
      %v278 = vrot.slane %v241, 1
      %v279 = vrot.slane %v243, 1
      %v280 = vrot.slane %v245, 1
      %v281 = vrot.slane %v247, 1
      %v282 = vrot.slane %v249, 1
      %vm315 = vcmask 1040384
      %v316 = vrot.slane %v221, 7
      %v317 = vrot.slane %v222, 7
      %v318 = vsel %vm315, %v316, %v317
      %v319 = vrot.slane %v219, 7
      %v320 = vrot.slane %v220, 7
      %v321 = vsel %vm315, %v319, %v320
      %v322 = vrot.slane %v223, 7
      %v323 = vrot.slane %v224, 7
      %v324 = vsel %vm315, %v322, %v323
      %v325 = vrot.slane %v225, 7
      %v326 = vrot.slane %v226, 7
      %v327 = vsel %vm315, %v325, %v326
      %v328 = vrot.slane %v227, 7
      %v329 = vrot.slane %v228, 7
      %v330 = vsel %vm315, %v328, %v329
      %v331 = vrot.slane %v229, 7
      %v332 = vrot.slane %v230, 7
      %v333 = vsel %vm315, %v331, %v332
      %v334 = vrot.slane %v231, 7
      %v335 = vrot.slane %v232, 7
      %v336 = vsel %vm315, %v334, %v335
      %v337 = vrot.slane %v233, 7
      %v338 = vrot.slane %v234, 7
      %v339 = vsel %vm315, %v337, %v338
      %v340 = vrot.slane %v235, 7
      %v341 = vrot.slane %v236, 7
      %v342 = vsel %vm315, %v340, %v341
      %v343 = vrot.slane %v237, 7
      %v344 = vrot.slane %v238, 7
      %v345 = vsel %vm315, %v343, %v344
      %v346 = vrot.slane %v239, 7
      %v347 = vrot.slane %v240, 7
      %v348 = vsel %vm315, %v346, %v347
      %v349 = vrot.slane %v241, 7
      %v350 = vrot.slane %v242, 7
      %v351 = vsel %vm315, %v349, %v350
      %v352 = vrot.slane %v243, 7
      %v353 = vrot.slane %v244, 7
      %v354 = vsel %vm315, %v352, %v353
      %v355 = vrot.slane %v245, 7
      %v356 = vrot.slane %v246, 7
      %v357 = vsel %vm315, %v355, %v356
      %v358 = vrot.slane %v247, 7
      %v359 = vrot.slane %v248, 7
      %v360 = vsel %vm315, %v358, %v359
      %v361 = vrot.slane %v249, 7
      %v362 = vrot.slane %v250, 7
      %v363 = vsel %vm315, %v361, %v362
      %v412 = vrot.slane %v222, 5
      %v413 = vrot.slane %v220, 5
      %v414 = vrot.slane %v224, 5
      %v415 = vrot.slane %v226, 5
      %v416 = vrot.slane %v228, 5
      %v417 = vrot.slane %v230, 5
      %v418 = vrot.slane %v232, 5
      %v419 = vrot.slane %v234, 5
      %v420 = vrot.slane %v236, 5
      %v421 = vrot.slane %v238, 5
      %v422 = vrot.slane %v240, 5
      %v423 = vrot.slane %v242, 5
      %v424 = vrot.slane %v244, 5
      %v425 = vrot.slane %v246, 5
      %v426 = vrot.slane %v248, 5
      %v427 = vrot.slane %v250, 5
      %v444 = vsel %vm315, %v267, %v316
      %v445 = vsel %vm315, %v268, %v319
      %v446 = vsel %vm315, %v269, %v322
      %v447 = vsel %vm315, %v270, %v325
      %v448 = vsel %vm315, %v271, %v328
      %v449 = vsel %vm315, %v272, %v331
      %v450 = vsel %vm315, %v273, %v334
      %v451 = vsel %vm315, %v274, %v337
      %v452 = vsel %vm315, %v275, %v340
      %v453 = vsel %vm315, %v276, %v343
      %v454 = vsel %vm315, %v277, %v346
      %v455 = vsel %vm315, %v278, %v349
      %v456 = vsel %vm315, %v279, %v352
      %v457 = vsel %vm315, %v280, %v355
      %v458 = vsel %vm315, %v281, %v358
      %v459 = vsel %vm315, %v282, %v361
      %v460 = vsel %vm315, %v317, %v412
      %v461 = vsel %vm315, %v320, %v413
      %v462 = vsel %vm315, %v323, %v414
      %v463 = vsel %vm315, %v326, %v415
      %v464 = vsel %vm315, %v329, %v416
      %v465 = vsel %vm315, %v332, %v417
      %v466 = vsel %vm315, %v335, %v418
      %v467 = vsel %vm315, %v338, %v419
      %v468 = vsel %vm315, %v341, %v420
      %v469 = vsel %vm315, %v344, %v421
      %v470 = vsel %vm315, %v347, %v422
      %v471 = vsel %vm315, %v350, %v423
      %v472 = vsel %vm315, %v353, %v424
      %v473 = vsel %vm315, %v356, %v425
      %v474 = vsel %vm315, %v359, %v426
      %v475 = vsel %vm315, %v362, %v427
      %v476 = vpack.c.bf16 %v318, %v444
      %v477 = vpack.c.bf16 %v321, %v445
      %v478 = vpack.c.bf16 %v324, %v446
      %v479 = vpack.c.bf16 %v327, %v447
      %v480 = vpack.c.bf16 %v330, %v448
      %v481 = vpack.c.bf16 %v333, %v449
      %v482 = vpack.c.bf16 %v336, %v450
      %v483 = vpack.c.bf16 %v339, %v451
      %v484 = vpack.c.bf16 %v342, %v452
      %v485 = vpack.c.bf16 %v345, %v453
      %v486 = vpack.c.bf16 %v348, %v454
      %v487 = vpack.c.bf16 %v351, %v455
      %v488 = vpack.c.bf16 %v354, %v456
      %v489 = vpack.c.bf16 %v357, %v457
      %v490 = vpack.c.bf16 %v360, %v458
      %vm521 = vcmask 1046528
      %v522 = vrot.slane %v444, 1
      %v523 = vrot.slane %v318, 1
      %v524 = vsel %vm521, %v522, %v523
      %v525 = vrot.slane %v460, 1
      %v526 = vsel %vm521, %v523, %v525
      %v527 = vrot.slane %v445, 1
      %v528 = vrot.slane %v321, 1
      %v529 = vsel %vm521, %v527, %v528
      %v530 = vrot.slane %v461, 1
      %v531 = vsel %vm521, %v528, %v530
      %v532 = vrot.slane %v446, 1
      %v533 = vrot.slane %v324, 1
      %v534 = vsel %vm521, %v532, %v533
      %v535 = vrot.slane %v462, 1
      %v536 = vsel %vm521, %v533, %v535
      %v537 = vrot.slane %v447, 1
      %v538 = vrot.slane %v327, 1
      %v539 = vsel %vm521, %v537, %v538
      %v540 = vrot.slane %v463, 1
      %v541 = vsel %vm521, %v538, %v540
      %v542 = vrot.slane %v448, 1
      %v543 = vrot.slane %v330, 1
      %v544 = vsel %vm521, %v542, %v543
      %v545 = vrot.slane %v464, 1
      %v546 = vsel %vm521, %v543, %v545
      %v547 = vrot.slane %v449, 1
      %v548 = vrot.slane %v333, 1
      %v549 = vsel %vm521, %v547, %v548
      %v550 = vrot.slane %v465, 1
      %v551 = vsel %vm521, %v548, %v550
      %v552 = vrot.slane %v450, 1
      %v553 = vrot.slane %v336, 1
      %v554 = vsel %vm521, %v552, %v553
      %v555 = vrot.slane %v466, 1
      %v556 = vsel %vm521, %v553, %v555
      %v557 = vrot.slane %v451, 1
      %v558 = vrot.slane %v339, 1
      %v559 = vsel %vm521, %v557, %v558
      %v560 = vrot.slane %v467, 1
      %v561 = vsel %vm521, %v558, %v560
      %v562 = vrot.slane %v452, 1
      %v563 = vrot.slane %v342, 1
      %v564 = vsel %vm521, %v562, %v563
      %v565 = vrot.slane %v468, 1
      %v566 = vsel %vm521, %v563, %v565
      %v567 = vrot.slane %v453, 1
      %v568 = vrot.slane %v345, 1
      %v569 = vsel %vm521, %v567, %v568
      %v570 = vrot.slane %v469, 1
      %v571 = vsel %vm521, %v568, %v570
      %v572 = vrot.slane %v454, 1
      %v573 = vrot.slane %v348, 1
      %v574 = vsel %vm521, %v572, %v573
      %v575 = vrot.slane %v470, 1
      %v576 = vsel %vm521, %v573, %v575
      %v577 = vrot.slane %v455, 1
      %v578 = vrot.slane %v351, 1
      %v579 = vsel %vm521, %v577, %v578
      %v580 = vrot.slane %v471, 1
      %v581 = vsel %vm521, %v578, %v580
      %v582 = vrot.slane %v456, 1
      %v583 = vrot.slane %v354, 1
      %v584 = vsel %vm521, %v582, %v583
      %v585 = vrot.slane %v472, 1
      %v586 = vsel %vm521, %v583, %v585
      %v587 = vrot.slane %v457, 1
      %v588 = vrot.slane %v357, 1
      %v589 = vsel %vm521, %v587, %v588
      %v590 = vrot.slane %v473, 1
      %v591 = vsel %vm521, %v588, %v590
      %v592 = vrot.slane %v458, 1
      %v593 = vrot.slane %v360, 1
      %v594 = vsel %vm521, %v592, %v593
      %v595 = vrot.slane %v474, 1
      %v596 = vsel %vm521, %v593, %v595
      %v627 = vpack.c.bf16 %v526, %v524
      %v628 = vpack.c.bf16 %v531, %v529
      %v629 = vpack.c.bf16 %v536, %v534
      %v630 = vpack.c.bf16 %v541, %v539
      %v631 = vpack.c.bf16 %v546, %v544
      %v632 = vpack.c.bf16 %v551, %v549
      %v633 = vpack.c.bf16 %v556, %v554
      %v634 = vpack.c.bf16 %v561, %v559
      %v635 = vpack.c.bf16 %v566, %v564
      %v636 = vpack.c.bf16 %v571, %v569
      %v637 = vpack.c.bf16 %v576, %v574
      %v638 = vpack.c.bf16 %v581, %v579
      %v639 = vpack.c.bf16 %v586, %v584
      %v640 = vpack.c.bf16 %v591, %v589
      %v641 = vpack.c.bf16 %v596, %v594
      %vm642 = vcmask 1045504
      %v643 = vrot.slane %v444, 2
      %v644 = vrot.slane %v318, 2
      %v645 = vsel %vm642, %v643, %v644
      %v646 = vrot.slane %v460, 2
      %v647 = vsel %vm642, %v644, %v646
      %v648 = vrot.slane %v445, 2
      %v649 = vrot.slane %v321, 2
      %v650 = vsel %vm642, %v648, %v649
      %v651 = vrot.slane %v461, 2
      %v652 = vsel %vm642, %v649, %v651
      %v653 = vrot.slane %v446, 2
      %v654 = vrot.slane %v324, 2
      %v655 = vsel %vm642, %v653, %v654
      %v656 = vrot.slane %v462, 2
      %v657 = vsel %vm642, %v654, %v656
      %v658 = vrot.slane %v447, 2
      %v659 = vrot.slane %v327, 2
      %v660 = vsel %vm642, %v658, %v659
      %v661 = vrot.slane %v463, 2
      %v662 = vsel %vm642, %v659, %v661
      %v663 = vrot.slane %v448, 2
      %v664 = vrot.slane %v330, 2
      %v665 = vsel %vm642, %v663, %v664
      %v666 = vrot.slane %v464, 2
      %v667 = vsel %vm642, %v664, %v666
      %v668 = vrot.slane %v449, 2
      %v669 = vrot.slane %v333, 2
      %v670 = vsel %vm642, %v668, %v669
      %v671 = vrot.slane %v465, 2
      %v672 = vsel %vm642, %v669, %v671
      %v673 = vrot.slane %v450, 2
      %v674 = vrot.slane %v336, 2
      %v675 = vsel %vm642, %v673, %v674
      %v676 = vrot.slane %v466, 2
      %v677 = vsel %vm642, %v674, %v676
      %v678 = vrot.slane %v451, 2
      %v679 = vrot.slane %v339, 2
      %v680 = vsel %vm642, %v678, %v679
      %v681 = vrot.slane %v467, 2
      %v682 = vsel %vm642, %v679, %v681
      %v683 = vrot.slane %v452, 2
      %v684 = vrot.slane %v342, 2
      %v685 = vsel %vm642, %v683, %v684
      %v686 = vrot.slane %v468, 2
      %v687 = vsel %vm642, %v684, %v686
      %v688 = vrot.slane %v453, 2
      %v689 = vrot.slane %v345, 2
      %v690 = vsel %vm642, %v688, %v689
      %v691 = vrot.slane %v469, 2
      %v692 = vsel %vm642, %v689, %v691
      %v693 = vrot.slane %v454, 2
      %v694 = vrot.slane %v348, 2
      %v695 = vsel %vm642, %v693, %v694
      %v696 = vrot.slane %v470, 2
      %v697 = vsel %vm642, %v694, %v696
      %v698 = vrot.slane %v455, 2
      %v699 = vrot.slane %v351, 2
      %v700 = vsel %vm642, %v698, %v699
      %v701 = vrot.slane %v471, 2
      %v702 = vsel %vm642, %v699, %v701
      %v703 = vrot.slane %v456, 2
      %v704 = vrot.slane %v354, 2
      %v705 = vsel %vm642, %v703, %v704
      %v706 = vrot.slane %v472, 2
      %v707 = vsel %vm642, %v704, %v706
      %v708 = vrot.slane %v457, 2
      %v709 = vrot.slane %v357, 2
      %v710 = vsel %vm642, %v708, %v709
      %v711 = vrot.slane %v473, 2
      %v712 = vsel %vm642, %v709, %v711
      %v713 = vrot.slane %v458, 2
      %v714 = vrot.slane %v360, 2
      %v715 = vsel %vm642, %v713, %v714
      %v716 = vrot.slane %v474, 2
      %v717 = vsel %vm642, %v714, %v716
      %v748 = vpack.c.bf16 %v647, %v645
      %v749 = vpack.c.bf16 %v652, %v650
      %v750 = vpack.c.bf16 %v657, %v655
      %v751 = vpack.c.bf16 %v662, %v660
      %v752 = vpack.c.bf16 %v667, %v665
      %v753 = vpack.c.bf16 %v672, %v670
      %v754 = vpack.c.bf16 %v677, %v675
      %v755 = vpack.c.bf16 %v682, %v680
      %v756 = vpack.c.bf16 %v687, %v685
      %v757 = vpack.c.bf16 %v692, %v690
      %v758 = vpack.c.bf16 %v697, %v695
      %v759 = vpack.c.bf16 %v702, %v700
      %v760 = vpack.c.bf16 %v707, %v705
      %v761 = vpack.c.bf16 %v712, %v710
      %v762 = vpack.c.bf16 %v717, %v715
      %v763 = vpack.c.bf16 %v363, %v459
      %v766 = vrot.slane %v459, 1
      %v767 = vrot.slane %v363, 1
      %v768 = vsel %vm521, %v766, %v767
      %v769 = vrot.slane %v475, 1
      %v770 = vsel %vm521, %v767, %v769
      %v773 = vpack.c.bf16 %v770, %v768
      %v774 = vrot.slane %v459, 2
      %v775 = vrot.slane %v363, 2
      %v776 = vsel %vm642, %v774, %v775
      %v777 = vrot.slane %v475, 2
      %v778 = vsel %vm642, %v775, %v777
      %v781 = vpack.c.bf16 %v778, %v776
      %v782 = vld [vmem:[%s2] sm:$0xf]
      %v783 = vld [vmem:[%s2 + $0x4] sm:$0xf]
      %v784 = vld [vmem:[%s2 + $0x8] sm:$0xf]
      %v785 = vld [vmem:[%s2 + $0xc] sm:$0xf]
      %v786 = vld [vmem:[%s2 + $0x10] sm:$0xf]
      %v787 = vld [vmem:[%s2 + $0x14] sm:$0xf]
      %v788 = vld [vmem:[%s2 + $0x18] sm:$0xf]
      %v789 = vld [vmem:[%s2 + $0x1c] sm:$0xf]
      %v790 = vld [vmem:[%s2 + $0x20] sm:$0xf]
      %v791 = vld [vmem:[%s2 + $0x24] sm:$0xf]
      %v792 = vld [vmem:[%s2 + $0x28] sm:$0xf]
      %v793 = vld [vmem:[%s2 + $0x2c] sm:$0xf]
      %v794 = vld [vmem:[%s2 + $0x30] sm:$0xf]
      %v795 = vld [vmem:[%s2 + $0x34] sm:$0xf]
      %v796 = vld [vmem:[%s2 + $0x38] sm:$0xf]
      %v797 = vld [vmem:[%s2 + $0x3c] sm:$0xf]
      %v798 = vld [vmem:[%s2 + $0x40] sm:$0xf]
      %v799 = vld [vmem:[%s2 + $0x44] sm:$0xf]
      %v800 = vld [vmem:[%s2 + $0x48] sm:$0xf]
      %v801 = vld [vmem:[%s2 + $0x4c] sm:$0xf]
      %v802 = vld [vmem:[%s2 + $0x50] sm:$0xf]
      %v803 = vld [vmem:[%s2 + $0x54] sm:$0xf]
      %v804 = vld [vmem:[%s2 + $0x58] sm:$0xf]
      %v805 = vld [vmem:[%s2 + $0x5c] sm:$0xf]
      %v806 = vld [vmem:[%s2 + $0x60] sm:$0xf]
      %v807 = vld [vmem:[%s2 + $0x64] sm:$0xf]
      %v808 = vld [vmem:[%s2 + $0x68] sm:$0xf]
      %v809 = vld [vmem:[%s2 + $0x6c] sm:$0xf]
      %v810 = vld [vmem:[%s2 + $0x70] sm:$0xf]
      %v811 = vld [vmem:[%s2 + $0x74] sm:$0xf]
      %v812 = vld [vmem:[%s2 + $0x78] sm:$0xf]
      %v813 = vld [vmem:[%s2 + $0x7c] sm:$0xf]
      %v814 = vld [vmem:[%s2 + $0x80] sm:$0xf]
      %v815 = vld [vmem:[%s2 + $0x84] sm:$0xf]
      %v816 = vld [vmem:[%s2 + $0x88] sm:$0xf]
      %v817 = vld [vmem:[%s2 + $0x8c] sm:$0xf]
      %v818 = vld [vmem:[%s2 + $0x90] sm:$0xf]
      %v819 = vld [vmem:[%s2 + $0x94] sm:$0xf]
      %v820 = vld [vmem:[%s2 + $0x98] sm:$0xf]
      %v821 = vld [vmem:[%s2 + $0x9c] sm:$0xf]
      %v822 = vld [vmem:[%s2 + $0xa0] sm:$0xf]
      %v823 = vld [vmem:[%s2 + $0xa4] sm:$0xf]
      %v824 = vld [vmem:[%s2 + $0xa8] sm:$0xf]
      %v825 = vld [vmem:[%s2 + $0xac] sm:$0xf]
      %v826 = vld [vmem:[%s2 + $0xb0] sm:$0xf]
      %v827 = vld [vmem:[%s2 + $0xb4] sm:$0xf]
      %v828 = vld [vmem:[%s2 + $0xb8] sm:$0xf]
      %v829 = vld [vmem:[%s2 + $0xbc] sm:$0xf]
      %v830 = vld [vmem:[%s2 + $0xc0] sm:$0xf]
      %v831 = vld [vmem:[%s2 + $0xc4] sm:$0xf]
      %v832 = vld [vmem:[%s2 + $0xc8] sm:$0xf]
      %v833 = vld [vmem:[%s2 + $0xcc] sm:$0xf]
      %v834 = vld [vmem:[%s2 + $0xd0] sm:$0xf]
      %v835 = vld [vmem:[%s2 + $0xd4] sm:$0xf]
      %v836 = vld [vmem:[%s2 + $0xd8] sm:$0xf]
      %v837 = vld [vmem:[%s2 + $0xdc] sm:$0xf]
      %v838 = vld [vmem:[%s2 + $0xe0] sm:$0xf]
      %v839 = vld [vmem:[%s2 + $0xe4] sm:$0xf]
      %v840 = vld [vmem:[%s2 + $0xe8] sm:$0xf]
      %v841 = vld [vmem:[%s2 + $0xec] sm:$0xf]
      %v842 = vld [vmem:[%s2 + $0xf0] sm:$0xf]
      %v843 = vld [vmem:[%s2 + $0xf4] sm:$0xf]
      %v844 = vld [vmem:[%s2 + $0xf8] sm:$0xf]
      %v845 = vld [vmem:[%s2 + $0xfc] sm:$0xf]
      %v846 = vld [vmem:[%s2 + $0x100] sm:$0xf]
      %v847 = vld [vmem:[%s2 + $0x104] sm:$0xf]
      %v848 = vld [vmem:[%s2 + $0x108] sm:$0xf]
      %v849 = vld [vmem:[%s2 + $0x10c] sm:$0xf]
      %v850 = vld [vmem:[%s2 + $0x110] sm:$0xf]
      %v851 = vld [vmem:[%s2 + $0x114] sm:$0xf]
      %v852 = vld [vmem:[%s2 + $0x118] sm:$0xf]
      %v853 = vld [vmem:[%s2 + $0x11c] sm:$0xf]
      %v854 = vld [vmem:[%s2 + $0x120] sm:$0xf]
      %v855 = vld [vmem:[%s2 + $0x124] sm:$0xf]
      %v856 = vld [vmem:[%s2 + $0x128] sm:$0xf]
      %v857 = vld [vmem:[%s2 + $0x12c] sm:$0xf]
      %v858 = vld [vmem:[%s2 + $0x130] sm:$0xf]
      %v859 = vld [vmem:[%s2 + $0x134] sm:$0xf]
      %v860 = vld [vmem:[%s2 + $0x138] sm:$0xf]
      %v861 = vld [vmem:[%s2 + $0x13c] sm:$0xf]
      %v862 = vld [vmem:[%s2 + $0x140] sm:$0xf]
      %v863 = vld [vmem:[%s2 + $0x144] sm:$0xf]
      %v864 = vld [vmem:[%s2 + $0x148] sm:$0xf]
      %v865 = vld [vmem:[%s2 + $0x14c] sm:$0xf]
      %v866 = vld [vmem:[%s2 + $0x150] sm:$0xf]
      %v867 = vld [vmem:[%s2 + $0x154] sm:$0xf]
      %v868 = vld [vmem:[%s2 + $0x158] sm:$0xf]
      %v869 = vld [vmem:[%s2 + $0x15c] sm:$0xf]
      %v870 = vld [vmem:[%s2 + $0x160] sm:$0xf]
      %v871 = vld [vmem:[%s2 + $0x164] sm:$0xf]
      %v872 = vld [vmem:[%s2 + $0x168] sm:$0xf]
      %v873 = vld [vmem:[%s2 + $0x16c] sm:$0xf]
      %v874 = vld [vmem:[%s2 + $0x170] sm:$0xf]
      %v875 = vld [vmem:[%s2 + $0x174] sm:$0xf]
      %v876 = vld [vmem:[%s2 + $0x178] sm:$0xf]
      %v877 = vld [vmem:[%s2 + $0x17c] sm:$0xf]
      %v878 = vld [vmem:[%s2 + $0x180] sm:$0xf]
      %v879 = vld [vmem:[%s2 + $0x184] sm:$0xf]
      %v880 = vld [vmem:[%s2 + $0x188] sm:$0xf]
      %v881 = vld [vmem:[%s2 + $0x18c] sm:$0xf]
      %v882 = vld [vmem:[%s2 + $0x190] sm:$0xf]
      %v883 = vld [vmem:[%s2 + $0x194] sm:$0xf]
      %v884 = vld [vmem:[%s2 + $0x198] sm:$0xf]
      %v885 = vld [vmem:[%s2 + $0x19c] sm:$0xf]
      %v886 = vld [vmem:[%s2 + $0x1a0] sm:$0xf]
      %v887 = vld [vmem:[%s2 + $0x1a4] sm:$0xf]
      %v888 = vld [vmem:[%s2 + $0x1a8] sm:$0xf]
      %v889 = vld [vmem:[%s2 + $0x1ac] sm:$0xf]
      %v890 = vld [vmem:[%s2 + $0x1b0] sm:$0xf]
      %v891 = vld [vmem:[%s2 + $0x1b4] sm:$0xf]
      %v892 = vld [vmem:[%s2 + $0x1b8] sm:$0xf]
      %v893 = vld [vmem:[%s2 + $0x1bc] sm:$0xf]
      %v894 = vld [vmem:[%s2 + $0x1c0] sm:$0xf]
      %v895 = vld [vmem:[%s2 + $0x1c4] sm:$0xf]
      %v896 = vld [vmem:[%s2 + $0x1c8] sm:$0xf]
      %v897 = vld [vmem:[%s2 + $0x1cc] sm:$0xf]
      %v898 = vld [vmem:[%s2 + $0x1d0] sm:$0xf]
      %v899 = vld [vmem:[%s2 + $0x1d4] sm:$0xf]
      %v900 = vld [vmem:[%s2 + $0x1d8] sm:$0xf]
      %v901 = vld [vmem:[%s2 + $0x1dc] sm:$0xf]
      %v902 = vld [vmem:[%s2 + $0x1e0] sm:$0xf]
      %v903 = vld [vmem:[%s2 + $0x1e4] sm:$0xf]
      %v904 = vld [vmem:[%s2 + $0x1e8] sm:$0xf]
      %v905 = vld [vmem:[%s2 + $0x1ec] sm:$0xf]
      %v906 = vld [vmem:[%s2 + $0x1f0] sm:$0xf]
      %v907 = vld [vmem:[%s2 + $0x1f4] sm:$0xf]
      %v908 = vld [vmem:[%s2 + $0x1f8] sm:$0xf]
      %v909 = vld [vmem:[%s2 + $0x1fc] sm:$0xf]
      %v910 = vld [vmem:[%s2 + $0x200] sm:$0xf]
      %v911 = vld [vmem:[%s2 + $0x204] sm:$0xf]
      %v912 = vld [vmem:[%s2 + $0x208] sm:$0xf]
      %v913 = vld [vmem:[%s2 + $0x20c] sm:$0xf]
      %v914 = vld [vmem:[%s2 + $0x210] sm:$0xf]
      %v915 = vld [vmem:[%s2 + $0x214] sm:$0xf]
      %v916 = vld [vmem:[%s2 + $0x218] sm:$0xf]
      %v917 = vld [vmem:[%s2 + $0x21c] sm:$0xf]
      %v918 = vld [vmem:[%s2 + $0x220] sm:$0xf]
      %v919 = vld [vmem:[%s2 + $0x224] sm:$0xf]
      %v920 = vld [vmem:[%s2 + $0x228] sm:$0xf]
      %v921 = vld [vmem:[%s2 + $0x22c] sm:$0xf]
      %v922 = vld [vmem:[%s2 + $0x230] sm:$0xf]
      %v923 = vld [vmem:[%s2 + $0x234] sm:$0xf]
      %v924 = vld [vmem:[%s2 + $0x238] sm:$0xf]
      %v925 = vld [vmem:[%s2 + $0x23c] sm:$0xf]
      %v926 = vld [vmem:[%s3] sm:$0x1]
      %v927 = vlaneseq
      %v928 = vshrl.u32 %v927, 7
      %v929 = vsub.s32 0, %v928
      %v930 = vrot.slane %v926, %v929
      %v1075 = vunpack.c.l.b16 %v782
      %v1076 = vunpack.c.l.b16 %v783
      %v1077 = vunpack.c.l.b16 %v784
      %v1078 = vunpack.c.l.b16 %v785
      %v1079 = vunpack.c.l.b16 %v786
      %v1080 = vunpack.c.l.b16 %v787
      %v1081 = vunpack.c.l.b16 %v788
      %v1082 = vunpack.c.l.b16 %v789
      %v1083 = vunpack.c.l.b16 %v790
      %v1084 = vunpack.c.l.b16 %v791
      %v1085 = vunpack.c.l.b16 %v792
      %v1086 = vunpack.c.l.b16 %v793
      %v1087 = vunpack.c.l.b16 %v794
      %v1088 = vunpack.c.l.b16 %v795
      %v1089 = vunpack.c.l.b16 %v796
      %v1090 = vunpack.c.l.b16 %v797
      %v1091 = vunpack.c.l.b16 %v798
      %v1092 = vunpack.c.l.b16 %v799
      %v1093 = vunpack.c.l.b16 %v800
      %v1094 = vunpack.c.l.b16 %v801
      %v1095 = vunpack.c.l.b16 %v802
      %v1096 = vunpack.c.l.b16 %v803
      %v1097 = vunpack.c.l.b16 %v804
      %v1098 = vunpack.c.l.b16 %v805
      %v1099 = vunpack.c.l.b16 %v806
      %v1100 = vunpack.c.l.b16 %v807
      %v1101 = vunpack.c.l.b16 %v808
      %v1102 = vunpack.c.l.b16 %v809
      %v1103 = vunpack.c.l.b16 %v810
      %v1104 = vunpack.c.l.b16 %v811
      %v1105 = vunpack.c.l.b16 %v812
      %v1106 = vunpack.c.l.b16 %v813
      %v1107 = vunpack.c.l.b16 %v814
      %v1108 = vunpack.c.l.b16 %v815
      %v1109 = vunpack.c.l.b16 %v816
      %v1110 = vunpack.c.l.b16 %v817
      %v1111 = vunpack.c.l.b16 %v818
      %v1112 = vunpack.c.l.b16 %v819
      %v1113 = vunpack.c.l.b16 %v820
      %v1114 = vunpack.c.l.b16 %v821
      %v1115 = vunpack.c.l.b16 %v822
      %v1116 = vunpack.c.l.b16 %v823
      %v1117 = vunpack.c.l.b16 %v824
      %v1118 = vunpack.c.l.b16 %v825
      %v1119 = vunpack.c.l.b16 %v826
      %v1120 = vunpack.c.l.b16 %v827
      %v1121 = vunpack.c.l.b16 %v828
      %v1122 = vunpack.c.l.b16 %v829
      %v1123 = vunpack.c.l.b16 %v830
      %v1124 = vunpack.c.l.b16 %v831
      %v1125 = vunpack.c.l.b16 %v832
      %v1126 = vunpack.c.l.b16 %v833
      %v1127 = vunpack.c.l.b16 %v834
      %v1128 = vunpack.c.l.b16 %v835
      %v1129 = vunpack.c.l.b16 %v836
      %v1130 = vunpack.c.l.b16 %v837
      %v1131 = vunpack.c.l.b16 %v838
      %v1132 = vunpack.c.l.b16 %v839
      %v1133 = vunpack.c.l.b16 %v840
      %v1134 = vunpack.c.l.b16 %v841
      %v1135 = vunpack.c.l.b16 %v842
      %v1136 = vunpack.c.l.b16 %v843
      %v1137 = vunpack.c.l.b16 %v844
      %v1138 = vunpack.c.l.b16 %v845
      %v1139 = vunpack.c.l.b16 %v846
      %v1140 = vunpack.c.l.b16 %v847
      %v1141 = vunpack.c.l.b16 %v848
      %v1142 = vunpack.c.l.b16 %v849
      %v1143 = vunpack.c.l.b16 %v850
      %v1144 = vunpack.c.l.b16 %v851
      %v1145 = vunpack.c.l.b16 %v852
      %v1146 = vunpack.c.l.b16 %v853
      %v1147 = vunpack.c.l.b16 %v854
      %v1148 = vunpack.c.l.b16 %v855
      %v1149 = vunpack.c.l.b16 %v856
      %v1150 = vunpack.c.l.b16 %v857
      %v1151 = vunpack.c.l.b16 %v858
      %v1152 = vunpack.c.l.b16 %v859
      %v1153 = vunpack.c.l.b16 %v860
      %v1154 = vunpack.c.l.b16 %v861
      %v1155 = vunpack.c.l.b16 %v862
      %v1156 = vunpack.c.l.b16 %v863
      %v1157 = vunpack.c.l.b16 %v864
      %v1158 = vunpack.c.l.b16 %v865
      %v1159 = vunpack.c.l.b16 %v866
      %v1160 = vunpack.c.l.b16 %v867
      %v1161 = vunpack.c.l.b16 %v868
      %v1162 = vunpack.c.l.b16 %v869
      %v1163 = vunpack.c.l.b16 %v870
      %v1164 = vunpack.c.l.b16 %v871
      %v1165 = vunpack.c.l.b16 %v872
      %v1166 = vunpack.c.l.b16 %v873
      %v1167 = vunpack.c.l.b16 %v874
      %v1168 = vunpack.c.l.b16 %v875
      %v1169 = vunpack.c.l.b16 %v876
      %v1170 = vunpack.c.l.b16 %v877
      %v1171 = vunpack.c.l.b16 %v878
      %v1172 = vunpack.c.l.b16 %v879
      %v1173 = vunpack.c.l.b16 %v880
      %v1174 = vunpack.c.l.b16 %v881
      %v1175 = vunpack.c.l.b16 %v882
      %v1176 = vunpack.c.l.b16 %v883
      %v1177 = vunpack.c.l.b16 %v884
      %v1178 = vunpack.c.l.b16 %v885
      %v1179 = vunpack.c.l.b16 %v886
      %v1180 = vunpack.c.l.b16 %v887
      %v1181 = vunpack.c.l.b16 %v888
      %v1182 = vunpack.c.l.b16 %v889
      %v1183 = vunpack.c.l.b16 %v890
      %v1184 = vunpack.c.l.b16 %v891
      %v1185 = vunpack.c.l.b16 %v892
      %v1186 = vunpack.c.l.b16 %v893
      %v1187 = vunpack.c.l.b16 %v894
      %v1188 = vunpack.c.l.b16 %v895
      %v1189 = vunpack.c.l.b16 %v896
      %v1190 = vunpack.c.l.b16 %v897
      %v1191 = vunpack.c.l.b16 %v898
      %v1192 = vunpack.c.l.b16 %v899
      %v1193 = vunpack.c.l.b16 %v900
      %v1194 = vunpack.c.l.b16 %v901
      %v1195 = vunpack.c.l.b16 %v902
      %v1196 = vunpack.c.l.b16 %v903
      %v1197 = vunpack.c.l.b16 %v904
      %v1198 = vunpack.c.l.b16 %v905
      %v1199 = vunpack.c.l.b16 %v906
      %v1200 = vunpack.c.l.b16 %v907
      %v1201 = vunpack.c.l.b16 %v908
      %v1202 = vunpack.c.l.b16 %v909
      %v1203 = vunpack.c.l.b16 %v910
      %v1204 = vunpack.c.l.b16 %v911
      %v1205 = vunpack.c.l.b16 %v912
      %v1206 = vunpack.c.l.b16 %v913
      %v1207 = vunpack.c.l.b16 %v914
      %v1208 = vunpack.c.l.b16 %v915
      %v1209 = vunpack.c.l.b16 %v916
      %v1210 = vunpack.c.l.b16 %v917
      %v1211 = vunpack.c.l.b16 %v918
      %v1212 = vunpack.c.l.b16 %v919
      %v1213 = vunpack.c.l.b16 %v920
      %v1214 = vunpack.c.l.b16 %v921
      %v1215 = vunpack.c.l.b16 %v922
      %v1216 = vunpack.c.l.b16 %v923
      %v1217 = vunpack.c.l.b16 %v924
      %v1218 = vunpack.c.l.b16 %v925
      %v1219 = vpack.c.b16 %v1076, %v1075
      %v1220 = vpack.c.b16 %v1078, %v1077
      %v1221 = vpack.c.b16 %v1080, %v1079
      %v1222 = vpack.c.b16 %v1082, %v1081
      %v1223 = vpack.c.b16 %v1084, %v1083
      %v1224 = vpack.c.b16 %v1086, %v1085
      %v1225 = vpack.c.b16 %v1088, %v1087
      %v1226 = vpack.c.b16 %v1090, %v1089
      %v1227 = vpack.c.b16 %v1092, %v1091
      %v1228 = vpack.c.b16 %v1094, %v1093
      %v1229 = vpack.c.b16 %v1096, %v1095
      %v1230 = vpack.c.b16 %v1098, %v1097
      %v1231 = vpack.c.b16 %v1100, %v1099
      %v1232 = vpack.c.b16 %v1102, %v1101
      %v1233 = vpack.c.b16 %v1104, %v1103
      %v1234 = vpack.c.b16 %v1106, %v1105
      %v1235 = vpack.c.b16 %v1108, %v1107
      %v1236 = vpack.c.b16 %v1110, %v1109
      %v1237 = vpack.c.b16 %v1112, %v1111
      %v1238 = vpack.c.b16 %v1114, %v1113
      %v1239 = vpack.c.b16 %v1116, %v1115
      %v1240 = vpack.c.b16 %v1118, %v1117
      %v1241 = vpack.c.b16 %v1120, %v1119
      %v1242 = vpack.c.b16 %v1122, %v1121
      %v1243 = vpack.c.b16 %v1124, %v1123
      %v1244 = vpack.c.b16 %v1126, %v1125
      %v1245 = vpack.c.b16 %v1128, %v1127
      %v1246 = vpack.c.b16 %v1130, %v1129
      %v1247 = vpack.c.b16 %v1132, %v1131
      %v1248 = vpack.c.b16 %v1134, %v1133
      %v1249 = vpack.c.b16 %v1136, %v1135
      %v1250 = vpack.c.b16 %v1138, %v1137
      %v1251 = vpack.c.b16 %v1140, %v1139
      %v1252 = vpack.c.b16 %v1142, %v1141
      %v1253 = vpack.c.b16 %v1144, %v1143
      %v1254 = vpack.c.b16 %v1146, %v1145
      %v1255 = vpack.c.b16 %v1148, %v1147
      %v1256 = vpack.c.b16 %v1150, %v1149
      %v1257 = vpack.c.b16 %v1152, %v1151
      %v1258 = vpack.c.b16 %v1154, %v1153
      %v1259 = vpack.c.b16 %v1156, %v1155
      %v1260 = vpack.c.b16 %v1158, %v1157
      %v1261 = vpack.c.b16 %v1160, %v1159
      %v1262 = vpack.c.b16 %v1162, %v1161
      %v1263 = vpack.c.b16 %v1164, %v1163
      %v1264 = vpack.c.b16 %v1166, %v1165
      %v1265 = vpack.c.b16 %v1168, %v1167
      %v1266 = vpack.c.b16 %v1170, %v1169
      %v1267 = vpack.c.b16 %v1172, %v1171
      %v1268 = vpack.c.b16 %v1174, %v1173
      %v1269 = vpack.c.b16 %v1176, %v1175
      %v1270 = vpack.c.b16 %v1178, %v1177
      %v1271 = vpack.c.b16 %v1180, %v1179
      %v1272 = vpack.c.b16 %v1182, %v1181
      %v1273 = vpack.c.b16 %v1184, %v1183
      %v1274 = vpack.c.b16 %v1186, %v1185
      %v1275 = vpack.c.b16 %v1188, %v1187
      %v1276 = vpack.c.b16 %v1190, %v1189
      %v1277 = vpack.c.b16 %v1192, %v1191
      %v1278 = vpack.c.b16 %v1194, %v1193
      %v1279 = vpack.c.b16 %v1196, %v1195
      %v1280 = vpack.c.b16 %v1198, %v1197
      %v1281 = vpack.c.b16 %v1200, %v1199
      %v1282 = vpack.c.b16 %v1202, %v1201
      %v1283 = vpack.c.b16 %v1204, %v1203
      %v1284 = vpack.c.b16 %v1206, %v1205
      %v1285 = vpack.c.b16 %v1208, %v1207
      %v1286 = vpack.c.b16 %v1210, %v1209
      %v1287 = vpack.c.b16 %v1212, %v1211
      %v1288 = vpack.c.b16 %v1214, %v1213
      %v1289 = vpack.c.b16 %v1216, %v1215
      %v1290 = vpack.c.b16 %v1218, %v1217
      %1363 = vmatprep.subr.bf16.mxu0 0
      %1364 = vmatpush1.bf16.msra.mxu0 %v1219
      %1365 = vmatprep.subr.bf16.mxu0 0
      %1366 = vmatpush1.bf16.msra.mxu0 %v1220
      %1367 = vmatprep.subr.bf16.mxu0 0
      %1368 = vmatpush1.bf16.msra.mxu0 %v1221
      %1369 = vmatprep.subr.bf16.mxu0 0
      %1370 = vmatpush1.bf16.msra.mxu0 %v1222
      %1371 = vmatprep.subr.bf16.mxu0 0
      %1372 = vmatpush1.bf16.msra.mxu0 %v1223
      %1373 = vmatprep.subr.bf16.mxu0 0
      %1374 = vmatpush1.bf16.msra.mxu0 %v1224
      %1375 = vmatprep.subr.bf16.mxu0 0
      %1376 = vmatpush1.bf16.msra.mxu0 %v1225
      %1377 = vmatprep.subr.bf16.mxu0 0
      %1378 = vmatpush1.bf16.msra.mxu0 %v1226
      %1379 = vmatprep.subr.bf16.mxu0 0
      %1380 = vmatpush1.bf16.msra.mxu0 %v1227
      %1381 = vmatprep.subr.bf16.mxu0 0
      %1382 = vmatpush1.bf16.msra.mxu0 %v1228
      %1383 = vmatprep.subr.bf16.mxu0 0
      %1384 = vmatpush1.bf16.msra.mxu0 %v1229
      %1385 = vmatprep.subr.bf16.mxu0 0
      %1386 = vmatpush1.bf16.msra.mxu0 %v1230
      %1387 = vmatprep.subr.bf16.mxu0 0
      %1388 = vmatpush1.bf16.msra.mxu0 %v1231
      %1389 = vmatprep.subr.bf16.mxu0 0
      %1390 = vmatpush1.bf16.msra.mxu0 %v1232
      %1391 = vmatprep.subr.bf16.mxu0 0
      %1392 = vmatpush1.bf16.msra.mxu0 %v1233
      %1393 = vmatprep.subr.bf16.mxu0 0
      %1394 = vmatpush1.bf16.msra.mxu0 %v1234
      %1395 = vmatprep.mubr.bf16.mxu0 %v627
      %1396 = vmatmul.mubr.bf16.gmra.mrb[0].mxu0 %v476
      %v1397 = vpop.f32.mrb[0].mxu0
      %v1398 = vadd.f32 %v930, %v1397
      %v1399 = vpop.f32.mrb[0].mxu0
      %v1400 = vpop.f32.mrb[0].mxu0
      %v1401 = vadd.f32 %v930, %v1400
      %v1402 = vpop.f32.mrb[0].mxu0
      %1403 = vmatprep.mubr.bf16.mxu0 %v628
      %1404 = vmatmul.mubr.bf16.gmra.mrb[0].mxu0 %v477
      %v1405 = vpop.f32.mrb[0].mxu0
      %v1406 = vadd.f32 %v930, %v1405
      %v1407 = vpop.f32.mrb[0].mxu0
      %v1408 = vpop.f32.mrb[0].mxu0
      %v1409 = vadd.f32 %v930, %v1408
      %v1410 = vpop.f32.mrb[0].mxu0
      %1411 = vmatprep.mubr.bf16.mxu0 %v627
      %1412 = vmatmul.mubr.bf16.gmra.mrb[0].mxu0 %v476
      %v1413 = vpop.f32.mrb[0].mxu0
      %v1414 = vadd.f32 %v930, %v1413
      %v1415 = vpop.f32.mrb[0].mxu0
      %v1416 = vpop.f32.mrb[0].mxu0
      %v1417 = vadd.f32 %v930, %v1416
      %v1418 = vpop.f32.mrb[0].mxu0
      %1419 = vmatprep.mubr.bf16.mxu0 %v629
      %1420 = vmatmul.mubr.bf16.gmra.mrb[0].mxu0 %v478
      %v1421 = vpop.f32.mrb[0].mxu0
      %v1422 = vadd.f32 %v930, %v1421
      %v1423 = vpop.f32.mrb[0].mxu0
      %v1424 = vpop.f32.mrb[0].mxu0
      %v1425 = vadd.f32 %v930, %v1424
      %v1426 = vpop.f32.mrb[0].mxu0
      %1427 = vmatprep.mubr.bf16.mxu0 %v630
      %1428 = vmatmul.mubr.bf16.gmra.mrb[0].mxu0 %v479
      %v1429 = vpop.f32.mrb[0].mxu0
      %v1430 = vadd.f32 %v930, %v1429
      %v1431 = vpop.f32.mrb[0].mxu0
      %v1432 = vpop.f32.mrb[0].mxu0
      %v1433 = vadd.f32 %v930, %v1432
      %v1434 = vpop.f32.mrb[0].mxu0
      %1435 = vmatprep.mubr.bf16.mxu0 %v631
      %1436 = vmatmul.mubr.bf16.gmra.mrb[0].mxu0 %v480
      %v1437 = vpop.f32.mrb[0].mxu0
      %v1438 = vadd.f32 %v930, %v1437
      %v1439 = vpop.f32.mrb[0].mxu0
      %v1440 = vpop.f32.mrb[0].mxu0
      %v1441 = vadd.f32 %v930, %v1440
      %v1442 = vpop.f32.mrb[0].mxu0
      %1443 = vmatprep.mubr.bf16.mxu0 %v632
      %1444 = vmatmul.mubr.bf16.gmra.mrb[0].mxu0 %v481
      %v1445 = vpop.f32.mrb[0].mxu0
      %v1446 = vadd.f32 %v930, %v1445
      %v1447 = vpop.f32.mrb[0].mxu0
      %v1448 = vpop.f32.mrb[0].mxu0
      %v1449 = vadd.f32 %v930, %v1448
      %v1450 = vpop.f32.mrb[0].mxu0
      %1451 = vmatprep.mubr.bf16.mxu0 %v633
      %1452 = vmatmul.mubr.bf16.gmra.mrb[0].mxu0 %v482
      %v1453 = vpop.f32.mrb[0].mxu0
      %v1454 = vadd.f32 %v930, %v1453
      %v1455 = vpop.f32.mrb[0].mxu0
      %v1456 = vpop.f32.mrb[0].mxu0
      %v1457 = vadd.f32 %v930, %v1456
      %v1458 = vpop.f32.mrb[0].mxu0
      %1459 = vmatprep.mubr.bf16.mxu0 %v634
      %1460 = vmatmul.mubr.bf16.gmra.mrb[0].mxu0 %v483
      %v1461 = vpop.f32.mrb[0].mxu0
      %v1462 = vadd.f32 %v930, %v1461
      %v1463 = vpop.f32.mrb[0].mxu0
      %v1464 = vpop.f32.mrb[0].mxu0
      %v1465 = vadd.f32 %v930, %v1464
      %v1466 = vpop.f32.mrb[0].mxu0
      %1467 = vmatprep.mubr.bf16.mxu0 %v635
      %1468 = vmatmul.mubr.bf16.gmra.mrb[0].mxu0 %v484
      %v1469 = vpop.f32.mrb[0].mxu0
      %v1470 = vadd.f32 %v930, %v1469
      %v1471 = vpop.f32.mrb[0].mxu0
      %v1472 = vpop.f32.mrb[0].mxu0
      %v1473 = vadd.f32 %v930, %v1472
      %v1474 = vpop.f32.mrb[0].mxu0
      %1475 = vmatprep.mubr.bf16.mxu0 %v636
      %1476 = vmatmul.mubr.bf16.gmra.mrb[0].mxu0 %v485
      %v1477 = vpop.f32.mrb[0].mxu0
      %v1478 = vadd.f32 %v930, %v1477
      %v1479 = vpop.f32.mrb[0].mxu0
      %v1480 = vpop.f32.mrb[0].mxu0
      %v1481 = vadd.f32 %v930, %v1480
      %v1482 = vpop.f32.mrb[0].mxu0
      %1483 = vmatprep.mubr.bf16.mxu0 %v637
      %1484 = vmatmul.mubr.bf16.gmra.mrb[0].mxu0 %v486
      %v1485 = vpop.f32.mrb[0].mxu0
      %v1486 = vadd.f32 %v930, %v1485
      %v1487 = vpop.f32.mrb[0].mxu0
      %v1488 = vpop.f32.mrb[0].mxu0
      %v1489 = vadd.f32 %v930, %v1488
      %v1490 = vpop.f32.mrb[0].mxu0
      %1491 = vmatprep.mubr.bf16.mxu0 %v638
      %1492 = vmatmul.mubr.bf16.gmra.mrb[0].mxu0 %v487
      %v1493 = vpop.f32.mrb[0].mxu0
      %v1494 = vadd.f32 %v930, %v1493
      %v1495 = vpop.f32.mrb[0].mxu0
      %v1496 = vpop.f32.mrb[0].mxu0
      %v1497 = vadd.f32 %v930, %v1496
      %v1498 = vpop.f32.mrb[0].mxu0
      %1499 = vmatprep.mubr.bf16.mxu0 %v639
      %1500 = vmatmul.mubr.bf16.gmra.mrb[0].mxu0 %v488
      %v1501 = vpop.f32.mrb[0].mxu0
      %v1502 = vadd.f32 %v930, %v1501
      %v1503 = vpop.f32.mrb[0].mxu0
      %v1504 = vpop.f32.mrb[0].mxu0
      %v1505 = vadd.f32 %v930, %v1504
      %v1506 = vpop.f32.mrb[0].mxu0
      %1507 = vmatprep.mubr.bf16.mxu0 %v640
      %1508 = vmatmul.mubr.bf16.gmra.mrb[0].mxu0 %v489
      %v1509 = vpop.f32.mrb[0].mxu0
      %v1510 = vadd.f32 %v930, %v1509
      %v1511 = vpop.f32.mrb[0].mxu0
      %v1512 = vpop.f32.mrb[0].mxu0
      %v1513 = vadd.f32 %v930, %v1512
      %v1514 = vpop.f32.mrb[0].mxu0
      %1515 = vmatprep.mubr.bf16.mxu0 %v641
      %1516 = vmatmul.mubr.bf16.gmra.mrb[0].mxu0 %v490
      %v1517 = vpop.f32.mrb[0].mxu0
      %v1518 = vadd.f32 %v930, %v1517
      %v1519 = vpop.f32.mrb[0].mxu0
      %v1520 = vpop.f32.mrb[0].mxu0
      %v1521 = vadd.f32 %v930, %v1520
      %v1522 = vpop.f32.mrb[0].mxu0
      %1523 = vdwg.mxu0
      %1524 = vmatprep.subr.bf16.mxu0 0
      %1525 = vmatpush1.bf16.msra.mxu0 %v1235
      %1526 = vmatprep.subr.bf16.mxu0 0
      %1527 = vmatpush1.bf16.msra.mxu0 %v1236
      %1528 = vmatprep.subr.bf16.mxu0 0
      %1529 = vmatpush1.bf16.msra.mxu0 %v1237
      %1530 = vmatprep.subr.bf16.mxu0 0
      %1531 = vmatpush1.bf16.msra.mxu0 %v1238
      %1532 = vmatprep.subr.bf16.mxu0 0
      %1533 = vmatpush1.bf16.msra.mxu0 %v1239
      %1534 = vmatprep.subr.bf16.mxu0 0
      %1535 = vmatpush1.bf16.msra.mxu0 %v1240
      %1536 = vmatprep.subr.bf16.mxu0 0
      %1537 = vmatpush1.bf16.msra.mxu0 %v1241
      %1538 = vmatprep.subr.bf16.mxu0 0
      %1539 = vmatpush1.bf16.msra.mxu0 %v1242
      %1540 = vmatprep.subr.bf16.mxu0 0
      %1541 = vmatpush1.bf16.msra.mxu0 %v1243
      %1542 = vmatprep.subr.bf16.mxu0 0
      %1543 = vmatpush1.bf16.msra.mxu0 %v1244
      %1544 = vmatprep.subr.bf16.mxu0 0
      %1545 = vmatpush1.bf16.msra.mxu0 %v1245
      %1546 = vmatprep.subr.bf16.mxu0 0
      %1547 = vmatpush1.bf16.msra.mxu0 %v1246
      %1548 = vmatprep.subr.bf16.mxu0 0
      %1549 = vmatpush1.bf16.msra.mxu0 %v1247
      %1550 = vmatprep.subr.bf16.mxu0 0
      %1551 = vmatpush1.bf16.msra.mxu0 %v1248
      %1552 = vmatprep.subr.bf16.mxu0 0
      %1553 = vmatpush1.bf16.msra.mxu0 %v1249
      %1554 = vmatprep.subr.bf16.mxu0 0
      %1555 = vmatpush1.bf16.msra.mxu0 %v1250
      %1556 = vmatprep.mubr.bf16.mxu0 %v477
      %1557 = vmatmul.mubr.bf16.gmra.mrb[0].mxu0 %v748
      %v1558 = vpop.f32.mrb[0].mxu0
      %v1559 = vadd.f32 %v1398, %v1558
      %v1560 = vpop.f32.mrb[0].mxu0
      %v1561 = vpop.f32.mrb[0].mxu0
      %v1562 = vadd.f32 %v1401, %v1561
      %v1563 = vpop.f32.mrb[0].mxu0
      %1564 = vmatprep.mubr.bf16.mxu0 %v476
      %1565 = vmatmul.mubr.bf16.gmra.mrb[0].mxu0 %v749
      %v1566 = vpop.f32.mrb[0].mxu0
      %v1567 = vadd.f32 %v1406, %v1566
      %v1568 = vpop.f32.mrb[0].mxu0
      %v1569 = vpop.f32.mrb[0].mxu0
      %v1570 = vadd.f32 %v1409, %v1569
      %v1571 = vpop.f32.mrb[0].mxu0
      %1572 = vmatprep.mubr.bf16.mxu0 %v478
      %1573 = vmatmul.mubr.bf16.gmra.mrb[0].mxu0 %v748
      %v1574 = vpop.f32.mrb[0].mxu0
      %v1575 = vadd.f32 %v1414, %v1574
      %v1576 = vpop.f32.mrb[0].mxu0
      %v1577 = vpop.f32.mrb[0].mxu0
      %v1578 = vadd.f32 %v1417, %v1577
      %v1579 = vpop.f32.mrb[0].mxu0
      %1580 = vmatprep.mubr.bf16.mxu0 %v479
      %1581 = vmatmul.mubr.bf16.gmra.mrb[0].mxu0 %v750
      %v1582 = vpop.f32.mrb[0].mxu0
      %v1583 = vadd.f32 %v1422, %v1582
      %v1584 = vpop.f32.mrb[0].mxu0
      %v1585 = vpop.f32.mrb[0].mxu0
      %v1586 = vadd.f32 %v1425, %v1585
      %v1587 = vpop.f32.mrb[0].mxu0
      %1588 = vmatprep.mubr.bf16.mxu0 %v480
      %1589 = vmatmul.mubr.bf16.gmra.mrb[0].mxu0 %v751
      %v1590 = vpop.f32.mrb[0].mxu0
      %v1591 = vadd.f32 %v1430, %v1590
      %v1592 = vpop.f32.mrb[0].mxu0
      %v1593 = vpop.f32.mrb[0].mxu0
      %v1594 = vadd.f32 %v1433, %v1593
      %v1595 = vpop.f32.mrb[0].mxu0
      %1596 = vmatprep.mubr.bf16.mxu0 %v481
      %1597 = vmatmul.mubr.bf16.gmra.mrb[0].mxu0 %v752
      %v1598 = vpop.f32.mrb[0].mxu0
      %v1599 = vadd.f32 %v1438, %v1598
      %v1600 = vpop.f32.mrb[0].mxu0
      %v1601 = vpop.f32.mrb[0].mxu0
      %v1602 = vadd.f32 %v1441, %v1601
      %v1603 = vpop.f32.mrb[0].mxu0
      %1604 = vmatprep.mubr.bf16.mxu0 %v482
      %1605 = vmatmul.mubr.bf16.gmra.mrb[0].mxu0 %v753
      %v1606 = vpop.f32.mrb[0].mxu0
      %v1607 = vadd.f32 %v1446, %v1606
      %v1608 = vpop.f32.mrb[0].mxu0
      %v1609 = vpop.f32.mrb[0].mxu0
      %v1610 = vadd.f32 %v1449, %v1609
      %v1611 = vpop.f32.mrb[0].mxu0
      %1612 = vmatprep.mubr.bf16.mxu0 %v483
      %1613 = vmatmul.mubr.bf16.gmra.mrb[0].mxu0 %v754
      %v1614 = vpop.f32.mrb[0].mxu0
      %v1615 = vadd.f32 %v1454, %v1614
      %v1616 = vpop.f32.mrb[0].mxu0
      %v1617 = vpop.f32.mrb[0].mxu0
      %v1618 = vadd.f32 %v1457, %v1617
      %v1619 = vpop.f32.mrb[0].mxu0
      %1620 = vmatprep.mubr.bf16.mxu0 %v484
      %1621 = vmatmul.mubr.bf16.gmra.mrb[0].mxu0 %v755
      %v1622 = vpop.f32.mrb[0].mxu0
      %v1623 = vadd.f32 %v1462, %v1622
      %v1624 = vpop.f32.mrb[0].mxu0
      %v1625 = vpop.f32.mrb[0].mxu0
      %v1626 = vadd.f32 %v1465, %v1625
      %v1627 = vpop.f32.mrb[0].mxu0
      %1628 = vmatprep.mubr.bf16.mxu0 %v485
      %1629 = vmatmul.mubr.bf16.gmra.mrb[0].mxu0 %v756
      %v1630 = vpop.f32.mrb[0].mxu0
      %v1631 = vadd.f32 %v1470, %v1630
      %v1632 = vpop.f32.mrb[0].mxu0
      %v1633 = vpop.f32.mrb[0].mxu0
      %v1634 = vadd.f32 %v1473, %v1633
      %v1635 = vpop.f32.mrb[0].mxu0
      %1636 = vmatprep.mubr.bf16.mxu0 %v486
      %1637 = vmatmul.mubr.bf16.gmra.mrb[0].mxu0 %v757
      %v1638 = vpop.f32.mrb[0].mxu0
      %v1639 = vadd.f32 %v1478, %v1638
      %v1640 = vpop.f32.mrb[0].mxu0
      %v1641 = vpop.f32.mrb[0].mxu0
      %v1642 = vadd.f32 %v1481, %v1641
      %v1643 = vpop.f32.mrb[0].mxu0
      %1644 = vmatprep.mubr.bf16.mxu0 %v487
      %1645 = vmatmul.mubr.bf16.gmra.mrb[0].mxu0 %v758
      %v1646 = vpop.f32.mrb[0].mxu0
      %v1647 = vadd.f32 %v1486, %v1646
      %v1648 = vpop.f32.mrb[0].mxu0
      %v1649 = vpop.f32.mrb[0].mxu0
      %v1650 = vadd.f32 %v1489, %v1649
      %v1651 = vpop.f32.mrb[0].mxu0
      %1652 = vmatprep.mubr.bf16.mxu0 %v488
      %1653 = vmatmul.mubr.bf16.gmra.mrb[0].mxu0 %v759
      %v1654 = vpop.f32.mrb[0].mxu0
      %v1655 = vadd.f32 %v1494, %v1654
      %v1656 = vpop.f32.mrb[0].mxu0
      %v1657 = vpop.f32.mrb[0].mxu0
      %v1658 = vadd.f32 %v1497, %v1657
      %v1659 = vpop.f32.mrb[0].mxu0
      %1660 = vmatprep.mubr.bf16.mxu0 %v489
      %1661 = vmatmul.mubr.bf16.gmra.mrb[0].mxu0 %v760
      %v1662 = vpop.f32.mrb[0].mxu0
      %v1663 = vadd.f32 %v1502, %v1662
      %v1664 = vpop.f32.mrb[0].mxu0
      %v1665 = vpop.f32.mrb[0].mxu0
      %v1666 = vadd.f32 %v1505, %v1665
      %v1667 = vpop.f32.mrb[0].mxu0
      %1668 = vmatprep.mubr.bf16.mxu0 %v490
      %1669 = vmatmul.mubr.bf16.gmra.mrb[0].mxu0 %v761
      %v1670 = vpop.f32.mrb[0].mxu0
      %v1671 = vadd.f32 %v1510, %v1670
      %v1672 = vpop.f32.mrb[0].mxu0
      %v1673 = vpop.f32.mrb[0].mxu0
      %v1674 = vadd.f32 %v1513, %v1673
      %v1675 = vpop.f32.mrb[0].mxu0
      %1676 = vmatprep.mubr.bf16.mxu0 %v763
      %1677 = vmatmul.mubr.bf16.gmra.mrb[0].mxu0 %v762
      %v1678 = vpop.f32.mrb[0].mxu0
      %v1679 = vadd.f32 %v1518, %v1678
      %v1680 = vpop.f32.mrb[0].mxu0
      %v1681 = vpop.f32.mrb[0].mxu0
      %v1682 = vadd.f32 %v1521, %v1681
      %v1683 = vpop.f32.mrb[0].mxu0
      %1684 = vdwg.mxu0
      %1685 = vmatprep.subr.bf16.mxu0 0
      %1686 = vmatpush1.bf16.msra.mxu0 %v1251
      %1687 = vmatprep.subr.bf16.mxu0 0
      %1688 = vmatpush1.bf16.msra.mxu0 %v1252
      %1689 = vmatprep.subr.bf16.mxu0 0
      %1690 = vmatpush1.bf16.msra.mxu0 %v1253
      %1691 = vmatprep.subr.bf16.mxu0 0
      %1692 = vmatpush1.bf16.msra.mxu0 %v1254
      %1693 = vmatprep.subr.bf16.mxu0 0
      %1694 = vmatpush1.bf16.msra.mxu0 %v1255
      %1695 = vmatprep.subr.bf16.mxu0 0
      %1696 = vmatpush1.bf16.msra.mxu0 %v1256
      %1697 = vmatprep.subr.bf16.mxu0 0
      %1698 = vmatpush1.bf16.msra.mxu0 %v1257
      %1699 = vmatprep.subr.bf16.mxu0 0
      %1700 = vmatpush1.bf16.msra.mxu0 %v1258
      %1701 = vmatprep.subr.bf16.mxu0 0
      %1702 = vmatpush1.bf16.msra.mxu0 %v1259
      %1703 = vmatprep.subr.bf16.mxu0 0
      %1704 = vmatpush1.bf16.msra.mxu0 %v1260
      %1705 = vmatprep.subr.bf16.mxu0 0
      %1706 = vmatpush1.bf16.msra.mxu0 %v1261
      %1707 = vmatprep.subr.bf16.mxu0 0
      %1708 = vmatpush1.bf16.msra.mxu0 %v1262
      %1709 = vmatprep.subr.bf16.mxu0 0
      %1710 = vmatpush1.bf16.msra.mxu0 %v1263
      %1711 = vmatprep.subr.bf16.mxu0 0
      %1712 = vmatpush1.bf16.msra.mxu0 %v1264
      %1713 = vmatprep.subr.bf16.mxu0 0
      %1714 = vmatpush1.bf16.msra.mxu0 %v1265
      %1715 = vmatprep.subr.bf16.mxu0 0
      %1716 = vmatpush1.bf16.msra.mxu0 %v1266
      %1717 = vmatprep.mubr.bf16.mxu0 %v749
      %1718 = vmatmul.mubr.bf16.gmra.mrb[0].mxu0 %v628
      %v1719 = vpop.f32.mrb[0].mxu0
      %v1720 = vadd.f32 %v1559, %v1719
      %v1721 = vpop.f32.mrb[0].mxu0
      %v1722 = vpop.f32.mrb[0].mxu0
      %v1723 = vadd.f32 %v1562, %v1722
      %v1724 = vpop.f32.mrb[0].mxu0
      %1725 = vmatprep.mubr.bf16.mxu0 %v748
      %1726 = vmatmul.mubr.bf16.gmra.mrb[0].mxu0 %v627
      %v1727 = vpop.f32.mrb[0].mxu0
      %v1728 = vadd.f32 %v1567, %v1727
      %v1729 = vpop.f32.mrb[0].mxu0
      %v1730 = vpop.f32.mrb[0].mxu0
      %v1731 = vadd.f32 %v1570, %v1730
      %v1732 = vpop.f32.mrb[0].mxu0
      %1733 = vmatprep.mubr.bf16.mxu0 %v750
      %1734 = vmatmul.mubr.bf16.gmra.mrb[0].mxu0 %v629
      %v1735 = vpop.f32.mrb[0].mxu0
      %v1736 = vadd.f32 %v1575, %v1735
      %v1737 = vpop.f32.mrb[0].mxu0
      %v1738 = vpop.f32.mrb[0].mxu0
      %v1739 = vadd.f32 %v1578, %v1738
      %v1740 = vpop.f32.mrb[0].mxu0
      %1741 = vmatprep.mubr.bf16.mxu0 %v751
      %1742 = vmatmul.mubr.bf16.gmra.mrb[0].mxu0 %v630
      %v1743 = vpop.f32.mrb[0].mxu0
      %v1744 = vadd.f32 %v1583, %v1743
      %v1745 = vpop.f32.mrb[0].mxu0
      %v1746 = vpop.f32.mrb[0].mxu0
      %v1747 = vadd.f32 %v1586, %v1746
      %v1748 = vpop.f32.mrb[0].mxu0
      %1749 = vmatprep.mubr.bf16.mxu0 %v752
      %1750 = vmatmul.mubr.bf16.gmra.mrb[0].mxu0 %v631
      %v1751 = vpop.f32.mrb[0].mxu0
      %v1752 = vadd.f32 %v1591, %v1751
      %v1753 = vpop.f32.mrb[0].mxu0
      %v1754 = vpop.f32.mrb[0].mxu0
      %v1755 = vadd.f32 %v1594, %v1754
      %v1756 = vpop.f32.mrb[0].mxu0
      %1757 = vmatprep.mubr.bf16.mxu0 %v753
      %1758 = vmatmul.mubr.bf16.gmra.mrb[0].mxu0 %v632
      %v1759 = vpop.f32.mrb[0].mxu0
      %v1760 = vadd.f32 %v1599, %v1759
      %v1761 = vpop.f32.mrb[0].mxu0
      %v1762 = vpop.f32.mrb[0].mxu0
      %v1763 = vadd.f32 %v1602, %v1762
      %v1764 = vpop.f32.mrb[0].mxu0
      %1765 = vmatprep.mubr.bf16.mxu0 %v754
      %1766 = vmatmul.mubr.bf16.gmra.mrb[0].mxu0 %v633
      %v1767 = vpop.f32.mrb[0].mxu0
      %v1768 = vadd.f32 %v1607, %v1767
      %v1769 = vpop.f32.mrb[0].mxu0
      %v1770 = vpop.f32.mrb[0].mxu0
      %v1771 = vadd.f32 %v1610, %v1770
      %v1772 = vpop.f32.mrb[0].mxu0
      %1773 = vmatprep.mubr.bf16.mxu0 %v755
      %1774 = vmatmul.mubr.bf16.gmra.mrb[0].mxu0 %v634
      %v1775 = vpop.f32.mrb[0].mxu0
      %v1776 = vadd.f32 %v1615, %v1775
      %v1777 = vpop.f32.mrb[0].mxu0
      %v1778 = vpop.f32.mrb[0].mxu0
      %v1779 = vadd.f32 %v1618, %v1778
      %v1780 = vpop.f32.mrb[0].mxu0
      %1781 = vmatprep.mubr.bf16.mxu0 %v756
      %1782 = vmatmul.mubr.bf16.gmra.mrb[0].mxu0 %v635
      %v1783 = vpop.f32.mrb[0].mxu0
      %v1784 = vadd.f32 %v1623, %v1783
      %v1785 = vpop.f32.mrb[0].mxu0
      %v1786 = vpop.f32.mrb[0].mxu0
      %v1787 = vadd.f32 %v1626, %v1786
      %v1788 = vpop.f32.mrb[0].mxu0
      %1789 = vmatprep.mubr.bf16.mxu0 %v757
      %1790 = vmatmul.mubr.bf16.gmra.mrb[0].mxu0 %v636
      %v1791 = vpop.f32.mrb[0].mxu0
      %v1792 = vadd.f32 %v1631, %v1791
      %v1793 = vpop.f32.mrb[0].mxu0
      %v1794 = vpop.f32.mrb[0].mxu0
      %v1795 = vadd.f32 %v1634, %v1794
      %v1796 = vpop.f32.mrb[0].mxu0
      %1797 = vmatprep.mubr.bf16.mxu0 %v758
      %1798 = vmatmul.mubr.bf16.gmra.mrb[0].mxu0 %v637
      %v1799 = vpop.f32.mrb[0].mxu0
      %v1800 = vadd.f32 %v1639, %v1799
      %v1801 = vpop.f32.mrb[0].mxu0
      %v1802 = vpop.f32.mrb[0].mxu0
      %v1803 = vadd.f32 %v1642, %v1802
      %v1804 = vpop.f32.mrb[0].mxu0
      %1805 = vmatprep.mubr.bf16.mxu0 %v759
      %1806 = vmatmul.mubr.bf16.gmra.mrb[0].mxu0 %v638
      %v1807 = vpop.f32.mrb[0].mxu0
      %v1808 = vadd.f32 %v1647, %v1807
      %v1809 = vpop.f32.mrb[0].mxu0
      %v1810 = vpop.f32.mrb[0].mxu0
      %v1811 = vadd.f32 %v1650, %v1810
      %v1812 = vpop.f32.mrb[0].mxu0
      %1813 = vmatprep.mubr.bf16.mxu0 %v760
      %1814 = vmatmul.mubr.bf16.gmra.mrb[0].mxu0 %v639
      %v1815 = vpop.f32.mrb[0].mxu0
      %v1816 = vadd.f32 %v1655, %v1815
      %v1817 = vpop.f32.mrb[0].mxu0
      %v1818 = vpop.f32.mrb[0].mxu0
      %v1819 = vadd.f32 %v1658, %v1818
      %v1820 = vpop.f32.mrb[0].mxu0
      %1821 = vmatprep.mubr.bf16.mxu0 %v761
      %1822 = vmatmul.mubr.bf16.gmra.mrb[0].mxu0 %v640
      %v1823 = vpop.f32.mrb[0].mxu0
      %v1824 = vadd.f32 %v1663, %v1823
      %v1825 = vpop.f32.mrb[0].mxu0
      %v1826 = vpop.f32.mrb[0].mxu0
      %v1827 = vadd.f32 %v1666, %v1826
      %v1828 = vpop.f32.mrb[0].mxu0
      %1829 = vmatprep.mubr.bf16.mxu0 %v762
      %1830 = vmatmul.mubr.bf16.gmra.mrb[0].mxu0 %v641
      %v1831 = vpop.f32.mrb[0].mxu0
      %v1832 = vadd.f32 %v1671, %v1831
      %v1833 = vpop.f32.mrb[0].mxu0
      %v1834 = vpop.f32.mrb[0].mxu0
      %v1835 = vadd.f32 %v1674, %v1834
      %v1836 = vpop.f32.mrb[0].mxu0
      %1837 = vmatprep.mubr.bf16.mxu0 %v781
      %1838 = vmatmul.mubr.bf16.gmra.mrb[0].mxu0 %v773
      %v1839 = vpop.f32.mrb[0].mxu0
      %v1840 = vadd.f32 %v1679, %v1839
      %v1841 = vpop.f32.mrb[0].mxu0
      %v1842 = vpop.f32.mrb[0].mxu0
      %v1843 = vadd.f32 %v1682, %v1842
      %v1844 = vpop.f32.mrb[0].mxu0
      %1845 = vdwg.mxu0
      %1846 = vmatprep.subr.bf16.mxu0 0
      %1847 = vmatpush1.bf16.msra.mxu0 %v1267
      %1848 = vmatprep.subr.bf16.mxu0 0
      %1849 = vmatpush1.bf16.msra.mxu0 %v1268
      %1850 = vmatprep.subr.bf16.mxu0 0
      %1851 = vmatpush1.bf16.msra.mxu0 %v1269
      %1852 = vmatprep.subr.bf16.mxu0 0
      %1853 = vmatpush1.bf16.msra.mxu0 %v1270
      %1854 = vmatprep.subr.bf16.mxu0 0
      %1855 = vmatpush1.bf16.msra.mxu0 %v1271
      %1856 = vmatprep.subr.bf16.mxu0 0
      %1857 = vmatpush1.bf16.msra.mxu0 %v1272
      %1858 = vmatprep.subr.bf16.mxu0 0
      %1859 = vmatpush1.bf16.msra.mxu0 %v1273
      %1860 = vmatprep.subr.bf16.mxu0 0
      %1861 = vmatpush1.bf16.msra.mxu0 %v1274
      %1862 = vmatprep.subr.bf16.mxu0 0
      %1863 = vmatpush1.bf16.msra.mxu0 %v1275
      %1864 = vmatprep.subr.bf16.mxu0 0
      %1865 = vmatpush1.bf16.msra.mxu0 %v1276
      %1866 = vmatprep.subr.bf16.mxu0 0
      %1867 = vmatpush1.bf16.msra.mxu0 %v1277
      %1868 = vmatprep.subr.bf16.mxu0 0
      %1869 = vmatpush1.bf16.msra.mxu0 %v1278
      %1870 = vmatprep.subr.bf16.mxu0 0
      %1871 = vmatpush1.bf16.msra.mxu0 %v1279
      %1872 = vmatprep.subr.bf16.mxu0 0
      %1873 = vmatpush1.bf16.msra.mxu0 %v1280
      %1874 = vmatprep.subr.bf16.mxu0 0
      %1875 = vmatpush1.bf16.msra.mxu0 %v1281
      %1876 = vmatprep.subr.bf16.mxu0 0
      %1877 = vmatpush1.bf16.msra.mxu0 %v1282
      %1878 = vmatprep.mubr.bf16.mxu0 %v627
      %1879 = vmatmul.mubr.bf16.gmra.mrb[0].mxu0 %v476
      %v1880 = vpop.f32.mrb[0].mxu0
      %v1881 = vadd.f32 %v1720, %v1880
      %v1882 = vpop.f32.mrb[0].mxu0
      %v1883 = vpop.f32.mrb[0].mxu0
      %v1884 = vadd.f32 %v1723, %v1883
      %v1885 = vpop.f32.mrb[0].mxu0
      %1886 = vmatprep.mubr.bf16.mxu0 %v629
      %1887 = vmatmul.mubr.bf16.gmra.mrb[0].mxu0 %v478
      %v1888 = vpop.f32.mrb[0].mxu0
      %v1889 = vadd.f32 %v1728, %v1888
      %v1890 = vpop.f32.mrb[0].mxu0
      %v1891 = vpop.f32.mrb[0].mxu0
      %v1892 = vadd.f32 %v1731, %v1891
      %v1893 = vpop.f32.mrb[0].mxu0
      %1894 = vmatprep.mubr.bf16.mxu0 %v630
      %1895 = vmatmul.mubr.bf16.gmra.mrb[0].mxu0 %v479
      %v1896 = vpop.f32.mrb[0].mxu0
      %v1897 = vadd.f32 %v1736, %v1896
      %v1898 = vpop.f32.mrb[0].mxu0
      %v1899 = vpop.f32.mrb[0].mxu0
      %v1900 = vadd.f32 %v1739, %v1899
      %v1901 = vpop.f32.mrb[0].mxu0
      %1902 = vmatprep.mubr.bf16.mxu0 %v631
      %1903 = vmatmul.mubr.bf16.gmra.mrb[0].mxu0 %v480
      %v1904 = vpop.f32.mrb[0].mxu0
      %v1905 = vadd.f32 %v1744, %v1904
      %v1906 = vpop.f32.mrb[0].mxu0
      %v1907 = vpop.f32.mrb[0].mxu0
      %v1908 = vadd.f32 %v1747, %v1907
      %v1909 = vpop.f32.mrb[0].mxu0
      %1910 = vmatprep.mubr.bf16.mxu0 %v632
      %1911 = vmatmul.mubr.bf16.gmra.mrb[0].mxu0 %v481
      %v1912 = vpop.f32.mrb[0].mxu0
      %v1913 = vadd.f32 %v1752, %v1912
      %v1914 = vpop.f32.mrb[0].mxu0
      %v1915 = vpop.f32.mrb[0].mxu0
      %v1916 = vadd.f32 %v1755, %v1915
      %v1917 = vpop.f32.mrb[0].mxu0
      %1918 = vmatprep.mubr.bf16.mxu0 %v633
      %1919 = vmatmul.mubr.bf16.gmra.mrb[0].mxu0 %v482
      %v1920 = vpop.f32.mrb[0].mxu0
      %v1921 = vadd.f32 %v1760, %v1920
      %v1922 = vpop.f32.mrb[0].mxu0
      %v1923 = vpop.f32.mrb[0].mxu0
      %v1924 = vadd.f32 %v1763, %v1923
      %v1925 = vpop.f32.mrb[0].mxu0
      %1926 = vmatprep.mubr.bf16.mxu0 %v634
      %1927 = vmatmul.mubr.bf16.gmra.mrb[0].mxu0 %v483
      %v1928 = vpop.f32.mrb[0].mxu0
      %v1929 = vadd.f32 %v1768, %v1928
      %v1930 = vpop.f32.mrb[0].mxu0
      %v1931 = vpop.f32.mrb[0].mxu0
      %v1932 = vadd.f32 %v1771, %v1931
      %v1933 = vpop.f32.mrb[0].mxu0
      %1934 = vmatprep.mubr.bf16.mxu0 %v635
      %1935 = vmatmul.mubr.bf16.gmra.mrb[0].mxu0 %v484
      %v1936 = vpop.f32.mrb[0].mxu0
      %v1937 = vadd.f32 %v1776, %v1936
      %v1938 = vpop.f32.mrb[0].mxu0
      %v1939 = vpop.f32.mrb[0].mxu0
      %v1940 = vadd.f32 %v1779, %v1939
      %v1941 = vpop.f32.mrb[0].mxu0
      %1942 = vmatprep.mubr.bf16.mxu0 %v636
      %1943 = vmatmul.mubr.bf16.gmra.mrb[0].mxu0 %v485
      %v1944 = vpop.f32.mrb[0].mxu0
      %v1945 = vadd.f32 %v1784, %v1944
      %v1946 = vpop.f32.mrb[0].mxu0
      %v1947 = vpop.f32.mrb[0].mxu0
      %v1948 = vadd.f32 %v1787, %v1947
      %v1949 = vpop.f32.mrb[0].mxu0
      %1950 = vmatprep.mubr.bf16.mxu0 %v637
      %1951 = vmatmul.mubr.bf16.gmra.mrb[0].mxu0 %v486
      %v1952 = vpop.f32.mrb[0].mxu0
      %v1953 = vadd.f32 %v1792, %v1952
      %v1954 = vpop.f32.mrb[0].mxu0
      %v1955 = vpop.f32.mrb[0].mxu0
      %v1956 = vadd.f32 %v1795, %v1955
      %v1957 = vpop.f32.mrb[0].mxu0
      %1958 = vmatprep.mubr.bf16.mxu0 %v638
      %1959 = vmatmul.mubr.bf16.gmra.mrb[0].mxu0 %v487
      %v1960 = vpop.f32.mrb[0].mxu0
      %v1961 = vadd.f32 %v1800, %v1960
      %v1962 = vpop.f32.mrb[0].mxu0
      %v1963 = vpop.f32.mrb[0].mxu0
      %v1964 = vadd.f32 %v1803, %v1963
      %v1965 = vpop.f32.mrb[0].mxu0
      %1966 = vmatprep.mubr.bf16.mxu0 %v639
      %1967 = vmatmul.mubr.bf16.gmra.mrb[0].mxu0 %v488
      %v1968 = vpop.f32.mrb[0].mxu0
      %v1969 = vadd.f32 %v1808, %v1968
      %v1970 = vpop.f32.mrb[0].mxu0
      %v1971 = vpop.f32.mrb[0].mxu0
      %v1972 = vadd.f32 %v1811, %v1971
      %v1973 = vpop.f32.mrb[0].mxu0
      %1974 = vmatprep.mubr.bf16.mxu0 %v640
      %1975 = vmatmul.mubr.bf16.gmra.mrb[0].mxu0 %v489
      %v1976 = vpop.f32.mrb[0].mxu0
      %v1977 = vadd.f32 %v1816, %v1976
      %v1978 = vpop.f32.mrb[0].mxu0
      %v1979 = vpop.f32.mrb[0].mxu0
      %v1980 = vadd.f32 %v1819, %v1979
      %v1981 = vpop.f32.mrb[0].mxu0
      %1982 = vmatprep.mubr.bf16.mxu0 %v641
      %1983 = vmatmul.mubr.bf16.gmra.mrb[0].mxu0 %v490
      %v1984 = vpop.f32.mrb[0].mxu0
      %v1985 = vadd.f32 %v1824, %v1984
      %v1986 = vpop.f32.mrb[0].mxu0
      %v1987 = vpop.f32.mrb[0].mxu0
      %v1988 = vadd.f32 %v1827, %v1987
      %v1989 = vpop.f32.mrb[0].mxu0
      %1990 = vmatprep.mubr.bf16.mxu0 %v773
      %1991 = vmatmul.mubr.bf16.gmra.mrb[0].mxu0 %v763
      %v1992 = vpop.f32.mrb[0].mxu0
      %v1993 = vadd.f32 %v1832, %v1992
      %v1994 = vpop.f32.mrb[0].mxu0
      %v1995 = vpop.f32.mrb[0].mxu0
      %v1996 = vadd.f32 %v1835, %v1995
      %v1997 = vpop.f32.mrb[0].mxu0
      %1998 = vmatprep.mubr.bf16.mxu0 %v641
      %1999 = vmatmul.mubr.bf16.gmra.mrb[0].mxu0 %v490
      %v2000 = vpop.f32.mrb[0].mxu0
      %v2001 = vadd.f32 %v1840, %v2000
      %v2002 = vpop.f32.mrb[0].mxu0
      %v2003 = vpop.f32.mrb[0].mxu0
      %v2004 = vadd.f32 %v1843, %v2003
      %v2005 = vpop.f32.mrb[0].mxu0
      %2006 = vdwg.mxu0
      %2007 = vmatprep.subr.bf16.mxu0 0
      %2008 = vmatpush1.bf16.msra.mxu0 %v1283
      %2009 = vmatprep.subr.bf16.mxu0 0
      %2010 = vmatpush1.bf16.msra.mxu0 %v1284
      %2011 = vmatprep.subr.bf16.mxu0 0
      %2012 = vmatpush1.bf16.msra.mxu0 %v1285
      %2013 = vmatprep.subr.bf16.mxu0 0
      %2014 = vmatpush1.bf16.msra.mxu0 %v1286
      %2015 = vmatprep.subr.bf16.mxu0 0
      %2016 = vmatpush1.bf16.msra.mxu0 %v1287
      %2017 = vmatprep.subr.bf16.mxu0 0
      %2018 = vmatpush1.bf16.msra.mxu0 %v1288
      %2019 = vmatprep.subr.bf16.mxu0 0
      %2020 = vmatpush1.bf16.msra.mxu0 %v1289
      %2021 = vmatprep.subr.bf16.mxu0 0
      %2022 = vmatpush1.bf16.msra.mxu0 %v1290
      %2023 = vmatprep.subr.bf16.mxu0 0
      %2024 = vmatpush1.bf16.msra.mxu0 0
      %2025 = vmatprep.subr.bf16.mxu0 0
      %2026 = vmatpush1.bf16.msra.mxu0 0
      %2027 = vmatprep.subr.bf16.mxu0 0
      %2028 = vmatpush1.bf16.msra.mxu0 0
      %2029 = vmatprep.subr.bf16.mxu0 0
      %2030 = vmatpush1.bf16.msra.mxu0 0
      %2031 = vmatprep.subr.bf16.mxu0 0
      %2032 = vmatpush1.bf16.msra.mxu0 0
      %2033 = vmatprep.subr.bf16.mxu0 0
      %2034 = vmatpush1.bf16.msra.mxu0 0
      %2035 = vmatprep.subr.bf16.mxu0 0
      %2036 = vmatpush1.bf16.msra.mxu0 0
      %2037 = vmatprep.subr.bf16.mxu0 0
      %2038 = vmatpush1.bf16.msra.mxu0 0
      %2039 = vmatprep.mubr.bf16.mxu0 0
      %2040 = vmatmul.mubr.bf16.gmra.mrb[0].mxu0 %v748
      %v2041 = vpop.f32.mrb[0].mxu0
      %v2042 = vadd.f32 %v1881, %v2041
      %v2043 = vpop.f32.mrb[0].mxu0
      %v2044 = vpop.f32.mrb[0].mxu0
      %v2045 = vadd.f32 %v1884, %v2044
      %v2046 = vpop.f32.mrb[0].mxu0
      %2047 = vmatprep.mubr.bf16.mxu0 0
      %2048 = vmatmul.mubr.bf16.gmra.mrb[0].mxu0 %v750
      %v2049 = vpop.f32.mrb[0].mxu0
      %v2050 = vadd.f32 %v1889, %v2049
      %v2051 = vpop.f32.mrb[0].mxu0
      %v2052 = vpop.f32.mrb[0].mxu0
      %v2053 = vadd.f32 %v1892, %v2052
      %v2054 = vpop.f32.mrb[0].mxu0
      %2055 = vmatprep.mubr.bf16.mxu0 0
      %2056 = vmatmul.mubr.bf16.gmra.mrb[0].mxu0 %v751
      %v2057 = vpop.f32.mrb[0].mxu0
      %v2058 = vadd.f32 %v1897, %v2057
      %v2059 = vpop.f32.mrb[0].mxu0
      %v2060 = vpop.f32.mrb[0].mxu0
      %v2061 = vadd.f32 %v1900, %v2060
      %v2062 = vpop.f32.mrb[0].mxu0
      %2063 = vmatprep.mubr.bf16.mxu0 0
      %2064 = vmatmul.mubr.bf16.gmra.mrb[0].mxu0 %v752
      %v2065 = vpop.f32.mrb[0].mxu0
      %v2066 = vadd.f32 %v1905, %v2065
      %v2067 = vpop.f32.mrb[0].mxu0
      %v2068 = vpop.f32.mrb[0].mxu0
      %v2069 = vadd.f32 %v1908, %v2068
      %v2070 = vpop.f32.mrb[0].mxu0
      %2071 = vmatprep.mubr.bf16.mxu0 0
      %2072 = vmatmul.mubr.bf16.gmra.mrb[0].mxu0 %v753
      %v2073 = vpop.f32.mrb[0].mxu0
      %v2074 = vadd.f32 %v1913, %v2073
      %v2075 = vpop.f32.mrb[0].mxu0
      %v2076 = vpop.f32.mrb[0].mxu0
      %v2077 = vadd.f32 %v1916, %v2076
      %v2078 = vpop.f32.mrb[0].mxu0
      %2079 = vmatprep.mubr.bf16.mxu0 0
      %2080 = vmatmul.mubr.bf16.gmra.mrb[0].mxu0 %v754
      %v2081 = vpop.f32.mrb[0].mxu0
      %v2082 = vadd.f32 %v1921, %v2081
      %v2083 = vpop.f32.mrb[0].mxu0
      %v2084 = vpop.f32.mrb[0].mxu0
      %v2085 = vadd.f32 %v1924, %v2084
      %v2086 = vpop.f32.mrb[0].mxu0
      %2087 = vmatprep.mubr.bf16.mxu0 0
      %2088 = vmatmul.mubr.bf16.gmra.mrb[0].mxu0 %v755
      %v2089 = vpop.f32.mrb[0].mxu0
      %v2090 = vadd.f32 %v1929, %v2089
      %v2091 = vpop.f32.mrb[0].mxu0
      %v2092 = vpop.f32.mrb[0].mxu0
      %v2093 = vadd.f32 %v1932, %v2092
      %v2094 = vpop.f32.mrb[0].mxu0
      %2095 = vmatprep.mubr.bf16.mxu0 0
      %2096 = vmatmul.mubr.bf16.gmra.mrb[0].mxu0 %v756
      %v2097 = vpop.f32.mrb[0].mxu0
      %v2098 = vadd.f32 %v1937, %v2097
      %v2099 = vpop.f32.mrb[0].mxu0
      %v2100 = vpop.f32.mrb[0].mxu0
      %v2101 = vadd.f32 %v1940, %v2100
      %v2102 = vpop.f32.mrb[0].mxu0
      %2103 = vmatprep.mubr.bf16.mxu0 0
      %2104 = vmatmul.mubr.bf16.gmra.mrb[0].mxu0 %v757
      %v2105 = vpop.f32.mrb[0].mxu0
      %v2106 = vadd.f32 %v1945, %v2105
      %v2107 = vpop.f32.mrb[0].mxu0
      %v2108 = vpop.f32.mrb[0].mxu0
      %v2109 = vadd.f32 %v1948, %v2108
      %v2110 = vpop.f32.mrb[0].mxu0
      %2111 = vmatprep.mubr.bf16.mxu0 0
      %2112 = vmatmul.mubr.bf16.gmra.mrb[0].mxu0 %v758
      %v2113 = vpop.f32.mrb[0].mxu0
      %v2114 = vadd.f32 %v1953, %v2113
      %v2115 = vpop.f32.mrb[0].mxu0
      %v2116 = vpop.f32.mrb[0].mxu0
      %v2117 = vadd.f32 %v1956, %v2116
      %v2118 = vpop.f32.mrb[0].mxu0
      %2119 = vmatprep.mubr.bf16.mxu0 0
      %2120 = vmatmul.mubr.bf16.gmra.mrb[0].mxu0 %v759
      %v2121 = vpop.f32.mrb[0].mxu0
      %v2122 = vadd.f32 %v1961, %v2121
      %v2123 = vpop.f32.mrb[0].mxu0
      %v2124 = vpop.f32.mrb[0].mxu0
      %v2125 = vadd.f32 %v1964, %v2124
      %v2126 = vpop.f32.mrb[0].mxu0
      %2127 = vmatprep.mubr.bf16.mxu0 0
      %2128 = vmatmul.mubr.bf16.gmra.mrb[0].mxu0 %v760
      %v2129 = vpop.f32.mrb[0].mxu0
      %v2130 = vadd.f32 %v1969, %v2129
      %v2131 = vpop.f32.mrb[0].mxu0
      %v2132 = vpop.f32.mrb[0].mxu0
      %v2133 = vadd.f32 %v1972, %v2132
      %v2134 = vpop.f32.mrb[0].mxu0
      %2135 = vmatprep.mubr.bf16.mxu0 0
      %2136 = vmatmul.mubr.bf16.gmra.mrb[0].mxu0 %v761
      %v2137 = vpop.f32.mrb[0].mxu0
      %v2138 = vadd.f32 %v1977, %v2137
      %v2139 = vpop.f32.mrb[0].mxu0
      %v2140 = vpop.f32.mrb[0].mxu0
      %v2141 = vadd.f32 %v1980, %v2140
      %v2142 = vpop.f32.mrb[0].mxu0
      %2143 = vmatprep.mubr.bf16.mxu0 0
      %2144 = vmatmul.mubr.bf16.gmra.mrb[0].mxu0 %v762
      %v2145 = vpop.f32.mrb[0].mxu0
      %v2146 = vadd.f32 %v1985, %v2145
      %v2147 = vpop.f32.mrb[0].mxu0
      %v2148 = vpop.f32.mrb[0].mxu0
      %v2149 = vadd.f32 %v1988, %v2148
      %v2150 = vpop.f32.mrb[0].mxu0
      %2151 = vmatprep.mubr.bf16.mxu0 0
      %2152 = vmatmul.mubr.bf16.gmra.mrb[0].mxu0 %v781
      %v2153 = vpop.f32.mrb[0].mxu0
      %v2154 = vadd.f32 %v1993, %v2153
      %v2155 = vpop.f32.mrb[0].mxu0
      %v2156 = vpop.f32.mrb[0].mxu0
      %v2157 = vadd.f32 %v1996, %v2156
      %v2158 = vpop.f32.mrb[0].mxu0
      %2159 = vmatprep.mubr.bf16.mxu0 0
      %2160 = vmatmul.mubr.bf16.gmra.mrb[0].mxu0 %v762
      %v2161 = vpop.f32.mrb[0].mxu0
      %v2162 = vadd.f32 %v2001, %v2161
      %v2163 = vpop.f32.mrb[0].mxu0
      %v2164 = vpop.f32.mrb[0].mxu0
      %v2165 = vadd.f32 %v2004, %v2164
      %v2166 = vpop.f32.mrb[0].mxu0
      %2167 = vdwg.mxu0
      %v2168 = vmax.f32 %v2042, 0.0
      %v2169 = vmax.f32 %v2045, 0.0
      %v2170 = vmax.f32 %v2050, 0.0
      %v2171 = vmax.f32 %v2053, 0.0
      %v2172 = vmax.f32 %v2058, 0.0
      %v2173 = vmax.f32 %v2061, 0.0
      %v2174 = vmax.f32 %v2066, 0.0
      %v2175 = vmax.f32 %v2069, 0.0
      %v2176 = vmax.f32 %v2074, 0.0
      %v2177 = vmax.f32 %v2077, 0.0
      %v2178 = vmax.f32 %v2082, 0.0
      %v2179 = vmax.f32 %v2085, 0.0
      %v2180 = vmax.f32 %v2090, 0.0
      %v2181 = vmax.f32 %v2093, 0.0
      %v2182 = vmax.f32 %v2098, 0.0
      %v2183 = vmax.f32 %v2101, 0.0
      %v2184 = vmax.f32 %v2106, 0.0
      %v2185 = vmax.f32 %v2109, 0.0
      %v2186 = vmax.f32 %v2114, 0.0
      %v2187 = vmax.f32 %v2117, 0.0
      %v2188 = vmax.f32 %v2122, 0.0
      %v2189 = vmax.f32 %v2125, 0.0
      %v2190 = vmax.f32 %v2130, 0.0
      %v2191 = vmax.f32 %v2133, 0.0
      %v2192 = vmax.f32 %v2138, 0.0
      %v2193 = vmax.f32 %v2141, 0.0
      %v2194 = vmax.f32 %v2146, 0.0
      %v2195 = vmax.f32 %v2149, 0.0
      %v2196 = vmax.f32 %v2154, 0.0
      %v2197 = vmax.f32 %v2157, 0.0
      %v2198 = vmax.f32 %v2162, 0.0
      %v2199 = vmax.f32 %v2165, 0.0
      %v2216 = vrot.slane %v2170, 1
      %v2217 = vrot.slane %v2168, 1
      %v2218 = vrot.slane %v2172, 1
      %v2219 = vrot.slane %v2174, 1
      %v2220 = vrot.slane %v2176, 1
      %v2221 = vrot.slane %v2178, 1
      %v2222 = vrot.slane %v2180, 1
      %v2223 = vrot.slane %v2182, 1
      %v2224 = vrot.slane %v2184, 1
      %v2225 = vrot.slane %v2186, 1
      %v2226 = vrot.slane %v2188, 1
      %v2227 = vrot.slane %v2190, 1
      %v2228 = vrot.slane %v2192, 1
      %v2229 = vrot.slane %v2194, 1
      %v2230 = vrot.slane %v2196, 1
      %v2231 = vrot.slane %v2198, 1
      %v2264 = vrot.slane %v2170, 7
      %v2265 = vrot.slane %v2171, 7
      %v2266 = vsel %vm315, %v2264, %v2265
      %v2267 = vrot.slane %v2168, 7
      %v2268 = vrot.slane %v2169, 7
      %v2269 = vsel %vm315, %v2267, %v2268
      %v2270 = vrot.slane %v2172, 7
      %v2271 = vrot.slane %v2173, 7
      %v2272 = vsel %vm315, %v2270, %v2271
      %v2273 = vrot.slane %v2174, 7
      %v2274 = vrot.slane %v2175, 7
      %v2275 = vsel %vm315, %v2273, %v2274
      %v2276 = vrot.slane %v2176, 7
      %v2277 = vrot.slane %v2177, 7
      %v2278 = vsel %vm315, %v2276, %v2277
      %v2279 = vrot.slane %v2178, 7
      %v2280 = vrot.slane %v2179, 7
      %v2281 = vsel %vm315, %v2279, %v2280
      %v2282 = vrot.slane %v2180, 7
      %v2283 = vrot.slane %v2181, 7
      %v2284 = vsel %vm315, %v2282, %v2283
      %v2285 = vrot.slane %v2182, 7
      %v2286 = vrot.slane %v2183, 7
      %v2287 = vsel %vm315, %v2285, %v2286
      %v2288 = vrot.slane %v2184, 7
      %v2289 = vrot.slane %v2185, 7
      %v2290 = vsel %vm315, %v2288, %v2289
      %v2291 = vrot.slane %v2186, 7
      %v2292 = vrot.slane %v2187, 7
      %v2293 = vsel %vm315, %v2291, %v2292
      %v2294 = vrot.slane %v2188, 7
      %v2295 = vrot.slane %v2189, 7
      %v2296 = vsel %vm315, %v2294, %v2295
      %v2297 = vrot.slane %v2190, 7
      %v2298 = vrot.slane %v2191, 7
      %v2299 = vsel %vm315, %v2297, %v2298
      %v2300 = vrot.slane %v2192, 7
      %v2301 = vrot.slane %v2193, 7
      %v2302 = vsel %vm315, %v2300, %v2301
      %v2303 = vrot.slane %v2194, 7
      %v2304 = vrot.slane %v2195, 7
      %v2305 = vsel %vm315, %v2303, %v2304
      %v2306 = vrot.slane %v2196, 7
      %v2307 = vrot.slane %v2197, 7
      %v2308 = vsel %vm315, %v2306, %v2307
      %v2309 = vrot.slane %v2198, 7
      %v2310 = vrot.slane %v2199, 7
      %v2311 = vsel %vm315, %v2309, %v2310
      %v2360 = vrot.slane %v2171, 5
      %v2361 = vrot.slane %v2169, 5
      %v2362 = vrot.slane %v2173, 5
      %v2363 = vrot.slane %v2175, 5
      %v2364 = vrot.slane %v2177, 5
      %v2365 = vrot.slane %v2179, 5
      %v2366 = vrot.slane %v2181, 5
      %v2367 = vrot.slane %v2183, 5
      %v2368 = vrot.slane %v2185, 5
      %v2369 = vrot.slane %v2187, 5
      %v2370 = vrot.slane %v2189, 5
      %v2371 = vrot.slane %v2191, 5
      %v2372 = vrot.slane %v2193, 5
      %v2373 = vrot.slane %v2195, 5
      %v2374 = vrot.slane %v2197, 5
      %v2375 = vrot.slane %v2199, 5
      %v2392 = vsel %vm315, %v2216, %v2264
      %v2393 = vsel %vm315, %v2217, %v2267
      %v2394 = vsel %vm315, %v2218, %v2270
      %v2395 = vsel %vm315, %v2219, %v2273
      %v2396 = vsel %vm315, %v2220, %v2276
      %v2397 = vsel %vm315, %v2221, %v2279
      %v2398 = vsel %vm315, %v2222, %v2282
      %v2399 = vsel %vm315, %v2223, %v2285
      %v2400 = vsel %vm315, %v2224, %v2288
      %v2401 = vsel %vm315, %v2225, %v2291
      %v2402 = vsel %vm315, %v2226, %v2294
      %v2403 = vsel %vm315, %v2227, %v2297
      %v2404 = vsel %vm315, %v2228, %v2300
      %v2405 = vsel %vm315, %v2229, %v2303
      %v2406 = vsel %vm315, %v2230, %v2306
      %v2407 = vsel %vm315, %v2231, %v2309
      %v2408 = vsel %vm315, %v2265, %v2360
      %v2409 = vsel %vm315, %v2268, %v2361
      %v2410 = vsel %vm315, %v2271, %v2362
      %v2411 = vsel %vm315, %v2274, %v2363
      %v2412 = vsel %vm315, %v2277, %v2364
      %v2413 = vsel %vm315, %v2280, %v2365
      %v2414 = vsel %vm315, %v2283, %v2366
      %v2415 = vsel %vm315, %v2286, %v2367
      %v2416 = vsel %vm315, %v2289, %v2368
      %v2417 = vsel %vm315, %v2292, %v2369
      %v2418 = vsel %vm315, %v2295, %v2370
      %v2419 = vsel %vm315, %v2298, %v2371
      %v2420 = vsel %vm315, %v2301, %v2372
      %v2421 = vsel %vm315, %v2304, %v2373
      %v2422 = vsel %vm315, %v2307, %v2374
      %v2423 = vsel %vm315, %v2310, %v2375
      %v2424 = vpack.c.bf16 %v2266, %v2392
      %v2425 = vpack.c.bf16 %v2269, %v2393
      %v2426 = vpack.c.bf16 %v2272, %v2394
      %v2427 = vpack.c.bf16 %v2275, %v2395
      %v2428 = vpack.c.bf16 %v2278, %v2396
      %v2429 = vpack.c.bf16 %v2281, %v2397
      %v2430 = vpack.c.bf16 %v2284, %v2398
      %v2431 = vpack.c.bf16 %v2287, %v2399
      %v2432 = vpack.c.bf16 %v2290, %v2400
      %v2433 = vpack.c.bf16 %v2293, %v2401
      %v2434 = vpack.c.bf16 %v2296, %v2402
      %v2435 = vpack.c.bf16 %v2299, %v2403
      %v2436 = vpack.c.bf16 %v2302, %v2404
      %v2437 = vpack.c.bf16 %v2305, %v2405
      %v2438 = vpack.c.bf16 %v2308, %v2406
      %v2469 = vrot.slane %v2392, 1
      %v2470 = vrot.slane %v2266, 1
      %v2471 = vsel %vm521, %v2469, %v2470
      %v2472 = vrot.slane %v2408, 1
      %v2473 = vsel %vm521, %v2470, %v2472
      %v2474 = vrot.slane %v2393, 1
      %v2475 = vrot.slane %v2269, 1
      %v2476 = vsel %vm521, %v2474, %v2475
      %v2477 = vrot.slane %v2409, 1
      %v2478 = vsel %vm521, %v2475, %v2477
      %v2479 = vrot.slane %v2394, 1
      %v2480 = vrot.slane %v2272, 1
      %v2481 = vsel %vm521, %v2479, %v2480
      %v2482 = vrot.slane %v2410, 1
      %v2483 = vsel %vm521, %v2480, %v2482
      %v2484 = vrot.slane %v2395, 1
      %v2485 = vrot.slane %v2275, 1
      %v2486 = vsel %vm521, %v2484, %v2485
      %v2487 = vrot.slane %v2411, 1
      %v2488 = vsel %vm521, %v2485, %v2487
      %v2489 = vrot.slane %v2396, 1
      %v2490 = vrot.slane %v2278, 1
      %v2491 = vsel %vm521, %v2489, %v2490
      %v2492 = vrot.slane %v2412, 1
      %v2493 = vsel %vm521, %v2490, %v2492
      %v2494 = vrot.slane %v2397, 1
      %v2495 = vrot.slane %v2281, 1
      %v2496 = vsel %vm521, %v2494, %v2495
      %v2497 = vrot.slane %v2413, 1
      %v2498 = vsel %vm521, %v2495, %v2497
      %v2499 = vrot.slane %v2398, 1
      %v2500 = vrot.slane %v2284, 1
      %v2501 = vsel %vm521, %v2499, %v2500
      %v2502 = vrot.slane %v2414, 1
      %v2503 = vsel %vm521, %v2500, %v2502
      %v2504 = vrot.slane %v2399, 1
      %v2505 = vrot.slane %v2287, 1
      %v2506 = vsel %vm521, %v2504, %v2505
      %v2507 = vrot.slane %v2415, 1
      %v2508 = vsel %vm521, %v2505, %v2507
      %v2509 = vrot.slane %v2400, 1
      %v2510 = vrot.slane %v2290, 1
      %v2511 = vsel %vm521, %v2509, %v2510
      %v2512 = vrot.slane %v2416, 1
      %v2513 = vsel %vm521, %v2510, %v2512
      %v2514 = vrot.slane %v2401, 1
      %v2515 = vrot.slane %v2293, 1
      %v2516 = vsel %vm521, %v2514, %v2515
      %v2517 = vrot.slane %v2417, 1
      %v2518 = vsel %vm521, %v2515, %v2517
      %v2519 = vrot.slane %v2402, 1
      %v2520 = vrot.slane %v2296, 1
      %v2521 = vsel %vm521, %v2519, %v2520
      %v2522 = vrot.slane %v2418, 1
      %v2523 = vsel %vm521, %v2520, %v2522
      %v2524 = vrot.slane %v2403, 1
      %v2525 = vrot.slane %v2299, 1
      %v2526 = vsel %vm521, %v2524, %v2525
      %v2527 = vrot.slane %v2419, 1
      %v2528 = vsel %vm521, %v2525, %v2527
      %v2529 = vrot.slane %v2404, 1
      %v2530 = vrot.slane %v2302, 1
      %v2531 = vsel %vm521, %v2529, %v2530
      %v2532 = vrot.slane %v2420, 1
      %v2533 = vsel %vm521, %v2530, %v2532
      %v2534 = vrot.slane %v2405, 1
      %v2535 = vrot.slane %v2305, 1
      %v2536 = vsel %vm521, %v2534, %v2535
      %v2537 = vrot.slane %v2421, 1
      %v2538 = vsel %vm521, %v2535, %v2537
      %v2539 = vrot.slane %v2406, 1
      %v2540 = vrot.slane %v2308, 1
      %v2541 = vsel %vm521, %v2539, %v2540
      %v2542 = vrot.slane %v2422, 1
      %v2543 = vsel %vm521, %v2540, %v2542
      %v2574 = vpack.c.bf16 %v2473, %v2471
      %v2575 = vpack.c.bf16 %v2478, %v2476
      %v2576 = vpack.c.bf16 %v2483, %v2481
      %v2577 = vpack.c.bf16 %v2488, %v2486
      %v2578 = vpack.c.bf16 %v2493, %v2491
      %v2579 = vpack.c.bf16 %v2498, %v2496
      %v2580 = vpack.c.bf16 %v2503, %v2501
      %v2581 = vpack.c.bf16 %v2508, %v2506
      %v2582 = vpack.c.bf16 %v2513, %v2511
      %v2583 = vpack.c.bf16 %v2518, %v2516
      %v2584 = vpack.c.bf16 %v2523, %v2521
      %v2585 = vpack.c.bf16 %v2528, %v2526
      %v2586 = vpack.c.bf16 %v2533, %v2531
      %v2587 = vpack.c.bf16 %v2538, %v2536
      %v2588 = vpack.c.bf16 %v2543, %v2541
      %v2589 = vrot.slane %v2392, 2
      %v2590 = vrot.slane %v2266, 2
      %v2591 = vsel %vm642, %v2589, %v2590
      %v2592 = vrot.slane %v2408, 2
      %v2593 = vsel %vm642, %v2590, %v2592
      %v2594 = vrot.slane %v2393, 2
      %v2595 = vrot.slane %v2269, 2
      %v2596 = vsel %vm642, %v2594, %v2595
      %v2597 = vrot.slane %v2409, 2
      %v2598 = vsel %vm642, %v2595, %v2597
      %v2599 = vrot.slane %v2394, 2
      %v2600 = vrot.slane %v2272, 2
      %v2601 = vsel %vm642, %v2599, %v2600
      %v2602 = vrot.slane %v2410, 2
      %v2603 = vsel %vm642, %v2600, %v2602
      %v2604 = vrot.slane %v2395, 2
      %v2605 = vrot.slane %v2275, 2
      %v2606 = vsel %vm642, %v2604, %v2605
      %v2607 = vrot.slane %v2411, 2
      %v2608 = vsel %vm642, %v2605, %v2607
      %v2609 = vrot.slane %v2396, 2
      %v2610 = vrot.slane %v2278, 2
      %v2611 = vsel %vm642, %v2609, %v2610
      %v2612 = vrot.slane %v2412, 2
      %v2613 = vsel %vm642, %v2610, %v2612
      %v2614 = vrot.slane %v2397, 2
      %v2615 = vrot.slane %v2281, 2
      %v2616 = vsel %vm642, %v2614, %v2615
      %v2617 = vrot.slane %v2413, 2
      %v2618 = vsel %vm642, %v2615, %v2617
      %v2619 = vrot.slane %v2398, 2
      %v2620 = vrot.slane %v2284, 2
      %v2621 = vsel %vm642, %v2619, %v2620
      %v2622 = vrot.slane %v2414, 2
      %v2623 = vsel %vm642, %v2620, %v2622
      %v2624 = vrot.slane %v2399, 2
      %v2625 = vrot.slane %v2287, 2
      %v2626 = vsel %vm642, %v2624, %v2625
      %v2627 = vrot.slane %v2415, 2
      %v2628 = vsel %vm642, %v2625, %v2627
      %v2629 = vrot.slane %v2400, 2
      %v2630 = vrot.slane %v2290, 2
      %v2631 = vsel %vm642, %v2629, %v2630
      %v2632 = vrot.slane %v2416, 2
      %v2633 = vsel %vm642, %v2630, %v2632
      %v2634 = vrot.slane %v2401, 2
      %v2635 = vrot.slane %v2293, 2
      %v2636 = vsel %vm642, %v2634, %v2635
      %v2637 = vrot.slane %v2417, 2
      %v2638 = vsel %vm642, %v2635, %v2637
      %v2639 = vrot.slane %v2402, 2
      %v2640 = vrot.slane %v2296, 2
      %v2641 = vsel %vm642, %v2639, %v2640
      %v2642 = vrot.slane %v2418, 2
      %v2643 = vsel %vm642, %v2640, %v2642
      %v2644 = vrot.slane %v2403, 2
      %v2645 = vrot.slane %v2299, 2
      %v2646 = vsel %vm642, %v2644, %v2645
      %v2647 = vrot.slane %v2419, 2
      %v2648 = vsel %vm642, %v2645, %v2647
      %v2649 = vrot.slane %v2404, 2
      %v2650 = vrot.slane %v2302, 2
      %v2651 = vsel %vm642, %v2649, %v2650
      %v2652 = vrot.slane %v2420, 2
      %v2653 = vsel %vm642, %v2650, %v2652
      %v2654 = vrot.slane %v2405, 2
      %v2655 = vrot.slane %v2305, 2
      %v2656 = vsel %vm642, %v2654, %v2655
      %v2657 = vrot.slane %v2421, 2
      %v2658 = vsel %vm642, %v2655, %v2657
      %v2659 = vrot.slane %v2406, 2
      %v2660 = vrot.slane %v2308, 2
      %v2661 = vsel %vm642, %v2659, %v2660
      %v2662 = vrot.slane %v2422, 2
      %v2663 = vsel %vm642, %v2660, %v2662
      %v2694 = vpack.c.bf16 %v2593, %v2591
      %v2695 = vpack.c.bf16 %v2598, %v2596
      %v2696 = vpack.c.bf16 %v2603, %v2601
      %v2697 = vpack.c.bf16 %v2608, %v2606
      %v2698 = vpack.c.bf16 %v2613, %v2611
      %v2699 = vpack.c.bf16 %v2618, %v2616
      %v2700 = vpack.c.bf16 %v2623, %v2621
      %v2701 = vpack.c.bf16 %v2628, %v2626
      %v2702 = vpack.c.bf16 %v2633, %v2631
      %v2703 = vpack.c.bf16 %v2638, %v2636
      %v2704 = vpack.c.bf16 %v2643, %v2641
      %v2705 = vpack.c.bf16 %v2648, %v2646
      %v2706 = vpack.c.bf16 %v2653, %v2651
      %v2707 = vpack.c.bf16 %v2658, %v2656
      %v2708 = vpack.c.bf16 %v2663, %v2661
      %v2709 = vpack.c.bf16 %v2311, %v2407
      %v2712 = vrot.slane %v2407, 1
      %v2713 = vrot.slane %v2311, 1
      %v2714 = vsel %vm521, %v2712, %v2713
      %v2715 = vrot.slane %v2423, 1
      %v2716 = vsel %vm521, %v2713, %v2715
      %v2719 = vpack.c.bf16 %v2716, %v2714
      %v2720 = vrot.slane %v2407, 2
      %v2721 = vrot.slane %v2311, 2
      %v2722 = vsel %vm642, %v2720, %v2721
      %v2723 = vrot.slane %v2423, 2
      %v2724 = vsel %vm642, %v2721, %v2723
      %v2727 = vpack.c.bf16 %v2724, %v2722
      %s2728 = scalar_lea.vmem %s2, 576
      %v2729 = vld [vmem:[%s2728] sm:$0xf]
      %v2730 = vld [vmem:[%s2728 + $0x4] sm:$0xf]
      %v2731 = vld [vmem:[%s2728 + $0x8] sm:$0xf]
      %v2732 = vld [vmem:[%s2728 + $0xc] sm:$0xf]
      %v2733 = vld [vmem:[%s2728 + $0x10] sm:$0xf]
      %v2734 = vld [vmem:[%s2728 + $0x14] sm:$0xf]
      %v2735 = vld [vmem:[%s2728 + $0x18] sm:$0xf]
      %v2736 = vld [vmem:[%s2728 + $0x1c] sm:$0xf]
      %v2737 = vld [vmem:[%s2728 + $0x20] sm:$0xf]
      %v2738 = vld [vmem:[%s2728 + $0x24] sm:$0xf]
      %v2739 = vld [vmem:[%s2728 + $0x28] sm:$0xf]
      %v2740 = vld [vmem:[%s2728 + $0x2c] sm:$0xf]
      %v2741 = vld [vmem:[%s2728 + $0x30] sm:$0xf]
      %v2742 = vld [vmem:[%s2728 + $0x34] sm:$0xf]
      %v2743 = vld [vmem:[%s2728 + $0x38] sm:$0xf]
      %v2744 = vld [vmem:[%s2728 + $0x3c] sm:$0xf]
      %v2745 = vld [vmem:[%s2728 + $0x40] sm:$0xf]
      %v2746 = vld [vmem:[%s2728 + $0x44] sm:$0xf]
      %v2747 = vld [vmem:[%s2728 + $0x48] sm:$0xf]
      %v2748 = vld [vmem:[%s2728 + $0x4c] sm:$0xf]
      %v2749 = vld [vmem:[%s2728 + $0x50] sm:$0xf]
      %v2750 = vld [vmem:[%s2728 + $0x54] sm:$0xf]
      %v2751 = vld [vmem:[%s2728 + $0x58] sm:$0xf]
      %v2752 = vld [vmem:[%s2728 + $0x5c] sm:$0xf]
      %v2753 = vld [vmem:[%s2728 + $0x60] sm:$0xf]
      %v2754 = vld [vmem:[%s2728 + $0x64] sm:$0xf]
      %v2755 = vld [vmem:[%s2728 + $0x68] sm:$0xf]
      %v2756 = vld [vmem:[%s2728 + $0x6c] sm:$0xf]
      %v2757 = vld [vmem:[%s2728 + $0x70] sm:$0xf]
      %v2758 = vld [vmem:[%s2728 + $0x74] sm:$0xf]
      %v2759 = vld [vmem:[%s2728 + $0x78] sm:$0xf]
      %v2760 = vld [vmem:[%s2728 + $0x7c] sm:$0xf]
      %v2761 = vld [vmem:[%s2728 + $0x80] sm:$0xf]
      %v2762 = vld [vmem:[%s2728 + $0x84] sm:$0xf]
      %v2763 = vld [vmem:[%s2728 + $0x88] sm:$0xf]
      %v2764 = vld [vmem:[%s2728 + $0x8c] sm:$0xf]
      %v2765 = vld [vmem:[%s2728 + $0x90] sm:$0xf]
      %v2766 = vld [vmem:[%s2728 + $0x94] sm:$0xf]
      %v2767 = vld [vmem:[%s2728 + $0x98] sm:$0xf]
      %v2768 = vld [vmem:[%s2728 + $0x9c] sm:$0xf]
      %v2769 = vld [vmem:[%s2728 + $0xa0] sm:$0xf]
      %v2770 = vld [vmem:[%s2728 + $0xa4] sm:$0xf]
      %v2771 = vld [vmem:[%s2728 + $0xa8] sm:$0xf]
      %v2772 = vld [vmem:[%s2728 + $0xac] sm:$0xf]
      %v2773 = vld [vmem:[%s2728 + $0xb0] sm:$0xf]
      %v2774 = vld [vmem:[%s2728 + $0xb4] sm:$0xf]
      %v2775 = vld [vmem:[%s2728 + $0xb8] sm:$0xf]
      %v2776 = vld [vmem:[%s2728 + $0xbc] sm:$0xf]
      %v2777 = vld [vmem:[%s2728 + $0xc0] sm:$0xf]
      %v2778 = vld [vmem:[%s2728 + $0xc4] sm:$0xf]
      %v2779 = vld [vmem:[%s2728 + $0xc8] sm:$0xf]
      %v2780 = vld [vmem:[%s2728 + $0xcc] sm:$0xf]
      %v2781 = vld [vmem:[%s2728 + $0xd0] sm:$0xf]
      %v2782 = vld [vmem:[%s2728 + $0xd4] sm:$0xf]
      %v2783 = vld [vmem:[%s2728 + $0xd8] sm:$0xf]
      %v2784 = vld [vmem:[%s2728 + $0xdc] sm:$0xf]
      %v2785 = vld [vmem:[%s2728 + $0xe0] sm:$0xf]
      %v2786 = vld [vmem:[%s2728 + $0xe4] sm:$0xf]
      %v2787 = vld [vmem:[%s2728 + $0xe8] sm:$0xf]
      %v2788 = vld [vmem:[%s2728 + $0xec] sm:$0xf]
      %v2789 = vld [vmem:[%s2728 + $0xf0] sm:$0xf]
      %v2790 = vld [vmem:[%s2728 + $0xf4] sm:$0xf]
      %v2791 = vld [vmem:[%s2728 + $0xf8] sm:$0xf]
      %v2792 = vld [vmem:[%s2728 + $0xfc] sm:$0xf]
      %v2793 = vld [vmem:[%s2728 + $0x100] sm:$0xf]
      %v2794 = vld [vmem:[%s2728 + $0x104] sm:$0xf]
      %v2795 = vld [vmem:[%s2728 + $0x108] sm:$0xf]
      %v2796 = vld [vmem:[%s2728 + $0x10c] sm:$0xf]
      %v2797 = vld [vmem:[%s2728 + $0x110] sm:$0xf]
      %v2798 = vld [vmem:[%s2728 + $0x114] sm:$0xf]
      %v2799 = vld [vmem:[%s2728 + $0x118] sm:$0xf]
      %v2800 = vld [vmem:[%s2728 + $0x11c] sm:$0xf]
      %v2801 = vld [vmem:[%s2728 + $0x120] sm:$0xf]
      %v2802 = vld [vmem:[%s2728 + $0x124] sm:$0xf]
      %v2803 = vld [vmem:[%s2728 + $0x128] sm:$0xf]
      %v2804 = vld [vmem:[%s2728 + $0x12c] sm:$0xf]
      %v2805 = vld [vmem:[%s2728 + $0x130] sm:$0xf]
      %v2806 = vld [vmem:[%s2728 + $0x134] sm:$0xf]
      %v2807 = vld [vmem:[%s2728 + $0x138] sm:$0xf]
      %v2808 = vld [vmem:[%s2728 + $0x13c] sm:$0xf]
      %v2809 = vld [vmem:[%s2728 + $0x140] sm:$0xf]
      %v2810 = vld [vmem:[%s2728 + $0x144] sm:$0xf]
      %v2811 = vld [vmem:[%s2728 + $0x148] sm:$0xf]
      %v2812 = vld [vmem:[%s2728 + $0x14c] sm:$0xf]
      %v2813 = vld [vmem:[%s2728 + $0x150] sm:$0xf]
      %v2814 = vld [vmem:[%s2728 + $0x154] sm:$0xf]
      %v2815 = vld [vmem:[%s2728 + $0x158] sm:$0xf]
      %v2816 = vld [vmem:[%s2728 + $0x15c] sm:$0xf]
      %v2817 = vld [vmem:[%s2728 + $0x160] sm:$0xf]
      %v2818 = vld [vmem:[%s2728 + $0x164] sm:$0xf]
      %v2819 = vld [vmem:[%s2728 + $0x168] sm:$0xf]
      %v2820 = vld [vmem:[%s2728 + $0x16c] sm:$0xf]
      %v2821 = vld [vmem:[%s2728 + $0x170] sm:$0xf]
      %v2822 = vld [vmem:[%s2728 + $0x174] sm:$0xf]
      %v2823 = vld [vmem:[%s2728 + $0x178] sm:$0xf]
      %v2824 = vld [vmem:[%s2728 + $0x17c] sm:$0xf]
      %v2825 = vld [vmem:[%s2728 + $0x180] sm:$0xf]
      %v2826 = vld [vmem:[%s2728 + $0x184] sm:$0xf]
      %v2827 = vld [vmem:[%s2728 + $0x188] sm:$0xf]
      %v2828 = vld [vmem:[%s2728 + $0x18c] sm:$0xf]
      %v2829 = vld [vmem:[%s2728 + $0x190] sm:$0xf]
      %v2830 = vld [vmem:[%s2728 + $0x194] sm:$0xf]
      %v2831 = vld [vmem:[%s2728 + $0x198] sm:$0xf]
      %v2832 = vld [vmem:[%s2728 + $0x19c] sm:$0xf]
      %v2833 = vld [vmem:[%s2728 + $0x1a0] sm:$0xf]
      %v2834 = vld [vmem:[%s2728 + $0x1a4] sm:$0xf]
      %v2835 = vld [vmem:[%s2728 + $0x1a8] sm:$0xf]
      %v2836 = vld [vmem:[%s2728 + $0x1ac] sm:$0xf]
      %v2837 = vld [vmem:[%s2728 + $0x1b0] sm:$0xf]
      %v2838 = vld [vmem:[%s2728 + $0x1b4] sm:$0xf]
      %v2839 = vld [vmem:[%s2728 + $0x1b8] sm:$0xf]
      %v2840 = vld [vmem:[%s2728 + $0x1bc] sm:$0xf]
      %v2841 = vld [vmem:[%s2728 + $0x1c0] sm:$0xf]
      %v2842 = vld [vmem:[%s2728 + $0x1c4] sm:$0xf]
      %v2843 = vld [vmem:[%s2728 + $0x1c8] sm:$0xf]
      %v2844 = vld [vmem:[%s2728 + $0x1cc] sm:$0xf]
      %v2845 = vld [vmem:[%s2728 + $0x1d0] sm:$0xf]
      %v2846 = vld [vmem:[%s2728 + $0x1d4] sm:$0xf]
      %v2847 = vld [vmem:[%s2728 + $0x1d8] sm:$0xf]
      %v2848 = vld [vmem:[%s2728 + $0x1dc] sm:$0xf]
      %v2849 = vld [vmem:[%s2728 + $0x1e0] sm:$0xf]
      %v2850 = vld [vmem:[%s2728 + $0x1e4] sm:$0xf]
      %v2851 = vld [vmem:[%s2728 + $0x1e8] sm:$0xf]
      %v2852 = vld [vmem:[%s2728 + $0x1ec] sm:$0xf]
      %v2853 = vld [vmem:[%s2728 + $0x1f0] sm:$0xf]
      %v2854 = vld [vmem:[%s2728 + $0x1f4] sm:$0xf]
      %v2855 = vld [vmem:[%s2728 + $0x1f8] sm:$0xf]
      %v2856 = vld [vmem:[%s2728 + $0x1fc] sm:$0xf]
      %v2857 = vld [vmem:[%s2728 + $0x200] sm:$0xf]
      %v2858 = vld [vmem:[%s2728 + $0x204] sm:$0xf]
      %v2859 = vld [vmem:[%s2728 + $0x208] sm:$0xf]
      %v2860 = vld [vmem:[%s2728 + $0x20c] sm:$0xf]
      %v2861 = vld [vmem:[%s2728 + $0x210] sm:$0xf]
      %v2862 = vld [vmem:[%s2728 + $0x214] sm:$0xf]
      %v2863 = vld [vmem:[%s2728 + $0x218] sm:$0xf]
      %v2864 = vld [vmem:[%s2728 + $0x21c] sm:$0xf]
      %v2865 = vld [vmem:[%s2728 + $0x220] sm:$0xf]
      %v2866 = vld [vmem:[%s2728 + $0x224] sm:$0xf]
      %v2867 = vld [vmem:[%s2728 + $0x228] sm:$0xf]
      %v2868 = vld [vmem:[%s2728 + $0x22c] sm:$0xf]
      %v2869 = vld [vmem:[%s2728 + $0x230] sm:$0xf]
      %v2870 = vld [vmem:[%s2728 + $0x234] sm:$0xf]
      %v2871 = vld [vmem:[%s2728 + $0x238] sm:$0xf]
      %v2872 = vld [vmem:[%s2728 + $0x23c] sm:$0xf]
      %v2873 = vld [vmem:[%s3 + $0x1] sm:$0x1]
      %v2874 = vlaneseq
      %v2875 = vshrl.u32 %v2874, 7
      %v2876 = vsub.s32 0, %v2875
      %v2877 = vrot.slane %v2873, %v2876
      %v3022 = vunpack.c.l.b16 %v2729
      %v3023 = vunpack.c.l.b16 %v2730
      %v3024 = vunpack.c.l.b16 %v2731
      %v3025 = vunpack.c.l.b16 %v2732
      %v3026 = vunpack.c.l.b16 %v2733
      %v3027 = vunpack.c.l.b16 %v2734
      %v3028 = vunpack.c.l.b16 %v2735
      %v3029 = vunpack.c.l.b16 %v2736
      %v3030 = vunpack.c.l.b16 %v2737
      %v3031 = vunpack.c.l.b16 %v2738
      %v3032 = vunpack.c.l.b16 %v2739
      %v3033 = vunpack.c.l.b16 %v2740
      %v3034 = vunpack.c.l.b16 %v2741
      %v3035 = vunpack.c.l.b16 %v2742
      %v3036 = vunpack.c.l.b16 %v2743
      %v3037 = vunpack.c.l.b16 %v2744
      %v3038 = vunpack.c.l.b16 %v2745
      %v3039 = vunpack.c.l.b16 %v2746
      %v3040 = vunpack.c.l.b16 %v2747
      %v3041 = vunpack.c.l.b16 %v2748
      %v3042 = vunpack.c.l.b16 %v2749
      %v3043 = vunpack.c.l.b16 %v2750
      %v3044 = vunpack.c.l.b16 %v2751
      %v3045 = vunpack.c.l.b16 %v2752
      %v3046 = vunpack.c.l.b16 %v2753
      %v3047 = vunpack.c.l.b16 %v2754
      %v3048 = vunpack.c.l.b16 %v2755
      %v3049 = vunpack.c.l.b16 %v2756
      %v3050 = vunpack.c.l.b16 %v2757
      %v3051 = vunpack.c.l.b16 %v2758
      %v3052 = vunpack.c.l.b16 %v2759
      %v3053 = vunpack.c.l.b16 %v2760
      %v3054 = vunpack.c.l.b16 %v2761
      %v3055 = vunpack.c.l.b16 %v2762
      %v3056 = vunpack.c.l.b16 %v2763
      %v3057 = vunpack.c.l.b16 %v2764
      %v3058 = vunpack.c.l.b16 %v2765
      %v3059 = vunpack.c.l.b16 %v2766
      %v3060 = vunpack.c.l.b16 %v2767
      %v3061 = vunpack.c.l.b16 %v2768
      %v3062 = vunpack.c.l.b16 %v2769
      %v3063 = vunpack.c.l.b16 %v2770
      %v3064 = vunpack.c.l.b16 %v2771
      %v3065 = vunpack.c.l.b16 %v2772
      %v3066 = vunpack.c.l.b16 %v2773
      %v3067 = vunpack.c.l.b16 %v2774
      %v3068 = vunpack.c.l.b16 %v2775
      %v3069 = vunpack.c.l.b16 %v2776
      %v3070 = vunpack.c.l.b16 %v2777
      %v3071 = vunpack.c.l.b16 %v2778
      %v3072 = vunpack.c.l.b16 %v2779
      %v3073 = vunpack.c.l.b16 %v2780
      %v3074 = vunpack.c.l.b16 %v2781
      %v3075 = vunpack.c.l.b16 %v2782
      %v3076 = vunpack.c.l.b16 %v2783
      %v3077 = vunpack.c.l.b16 %v2784
      %v3078 = vunpack.c.l.b16 %v2785
      %v3079 = vunpack.c.l.b16 %v2786
      %v3080 = vunpack.c.l.b16 %v2787
      %v3081 = vunpack.c.l.b16 %v2788
      %v3082 = vunpack.c.l.b16 %v2789
      %v3083 = vunpack.c.l.b16 %v2790
      %v3084 = vunpack.c.l.b16 %v2791
      %v3085 = vunpack.c.l.b16 %v2792
      %v3086 = vunpack.c.l.b16 %v2793
      %v3087 = vunpack.c.l.b16 %v2794
      %v3088 = vunpack.c.l.b16 %v2795
      %v3089 = vunpack.c.l.b16 %v2796
      %v3090 = vunpack.c.l.b16 %v2797
      %v3091 = vunpack.c.l.b16 %v2798
      %v3092 = vunpack.c.l.b16 %v2799
      %v3093 = vunpack.c.l.b16 %v2800
      %v3094 = vunpack.c.l.b16 %v2801
      %v3095 = vunpack.c.l.b16 %v2802
      %v3096 = vunpack.c.l.b16 %v2803
      %v3097 = vunpack.c.l.b16 %v2804
      %v3098 = vunpack.c.l.b16 %v2805
      %v3099 = vunpack.c.l.b16 %v2806
      %v3100 = vunpack.c.l.b16 %v2807
      %v3101 = vunpack.c.l.b16 %v2808
      %v3102 = vunpack.c.l.b16 %v2809
      %v3103 = vunpack.c.l.b16 %v2810
      %v3104 = vunpack.c.l.b16 %v2811
      %v3105 = vunpack.c.l.b16 %v2812
      %v3106 = vunpack.c.l.b16 %v2813
      %v3107 = vunpack.c.l.b16 %v2814
      %v3108 = vunpack.c.l.b16 %v2815
      %v3109 = vunpack.c.l.b16 %v2816
      %v3110 = vunpack.c.l.b16 %v2817
      %v3111 = vunpack.c.l.b16 %v2818
      %v3112 = vunpack.c.l.b16 %v2819
      %v3113 = vunpack.c.l.b16 %v2820
      %v3114 = vunpack.c.l.b16 %v2821
      %v3115 = vunpack.c.l.b16 %v2822
      %v3116 = vunpack.c.l.b16 %v2823
      %v3117 = vunpack.c.l.b16 %v2824
      %v3118 = vunpack.c.l.b16 %v2825
      %v3119 = vunpack.c.l.b16 %v2826
      %v3120 = vunpack.c.l.b16 %v2827
      %v3121 = vunpack.c.l.b16 %v2828
      %v3122 = vunpack.c.l.b16 %v2829
      %v3123 = vunpack.c.l.b16 %v2830
      %v3124 = vunpack.c.l.b16 %v2831
      %v3125 = vunpack.c.l.b16 %v2832
      %v3126 = vunpack.c.l.b16 %v2833
      %v3127 = vunpack.c.l.b16 %v2834
      %v3128 = vunpack.c.l.b16 %v2835
      %v3129 = vunpack.c.l.b16 %v2836
      %v3130 = vunpack.c.l.b16 %v2837
      %v3131 = vunpack.c.l.b16 %v2838
      %v3132 = vunpack.c.l.b16 %v2839
      %v3133 = vunpack.c.l.b16 %v2840
      %v3134 = vunpack.c.l.b16 %v2841
      %v3135 = vunpack.c.l.b16 %v2842
      %v3136 = vunpack.c.l.b16 %v2843
      %v3137 = vunpack.c.l.b16 %v2844
      %v3138 = vunpack.c.l.b16 %v2845
      %v3139 = vunpack.c.l.b16 %v2846
      %v3140 = vunpack.c.l.b16 %v2847
      %v3141 = vunpack.c.l.b16 %v2848
      %v3142 = vunpack.c.l.b16 %v2849
      %v3143 = vunpack.c.l.b16 %v2850
      %v3144 = vunpack.c.l.b16 %v2851
      %v3145 = vunpack.c.l.b16 %v2852
      %v3146 = vunpack.c.l.b16 %v2853
      %v3147 = vunpack.c.l.b16 %v2854
      %v3148 = vunpack.c.l.b16 %v2855
      %v3149 = vunpack.c.l.b16 %v2856
      %v3150 = vunpack.c.l.b16 %v2857
      %v3151 = vunpack.c.l.b16 %v2858
      %v3152 = vunpack.c.l.b16 %v2859
      %v3153 = vunpack.c.l.b16 %v2860
      %v3154 = vunpack.c.l.b16 %v2861
      %v3155 = vunpack.c.l.b16 %v2862
      %v3156 = vunpack.c.l.b16 %v2863
      %v3157 = vunpack.c.l.b16 %v2864
      %v3158 = vunpack.c.l.b16 %v2865
      %v3159 = vunpack.c.l.b16 %v2866
      %v3160 = vunpack.c.l.b16 %v2867
      %v3161 = vunpack.c.l.b16 %v2868
      %v3162 = vunpack.c.l.b16 %v2869
      %v3163 = vunpack.c.l.b16 %v2870
      %v3164 = vunpack.c.l.b16 %v2871
      %v3165 = vunpack.c.l.b16 %v2872
      %v3166 = vpack.c.b16 %v3023, %v3022
      %v3167 = vpack.c.b16 %v3025, %v3024
      %v3168 = vpack.c.b16 %v3027, %v3026
      %v3169 = vpack.c.b16 %v3029, %v3028
      %v3170 = vpack.c.b16 %v3031, %v3030
      %v3171 = vpack.c.b16 %v3033, %v3032
      %v3172 = vpack.c.b16 %v3035, %v3034
      %v3173 = vpack.c.b16 %v3037, %v3036
      %v3174 = vpack.c.b16 %v3039, %v3038
      %v3175 = vpack.c.b16 %v3041, %v3040
      %v3176 = vpack.c.b16 %v3043, %v3042
      %v3177 = vpack.c.b16 %v3045, %v3044
      %v3178 = vpack.c.b16 %v3047, %v3046
      %v3179 = vpack.c.b16 %v3049, %v3048
      %v3180 = vpack.c.b16 %v3051, %v3050
      %v3181 = vpack.c.b16 %v3053, %v3052
      %v3182 = vpack.c.b16 %v3055, %v3054
      %v3183 = vpack.c.b16 %v3057, %v3056
      %v3184 = vpack.c.b16 %v3059, %v3058
      %v3185 = vpack.c.b16 %v3061, %v3060
      %v3186 = vpack.c.b16 %v3063, %v3062
      %v3187 = vpack.c.b16 %v3065, %v3064
      %v3188 = vpack.c.b16 %v3067, %v3066
      %v3189 = vpack.c.b16 %v3069, %v3068
      %v3190 = vpack.c.b16 %v3071, %v3070
      %v3191 = vpack.c.b16 %v3073, %v3072
      %v3192 = vpack.c.b16 %v3075, %v3074
      %v3193 = vpack.c.b16 %v3077, %v3076
      %v3194 = vpack.c.b16 %v3079, %v3078
      %v3195 = vpack.c.b16 %v3081, %v3080
      %v3196 = vpack.c.b16 %v3083, %v3082
      %v3197 = vpack.c.b16 %v3085, %v3084
      %v3198 = vpack.c.b16 %v3087, %v3086
      %v3199 = vpack.c.b16 %v3089, %v3088
      %v3200 = vpack.c.b16 %v3091, %v3090
      %v3201 = vpack.c.b16 %v3093, %v3092
      %v3202 = vpack.c.b16 %v3095, %v3094
      %v3203 = vpack.c.b16 %v3097, %v3096
      %v3204 = vpack.c.b16 %v3099, %v3098
      %v3205 = vpack.c.b16 %v3101, %v3100
      %v3206 = vpack.c.b16 %v3103, %v3102
      %v3207 = vpack.c.b16 %v3105, %v3104
      %v3208 = vpack.c.b16 %v3107, %v3106
      %v3209 = vpack.c.b16 %v3109, %v3108
      %v3210 = vpack.c.b16 %v3111, %v3110
      %v3211 = vpack.c.b16 %v3113, %v3112
      %v3212 = vpack.c.b16 %v3115, %v3114
      %v3213 = vpack.c.b16 %v3117, %v3116
      %v3214 = vpack.c.b16 %v3119, %v3118
      %v3215 = vpack.c.b16 %v3121, %v3120
      %v3216 = vpack.c.b16 %v3123, %v3122
      %v3217 = vpack.c.b16 %v3125, %v3124
      %v3218 = vpack.c.b16 %v3127, %v3126
      %v3219 = vpack.c.b16 %v3129, %v3128
      %v3220 = vpack.c.b16 %v3131, %v3130
      %v3221 = vpack.c.b16 %v3133, %v3132
      %v3222 = vpack.c.b16 %v3135, %v3134
      %v3223 = vpack.c.b16 %v3137, %v3136
      %v3224 = vpack.c.b16 %v3139, %v3138
      %v3225 = vpack.c.b16 %v3141, %v3140
      %v3226 = vpack.c.b16 %v3143, %v3142
      %v3227 = vpack.c.b16 %v3145, %v3144
      %v3228 = vpack.c.b16 %v3147, %v3146
      %v3229 = vpack.c.b16 %v3149, %v3148
      %v3230 = vpack.c.b16 %v3151, %v3150
      %v3231 = vpack.c.b16 %v3153, %v3152
      %v3232 = vpack.c.b16 %v3155, %v3154
      %v3233 = vpack.c.b16 %v3157, %v3156
      %v3234 = vpack.c.b16 %v3159, %v3158
      %v3235 = vpack.c.b16 %v3161, %v3160
      %v3236 = vpack.c.b16 %v3163, %v3162
      %v3237 = vpack.c.b16 %v3165, %v3164
      %3310 = vmatprep.subr.bf16.mxu0 0
      %3311 = vmatpush1.bf16.msra.mxu0 %v3166
      %3312 = vmatprep.subr.bf16.mxu0 0
      %3313 = vmatpush1.bf16.msra.mxu0 %v3167
      %3314 = vmatprep.subr.bf16.mxu0 0
      %3315 = vmatpush1.bf16.msra.mxu0 %v3168
      %3316 = vmatprep.subr.bf16.mxu0 0
      %3317 = vmatpush1.bf16.msra.mxu0 %v3169
      %3318 = vmatprep.subr.bf16.mxu0 0
      %3319 = vmatpush1.bf16.msra.mxu0 %v3170
      %3320 = vmatprep.subr.bf16.mxu0 0
      %3321 = vmatpush1.bf16.msra.mxu0 %v3171
      %3322 = vmatprep.subr.bf16.mxu0 0
      %3323 = vmatpush1.bf16.msra.mxu0 %v3172
      %3324 = vmatprep.subr.bf16.mxu0 0
      %3325 = vmatpush1.bf16.msra.mxu0 %v3173
      %3326 = vmatprep.subr.bf16.mxu0 0
      %3327 = vmatpush1.bf16.msra.mxu0 %v3174
      %3328 = vmatprep.subr.bf16.mxu0 0
      %3329 = vmatpush1.bf16.msra.mxu0 %v3175
      %3330 = vmatprep.subr.bf16.mxu0 0
      %3331 = vmatpush1.bf16.msra.mxu0 %v3176
      %3332 = vmatprep.subr.bf16.mxu0 0
      %3333 = vmatpush1.bf16.msra.mxu0 %v3177
      %3334 = vmatprep.subr.bf16.mxu0 0
      %3335 = vmatpush1.bf16.msra.mxu0 %v3178
      %3336 = vmatprep.subr.bf16.mxu0 0
      %3337 = vmatpush1.bf16.msra.mxu0 %v3179
      %3338 = vmatprep.subr.bf16.mxu0 0
      %3339 = vmatpush1.bf16.msra.mxu0 %v3180
      %3340 = vmatprep.subr.bf16.mxu0 0
      %3341 = vmatpush1.bf16.msra.mxu0 %v3181
      %3342 = vmatprep.mubr.bf16.mxu0 %v2574
      %3343 = vmatmul.mubr.bf16.gmra.mrb[0].mxu0 %v2424
      %v3344 = vpop.f32.mrb[0].mxu0
      %v3345 = vadd.f32 %v2877, %v3344
      %v3346 = vpop.f32.mrb[0].mxu0
      %v3347 = vpop.f32.mrb[0].mxu0
      %v3348 = vadd.f32 %v2877, %v3347
      %v3349 = vpop.f32.mrb[0].mxu0
      %3350 = vmatprep.mubr.bf16.mxu0 %v2575
      %3351 = vmatmul.mubr.bf16.gmra.mrb[0].mxu0 %v2425
      %v3352 = vpop.f32.mrb[0].mxu0
      %v3353 = vadd.f32 %v2877, %v3352
      %v3354 = vpop.f32.mrb[0].mxu0
      %v3355 = vpop.f32.mrb[0].mxu0
      %v3356 = vadd.f32 %v2877, %v3355
      %v3357 = vpop.f32.mrb[0].mxu0
      %3358 = vmatprep.mubr.bf16.mxu0 %v2574
      %3359 = vmatmul.mubr.bf16.gmra.mrb[0].mxu0 %v2424
      %v3360 = vpop.f32.mrb[0].mxu0
      %v3361 = vadd.f32 %v2877, %v3360
      %v3362 = vpop.f32.mrb[0].mxu0
      %v3363 = vpop.f32.mrb[0].mxu0
      %v3364 = vadd.f32 %v2877, %v3363
      %v3365 = vpop.f32.mrb[0].mxu0
      %3366 = vmatprep.mubr.bf16.mxu0 %v2576
      %3367 = vmatmul.mubr.bf16.gmra.mrb[0].mxu0 %v2426
      %v3368 = vpop.f32.mrb[0].mxu0
      %v3369 = vadd.f32 %v2877, %v3368
      %v3370 = vpop.f32.mrb[0].mxu0
      %v3371 = vpop.f32.mrb[0].mxu0
      %v3372 = vadd.f32 %v2877, %v3371
      %v3373 = vpop.f32.mrb[0].mxu0
      %3374 = vmatprep.mubr.bf16.mxu0 %v2577
      %3375 = vmatmul.mubr.bf16.gmra.mrb[0].mxu0 %v2427
      %v3376 = vpop.f32.mrb[0].mxu0
      %v3377 = vadd.f32 %v2877, %v3376
      %v3378 = vpop.f32.mrb[0].mxu0
      %v3379 = vpop.f32.mrb[0].mxu0
      %v3380 = vadd.f32 %v2877, %v3379
      %v3381 = vpop.f32.mrb[0].mxu0
      %3382 = vmatprep.mubr.bf16.mxu0 %v2578
      %3383 = vmatmul.mubr.bf16.gmra.mrb[0].mxu0 %v2428
      %v3384 = vpop.f32.mrb[0].mxu0
      %v3385 = vadd.f32 %v2877, %v3384
      %v3386 = vpop.f32.mrb[0].mxu0
      %v3387 = vpop.f32.mrb[0].mxu0
      %v3388 = vadd.f32 %v2877, %v3387
      %v3389 = vpop.f32.mrb[0].mxu0
      %3390 = vmatprep.mubr.bf16.mxu0 %v2579
      %3391 = vmatmul.mubr.bf16.gmra.mrb[0].mxu0 %v2429
      %v3392 = vpop.f32.mrb[0].mxu0
      %v3393 = vadd.f32 %v2877, %v3392
      %v3394 = vpop.f32.mrb[0].mxu0
      %v3395 = vpop.f32.mrb[0].mxu0
      %v3396 = vadd.f32 %v2877, %v3395
      %v3397 = vpop.f32.mrb[0].mxu0
      %3398 = vmatprep.mubr.bf16.mxu0 %v2580
      %3399 = vmatmul.mubr.bf16.gmra.mrb[0].mxu0 %v2430
      %v3400 = vpop.f32.mrb[0].mxu0
      %v3401 = vadd.f32 %v2877, %v3400
      %v3402 = vpop.f32.mrb[0].mxu0
      %v3403 = vpop.f32.mrb[0].mxu0
      %v3404 = vadd.f32 %v2877, %v3403
      %v3405 = vpop.f32.mrb[0].mxu0
      %3406 = vmatprep.mubr.bf16.mxu0 %v2581
      %3407 = vmatmul.mubr.bf16.gmra.mrb[0].mxu0 %v2431
      %v3408 = vpop.f32.mrb[0].mxu0
      %v3409 = vadd.f32 %v2877, %v3408
      %v3410 = vpop.f32.mrb[0].mxu0
      %v3411 = vpop.f32.mrb[0].mxu0
      %v3412 = vadd.f32 %v2877, %v3411
      %v3413 = vpop.f32.mrb[0].mxu0
      %3414 = vmatprep.mubr.bf16.mxu0 %v2582
      %3415 = vmatmul.mubr.bf16.gmra.mrb[0].mxu0 %v2432
      %v3416 = vpop.f32.mrb[0].mxu0
      %v3417 = vadd.f32 %v2877, %v3416
      %v3418 = vpop.f32.mrb[0].mxu0
      %v3419 = vpop.f32.mrb[0].mxu0
      %v3420 = vadd.f32 %v2877, %v3419
      %v3421 = vpop.f32.mrb[0].mxu0
      %3422 = vmatprep.mubr.bf16.mxu0 %v2583
      %3423 = vmatmul.mubr.bf16.gmra.mrb[0].mxu0 %v2433
      %v3424 = vpop.f32.mrb[0].mxu0
      %v3425 = vadd.f32 %v2877, %v3424
      %v3426 = vpop.f32.mrb[0].mxu0
      %v3427 = vpop.f32.mrb[0].mxu0
      %v3428 = vadd.f32 %v2877, %v3427
      %v3429 = vpop.f32.mrb[0].mxu0
      %3430 = vmatprep.mubr.bf16.mxu0 %v2584
      %3431 = vmatmul.mubr.bf16.gmra.mrb[0].mxu0 %v2434
      %v3432 = vpop.f32.mrb[0].mxu0
      %v3433 = vadd.f32 %v2877, %v3432
      %v3434 = vpop.f32.mrb[0].mxu0
      %v3435 = vpop.f32.mrb[0].mxu0
      %v3436 = vadd.f32 %v2877, %v3435
      %v3437 = vpop.f32.mrb[0].mxu0
      %3438 = vmatprep.mubr.bf16.mxu0 %v2585
      %3439 = vmatmul.mubr.bf16.gmra.mrb[0].mxu0 %v2435
      %v3440 = vpop.f32.mrb[0].mxu0
      %v3441 = vadd.f32 %v2877, %v3440
      %v3442 = vpop.f32.mrb[0].mxu0
      %v3443 = vpop.f32.mrb[0].mxu0
      %v3444 = vadd.f32 %v2877, %v3443
      %v3445 = vpop.f32.mrb[0].mxu0
      %3446 = vmatprep.mubr.bf16.mxu0 %v2586
      %3447 = vmatmul.mubr.bf16.gmra.mrb[0].mxu0 %v2436
      %v3448 = vpop.f32.mrb[0].mxu0
      %v3449 = vadd.f32 %v2877, %v3448
      %v3450 = vpop.f32.mrb[0].mxu0
      %v3451 = vpop.f32.mrb[0].mxu0
      %v3452 = vadd.f32 %v2877, %v3451
      %v3453 = vpop.f32.mrb[0].mxu0
      %3454 = vmatprep.mubr.bf16.mxu0 %v2587
      %3455 = vmatmul.mubr.bf16.gmra.mrb[0].mxu0 %v2437
      %v3456 = vpop.f32.mrb[0].mxu0
      %v3457 = vadd.f32 %v2877, %v3456
      %v3458 = vpop.f32.mrb[0].mxu0
      %v3459 = vpop.f32.mrb[0].mxu0
      %v3460 = vadd.f32 %v2877, %v3459
      %v3461 = vpop.f32.mrb[0].mxu0
      %3462 = vmatprep.mubr.bf16.mxu0 %v2588
      %3463 = vmatmul.mubr.bf16.gmra.mrb[0].mxu0 %v2438
      %v3464 = vpop.f32.mrb[0].mxu0
      %v3465 = vadd.f32 %v2877, %v3464
      %v3466 = vpop.f32.mrb[0].mxu0
      %v3467 = vpop.f32.mrb[0].mxu0
      %v3468 = vadd.f32 %v2877, %v3467
      %v3469 = vpop.f32.mrb[0].mxu0
      %3470 = vdwg.mxu0
      %3471 = vmatprep.subr.bf16.mxu0 0
      %3472 = vmatpush1.bf16.msra.mxu0 %v3182
      %3473 = vmatprep.subr.bf16.mxu0 0
      %3474 = vmatpush1.bf16.msra.mxu0 %v3183
      %3475 = vmatprep.subr.bf16.mxu0 0
      %3476 = vmatpush1.bf16.msra.mxu0 %v3184
      %3477 = vmatprep.subr.bf16.mxu0 0
      %3478 = vmatpush1.bf16.msra.mxu0 %v3185
      %3479 = vmatprep.subr.bf16.mxu0 0
      %3480 = vmatpush1.bf16.msra.mxu0 %v3186
      %3481 = vmatprep.subr.bf16.mxu0 0
      %3482 = vmatpush1.bf16.msra.mxu0 %v3187
      %3483 = vmatprep.subr.bf16.mxu0 0
      %3484 = vmatpush1.bf16.msra.mxu0 %v3188
      %3485 = vmatprep.subr.bf16.mxu0 0
      %3486 = vmatpush1.bf16.msra.mxu0 %v3189
      %3487 = vmatprep.subr.bf16.mxu0 0
      %3488 = vmatpush1.bf16.msra.mxu0 %v3190
      %3489 = vmatprep.subr.bf16.mxu0 0
      %3490 = vmatpush1.bf16.msra.mxu0 %v3191
      %3491 = vmatprep.subr.bf16.mxu0 0
      %3492 = vmatpush1.bf16.msra.mxu0 %v3192
      %3493 = vmatprep.subr.bf16.mxu0 0
      %3494 = vmatpush1.bf16.msra.mxu0 %v3193
      %3495 = vmatprep.subr.bf16.mxu0 0
      %3496 = vmatpush1.bf16.msra.mxu0 %v3194
      %3497 = vmatprep.subr.bf16.mxu0 0
      %3498 = vmatpush1.bf16.msra.mxu0 %v3195
      %3499 = vmatprep.subr.bf16.mxu0 0
      %3500 = vmatpush1.bf16.msra.mxu0 %v3196
      %3501 = vmatprep.subr.bf16.mxu0 0
      %3502 = vmatpush1.bf16.msra.mxu0 %v3197
      %3503 = vmatprep.mubr.bf16.mxu0 %v2425
      %3504 = vmatmul.mubr.bf16.gmra.mrb[0].mxu0 %v2694
      %v3505 = vpop.f32.mrb[0].mxu0
      %v3506 = vadd.f32 %v3345, %v3505
      %v3507 = vpop.f32.mrb[0].mxu0
      %v3508 = vpop.f32.mrb[0].mxu0
      %v3509 = vadd.f32 %v3348, %v3508
      %v3510 = vpop.f32.mrb[0].mxu0
      %3511 = vmatprep.mubr.bf16.mxu0 %v2424
      %3512 = vmatmul.mubr.bf16.gmra.mrb[0].mxu0 %v2695
      %v3513 = vpop.f32.mrb[0].mxu0
      %v3514 = vadd.f32 %v3353, %v3513
      %v3515 = vpop.f32.mrb[0].mxu0
      %v3516 = vpop.f32.mrb[0].mxu0
      %v3517 = vadd.f32 %v3356, %v3516
      %v3518 = vpop.f32.mrb[0].mxu0
      %3519 = vmatprep.mubr.bf16.mxu0 %v2426
      %3520 = vmatmul.mubr.bf16.gmra.mrb[0].mxu0 %v2694
      %v3521 = vpop.f32.mrb[0].mxu0
      %v3522 = vadd.f32 %v3361, %v3521
      %v3523 = vpop.f32.mrb[0].mxu0
      %v3524 = vpop.f32.mrb[0].mxu0
      %v3525 = vadd.f32 %v3364, %v3524
      %v3526 = vpop.f32.mrb[0].mxu0
      %3527 = vmatprep.mubr.bf16.mxu0 %v2427
      %3528 = vmatmul.mubr.bf16.gmra.mrb[0].mxu0 %v2696
      %v3529 = vpop.f32.mrb[0].mxu0
      %v3530 = vadd.f32 %v3369, %v3529
      %v3531 = vpop.f32.mrb[0].mxu0
      %v3532 = vpop.f32.mrb[0].mxu0
      %v3533 = vadd.f32 %v3372, %v3532
      %v3534 = vpop.f32.mrb[0].mxu0
      %3535 = vmatprep.mubr.bf16.mxu0 %v2428
      %3536 = vmatmul.mubr.bf16.gmra.mrb[0].mxu0 %v2697
      %v3537 = vpop.f32.mrb[0].mxu0
      %v3538 = vadd.f32 %v3377, %v3537
      %v3539 = vpop.f32.mrb[0].mxu0
      %v3540 = vpop.f32.mrb[0].mxu0
      %v3541 = vadd.f32 %v3380, %v3540
      %v3542 = vpop.f32.mrb[0].mxu0
      %3543 = vmatprep.mubr.bf16.mxu0 %v2429
      %3544 = vmatmul.mubr.bf16.gmra.mrb[0].mxu0 %v2698
      %v3545 = vpop.f32.mrb[0].mxu0
      %v3546 = vadd.f32 %v3385, %v3545
      %v3547 = vpop.f32.mrb[0].mxu0
      %v3548 = vpop.f32.mrb[0].mxu0
      %v3549 = vadd.f32 %v3388, %v3548
      %v3550 = vpop.f32.mrb[0].mxu0
      %3551 = vmatprep.mubr.bf16.mxu0 %v2430
      %3552 = vmatmul.mubr.bf16.gmra.mrb[0].mxu0 %v2699
      %v3553 = vpop.f32.mrb[0].mxu0
      %v3554 = vadd.f32 %v3393, %v3553
      %v3555 = vpop.f32.mrb[0].mxu0
      %v3556 = vpop.f32.mrb[0].mxu0
      %v3557 = vadd.f32 %v3396, %v3556
      %v3558 = vpop.f32.mrb[0].mxu0
      %3559 = vmatprep.mubr.bf16.mxu0 %v2431
      %3560 = vmatmul.mubr.bf16.gmra.mrb[0].mxu0 %v2700
      %v3561 = vpop.f32.mrb[0].mxu0
      %v3562 = vadd.f32 %v3401, %v3561
      %v3563 = vpop.f32.mrb[0].mxu0
      %v3564 = vpop.f32.mrb[0].mxu0
      %v3565 = vadd.f32 %v3404, %v3564
      %v3566 = vpop.f32.mrb[0].mxu0
      %3567 = vmatprep.mubr.bf16.mxu0 %v2432
      %3568 = vmatmul.mubr.bf16.gmra.mrb[0].mxu0 %v2701
      %v3569 = vpop.f32.mrb[0].mxu0
      %v3570 = vadd.f32 %v3409, %v3569
      %v3571 = vpop.f32.mrb[0].mxu0
      %v3572 = vpop.f32.mrb[0].mxu0
      %v3573 = vadd.f32 %v3412, %v3572
      %v3574 = vpop.f32.mrb[0].mxu0
      %3575 = vmatprep.mubr.bf16.mxu0 %v2433
      %3576 = vmatmul.mubr.bf16.gmra.mrb[0].mxu0 %v2702
      %v3577 = vpop.f32.mrb[0].mxu0
      %v3578 = vadd.f32 %v3417, %v3577
      %v3579 = vpop.f32.mrb[0].mxu0
      %v3580 = vpop.f32.mrb[0].mxu0
      %v3581 = vadd.f32 %v3420, %v3580
      %v3582 = vpop.f32.mrb[0].mxu0
      %3583 = vmatprep.mubr.bf16.mxu0 %v2434
      %3584 = vmatmul.mubr.bf16.gmra.mrb[0].mxu0 %v2703
      %v3585 = vpop.f32.mrb[0].mxu0
      %v3586 = vadd.f32 %v3425, %v3585
      %v3587 = vpop.f32.mrb[0].mxu0
      %v3588 = vpop.f32.mrb[0].mxu0
      %v3589 = vadd.f32 %v3428, %v3588
      %v3590 = vpop.f32.mrb[0].mxu0
      %3591 = vmatprep.mubr.bf16.mxu0 %v2435
      %3592 = vmatmul.mubr.bf16.gmra.mrb[0].mxu0 %v2704
      %v3593 = vpop.f32.mrb[0].mxu0
      %v3594 = vadd.f32 %v3433, %v3593
      %v3595 = vpop.f32.mrb[0].mxu0
      %v3596 = vpop.f32.mrb[0].mxu0
      %v3597 = vadd.f32 %v3436, %v3596
      %v3598 = vpop.f32.mrb[0].mxu0
      %3599 = vmatprep.mubr.bf16.mxu0 %v2436
      %3600 = vmatmul.mubr.bf16.gmra.mrb[0].mxu0 %v2705
      %v3601 = vpop.f32.mrb[0].mxu0
      %v3602 = vadd.f32 %v3441, %v3601
      %v3603 = vpop.f32.mrb[0].mxu0
      %v3604 = vpop.f32.mrb[0].mxu0
      %v3605 = vadd.f32 %v3444, %v3604
      %v3606 = vpop.f32.mrb[0].mxu0
      %3607 = vmatprep.mubr.bf16.mxu0 %v2437
      %3608 = vmatmul.mubr.bf16.gmra.mrb[0].mxu0 %v2706
      %v3609 = vpop.f32.mrb[0].mxu0
      %v3610 = vadd.f32 %v3449, %v3609
      %v3611 = vpop.f32.mrb[0].mxu0
      %v3612 = vpop.f32.mrb[0].mxu0
      %v3613 = vadd.f32 %v3452, %v3612
      %v3614 = vpop.f32.mrb[0].mxu0
      %3615 = vmatprep.mubr.bf16.mxu0 %v2438
      %3616 = vmatmul.mubr.bf16.gmra.mrb[0].mxu0 %v2707
      %v3617 = vpop.f32.mrb[0].mxu0
      %v3618 = vadd.f32 %v3457, %v3617
      %v3619 = vpop.f32.mrb[0].mxu0
      %v3620 = vpop.f32.mrb[0].mxu0
      %v3621 = vadd.f32 %v3460, %v3620
      %v3622 = vpop.f32.mrb[0].mxu0
      %3623 = vmatprep.mubr.bf16.mxu0 %v2709
      %3624 = vmatmul.mubr.bf16.gmra.mrb[0].mxu0 %v2708
      %v3625 = vpop.f32.mrb[0].mxu0
      %v3626 = vadd.f32 %v3465, %v3625
      %v3627 = vpop.f32.mrb[0].mxu0
      %v3628 = vpop.f32.mrb[0].mxu0
      %v3629 = vadd.f32 %v3468, %v3628
      %v3630 = vpop.f32.mrb[0].mxu0
      %3631 = vdwg.mxu0
      %3632 = vmatprep.subr.bf16.mxu0 0
      %3633 = vmatpush1.bf16.msra.mxu0 %v3198
      %3634 = vmatprep.subr.bf16.mxu0 0
      %3635 = vmatpush1.bf16.msra.mxu0 %v3199
      %3636 = vmatprep.subr.bf16.mxu0 0
      %3637 = vmatpush1.bf16.msra.mxu0 %v3200
      %3638 = vmatprep.subr.bf16.mxu0 0
      %3639 = vmatpush1.bf16.msra.mxu0 %v3201
      %3640 = vmatprep.subr.bf16.mxu0 0
      %3641 = vmatpush1.bf16.msra.mxu0 %v3202
      %3642 = vmatprep.subr.bf16.mxu0 0
      %3643 = vmatpush1.bf16.msra.mxu0 %v3203
      %3644 = vmatprep.subr.bf16.mxu0 0
      %3645 = vmatpush1.bf16.msra.mxu0 %v3204
      %3646 = vmatprep.subr.bf16.mxu0 0
      %3647 = vmatpush1.bf16.msra.mxu0 %v3205
      %3648 = vmatprep.subr.bf16.mxu0 0
      %3649 = vmatpush1.bf16.msra.mxu0 %v3206
      %3650 = vmatprep.subr.bf16.mxu0 0
      %3651 = vmatpush1.bf16.msra.mxu0 %v3207
      %3652 = vmatprep.subr.bf16.mxu0 0
      %3653 = vmatpush1.bf16.msra.mxu0 %v3208
      %3654 = vmatprep.subr.bf16.mxu0 0
      %3655 = vmatpush1.bf16.msra.mxu0 %v3209
      %3656 = vmatprep.subr.bf16.mxu0 0
      %3657 = vmatpush1.bf16.msra.mxu0 %v3210
      %3658 = vmatprep.subr.bf16.mxu0 0
      %3659 = vmatpush1.bf16.msra.mxu0 %v3211
      %3660 = vmatprep.subr.bf16.mxu0 0
      %3661 = vmatpush1.bf16.msra.mxu0 %v3212
      %3662 = vmatprep.subr.bf16.mxu0 0
      %3663 = vmatpush1.bf16.msra.mxu0 %v3213
      %3664 = vmatprep.mubr.bf16.mxu0 %v2695
      %3665 = vmatmul.mubr.bf16.gmra.mrb[0].mxu0 %v2575
      %v3666 = vpop.f32.mrb[0].mxu0
      %v3667 = vadd.f32 %v3506, %v3666
      %v3668 = vpop.f32.mrb[0].mxu0
      %v3669 = vpop.f32.mrb[0].mxu0
      %v3670 = vadd.f32 %v3509, %v3669
      %v3671 = vpop.f32.mrb[0].mxu0
      %3672 = vmatprep.mubr.bf16.mxu0 %v2694
      %3673 = vmatmul.mubr.bf16.gmra.mrb[0].mxu0 %v2574
      %v3674 = vpop.f32.mrb[0].mxu0
      %v3675 = vadd.f32 %v3514, %v3674
      %v3676 = vpop.f32.mrb[0].mxu0
      %v3677 = vpop.f32.mrb[0].mxu0
      %v3678 = vadd.f32 %v3517, %v3677
      %v3679 = vpop.f32.mrb[0].mxu0
      %3680 = vmatprep.mubr.bf16.mxu0 %v2696
      %3681 = vmatmul.mubr.bf16.gmra.mrb[0].mxu0 %v2576
      %v3682 = vpop.f32.mrb[0].mxu0
      %v3683 = vadd.f32 %v3522, %v3682
      %v3684 = vpop.f32.mrb[0].mxu0
      %v3685 = vpop.f32.mrb[0].mxu0
      %v3686 = vadd.f32 %v3525, %v3685
      %v3687 = vpop.f32.mrb[0].mxu0
      %3688 = vmatprep.mubr.bf16.mxu0 %v2697
      %3689 = vmatmul.mubr.bf16.gmra.mrb[0].mxu0 %v2577
      %v3690 = vpop.f32.mrb[0].mxu0
      %v3691 = vadd.f32 %v3530, %v3690
      %v3692 = vpop.f32.mrb[0].mxu0
      %v3693 = vpop.f32.mrb[0].mxu0
      %v3694 = vadd.f32 %v3533, %v3693
      %v3695 = vpop.f32.mrb[0].mxu0
      %3696 = vmatprep.mubr.bf16.mxu0 %v2698
      %3697 = vmatmul.mubr.bf16.gmra.mrb[0].mxu0 %v2578
      %v3698 = vpop.f32.mrb[0].mxu0
      %v3699 = vadd.f32 %v3538, %v3698
      %v3700 = vpop.f32.mrb[0].mxu0
      %v3701 = vpop.f32.mrb[0].mxu0
      %v3702 = vadd.f32 %v3541, %v3701
      %v3703 = vpop.f32.mrb[0].mxu0
      %3704 = vmatprep.mubr.bf16.mxu0 %v2699
      %3705 = vmatmul.mubr.bf16.gmra.mrb[0].mxu0 %v2579
      %v3706 = vpop.f32.mrb[0].mxu0
      %v3707 = vadd.f32 %v3546, %v3706
      %v3708 = vpop.f32.mrb[0].mxu0
      %v3709 = vpop.f32.mrb[0].mxu0
      %v3710 = vadd.f32 %v3549, %v3709
      %v3711 = vpop.f32.mrb[0].mxu0
      %3712 = vmatprep.mubr.bf16.mxu0 %v2700
      %3713 = vmatmul.mubr.bf16.gmra.mrb[0].mxu0 %v2580
      %v3714 = vpop.f32.mrb[0].mxu0
      %v3715 = vadd.f32 %v3554, %v3714
      %v3716 = vpop.f32.mrb[0].mxu0
      %v3717 = vpop.f32.mrb[0].mxu0
      %v3718 = vadd.f32 %v3557, %v3717
      %v3719 = vpop.f32.mrb[0].mxu0
      %3720 = vmatprep.mubr.bf16.mxu0 %v2701
      %3721 = vmatmul.mubr.bf16.gmra.mrb[0].mxu0 %v2581
      %v3722 = vpop.f32.mrb[0].mxu0
      %v3723 = vadd.f32 %v3562, %v3722
      %v3724 = vpop.f32.mrb[0].mxu0
      %v3725 = vpop.f32.mrb[0].mxu0
      %v3726 = vadd.f32 %v3565, %v3725
      %v3727 = vpop.f32.mrb[0].mxu0
      %3728 = vmatprep.mubr.bf16.mxu0 %v2702
      %3729 = vmatmul.mubr.bf16.gmra.mrb[0].mxu0 %v2582
      %v3730 = vpop.f32.mrb[0].mxu0
      %v3731 = vadd.f32 %v3570, %v3730
      %v3732 = vpop.f32.mrb[0].mxu0
      %v3733 = vpop.f32.mrb[0].mxu0
      %v3734 = vadd.f32 %v3573, %v3733
      %v3735 = vpop.f32.mrb[0].mxu0
      %3736 = vmatprep.mubr.bf16.mxu0 %v2703
      %3737 = vmatmul.mubr.bf16.gmra.mrb[0].mxu0 %v2583
      %v3738 = vpop.f32.mrb[0].mxu0
      %v3739 = vadd.f32 %v3578, %v3738
      %v3740 = vpop.f32.mrb[0].mxu0
      %v3741 = vpop.f32.mrb[0].mxu0
      %v3742 = vadd.f32 %v3581, %v3741
      %v3743 = vpop.f32.mrb[0].mxu0
      %3744 = vmatprep.mubr.bf16.mxu0 %v2704
      %3745 = vmatmul.mubr.bf16.gmra.mrb[0].mxu0 %v2584
      %v3746 = vpop.f32.mrb[0].mxu0
      %v3747 = vadd.f32 %v3586, %v3746
      %v3748 = vpop.f32.mrb[0].mxu0
      %v3749 = vpop.f32.mrb[0].mxu0
      %v3750 = vadd.f32 %v3589, %v3749
      %v3751 = vpop.f32.mrb[0].mxu0
      %3752 = vmatprep.mubr.bf16.mxu0 %v2705
      %3753 = vmatmul.mubr.bf16.gmra.mrb[0].mxu0 %v2585
      %v3754 = vpop.f32.mrb[0].mxu0
      %v3755 = vadd.f32 %v3594, %v3754
      %v3756 = vpop.f32.mrb[0].mxu0
      %v3757 = vpop.f32.mrb[0].mxu0
      %v3758 = vadd.f32 %v3597, %v3757
      %v3759 = vpop.f32.mrb[0].mxu0
      %3760 = vmatprep.mubr.bf16.mxu0 %v2706
      %3761 = vmatmul.mubr.bf16.gmra.mrb[0].mxu0 %v2586
      %v3762 = vpop.f32.mrb[0].mxu0
      %v3763 = vadd.f32 %v3602, %v3762
      %v3764 = vpop.f32.mrb[0].mxu0
      %v3765 = vpop.f32.mrb[0].mxu0
      %v3766 = vadd.f32 %v3605, %v3765
      %v3767 = vpop.f32.mrb[0].mxu0
      %3768 = vmatprep.mubr.bf16.mxu0 %v2707
      %3769 = vmatmul.mubr.bf16.gmra.mrb[0].mxu0 %v2587
      %v3770 = vpop.f32.mrb[0].mxu0
      %v3771 = vadd.f32 %v3610, %v3770
      %v3772 = vpop.f32.mrb[0].mxu0
      %v3773 = vpop.f32.mrb[0].mxu0
      %v3774 = vadd.f32 %v3613, %v3773
      %v3775 = vpop.f32.mrb[0].mxu0
      %3776 = vmatprep.mubr.bf16.mxu0 %v2708
      %3777 = vmatmul.mubr.bf16.gmra.mrb[0].mxu0 %v2588
      %v3778 = vpop.f32.mrb[0].mxu0
      %v3779 = vadd.f32 %v3618, %v3778
      %v3780 = vpop.f32.mrb[0].mxu0
      %v3781 = vpop.f32.mrb[0].mxu0
      %v3782 = vadd.f32 %v3621, %v3781
      %v3783 = vpop.f32.mrb[0].mxu0
      %3784 = vmatprep.mubr.bf16.mxu0 %v2727
      %3785 = vmatmul.mubr.bf16.gmra.mrb[0].mxu0 %v2719
      %v3786 = vpop.f32.mrb[0].mxu0
      %v3787 = vadd.f32 %v3626, %v3786
      %v3788 = vpop.f32.mrb[0].mxu0
      %v3789 = vpop.f32.mrb[0].mxu0
      %v3790 = vadd.f32 %v3629, %v3789
      %v3791 = vpop.f32.mrb[0].mxu0
      %3792 = vdwg.mxu0
      %3793 = vmatprep.subr.bf16.mxu0 0
      %3794 = vmatpush1.bf16.msra.mxu0 %v3214
      %3795 = vmatprep.subr.bf16.mxu0 0
      %3796 = vmatpush1.bf16.msra.mxu0 %v3215
      %3797 = vmatprep.subr.bf16.mxu0 0
      %3798 = vmatpush1.bf16.msra.mxu0 %v3216
      %3799 = vmatprep.subr.bf16.mxu0 0
      %3800 = vmatpush1.bf16.msra.mxu0 %v3217
      %3801 = vmatprep.subr.bf16.mxu0 0
      %3802 = vmatpush1.bf16.msra.mxu0 %v3218
      %3803 = vmatprep.subr.bf16.mxu0 0
      %3804 = vmatpush1.bf16.msra.mxu0 %v3219
      %3805 = vmatprep.subr.bf16.mxu0 0
      %3806 = vmatpush1.bf16.msra.mxu0 %v3220
      %3807 = vmatprep.subr.bf16.mxu0 0
      %3808 = vmatpush1.bf16.msra.mxu0 %v3221
      %3809 = vmatprep.subr.bf16.mxu0 0
      %3810 = vmatpush1.bf16.msra.mxu0 %v3222
      %3811 = vmatprep.subr.bf16.mxu0 0
      %3812 = vmatpush1.bf16.msra.mxu0 %v3223
      %3813 = vmatprep.subr.bf16.mxu0 0
      %3814 = vmatpush1.bf16.msra.mxu0 %v3224
      %3815 = vmatprep.subr.bf16.mxu0 0
      %3816 = vmatpush1.bf16.msra.mxu0 %v3225
      %3817 = vmatprep.subr.bf16.mxu0 0
      %3818 = vmatpush1.bf16.msra.mxu0 %v3226
      %3819 = vmatprep.subr.bf16.mxu0 0
      %3820 = vmatpush1.bf16.msra.mxu0 %v3227
      %3821 = vmatprep.subr.bf16.mxu0 0
      %3822 = vmatpush1.bf16.msra.mxu0 %v3228
      %3823 = vmatprep.subr.bf16.mxu0 0
      %3824 = vmatpush1.bf16.msra.mxu0 %v3229
      %3825 = vmatprep.mubr.bf16.mxu0 %v2574
      %3826 = vmatmul.mubr.bf16.gmra.mrb[0].mxu0 %v2424
      %v3827 = vpop.f32.mrb[0].mxu0
      %v3828 = vadd.f32 %v3667, %v3827
      %v3829 = vpop.f32.mrb[0].mxu0
      %v3830 = vpop.f32.mrb[0].mxu0
      %v3831 = vadd.f32 %v3670, %v3830
      %v3832 = vpop.f32.mrb[0].mxu0
      %3833 = vmatprep.mubr.bf16.mxu0 %v2576
      %3834 = vmatmul.mubr.bf16.gmra.mrb[0].mxu0 %v2426
      %v3835 = vpop.f32.mrb[0].mxu0
      %v3836 = vadd.f32 %v3675, %v3835
      %v3837 = vpop.f32.mrb[0].mxu0
      %v3838 = vpop.f32.mrb[0].mxu0
      %v3839 = vadd.f32 %v3678, %v3838
      %v3840 = vpop.f32.mrb[0].mxu0
      %3841 = vmatprep.mubr.bf16.mxu0 %v2577
      %3842 = vmatmul.mubr.bf16.gmra.mrb[0].mxu0 %v2427
      %v3843 = vpop.f32.mrb[0].mxu0
      %v3844 = vadd.f32 %v3683, %v3843
      %v3845 = vpop.f32.mrb[0].mxu0
      %v3846 = vpop.f32.mrb[0].mxu0
      %v3847 = vadd.f32 %v3686, %v3846
      %v3848 = vpop.f32.mrb[0].mxu0
      %3849 = vmatprep.mubr.bf16.mxu0 %v2578
      %3850 = vmatmul.mubr.bf16.gmra.mrb[0].mxu0 %v2428
      %v3851 = vpop.f32.mrb[0].mxu0
      %v3852 = vadd.f32 %v3691, %v3851
      %v3853 = vpop.f32.mrb[0].mxu0
      %v3854 = vpop.f32.mrb[0].mxu0
      %v3855 = vadd.f32 %v3694, %v3854
      %v3856 = vpop.f32.mrb[0].mxu0
      %3857 = vmatprep.mubr.bf16.mxu0 %v2579
      %3858 = vmatmul.mubr.bf16.gmra.mrb[0].mxu0 %v2429
      %v3859 = vpop.f32.mrb[0].mxu0
      %v3860 = vadd.f32 %v3699, %v3859
      %v3861 = vpop.f32.mrb[0].mxu0
      %v3862 = vpop.f32.mrb[0].mxu0
      %v3863 = vadd.f32 %v3702, %v3862
      %v3864 = vpop.f32.mrb[0].mxu0
      %3865 = vmatprep.mubr.bf16.mxu0 %v2580
      %3866 = vmatmul.mubr.bf16.gmra.mrb[0].mxu0 %v2430
      %v3867 = vpop.f32.mrb[0].mxu0
      %v3868 = vadd.f32 %v3707, %v3867
      %v3869 = vpop.f32.mrb[0].mxu0
      %v3870 = vpop.f32.mrb[0].mxu0
      %v3871 = vadd.f32 %v3710, %v3870
      %v3872 = vpop.f32.mrb[0].mxu0
      %3873 = vmatprep.mubr.bf16.mxu0 %v2581
      %3874 = vmatmul.mubr.bf16.gmra.mrb[0].mxu0 %v2431
      %v3875 = vpop.f32.mrb[0].mxu0
      %v3876 = vadd.f32 %v3715, %v3875
      %v3877 = vpop.f32.mrb[0].mxu0
      %v3878 = vpop.f32.mrb[0].mxu0
      %v3879 = vadd.f32 %v3718, %v3878
      %v3880 = vpop.f32.mrb[0].mxu0
      %3881 = vmatprep.mubr.bf16.mxu0 %v2582
      %3882 = vmatmul.mubr.bf16.gmra.mrb[0].mxu0 %v2432
      %v3883 = vpop.f32.mrb[0].mxu0
      %v3884 = vadd.f32 %v3723, %v3883
      %v3885 = vpop.f32.mrb[0].mxu0
      %v3886 = vpop.f32.mrb[0].mxu0
      %v3887 = vadd.f32 %v3726, %v3886
      %v3888 = vpop.f32.mrb[0].mxu0
      %3889 = vmatprep.mubr.bf16.mxu0 %v2583
      %3890 = vmatmul.mubr.bf16.gmra.mrb[0].mxu0 %v2433
      %v3891 = vpop.f32.mrb[0].mxu0
      %v3892 = vadd.f32 %v3731, %v3891
      %v3893 = vpop.f32.mrb[0].mxu0
      %v3894 = vpop.f32.mrb[0].mxu0
      %v3895 = vadd.f32 %v3734, %v3894
      %v3896 = vpop.f32.mrb[0].mxu0
      %3897 = vmatprep.mubr.bf16.mxu0 %v2584
      %3898 = vmatmul.mubr.bf16.gmra.mrb[0].mxu0 %v2434
      %v3899 = vpop.f32.mrb[0].mxu0
      %v3900 = vadd.f32 %v3739, %v3899
      %v3901 = vpop.f32.mrb[0].mxu0
      %v3902 = vpop.f32.mrb[0].mxu0
      %v3903 = vadd.f32 %v3742, %v3902
      %v3904 = vpop.f32.mrb[0].mxu0
      %3905 = vmatprep.mubr.bf16.mxu0 %v2585
      %3906 = vmatmul.mubr.bf16.gmra.mrb[0].mxu0 %v2435
      %v3907 = vpop.f32.mrb[0].mxu0
      %v3908 = vadd.f32 %v3747, %v3907
      %v3909 = vpop.f32.mrb[0].mxu0
      %v3910 = vpop.f32.mrb[0].mxu0
      %v3911 = vadd.f32 %v3750, %v3910
      %v3912 = vpop.f32.mrb[0].mxu0
      %3913 = vmatprep.mubr.bf16.mxu0 %v2586
      %3914 = vmatmul.mubr.bf16.gmra.mrb[0].mxu0 %v2436
      %v3915 = vpop.f32.mrb[0].mxu0
      %v3916 = vadd.f32 %v3755, %v3915
      %v3917 = vpop.f32.mrb[0].mxu0
      %v3918 = vpop.f32.mrb[0].mxu0
      %v3919 = vadd.f32 %v3758, %v3918
      %v3920 = vpop.f32.mrb[0].mxu0
      %3921 = vmatprep.mubr.bf16.mxu0 %v2587
      %3922 = vmatmul.mubr.bf16.gmra.mrb[0].mxu0 %v2437
      %v3923 = vpop.f32.mrb[0].mxu0
      %v3924 = vadd.f32 %v3763, %v3923
      %v3925 = vpop.f32.mrb[0].mxu0
      %v3926 = vpop.f32.mrb[0].mxu0
      %v3927 = vadd.f32 %v3766, %v3926
      %v3928 = vpop.f32.mrb[0].mxu0
      %3929 = vmatprep.mubr.bf16.mxu0 %v2588
      %3930 = vmatmul.mubr.bf16.gmra.mrb[0].mxu0 %v2438
      %v3931 = vpop.f32.mrb[0].mxu0
      %v3932 = vadd.f32 %v3771, %v3931
      %v3933 = vpop.f32.mrb[0].mxu0
      %v3934 = vpop.f32.mrb[0].mxu0
      %v3935 = vadd.f32 %v3774, %v3934
      %v3936 = vpop.f32.mrb[0].mxu0
      %3937 = vmatprep.mubr.bf16.mxu0 %v2719
      %3938 = vmatmul.mubr.bf16.gmra.mrb[0].mxu0 %v2709
      %v3939 = vpop.f32.mrb[0].mxu0
      %v3940 = vadd.f32 %v3779, %v3939
      %v3941 = vpop.f32.mrb[0].mxu0
      %v3942 = vpop.f32.mrb[0].mxu0
      %v3943 = vadd.f32 %v3782, %v3942
      %v3944 = vpop.f32.mrb[0].mxu0
      %3945 = vmatprep.mubr.bf16.mxu0 %v2588
      %3946 = vmatmul.mubr.bf16.gmra.mrb[0].mxu0 %v2438
      %v3947 = vpop.f32.mrb[0].mxu0
      %v3948 = vadd.f32 %v3787, %v3947
      %v3949 = vpop.f32.mrb[0].mxu0
      %v3950 = vpop.f32.mrb[0].mxu0
      %v3951 = vadd.f32 %v3790, %v3950
      %v3952 = vpop.f32.mrb[0].mxu0
      %3953 = vdwg.mxu0
      %3954 = vmatprep.subr.bf16.mxu0 0
      %3955 = vmatpush1.bf16.msra.mxu0 %v3230
      %3956 = vmatprep.subr.bf16.mxu0 0
      %3957 = vmatpush1.bf16.msra.mxu0 %v3231
      %3958 = vmatprep.subr.bf16.mxu0 0
      %3959 = vmatpush1.bf16.msra.mxu0 %v3232
      %3960 = vmatprep.subr.bf16.mxu0 0
      %3961 = vmatpush1.bf16.msra.mxu0 %v3233
      %3962 = vmatprep.subr.bf16.mxu0 0
      %3963 = vmatpush1.bf16.msra.mxu0 %v3234
      %3964 = vmatprep.subr.bf16.mxu0 0
      %3965 = vmatpush1.bf16.msra.mxu0 %v3235
      %3966 = vmatprep.subr.bf16.mxu0 0
      %3967 = vmatpush1.bf16.msra.mxu0 %v3236
      %3968 = vmatprep.subr.bf16.mxu0 0
      %3969 = vmatpush1.bf16.msra.mxu0 %v3237
      %3970 = vmatprep.subr.bf16.mxu0 0
      %3971 = vmatpush1.bf16.msra.mxu0 0
      %3972 = vmatprep.subr.bf16.mxu0 0
      %3973 = vmatpush1.bf16.msra.mxu0 0
      %3974 = vmatprep.subr.bf16.mxu0 0
      %3975 = vmatpush1.bf16.msra.mxu0 0
      %3976 = vmatprep.subr.bf16.mxu0 0
      %3977 = vmatpush1.bf16.msra.mxu0 0
      %3978 = vmatprep.subr.bf16.mxu0 0
      %3979 = vmatpush1.bf16.msra.mxu0 0
      %3980 = vmatprep.subr.bf16.mxu0 0
      %3981 = vmatpush1.bf16.msra.mxu0 0
      %3982 = vmatprep.subr.bf16.mxu0 0
      %3983 = vmatpush1.bf16.msra.mxu0 0
      %3984 = vmatprep.subr.bf16.mxu0 0
      %3985 = vmatpush1.bf16.msra.mxu0 0
      %3986 = vmatprep.mubr.bf16.mxu0 0
      %3987 = vmatmul.mubr.bf16.gmra.mrb[0].mxu0 %v2694
      %v3988 = vpop.f32.mrb[0].mxu0
      %v3989 = vadd.f32 %v3828, %v3988
      %v3990 = vpop.f32.mrb[0].mxu0
      %v3991 = vpop.f32.mrb[0].mxu0
      %v3992 = vadd.f32 %v3831, %v3991
      %v3993 = vpop.f32.mrb[0].mxu0
      %3994 = vmatprep.mubr.bf16.mxu0 0
      %3995 = vmatmul.mubr.bf16.gmra.mrb[0].mxu0 %v2696
      %v3996 = vpop.f32.mrb[0].mxu0
      %v3997 = vadd.f32 %v3836, %v3996
      %v3998 = vpop.f32.mrb[0].mxu0
      %v3999 = vpop.f32.mrb[0].mxu0
      %v4000 = vadd.f32 %v3839, %v3999
      %v4001 = vpop.f32.mrb[0].mxu0
      %4002 = vmatprep.mubr.bf16.mxu0 0
      %4003 = vmatmul.mubr.bf16.gmra.mrb[0].mxu0 %v2697
      %v4004 = vpop.f32.mrb[0].mxu0
      %v4005 = vadd.f32 %v3844, %v4004
      %v4006 = vpop.f32.mrb[0].mxu0
      %v4007 = vpop.f32.mrb[0].mxu0
      %v4008 = vadd.f32 %v3847, %v4007
      %v4009 = vpop.f32.mrb[0].mxu0
      %4010 = vmatprep.mubr.bf16.mxu0 0
      %4011 = vmatmul.mubr.bf16.gmra.mrb[0].mxu0 %v2698
      %v4012 = vpop.f32.mrb[0].mxu0
      %v4013 = vadd.f32 %v3852, %v4012
      %v4014 = vpop.f32.mrb[0].mxu0
      %v4015 = vpop.f32.mrb[0].mxu0
      %v4016 = vadd.f32 %v3855, %v4015
      %v4017 = vpop.f32.mrb[0].mxu0
      %4018 = vmatprep.mubr.bf16.mxu0 0
      %4019 = vmatmul.mubr.bf16.gmra.mrb[0].mxu0 %v2699
      %v4020 = vpop.f32.mrb[0].mxu0
      %v4021 = vadd.f32 %v3860, %v4020
      %v4022 = vpop.f32.mrb[0].mxu0
      %v4023 = vpop.f32.mrb[0].mxu0
      %v4024 = vadd.f32 %v3863, %v4023
      %v4025 = vpop.f32.mrb[0].mxu0
      %4026 = vmatprep.mubr.bf16.mxu0 0
      %4027 = vmatmul.mubr.bf16.gmra.mrb[0].mxu0 %v2700
      %v4028 = vpop.f32.mrb[0].mxu0
      %v4029 = vadd.f32 %v3868, %v4028
      %v4030 = vpop.f32.mrb[0].mxu0
      %v4031 = vpop.f32.mrb[0].mxu0
      %v4032 = vadd.f32 %v3871, %v4031
      %v4033 = vpop.f32.mrb[0].mxu0
      %4034 = vmatprep.mubr.bf16.mxu0 0
      %4035 = vmatmul.mubr.bf16.gmra.mrb[0].mxu0 %v2701
      %v4036 = vpop.f32.mrb[0].mxu0
      %v4037 = vadd.f32 %v3876, %v4036
      %v4038 = vpop.f32.mrb[0].mxu0
      %v4039 = vpop.f32.mrb[0].mxu0
      %v4040 = vadd.f32 %v3879, %v4039
      %v4041 = vpop.f32.mrb[0].mxu0
      %4042 = vmatprep.mubr.bf16.mxu0 0
      %4043 = vmatmul.mubr.bf16.gmra.mrb[0].mxu0 %v2702
      %v4044 = vpop.f32.mrb[0].mxu0
      %v4045 = vadd.f32 %v3884, %v4044
      %v4046 = vpop.f32.mrb[0].mxu0
      %v4047 = vpop.f32.mrb[0].mxu0
      %v4048 = vadd.f32 %v3887, %v4047
      %v4049 = vpop.f32.mrb[0].mxu0
      %4050 = vmatprep.mubr.bf16.mxu0 0
      %4051 = vmatmul.mubr.bf16.gmra.mrb[0].mxu0 %v2703
      %v4052 = vpop.f32.mrb[0].mxu0
      %v4053 = vadd.f32 %v3892, %v4052
      %v4054 = vpop.f32.mrb[0].mxu0
      %v4055 = vpop.f32.mrb[0].mxu0
      %v4056 = vadd.f32 %v3895, %v4055
      %v4057 = vpop.f32.mrb[0].mxu0
      %4058 = vmatprep.mubr.bf16.mxu0 0
      %4059 = vmatmul.mubr.bf16.gmra.mrb[0].mxu0 %v2704
      %v4060 = vpop.f32.mrb[0].mxu0
      %v4061 = vadd.f32 %v3900, %v4060
      %v4062 = vpop.f32.mrb[0].mxu0
      %v4063 = vpop.f32.mrb[0].mxu0
      %v4064 = vadd.f32 %v3903, %v4063
      %v4065 = vpop.f32.mrb[0].mxu0
      %4066 = vmatprep.mubr.bf16.mxu0 0
      %4067 = vmatmul.mubr.bf16.gmra.mrb[0].mxu0 %v2705
      %v4068 = vpop.f32.mrb[0].mxu0
      %v4069 = vadd.f32 %v3908, %v4068
      %v4070 = vpop.f32.mrb[0].mxu0
      %v4071 = vpop.f32.mrb[0].mxu0
      %v4072 = vadd.f32 %v3911, %v4071
      %v4073 = vpop.f32.mrb[0].mxu0
      %4074 = vmatprep.mubr.bf16.mxu0 0
      %4075 = vmatmul.mubr.bf16.gmra.mrb[0].mxu0 %v2706
      %v4076 = vpop.f32.mrb[0].mxu0
      %v4077 = vadd.f32 %v3916, %v4076
      %v4078 = vpop.f32.mrb[0].mxu0
      %v4079 = vpop.f32.mrb[0].mxu0
      %v4080 = vadd.f32 %v3919, %v4079
      %v4081 = vpop.f32.mrb[0].mxu0
      %4082 = vmatprep.mubr.bf16.mxu0 0
      %4083 = vmatmul.mubr.bf16.gmra.mrb[0].mxu0 %v2707
      %v4084 = vpop.f32.mrb[0].mxu0
      %v4085 = vadd.f32 %v3924, %v4084
      %v4086 = vpop.f32.mrb[0].mxu0
      %v4087 = vpop.f32.mrb[0].mxu0
      %v4088 = vadd.f32 %v3927, %v4087
      %v4089 = vpop.f32.mrb[0].mxu0
      %4090 = vmatprep.mubr.bf16.mxu0 0
      %4091 = vmatmul.mubr.bf16.gmra.mrb[0].mxu0 %v2708
      %v4092 = vpop.f32.mrb[0].mxu0
      %v4093 = vadd.f32 %v3932, %v4092
      %v4094 = vpop.f32.mrb[0].mxu0
      %v4095 = vpop.f32.mrb[0].mxu0
      %v4096 = vadd.f32 %v3935, %v4095
      %v4097 = vpop.f32.mrb[0].mxu0
      %4098 = vmatprep.mubr.bf16.mxu0 0
      %4099 = vmatmul.mubr.bf16.gmra.mrb[0].mxu0 %v2727
      %v4100 = vpop.f32.mrb[0].mxu0
      %v4101 = vadd.f32 %v3940, %v4100
      %v4102 = vpop.f32.mrb[0].mxu0
      %v4103 = vpop.f32.mrb[0].mxu0
      %v4104 = vadd.f32 %v3943, %v4103
      %v4105 = vpop.f32.mrb[0].mxu0
      %4106 = vmatprep.mubr.bf16.mxu0 0
      %4107 = vmatmul.mubr.bf16.gmra.mrb[0].mxu0 %v2708
      %v4108 = vpop.f32.mrb[0].mxu0
      %v4109 = vadd.f32 %v3948, %v4108
      %v4110 = vpop.f32.mrb[0].mxu0
      %v4111 = vpop.f32.mrb[0].mxu0
      %v4112 = vadd.f32 %v3951, %v4111
      %v4113 = vpop.f32.mrb[0].mxu0
      %4114 = vdwg.mxu0
      %v4115 = vmax.f32 %v3989, 0.0
      %v4116 = vmax.f32 %v3992, 0.0
      %v4117 = vmax.f32 %v3997, 0.0
      %v4118 = vmax.f32 %v4000, 0.0
      %v4119 = vmax.f32 %v4005, 0.0
      %v4120 = vmax.f32 %v4008, 0.0
      %v4121 = vmax.f32 %v4013, 0.0
      %v4122 = vmax.f32 %v4016, 0.0
      %v4123 = vmax.f32 %v4021, 0.0
      %v4124 = vmax.f32 %v4024, 0.0
      %v4125 = vmax.f32 %v4029, 0.0
      %v4126 = vmax.f32 %v4032, 0.0
      %v4127 = vmax.f32 %v4037, 0.0
      %v4128 = vmax.f32 %v4040, 0.0
      %v4129 = vmax.f32 %v4045, 0.0
      %v4130 = vmax.f32 %v4048, 0.0
      %v4131 = vmax.f32 %v4053, 0.0
      %v4132 = vmax.f32 %v4056, 0.0
      %v4133 = vmax.f32 %v4061, 0.0
      %v4134 = vmax.f32 %v4064, 0.0
      %v4135 = vmax.f32 %v4069, 0.0
      %v4136 = vmax.f32 %v4072, 0.0
      %v4137 = vmax.f32 %v4077, 0.0
      %v4138 = vmax.f32 %v4080, 0.0
      %v4139 = vmax.f32 %v4085, 0.0
      %v4140 = vmax.f32 %v4088, 0.0
      %v4141 = vmax.f32 %v4093, 0.0
      %v4142 = vmax.f32 %v4096, 0.0
      %v4143 = vmax.f32 %v4101, 0.0
      %v4144 = vmax.f32 %v4104, 0.0
      %v4145 = vmax.f32 %v4109, 0.0
      %v4146 = vmax.f32 %v4112, 0.0
      %v4147 = vld [vmem:[%s212] sm:$0xff]
      %v4148 = vld [vmem:[%s212 + $0x8] sm:$0xff]
      %v4149 = vld [vmem:[%s212 + $0x10] sm:$0xff]
      %v4150 = vld [vmem:[%s212 + $0x18] sm:$0xff]
      %v4151 = vld [vmem:[%s212 + $0x20] sm:$0xff]
      %v4152 = vld [vmem:[%s212 + $0x28] sm:$0xff]
      %v4153 = vld [vmem:[%s212 + $0x30] sm:$0xff]
      %v4154 = vld [vmem:[%s212 + $0x38] sm:$0xff]
      %v4155 = vld [vmem:[%s212 + $0x40] sm:$0xff]
      %v4156 = vld [vmem:[%s212 + $0x48] sm:$0xff]
      %v4157 = vld [vmem:[%s212 + $0x50] sm:$0xff]
      %v4158 = vld [vmem:[%s212 + $0x58] sm:$0xff]
      %v4159 = vld [vmem:[%s212 + $0x60] sm:$0xff]
      %v4160 = vld [vmem:[%s212 + $0x68] sm:$0xff]
      %v4161 = vld [vmem:[%s212 + $0x70] sm:$0xff]
      %v4162 = vld [vmem:[%s212 + $0x78] sm:$0xff]
      %v4163 = vld [vmem:[%s212 + $0x80] sm:$0xff]
      %v4164 = vld [vmem:[%s212 + $0x88] sm:$0xff]
      %v4165 = vld [vmem:[%s212 + $0x90] sm:$0xff]
      %v4166 = vld [vmem:[%s212 + $0x98] sm:$0xff]
      %v4167 = vld [vmem:[%s212 + $0xa0] sm:$0xff]
      %v4168 = vld [vmem:[%s212 + $0xa8] sm:$0xff]
      %v4169 = vld [vmem:[%s212 + $0xb0] sm:$0xff]
      %v4170 = vld [vmem:[%s212 + $0xb8] sm:$0xff]
      %v4171 = vld [vmem:[%s212 + $0xc0] sm:$0xff]
      %v4172 = vld [vmem:[%s212 + $0xc8] sm:$0xff]
      %v4173 = vld [vmem:[%s212 + $0xd0] sm:$0xff]
      %v4174 = vld [vmem:[%s212 + $0xd8] sm:$0xff]
      %v4175 = vld [vmem:[%s212 + $0xe0] sm:$0xff]
      %v4176 = vld [vmem:[%s212 + $0xe8] sm:$0xff]
      %v4177 = vld [vmem:[%s212 + $0xf0] sm:$0xff]
      %v4178 = vld [vmem:[%s212 + $0xf8] sm:$0xff]
      %v4195 = vrot.slane %v4149, 1
      %v4196 = vrot.slane %v4147, 1
      %v4197 = vrot.slane %v4151, 1
      %v4198 = vrot.slane %v4153, 1
      %v4199 = vrot.slane %v4155, 1
      %v4200 = vrot.slane %v4157, 1
      %v4201 = vrot.slane %v4159, 1
      %v4202 = vrot.slane %v4161, 1
      %v4203 = vrot.slane %v4163, 1
      %v4204 = vrot.slane %v4165, 1
      %v4205 = vrot.slane %v4167, 1
      %v4206 = vrot.slane %v4169, 1
      %v4207 = vrot.slane %v4171, 1
      %v4208 = vrot.slane %v4173, 1
      %v4209 = vrot.slane %v4175, 1
      %v4210 = vrot.slane %v4177, 1
      %v4243 = vrot.slane %v4149, 7
      %v4244 = vrot.slane %v4150, 7
      %v4245 = vsel %vm315, %v4243, %v4244
      %v4246 = vrot.slane %v4147, 7
      %v4247 = vrot.slane %v4148, 7
      %v4248 = vsel %vm315, %v4246, %v4247
      %v4249 = vrot.slane %v4151, 7
      %v4250 = vrot.slane %v4152, 7
      %v4251 = vsel %vm315, %v4249, %v4250
      %v4252 = vrot.slane %v4153, 7
      %v4253 = vrot.slane %v4154, 7
      %v4254 = vsel %vm315, %v4252, %v4253
      %v4255 = vrot.slane %v4155, 7
      %v4256 = vrot.slane %v4156, 7
      %v4257 = vsel %vm315, %v4255, %v4256
      %v4258 = vrot.slane %v4157, 7
      %v4259 = vrot.slane %v4158, 7
      %v4260 = vsel %vm315, %v4258, %v4259
      %v4261 = vrot.slane %v4159, 7
      %v4262 = vrot.slane %v4160, 7
      %v4263 = vsel %vm315, %v4261, %v4262
      %v4264 = vrot.slane %v4161, 7
      %v4265 = vrot.slane %v4162, 7
      %v4266 = vsel %vm315, %v4264, %v4265
      %v4267 = vrot.slane %v4163, 7
      %v4268 = vrot.slane %v4164, 7
      %v4269 = vsel %vm315, %v4267, %v4268
      %v4270 = vrot.slane %v4165, 7
      %v4271 = vrot.slane %v4166, 7
      %v4272 = vsel %vm315, %v4270, %v4271
      %v4273 = vrot.slane %v4167, 7
      %v4274 = vrot.slane %v4168, 7
      %v4275 = vsel %vm315, %v4273, %v4274
      %v4276 = vrot.slane %v4169, 7
      %v4277 = vrot.slane %v4170, 7
      %v4278 = vsel %vm315, %v4276, %v4277
      %v4279 = vrot.slane %v4171, 7
      %v4280 = vrot.slane %v4172, 7
      %v4281 = vsel %vm315, %v4279, %v4280
      %v4282 = vrot.slane %v4173, 7
      %v4283 = vrot.slane %v4174, 7
      %v4284 = vsel %vm315, %v4282, %v4283
      %v4285 = vrot.slane %v4175, 7
      %v4286 = vrot.slane %v4176, 7
      %v4287 = vsel %vm315, %v4285, %v4286
      %v4288 = vrot.slane %v4177, 7
      %v4289 = vrot.slane %v4178, 7
      %v4290 = vsel %vm315, %v4288, %v4289
      %v4339 = vrot.slane %v4150, 5
      %v4340 = vrot.slane %v4148, 5
      %v4341 = vrot.slane %v4152, 5
      %v4342 = vrot.slane %v4154, 5
      %v4343 = vrot.slane %v4156, 5
      %v4344 = vrot.slane %v4158, 5
      %v4345 = vrot.slane %v4160, 5
      %v4346 = vrot.slane %v4162, 5
      %v4347 = vrot.slane %v4164, 5
      %v4348 = vrot.slane %v4166, 5
      %v4349 = vrot.slane %v4168, 5
      %v4350 = vrot.slane %v4170, 5
      %v4351 = vrot.slane %v4172, 5
      %v4352 = vrot.slane %v4174, 5
      %v4353 = vrot.slane %v4176, 5
      %v4354 = vrot.slane %v4178, 5
      %v4371 = vsel %vm315, %v4195, %v4243
      %v4372 = vsel %vm315, %v4196, %v4246
      %v4373 = vsel %vm315, %v4197, %v4249
      %v4374 = vsel %vm315, %v4198, %v4252
      %v4375 = vsel %vm315, %v4199, %v4255
      %v4376 = vsel %vm315, %v4200, %v4258
      %v4377 = vsel %vm315, %v4201, %v4261
      %v4378 = vsel %vm315, %v4202, %v4264
      %v4379 = vsel %vm315, %v4203, %v4267
      %v4380 = vsel %vm315, %v4204, %v4270
      %v4381 = vsel %vm315, %v4205, %v4273
      %v4382 = vsel %vm315, %v4206, %v4276
      %v4383 = vsel %vm315, %v4207, %v4279
      %v4384 = vsel %vm315, %v4208, %v4282
      %v4385 = vsel %vm315, %v4209, %v4285
      %v4386 = vsel %vm315, %v4210, %v4288
      %v4387 = vsel %vm315, %v4244, %v4339
      %v4388 = vsel %vm315, %v4247, %v4340
      %v4389 = vsel %vm315, %v4250, %v4341
      %v4390 = vsel %vm315, %v4253, %v4342
      %v4391 = vsel %vm315, %v4256, %v4343
      %v4392 = vsel %vm315, %v4259, %v4344
      %v4393 = vsel %vm315, %v4262, %v4345
      %v4394 = vsel %vm315, %v4265, %v4346
      %v4395 = vsel %vm315, %v4268, %v4347
      %v4396 = vsel %vm315, %v4271, %v4348
      %v4397 = vsel %vm315, %v4274, %v4349
      %v4398 = vsel %vm315, %v4277, %v4350
      %v4399 = vsel %vm315, %v4280, %v4351
      %v4400 = vsel %vm315, %v4283, %v4352
      %v4401 = vsel %vm315, %v4286, %v4353
      %v4402 = vsel %vm315, %v4289, %v4354
      %v4403 = vpack.c.bf16 %v4245, %v4371
      %v4404 = vpack.c.bf16 %v4248, %v4372
      %v4405 = vpack.c.bf16 %v4251, %v4373
      %v4406 = vpack.c.bf16 %v4254, %v4374
      %v4407 = vpack.c.bf16 %v4257, %v4375
      %v4408 = vpack.c.bf16 %v4260, %v4376
      %v4409 = vpack.c.bf16 %v4263, %v4377
      %v4410 = vpack.c.bf16 %v4266, %v4378
      %v4411 = vpack.c.bf16 %v4269, %v4379
      %v4412 = vpack.c.bf16 %v4272, %v4380
      %v4413 = vpack.c.bf16 %v4275, %v4381
      %v4414 = vpack.c.bf16 %v4278, %v4382
      %v4415 = vpack.c.bf16 %v4281, %v4383
      %v4416 = vpack.c.bf16 %v4284, %v4384
      %v4417 = vpack.c.bf16 %v4287, %v4385
      %v4448 = vrot.slane %v4371, 1
      %v4449 = vrot.slane %v4245, 1
      %v4450 = vsel %vm521, %v4448, %v4449
      %v4451 = vrot.slane %v4387, 1
      %v4452 = vsel %vm521, %v4449, %v4451
      %v4453 = vrot.slane %v4372, 1
      %v4454 = vrot.slane %v4248, 1
      %v4455 = vsel %vm521, %v4453, %v4454
      %v4456 = vrot.slane %v4388, 1
      %v4457 = vsel %vm521, %v4454, %v4456
      %v4458 = vrot.slane %v4373, 1
      %v4459 = vrot.slane %v4251, 1
      %v4460 = vsel %vm521, %v4458, %v4459
      %v4461 = vrot.slane %v4389, 1
      %v4462 = vsel %vm521, %v4459, %v4461
      %v4463 = vrot.slane %v4374, 1
      %v4464 = vrot.slane %v4254, 1
      %v4465 = vsel %vm521, %v4463, %v4464
      %v4466 = vrot.slane %v4390, 1
      %v4467 = vsel %vm521, %v4464, %v4466
      %v4468 = vrot.slane %v4375, 1
      %v4469 = vrot.slane %v4257, 1
      %v4470 = vsel %vm521, %v4468, %v4469
      %v4471 = vrot.slane %v4391, 1
      %v4472 = vsel %vm521, %v4469, %v4471
      %v4473 = vrot.slane %v4376, 1
      %v4474 = vrot.slane %v4260, 1
      %v4475 = vsel %vm521, %v4473, %v4474
      %v4476 = vrot.slane %v4392, 1
      %v4477 = vsel %vm521, %v4474, %v4476
      %v4478 = vrot.slane %v4377, 1
      %v4479 = vrot.slane %v4263, 1
      %v4480 = vsel %vm521, %v4478, %v4479
      %v4481 = vrot.slane %v4393, 1
      %v4482 = vsel %vm521, %v4479, %v4481
      %v4483 = vrot.slane %v4378, 1
      %v4484 = vrot.slane %v4266, 1
      %v4485 = vsel %vm521, %v4483, %v4484
      %v4486 = vrot.slane %v4394, 1
      %v4487 = vsel %vm521, %v4484, %v4486
      %v4488 = vrot.slane %v4379, 1
      %v4489 = vrot.slane %v4269, 1
      %v4490 = vsel %vm521, %v4488, %v4489
      %v4491 = vrot.slane %v4395, 1
      %v4492 = vsel %vm521, %v4489, %v4491
      %v4493 = vrot.slane %v4380, 1
      %v4494 = vrot.slane %v4272, 1
      %v4495 = vsel %vm521, %v4493, %v4494
      %v4496 = vrot.slane %v4396, 1
      %v4497 = vsel %vm521, %v4494, %v4496
      %v4498 = vrot.slane %v4381, 1
      %v4499 = vrot.slane %v4275, 1
      %v4500 = vsel %vm521, %v4498, %v4499
      %v4501 = vrot.slane %v4397, 1
      %v4502 = vsel %vm521, %v4499, %v4501
      %v4503 = vrot.slane %v4382, 1
      %v4504 = vrot.slane %v4278, 1
      %v4505 = vsel %vm521, %v4503, %v4504
      %v4506 = vrot.slane %v4398, 1
      %v4507 = vsel %vm521, %v4504, %v4506
      %v4508 = vrot.slane %v4383, 1
      %v4509 = vrot.slane %v4281, 1
      %v4510 = vsel %vm521, %v4508, %v4509
      %v4511 = vrot.slane %v4399, 1
      %v4512 = vsel %vm521, %v4509, %v4511
      %v4513 = vrot.slane %v4384, 1
      %v4514 = vrot.slane %v4284, 1
      %v4515 = vsel %vm521, %v4513, %v4514
      %v4516 = vrot.slane %v4400, 1
      %v4517 = vsel %vm521, %v4514, %v4516
      %v4518 = vrot.slane %v4385, 1
      %v4519 = vrot.slane %v4287, 1
      %v4520 = vsel %vm521, %v4518, %v4519
      %v4521 = vrot.slane %v4401, 1
      %v4522 = vsel %vm521, %v4519, %v4521
      %v4553 = vpack.c.bf16 %v4452, %v4450
      %v4554 = vpack.c.bf16 %v4457, %v4455
      %v4555 = vpack.c.bf16 %v4462, %v4460
      %v4556 = vpack.c.bf16 %v4467, %v4465
      %v4557 = vpack.c.bf16 %v4472, %v4470
      %v4558 = vpack.c.bf16 %v4477, %v4475
      %v4559 = vpack.c.bf16 %v4482, %v4480
      %v4560 = vpack.c.bf16 %v4487, %v4485
      %v4561 = vpack.c.bf16 %v4492, %v4490
      %v4562 = vpack.c.bf16 %v4497, %v4495
      %v4563 = vpack.c.bf16 %v4502, %v4500
      %v4564 = vpack.c.bf16 %v4507, %v4505
      %v4565 = vpack.c.bf16 %v4512, %v4510
      %v4566 = vpack.c.bf16 %v4517, %v4515
      %v4567 = vpack.c.bf16 %v4522, %v4520
      %v4568 = vrot.slane %v4371, 2
      %v4569 = vrot.slane %v4245, 2
      %v4570 = vsel %vm642, %v4568, %v4569
      %v4571 = vrot.slane %v4387, 2
      %v4572 = vsel %vm642, %v4569, %v4571
      %v4573 = vrot.slane %v4372, 2
      %v4574 = vrot.slane %v4248, 2
      %v4575 = vsel %vm642, %v4573, %v4574
      %v4576 = vrot.slane %v4388, 2
      %v4577 = vsel %vm642, %v4574, %v4576
      %v4578 = vrot.slane %v4373, 2
      %v4579 = vrot.slane %v4251, 2
      %v4580 = vsel %vm642, %v4578, %v4579
      %v4581 = vrot.slane %v4389, 2
      %v4582 = vsel %vm642, %v4579, %v4581
      %v4583 = vrot.slane %v4374, 2
      %v4584 = vrot.slane %v4254, 2
      %v4585 = vsel %vm642, %v4583, %v4584
      %v4586 = vrot.slane %v4390, 2
      %v4587 = vsel %vm642, %v4584, %v4586
      %v4588 = vrot.slane %v4375, 2
      %v4589 = vrot.slane %v4257, 2
      %v4590 = vsel %vm642, %v4588, %v4589
      %v4591 = vrot.slane %v4391, 2
      %v4592 = vsel %vm642, %v4589, %v4591
      %v4593 = vrot.slane %v4376, 2
      %v4594 = vrot.slane %v4260, 2
      %v4595 = vsel %vm642, %v4593, %v4594
      %v4596 = vrot.slane %v4392, 2
      %v4597 = vsel %vm642, %v4594, %v4596
      %v4598 = vrot.slane %v4377, 2
      %v4599 = vrot.slane %v4263, 2
      %v4600 = vsel %vm642, %v4598, %v4599
      %v4601 = vrot.slane %v4393, 2
      %v4602 = vsel %vm642, %v4599, %v4601
      %v4603 = vrot.slane %v4378, 2
      %v4604 = vrot.slane %v4266, 2
      %v4605 = vsel %vm642, %v4603, %v4604
      %v4606 = vrot.slane %v4394, 2
      %v4607 = vsel %vm642, %v4604, %v4606
      %v4608 = vrot.slane %v4379, 2
      %v4609 = vrot.slane %v4269, 2
      %v4610 = vsel %vm642, %v4608, %v4609
      %v4611 = vrot.slane %v4395, 2
      %v4612 = vsel %vm642, %v4609, %v4611
      %v4613 = vrot.slane %v4380, 2
      %v4614 = vrot.slane %v4272, 2
      %v4615 = vsel %vm642, %v4613, %v4614
      %v4616 = vrot.slane %v4396, 2
      %v4617 = vsel %vm642, %v4614, %v4616
      %v4618 = vrot.slane %v4381, 2
      %v4619 = vrot.slane %v4275, 2
      %v4620 = vsel %vm642, %v4618, %v4619
      %v4621 = vrot.slane %v4397, 2
      %v4622 = vsel %vm642, %v4619, %v4621
      %v4623 = vrot.slane %v4382, 2
      %v4624 = vrot.slane %v4278, 2
      %v4625 = vsel %vm642, %v4623, %v4624
      %v4626 = vrot.slane %v4398, 2
      %v4627 = vsel %vm642, %v4624, %v4626
      %v4628 = vrot.slane %v4383, 2
      %v4629 = vrot.slane %v4281, 2
      %v4630 = vsel %vm642, %v4628, %v4629
      %v4631 = vrot.slane %v4399, 2
      %v4632 = vsel %vm642, %v4629, %v4631
      %v4633 = vrot.slane %v4384, 2
      %v4634 = vrot.slane %v4284, 2
      %v4635 = vsel %vm642, %v4633, %v4634
      %v4636 = vrot.slane %v4400, 2
      %v4637 = vsel %vm642, %v4634, %v4636
      %v4638 = vrot.slane %v4385, 2
      %v4639 = vrot.slane %v4287, 2
      %v4640 = vsel %vm642, %v4638, %v4639
      %v4641 = vrot.slane %v4401, 2
      %v4642 = vsel %vm642, %v4639, %v4641
      %v4673 = vpack.c.bf16 %v4572, %v4570
      %v4674 = vpack.c.bf16 %v4577, %v4575
      %v4675 = vpack.c.bf16 %v4582, %v4580
      %v4676 = vpack.c.bf16 %v4587, %v4585
      %v4677 = vpack.c.bf16 %v4592, %v4590
      %v4678 = vpack.c.bf16 %v4597, %v4595
      %v4679 = vpack.c.bf16 %v4602, %v4600
      %v4680 = vpack.c.bf16 %v4607, %v4605
      %v4681 = vpack.c.bf16 %v4612, %v4610
      %v4682 = vpack.c.bf16 %v4617, %v4615
      %v4683 = vpack.c.bf16 %v4622, %v4620
      %v4684 = vpack.c.bf16 %v4627, %v4625
      %v4685 = vpack.c.bf16 %v4632, %v4630
      %v4686 = vpack.c.bf16 %v4637, %v4635
      %v4687 = vpack.c.bf16 %v4642, %v4640
      %v4688 = vpack.c.bf16 %v4290, %v4386
      %v4691 = vrot.slane %v4386, 1
      %v4692 = vrot.slane %v4290, 1
      %v4693 = vsel %vm521, %v4691, %v4692
      %v4694 = vrot.slane %v4402, 1
      %v4695 = vsel %vm521, %v4692, %v4694
      %v4698 = vpack.c.bf16 %v4695, %v4693
      %v4699 = vrot.slane %v4386, 2
      %v4700 = vrot.slane %v4290, 2
      %v4701 = vsel %vm642, %v4699, %v4700
      %v4702 = vrot.slane %v4402, 2
      %v4703 = vsel %vm642, %v4700, %v4702
      %v4706 = vpack.c.bf16 %v4703, %v4701
      %4707 = vmatprep.subr.bf16.mxu0 0
      %4708 = vmatpush1.bf16.msra.mxu0 %v1219
      %4709 = vmatprep.subr.bf16.mxu0 0
      %4710 = vmatpush1.bf16.msra.mxu0 %v1220
      %4711 = vmatprep.subr.bf16.mxu0 0
      %4712 = vmatpush1.bf16.msra.mxu0 %v1221
      %4713 = vmatprep.subr.bf16.mxu0 0
      %4714 = vmatpush1.bf16.msra.mxu0 %v1222
      %4715 = vmatprep.subr.bf16.mxu0 0
      %4716 = vmatpush1.bf16.msra.mxu0 %v1223
      %4717 = vmatprep.subr.bf16.mxu0 0
      %4718 = vmatpush1.bf16.msra.mxu0 %v1224
      %4719 = vmatprep.subr.bf16.mxu0 0
      %4720 = vmatpush1.bf16.msra.mxu0 %v1225
      %4721 = vmatprep.subr.bf16.mxu0 0
      %4722 = vmatpush1.bf16.msra.mxu0 %v1226
      %4723 = vmatprep.subr.bf16.mxu0 0
      %4724 = vmatpush1.bf16.msra.mxu0 %v1227
      %4725 = vmatprep.subr.bf16.mxu0 0
      %4726 = vmatpush1.bf16.msra.mxu0 %v1228
      %4727 = vmatprep.subr.bf16.mxu0 0
      %4728 = vmatpush1.bf16.msra.mxu0 %v1229
      %4729 = vmatprep.subr.bf16.mxu0 0
      %4730 = vmatpush1.bf16.msra.mxu0 %v1230
      %4731 = vmatprep.subr.bf16.mxu0 0
      %4732 = vmatpush1.bf16.msra.mxu0 %v1231
      %4733 = vmatprep.subr.bf16.mxu0 0
      %4734 = vmatpush1.bf16.msra.mxu0 %v1232
      %4735 = vmatprep.subr.bf16.mxu0 0
      %4736 = vmatpush1.bf16.msra.mxu0 %v1233
      %4737 = vmatprep.subr.bf16.mxu0 0
      %4738 = vmatpush1.bf16.msra.mxu0 %v1234
      %4739 = vmatprep.mubr.bf16.mxu0 %v4553
      %4740 = vmatmul.mubr.bf16.gmra.mrb[0].mxu0 %v4403
      %v4741 = vpop.f32.mrb[0].mxu0
      %v4742 = vadd.f32 %v930, %v4741
      %v4743 = vpop.f32.mrb[0].mxu0
      %v4744 = vpop.f32.mrb[0].mxu0
      %v4745 = vadd.f32 %v930, %v4744
      %v4746 = vpop.f32.mrb[0].mxu0
      %4747 = vmatprep.mubr.bf16.mxu0 %v4554
      %4748 = vmatmul.mubr.bf16.gmra.mrb[0].mxu0 %v4404
      %v4749 = vpop.f32.mrb[0].mxu0
      %v4750 = vadd.f32 %v930, %v4749
      %v4751 = vpop.f32.mrb[0].mxu0
      %v4752 = vpop.f32.mrb[0].mxu0
      %v4753 = vadd.f32 %v930, %v4752
      %v4754 = vpop.f32.mrb[0].mxu0
      %4755 = vmatprep.mubr.bf16.mxu0 %v4553
      %4756 = vmatmul.mubr.bf16.gmra.mrb[0].mxu0 %v4403
      %v4757 = vpop.f32.mrb[0].mxu0
      %v4758 = vadd.f32 %v930, %v4757
      %v4759 = vpop.f32.mrb[0].mxu0
      %v4760 = vpop.f32.mrb[0].mxu0
      %v4761 = vadd.f32 %v930, %v4760
      %v4762 = vpop.f32.mrb[0].mxu0
      %4763 = vmatprep.mubr.bf16.mxu0 %v4555
      %4764 = vmatmul.mubr.bf16.gmra.mrb[0].mxu0 %v4405
      %v4765 = vpop.f32.mrb[0].mxu0
      %v4766 = vadd.f32 %v930, %v4765
      %v4767 = vpop.f32.mrb[0].mxu0
      %v4768 = vpop.f32.mrb[0].mxu0
      %v4769 = vadd.f32 %v930, %v4768
      %v4770 = vpop.f32.mrb[0].mxu0
      %4771 = vmatprep.mubr.bf16.mxu0 %v4556
      %4772 = vmatmul.mubr.bf16.gmra.mrb[0].mxu0 %v4406
      %v4773 = vpop.f32.mrb[0].mxu0
      %v4774 = vadd.f32 %v930, %v4773
      %v4775 = vpop.f32.mrb[0].mxu0
      %v4776 = vpop.f32.mrb[0].mxu0
      %v4777 = vadd.f32 %v930, %v4776
      %v4778 = vpop.f32.mrb[0].mxu0
      %4779 = vmatprep.mubr.bf16.mxu0 %v4557
      %4780 = vmatmul.mubr.bf16.gmra.mrb[0].mxu0 %v4407
      %v4781 = vpop.f32.mrb[0].mxu0
      %v4782 = vadd.f32 %v930, %v4781
      %v4783 = vpop.f32.mrb[0].mxu0
      %v4784 = vpop.f32.mrb[0].mxu0
      %v4785 = vadd.f32 %v930, %v4784
      %v4786 = vpop.f32.mrb[0].mxu0
      %4787 = vmatprep.mubr.bf16.mxu0 %v4558
      %4788 = vmatmul.mubr.bf16.gmra.mrb[0].mxu0 %v4408
      %v4789 = vpop.f32.mrb[0].mxu0
      %v4790 = vadd.f32 %v930, %v4789
      %v4791 = vpop.f32.mrb[0].mxu0
      %v4792 = vpop.f32.mrb[0].mxu0
      %v4793 = vadd.f32 %v930, %v4792
      %v4794 = vpop.f32.mrb[0].mxu0
      %4795 = vmatprep.mubr.bf16.mxu0 %v4559
      %4796 = vmatmul.mubr.bf16.gmra.mrb[0].mxu0 %v4409
      %v4797 = vpop.f32.mrb[0].mxu0
      %v4798 = vadd.f32 %v930, %v4797
      %v4799 = vpop.f32.mrb[0].mxu0
      %v4800 = vpop.f32.mrb[0].mxu0
      %v4801 = vadd.f32 %v930, %v4800
      %v4802 = vpop.f32.mrb[0].mxu0
      %4803 = vmatprep.mubr.bf16.mxu0 %v4560
      %4804 = vmatmul.mubr.bf16.gmra.mrb[0].mxu0 %v4410
      %v4805 = vpop.f32.mrb[0].mxu0
      %v4806 = vadd.f32 %v930, %v4805
      %v4807 = vpop.f32.mrb[0].mxu0
      %v4808 = vpop.f32.mrb[0].mxu0
      %v4809 = vadd.f32 %v930, %v4808
      %v4810 = vpop.f32.mrb[0].mxu0
      %4811 = vmatprep.mubr.bf16.mxu0 %v4561
      %4812 = vmatmul.mubr.bf16.gmra.mrb[0].mxu0 %v4411
      %v4813 = vpop.f32.mrb[0].mxu0
      %v4814 = vadd.f32 %v930, %v4813
      %v4815 = vpop.f32.mrb[0].mxu0
      %v4816 = vpop.f32.mrb[0].mxu0
      %v4817 = vadd.f32 %v930, %v4816
      %v4818 = vpop.f32.mrb[0].mxu0
      %4819 = vmatprep.mubr.bf16.mxu0 %v4562
      %4820 = vmatmul.mubr.bf16.gmra.mrb[0].mxu0 %v4412
      %v4821 = vpop.f32.mrb[0].mxu0
      %v4822 = vadd.f32 %v930, %v4821
      %v4823 = vpop.f32.mrb[0].mxu0
      %v4824 = vpop.f32.mrb[0].mxu0
      %v4825 = vadd.f32 %v930, %v4824
      %v4826 = vpop.f32.mrb[0].mxu0
      %4827 = vmatprep.mubr.bf16.mxu0 %v4563
      %4828 = vmatmul.mubr.bf16.gmra.mrb[0].mxu0 %v4413
      %v4829 = vpop.f32.mrb[0].mxu0
      %v4830 = vadd.f32 %v930, %v4829
      %v4831 = vpop.f32.mrb[0].mxu0
      %v4832 = vpop.f32.mrb[0].mxu0
      %v4833 = vadd.f32 %v930, %v4832
      %v4834 = vpop.f32.mrb[0].mxu0
      %4835 = vmatprep.mubr.bf16.mxu0 %v4564
      %4836 = vmatmul.mubr.bf16.gmra.mrb[0].mxu0 %v4414
      %v4837 = vpop.f32.mrb[0].mxu0
      %v4838 = vadd.f32 %v930, %v4837
      %v4839 = vpop.f32.mrb[0].mxu0
      %v4840 = vpop.f32.mrb[0].mxu0
      %v4841 = vadd.f32 %v930, %v4840
      %v4842 = vpop.f32.mrb[0].mxu0
      %4843 = vmatprep.mubr.bf16.mxu0 %v4565
      %4844 = vmatmul.mubr.bf16.gmra.mrb[0].mxu0 %v4415
      %v4845 = vpop.f32.mrb[0].mxu0
      %v4846 = vadd.f32 %v930, %v4845
      %v4847 = vpop.f32.mrb[0].mxu0
      %v4848 = vpop.f32.mrb[0].mxu0
      %v4849 = vadd.f32 %v930, %v4848
      %v4850 = vpop.f32.mrb[0].mxu0
      %4851 = vmatprep.mubr.bf16.mxu0 %v4566
      %4852 = vmatmul.mubr.bf16.gmra.mrb[0].mxu0 %v4416
      %v4853 = vpop.f32.mrb[0].mxu0
      %v4854 = vadd.f32 %v930, %v4853
      %v4855 = vpop.f32.mrb[0].mxu0
      %v4856 = vpop.f32.mrb[0].mxu0
      %v4857 = vadd.f32 %v930, %v4856
      %v4858 = vpop.f32.mrb[0].mxu0
      %4859 = vmatprep.mubr.bf16.mxu0 %v4567
      %4860 = vmatmul.mubr.bf16.gmra.mrb[0].mxu0 %v4417
      %v4861 = vpop.f32.mrb[0].mxu0
      %v4862 = vadd.f32 %v930, %v4861
      %v4863 = vpop.f32.mrb[0].mxu0
      %v4864 = vpop.f32.mrb[0].mxu0
      %v4865 = vadd.f32 %v930, %v4864
      %v4866 = vpop.f32.mrb[0].mxu0
      %4867 = vdwg.mxu0
      %4868 = vmatprep.subr.bf16.mxu0 0
      %4869 = vmatpush1.bf16.msra.mxu0 %v1235
      %4870 = vmatprep.subr.bf16.mxu0 0
      %4871 = vmatpush1.bf16.msra.mxu0 %v1236
      %4872 = vmatprep.subr.bf16.mxu0 0
      %4873 = vmatpush1.bf16.msra.mxu0 %v1237
      %4874 = vmatprep.subr.bf16.mxu0 0
      %4875 = vmatpush1.bf16.msra.mxu0 %v1238
      %4876 = vmatprep.subr.bf16.mxu0 0
      %4877 = vmatpush1.bf16.msra.mxu0 %v1239
      %4878 = vmatprep.subr.bf16.mxu0 0
      %4879 = vmatpush1.bf16.msra.mxu0 %v1240
      %4880 = vmatprep.subr.bf16.mxu0 0
      %4881 = vmatpush1.bf16.msra.mxu0 %v1241
      %4882 = vmatprep.subr.bf16.mxu0 0
      %4883 = vmatpush1.bf16.msra.mxu0 %v1242
      %4884 = vmatprep.subr.bf16.mxu0 0
      %4885 = vmatpush1.bf16.msra.mxu0 %v1243
      %4886 = vmatprep.subr.bf16.mxu0 0
      %4887 = vmatpush1.bf16.msra.mxu0 %v1244
      %4888 = vmatprep.subr.bf16.mxu0 0
      %4889 = vmatpush1.bf16.msra.mxu0 %v1245
      %4890 = vmatprep.subr.bf16.mxu0 0
      %4891 = vmatpush1.bf16.msra.mxu0 %v1246
      %4892 = vmatprep.subr.bf16.mxu0 0
      %4893 = vmatpush1.bf16.msra.mxu0 %v1247
      %4894 = vmatprep.subr.bf16.mxu0 0
      %4895 = vmatpush1.bf16.msra.mxu0 %v1248
      %4896 = vmatprep.subr.bf16.mxu0 0
      %4897 = vmatpush1.bf16.msra.mxu0 %v1249
      %4898 = vmatprep.subr.bf16.mxu0 0
      %4899 = vmatpush1.bf16.msra.mxu0 %v1250
      %4900 = vmatprep.mubr.bf16.mxu0 %v4404
      %4901 = vmatmul.mubr.bf16.gmra.mrb[0].mxu0 %v4673
      %v4902 = vpop.f32.mrb[0].mxu0
      %v4903 = vadd.f32 %v4742, %v4902
      %v4904 = vpop.f32.mrb[0].mxu0
      %v4905 = vpop.f32.mrb[0].mxu0
      %v4906 = vadd.f32 %v4745, %v4905
      %v4907 = vpop.f32.mrb[0].mxu0
      %4908 = vmatprep.mubr.bf16.mxu0 %v4403
      %4909 = vmatmul.mubr.bf16.gmra.mrb[0].mxu0 %v4674
      %v4910 = vpop.f32.mrb[0].mxu0
      %v4911 = vadd.f32 %v4750, %v4910
      %v4912 = vpop.f32.mrb[0].mxu0
      %v4913 = vpop.f32.mrb[0].mxu0
      %v4914 = vadd.f32 %v4753, %v4913
      %v4915 = vpop.f32.mrb[0].mxu0
      %4916 = vmatprep.mubr.bf16.mxu0 %v4405
      %4917 = vmatmul.mubr.bf16.gmra.mrb[0].mxu0 %v4673
      %v4918 = vpop.f32.mrb[0].mxu0
      %v4919 = vadd.f32 %v4758, %v4918
      %v4920 = vpop.f32.mrb[0].mxu0
      %v4921 = vpop.f32.mrb[0].mxu0
      %v4922 = vadd.f32 %v4761, %v4921
      %v4923 = vpop.f32.mrb[0].mxu0
      %4924 = vmatprep.mubr.bf16.mxu0 %v4406
      %4925 = vmatmul.mubr.bf16.gmra.mrb[0].mxu0 %v4675
      %v4926 = vpop.f32.mrb[0].mxu0
      %v4927 = vadd.f32 %v4766, %v4926
      %v4928 = vpop.f32.mrb[0].mxu0
      %v4929 = vpop.f32.mrb[0].mxu0
      %v4930 = vadd.f32 %v4769, %v4929
      %v4931 = vpop.f32.mrb[0].mxu0
      %4932 = vmatprep.mubr.bf16.mxu0 %v4407
      %4933 = vmatmul.mubr.bf16.gmra.mrb[0].mxu0 %v4676
      %v4934 = vpop.f32.mrb[0].mxu0
      %v4935 = vadd.f32 %v4774, %v4934
      %v4936 = vpop.f32.mrb[0].mxu0
      %v4937 = vpop.f32.mrb[0].mxu0
      %v4938 = vadd.f32 %v4777, %v4937
      %v4939 = vpop.f32.mrb[0].mxu0
      %4940 = vmatprep.mubr.bf16.mxu0 %v4408
      %4941 = vmatmul.mubr.bf16.gmra.mrb[0].mxu0 %v4677
      %v4942 = vpop.f32.mrb[0].mxu0
      %v4943 = vadd.f32 %v4782, %v4942
      %v4944 = vpop.f32.mrb[0].mxu0
      %v4945 = vpop.f32.mrb[0].mxu0
      %v4946 = vadd.f32 %v4785, %v4945
      %v4947 = vpop.f32.mrb[0].mxu0
      %4948 = vmatprep.mubr.bf16.mxu0 %v4409
      %4949 = vmatmul.mubr.bf16.gmra.mrb[0].mxu0 %v4678
      %v4950 = vpop.f32.mrb[0].mxu0
      %v4951 = vadd.f32 %v4790, %v4950
      %v4952 = vpop.f32.mrb[0].mxu0
      %v4953 = vpop.f32.mrb[0].mxu0
      %v4954 = vadd.f32 %v4793, %v4953
      %v4955 = vpop.f32.mrb[0].mxu0
      %4956 = vmatprep.mubr.bf16.mxu0 %v4410
      %4957 = vmatmul.mubr.bf16.gmra.mrb[0].mxu0 %v4679
      %v4958 = vpop.f32.mrb[0].mxu0
      %v4959 = vadd.f32 %v4798, %v4958
      %v4960 = vpop.f32.mrb[0].mxu0
      %v4961 = vpop.f32.mrb[0].mxu0
      %v4962 = vadd.f32 %v4801, %v4961
      %v4963 = vpop.f32.mrb[0].mxu0
      %4964 = vmatprep.mubr.bf16.mxu0 %v4411
      %4965 = vmatmul.mubr.bf16.gmra.mrb[0].mxu0 %v4680
      %v4966 = vpop.f32.mrb[0].mxu0
      %v4967 = vadd.f32 %v4806, %v4966
      %v4968 = vpop.f32.mrb[0].mxu0
      %v4969 = vpop.f32.mrb[0].mxu0
      %v4970 = vadd.f32 %v4809, %v4969
      %v4971 = vpop.f32.mrb[0].mxu0
      %4972 = vmatprep.mubr.bf16.mxu0 %v4412
      %4973 = vmatmul.mubr.bf16.gmra.mrb[0].mxu0 %v4681
      %v4974 = vpop.f32.mrb[0].mxu0
      %v4975 = vadd.f32 %v4814, %v4974
      %v4976 = vpop.f32.mrb[0].mxu0
      %v4977 = vpop.f32.mrb[0].mxu0
      %v4978 = vadd.f32 %v4817, %v4977
      %v4979 = vpop.f32.mrb[0].mxu0
      %4980 = vmatprep.mubr.bf16.mxu0 %v4413
      %4981 = vmatmul.mubr.bf16.gmra.mrb[0].mxu0 %v4682
      %v4982 = vpop.f32.mrb[0].mxu0
      %v4983 = vadd.f32 %v4822, %v4982
      %v4984 = vpop.f32.mrb[0].mxu0
      %v4985 = vpop.f32.mrb[0].mxu0
      %v4986 = vadd.f32 %v4825, %v4985
      %v4987 = vpop.f32.mrb[0].mxu0
      %4988 = vmatprep.mubr.bf16.mxu0 %v4414
      %4989 = vmatmul.mubr.bf16.gmra.mrb[0].mxu0 %v4683
      %v4990 = vpop.f32.mrb[0].mxu0
      %v4991 = vadd.f32 %v4830, %v4990
      %v4992 = vpop.f32.mrb[0].mxu0
      %v4993 = vpop.f32.mrb[0].mxu0
      %v4994 = vadd.f32 %v4833, %v4993
      %v4995 = vpop.f32.mrb[0].mxu0
      %4996 = vmatprep.mubr.bf16.mxu0 %v4415
      %4997 = vmatmul.mubr.bf16.gmra.mrb[0].mxu0 %v4684
      %v4998 = vpop.f32.mrb[0].mxu0
      %v4999 = vadd.f32 %v4838, %v4998
      %v5000 = vpop.f32.mrb[0].mxu0
      %v5001 = vpop.f32.mrb[0].mxu0
      %v5002 = vadd.f32 %v4841, %v5001
      %v5003 = vpop.f32.mrb[0].mxu0
      %5004 = vmatprep.mubr.bf16.mxu0 %v4416
      %5005 = vmatmul.mubr.bf16.gmra.mrb[0].mxu0 %v4685
      %v5006 = vpop.f32.mrb[0].mxu0
      %v5007 = vadd.f32 %v4846, %v5006
      %v5008 = vpop.f32.mrb[0].mxu0
      %v5009 = vpop.f32.mrb[0].mxu0
      %v5010 = vadd.f32 %v4849, %v5009
      %v5011 = vpop.f32.mrb[0].mxu0
      %5012 = vmatprep.mubr.bf16.mxu0 %v4417
      %5013 = vmatmul.mubr.bf16.gmra.mrb[0].mxu0 %v4686
      %v5014 = vpop.f32.mrb[0].mxu0
      %v5015 = vadd.f32 %v4854, %v5014
      %v5016 = vpop.f32.mrb[0].mxu0
      %v5017 = vpop.f32.mrb[0].mxu0
      %v5018 = vadd.f32 %v4857, %v5017
      %v5019 = vpop.f32.mrb[0].mxu0
      %5020 = vmatprep.mubr.bf16.mxu0 %v4688
      %5021 = vmatmul.mubr.bf16.gmra.mrb[0].mxu0 %v4687
      %v5022 = vpop.f32.mrb[0].mxu0
      %v5023 = vadd.f32 %v4862, %v5022
      %v5024 = vpop.f32.mrb[0].mxu0
      %v5025 = vpop.f32.mrb[0].mxu0
      %v5026 = vadd.f32 %v4865, %v5025
      %v5027 = vpop.f32.mrb[0].mxu0
      %5028 = vdwg.mxu0
      %5029 = vmatprep.subr.bf16.mxu0 0
      %5030 = vmatpush1.bf16.msra.mxu0 %v1251
      %5031 = vmatprep.subr.bf16.mxu0 0
      %5032 = vmatpush1.bf16.msra.mxu0 %v1252
      %5033 = vmatprep.subr.bf16.mxu0 0
      %5034 = vmatpush1.bf16.msra.mxu0 %v1253
      %5035 = vmatprep.subr.bf16.mxu0 0
      %5036 = vmatpush1.bf16.msra.mxu0 %v1254
      %5037 = vmatprep.subr.bf16.mxu0 0
      %5038 = vmatpush1.bf16.msra.mxu0 %v1255
      %5039 = vmatprep.subr.bf16.mxu0 0
      %5040 = vmatpush1.bf16.msra.mxu0 %v1256
      %5041 = vmatprep.subr.bf16.mxu0 0
      %5042 = vmatpush1.bf16.msra.mxu0 %v1257
      %5043 = vmatprep.subr.bf16.mxu0 0
      %5044 = vmatpush1.bf16.msra.mxu0 %v1258
      %5045 = vmatprep.subr.bf16.mxu0 0
      %5046 = vmatpush1.bf16.msra.mxu0 %v1259
      %5047 = vmatprep.subr.bf16.mxu0 0
      %5048 = vmatpush1.bf16.msra.mxu0 %v1260
      %5049 = vmatprep.subr.bf16.mxu0 0
      %5050 = vmatpush1.bf16.msra.mxu0 %v1261
      %5051 = vmatprep.subr.bf16.mxu0 0
      %5052 = vmatpush1.bf16.msra.mxu0 %v1262
      %5053 = vmatprep.subr.bf16.mxu0 0
      %5054 = vmatpush1.bf16.msra.mxu0 %v1263
      %5055 = vmatprep.subr.bf16.mxu0 0
      %5056 = vmatpush1.bf16.msra.mxu0 %v1264
      %5057 = vmatprep.subr.bf16.mxu0 0
      %5058 = vmatpush1.bf16.msra.mxu0 %v1265
      %5059 = vmatprep.subr.bf16.mxu0 0
      %5060 = vmatpush1.bf16.msra.mxu0 %v1266
      %5061 = vmatprep.mubr.bf16.mxu0 %v4674
      %5062 = vmatmul.mubr.bf16.gmra.mrb[0].mxu0 %v4554
      %v5063 = vpop.f32.mrb[0].mxu0
      %v5064 = vadd.f32 %v4903, %v5063
      %v5065 = vpop.f32.mrb[0].mxu0
      %v5066 = vpop.f32.mrb[0].mxu0
      %v5067 = vadd.f32 %v4906, %v5066
      %v5068 = vpop.f32.mrb[0].mxu0
      %5069 = vmatprep.mubr.bf16.mxu0 %v4673
      %5070 = vmatmul.mubr.bf16.gmra.mrb[0].mxu0 %v4553
      %v5071 = vpop.f32.mrb[0].mxu0
      %v5072 = vadd.f32 %v4911, %v5071
      %v5073 = vpop.f32.mrb[0].mxu0
      %v5074 = vpop.f32.mrb[0].mxu0
      %v5075 = vadd.f32 %v4914, %v5074
      %v5076 = vpop.f32.mrb[0].mxu0
      %5077 = vmatprep.mubr.bf16.mxu0 %v4675
      %5078 = vmatmul.mubr.bf16.gmra.mrb[0].mxu0 %v4555
      %v5079 = vpop.f32.mrb[0].mxu0
      %v5080 = vadd.f32 %v4919, %v5079
      %v5081 = vpop.f32.mrb[0].mxu0
      %v5082 = vpop.f32.mrb[0].mxu0
      %v5083 = vadd.f32 %v4922, %v5082
      %v5084 = vpop.f32.mrb[0].mxu0
      %5085 = vmatprep.mubr.bf16.mxu0 %v4676
      %5086 = vmatmul.mubr.bf16.gmra.mrb[0].mxu0 %v4556
      %v5087 = vpop.f32.mrb[0].mxu0
      %v5088 = vadd.f32 %v4927, %v5087
      %v5089 = vpop.f32.mrb[0].mxu0
      %v5090 = vpop.f32.mrb[0].mxu0
      %v5091 = vadd.f32 %v4930, %v5090
      %v5092 = vpop.f32.mrb[0].mxu0
      %5093 = vmatprep.mubr.bf16.mxu0 %v4677
      %5094 = vmatmul.mubr.bf16.gmra.mrb[0].mxu0 %v4557
      %v5095 = vpop.f32.mrb[0].mxu0
      %v5096 = vadd.f32 %v4935, %v5095
      %v5097 = vpop.f32.mrb[0].mxu0
      %v5098 = vpop.f32.mrb[0].mxu0
      %v5099 = vadd.f32 %v4938, %v5098
      %v5100 = vpop.f32.mrb[0].mxu0
      %5101 = vmatprep.mubr.bf16.mxu0 %v4678
      %5102 = vmatmul.mubr.bf16.gmra.mrb[0].mxu0 %v4558
      %v5103 = vpop.f32.mrb[0].mxu0
      %v5104 = vadd.f32 %v4943, %v5103
      %v5105 = vpop.f32.mrb[0].mxu0
      %v5106 = vpop.f32.mrb[0].mxu0
      %v5107 = vadd.f32 %v4946, %v5106
      %v5108 = vpop.f32.mrb[0].mxu0
      %5109 = vmatprep.mubr.bf16.mxu0 %v4679
      %5110 = vmatmul.mubr.bf16.gmra.mrb[0].mxu0 %v4559
      %v5111 = vpop.f32.mrb[0].mxu0
      %v5112 = vadd.f32 %v4951, %v5111
      %v5113 = vpop.f32.mrb[0].mxu0
      %v5114 = vpop.f32.mrb[0].mxu0
      %v5115 = vadd.f32 %v4954, %v5114
      %v5116 = vpop.f32.mrb[0].mxu0
      %5117 = vmatprep.mubr.bf16.mxu0 %v4680
      %5118 = vmatmul.mubr.bf16.gmra.mrb[0].mxu0 %v4560
      %v5119 = vpop.f32.mrb[0].mxu0
      %v5120 = vadd.f32 %v4959, %v5119
      %v5121 = vpop.f32.mrb[0].mxu0
      %v5122 = vpop.f32.mrb[0].mxu0
      %v5123 = vadd.f32 %v4962, %v5122
      %v5124 = vpop.f32.mrb[0].mxu0
      %5125 = vmatprep.mubr.bf16.mxu0 %v4681
      %5126 = vmatmul.mubr.bf16.gmra.mrb[0].mxu0 %v4561
      %v5127 = vpop.f32.mrb[0].mxu0
      %v5128 = vadd.f32 %v4967, %v5127
      %v5129 = vpop.f32.mrb[0].mxu0
      %v5130 = vpop.f32.mrb[0].mxu0
      %v5131 = vadd.f32 %v4970, %v5130
      %v5132 = vpop.f32.mrb[0].mxu0
      %5133 = vmatprep.mubr.bf16.mxu0 %v4682
      %5134 = vmatmul.mubr.bf16.gmra.mrb[0].mxu0 %v4562
      %v5135 = vpop.f32.mrb[0].mxu0
      %v5136 = vadd.f32 %v4975, %v5135
      %v5137 = vpop.f32.mrb[0].mxu0
      %v5138 = vpop.f32.mrb[0].mxu0
      %v5139 = vadd.f32 %v4978, %v5138
      %v5140 = vpop.f32.mrb[0].mxu0
      %5141 = vmatprep.mubr.bf16.mxu0 %v4683
      %5142 = vmatmul.mubr.bf16.gmra.mrb[0].mxu0 %v4563
      %v5143 = vpop.f32.mrb[0].mxu0
      %v5144 = vadd.f32 %v4983, %v5143
      %v5145 = vpop.f32.mrb[0].mxu0
      %v5146 = vpop.f32.mrb[0].mxu0
      %v5147 = vadd.f32 %v4986, %v5146
      %v5148 = vpop.f32.mrb[0].mxu0
      %5149 = vmatprep.mubr.bf16.mxu0 %v4684
      %5150 = vmatmul.mubr.bf16.gmra.mrb[0].mxu0 %v4564
      %v5151 = vpop.f32.mrb[0].mxu0
      %v5152 = vadd.f32 %v4991, %v5151
      %v5153 = vpop.f32.mrb[0].mxu0
      %v5154 = vpop.f32.mrb[0].mxu0
      %v5155 = vadd.f32 %v4994, %v5154
      %v5156 = vpop.f32.mrb[0].mxu0
      %5157 = vmatprep.mubr.bf16.mxu0 %v4685
      %5158 = vmatmul.mubr.bf16.gmra.mrb[0].mxu0 %v4565
      %v5159 = vpop.f32.mrb[0].mxu0
      %v5160 = vadd.f32 %v4999, %v5159
      %v5161 = vpop.f32.mrb[0].mxu0
      %v5162 = vpop.f32.mrb[0].mxu0
      %v5163 = vadd.f32 %v5002, %v5162
      %v5164 = vpop.f32.mrb[0].mxu0
      %5165 = vmatprep.mubr.bf16.mxu0 %v4686
      %5166 = vmatmul.mubr.bf16.gmra.mrb[0].mxu0 %v4566
      %v5167 = vpop.f32.mrb[0].mxu0
      %v5168 = vadd.f32 %v5007, %v5167
      %v5169 = vpop.f32.mrb[0].mxu0
      %v5170 = vpop.f32.mrb[0].mxu0
      %v5171 = vadd.f32 %v5010, %v5170
      %v5172 = vpop.f32.mrb[0].mxu0
      %5173 = vmatprep.mubr.bf16.mxu0 %v4687
      %5174 = vmatmul.mubr.bf16.gmra.mrb[0].mxu0 %v4567
      %v5175 = vpop.f32.mrb[0].mxu0
      %v5176 = vadd.f32 %v5015, %v5175
      %v5177 = vpop.f32.mrb[0].mxu0
      %v5178 = vpop.f32.mrb[0].mxu0
      %v5179 = vadd.f32 %v5018, %v5178
      %v5180 = vpop.f32.mrb[0].mxu0
      %5181 = vmatprep.mubr.bf16.mxu0 %v4706
      %5182 = vmatmul.mubr.bf16.gmra.mrb[0].mxu0 %v4698
      %v5183 = vpop.f32.mrb[0].mxu0
      %v5184 = vadd.f32 %v5023, %v5183
      %v5185 = vpop.f32.mrb[0].mxu0
      %v5186 = vpop.f32.mrb[0].mxu0
      %v5187 = vadd.f32 %v5026, %v5186
      %v5188 = vpop.f32.mrb[0].mxu0
      %5189 = vdwg.mxu0
      %5190 = vmatprep.subr.bf16.mxu0 0
      %5191 = vmatpush1.bf16.msra.mxu0 %v1267
      %5192 = vmatprep.subr.bf16.mxu0 0
      %5193 = vmatpush1.bf16.msra.mxu0 %v1268
      %5194 = vmatprep.subr.bf16.mxu0 0
      %5195 = vmatpush1.bf16.msra.mxu0 %v1269
      %5196 = vmatprep.subr.bf16.mxu0 0
      %5197 = vmatpush1.bf16.msra.mxu0 %v1270
      %5198 = vmatprep.subr.bf16.mxu0 0
      %5199 = vmatpush1.bf16.msra.mxu0 %v1271
      %5200 = vmatprep.subr.bf16.mxu0 0
      %5201 = vmatpush1.bf16.msra.mxu0 %v1272
      %5202 = vmatprep.subr.bf16.mxu0 0
      %5203 = vmatpush1.bf16.msra.mxu0 %v1273
      %5204 = vmatprep.subr.bf16.mxu0 0
      %5205 = vmatpush1.bf16.msra.mxu0 %v1274
      %5206 = vmatprep.subr.bf16.mxu0 0
      %5207 = vmatpush1.bf16.msra.mxu0 %v1275
      %5208 = vmatprep.subr.bf16.mxu0 0
      %5209 = vmatpush1.bf16.msra.mxu0 %v1276
      %5210 = vmatprep.subr.bf16.mxu0 0
      %5211 = vmatpush1.bf16.msra.mxu0 %v1277
      %5212 = vmatprep.subr.bf16.mxu0 0
      %5213 = vmatpush1.bf16.msra.mxu0 %v1278
      %5214 = vmatprep.subr.bf16.mxu0 0
      %5215 = vmatpush1.bf16.msra.mxu0 %v1279
      %5216 = vmatprep.subr.bf16.mxu0 0
      %5217 = vmatpush1.bf16.msra.mxu0 %v1280
      %5218 = vmatprep.subr.bf16.mxu0 0
      %5219 = vmatpush1.bf16.msra.mxu0 %v1281
      %5220 = vmatprep.subr.bf16.mxu0 0
      %5221 = vmatpush1.bf16.msra.mxu0 %v1282
      %5222 = vmatprep.mubr.bf16.mxu0 %v4553
      %5223 = vmatmul.mubr.bf16.gmra.mrb[0].mxu0 %v4403
      %v5224 = vpop.f32.mrb[0].mxu0
      %v5225 = vadd.f32 %v5064, %v5224
      %v5226 = vpop.f32.mrb[0].mxu0
      %v5227 = vpop.f32.mrb[0].mxu0
      %v5228 = vadd.f32 %v5067, %v5227
      %v5229 = vpop.f32.mrb[0].mxu0
      %5230 = vmatprep.mubr.bf16.mxu0 %v4555
      %5231 = vmatmul.mubr.bf16.gmra.mrb[0].mxu0 %v4405
      %v5232 = vpop.f32.mrb[0].mxu0
      %v5233 = vadd.f32 %v5072, %v5232
      %v5234 = vpop.f32.mrb[0].mxu0
      %v5235 = vpop.f32.mrb[0].mxu0
      %v5236 = vadd.f32 %v5075, %v5235
      %v5237 = vpop.f32.mrb[0].mxu0
      %5238 = vmatprep.mubr.bf16.mxu0 %v4556
      %5239 = vmatmul.mubr.bf16.gmra.mrb[0].mxu0 %v4406
      %v5240 = vpop.f32.mrb[0].mxu0
      %v5241 = vadd.f32 %v5080, %v5240
      %v5242 = vpop.f32.mrb[0].mxu0
      %v5243 = vpop.f32.mrb[0].mxu0
      %v5244 = vadd.f32 %v5083, %v5243
      %v5245 = vpop.f32.mrb[0].mxu0
      %5246 = vmatprep.mubr.bf16.mxu0 %v4557
      %5247 = vmatmul.mubr.bf16.gmra.mrb[0].mxu0 %v4407
      %v5248 = vpop.f32.mrb[0].mxu0
      %v5249 = vadd.f32 %v5088, %v5248
      %v5250 = vpop.f32.mrb[0].mxu0
      %v5251 = vpop.f32.mrb[0].mxu0
      %v5252 = vadd.f32 %v5091, %v5251
      %v5253 = vpop.f32.mrb[0].mxu0
      %5254 = vmatprep.mubr.bf16.mxu0 %v4558
      %5255 = vmatmul.mubr.bf16.gmra.mrb[0].mxu0 %v4408
      %v5256 = vpop.f32.mrb[0].mxu0
      %v5257 = vadd.f32 %v5096, %v5256
      %v5258 = vpop.f32.mrb[0].mxu0
      %v5259 = vpop.f32.mrb[0].mxu0
      %v5260 = vadd.f32 %v5099, %v5259
      %v5261 = vpop.f32.mrb[0].mxu0
      %5262 = vmatprep.mubr.bf16.mxu0 %v4559
      %5263 = vmatmul.mubr.bf16.gmra.mrb[0].mxu0 %v4409
      %v5264 = vpop.f32.mrb[0].mxu0
      %v5265 = vadd.f32 %v5104, %v5264
      %v5266 = vpop.f32.mrb[0].mxu0
      %v5267 = vpop.f32.mrb[0].mxu0
      %v5268 = vadd.f32 %v5107, %v5267
      %v5269 = vpop.f32.mrb[0].mxu0
      %5270 = vmatprep.mubr.bf16.mxu0 %v4560
      %5271 = vmatmul.mubr.bf16.gmra.mrb[0].mxu0 %v4410
      %v5272 = vpop.f32.mrb[0].mxu0
      %v5273 = vadd.f32 %v5112, %v5272
      %v5274 = vpop.f32.mrb[0].mxu0
      %v5275 = vpop.f32.mrb[0].mxu0
      %v5276 = vadd.f32 %v5115, %v5275
      %v5277 = vpop.f32.mrb[0].mxu0
      %5278 = vmatprep.mubr.bf16.mxu0 %v4561
      %5279 = vmatmul.mubr.bf16.gmra.mrb[0].mxu0 %v4411
      %v5280 = vpop.f32.mrb[0].mxu0
      %v5281 = vadd.f32 %v5120, %v5280
      %v5282 = vpop.f32.mrb[0].mxu0
      %v5283 = vpop.f32.mrb[0].mxu0
      %v5284 = vadd.f32 %v5123, %v5283
      %v5285 = vpop.f32.mrb[0].mxu0
      %5286 = vmatprep.mubr.bf16.mxu0 %v4562
      %5287 = vmatmul.mubr.bf16.gmra.mrb[0].mxu0 %v4412
      %v5288 = vpop.f32.mrb[0].mxu0
      %v5289 = vadd.f32 %v5128, %v5288
      %v5290 = vpop.f32.mrb[0].mxu0
      %v5291 = vpop.f32.mrb[0].mxu0
      %v5292 = vadd.f32 %v5131, %v5291
      %v5293 = vpop.f32.mrb[0].mxu0
      %5294 = vmatprep.mubr.bf16.mxu0 %v4563
      %5295 = vmatmul.mubr.bf16.gmra.mrb[0].mxu0 %v4413
      %v5296 = vpop.f32.mrb[0].mxu0
      %v5297 = vadd.f32 %v5136, %v5296
      %v5298 = vpop.f32.mrb[0].mxu0
      %v5299 = vpop.f32.mrb[0].mxu0
      %v5300 = vadd.f32 %v5139, %v5299
      %v5301 = vpop.f32.mrb[0].mxu0
      %5302 = vmatprep.mubr.bf16.mxu0 %v4564
      %5303 = vmatmul.mubr.bf16.gmra.mrb[0].mxu0 %v4414
      %v5304 = vpop.f32.mrb[0].mxu0
      %v5305 = vadd.f32 %v5144, %v5304
      %v5306 = vpop.f32.mrb[0].mxu0
      %v5307 = vpop.f32.mrb[0].mxu0
      %v5308 = vadd.f32 %v5147, %v5307
      %v5309 = vpop.f32.mrb[0].mxu0
      %5310 = vmatprep.mubr.bf16.mxu0 %v4565
      %5311 = vmatmul.mubr.bf16.gmra.mrb[0].mxu0 %v4415
      %v5312 = vpop.f32.mrb[0].mxu0
      %v5313 = vadd.f32 %v5152, %v5312
      %v5314 = vpop.f32.mrb[0].mxu0
      %v5315 = vpop.f32.mrb[0].mxu0
      %v5316 = vadd.f32 %v5155, %v5315
      %v5317 = vpop.f32.mrb[0].mxu0
      %5318 = vmatprep.mubr.bf16.mxu0 %v4566
      %5319 = vmatmul.mubr.bf16.gmra.mrb[0].mxu0 %v4416
      %v5320 = vpop.f32.mrb[0].mxu0
      %v5321 = vadd.f32 %v5160, %v5320
      %v5322 = vpop.f32.mrb[0].mxu0
      %v5323 = vpop.f32.mrb[0].mxu0
      %v5324 = vadd.f32 %v5163, %v5323
      %v5325 = vpop.f32.mrb[0].mxu0
      %5326 = vmatprep.mubr.bf16.mxu0 %v4567
      %5327 = vmatmul.mubr.bf16.gmra.mrb[0].mxu0 %v4417
      %v5328 = vpop.f32.mrb[0].mxu0
      %v5329 = vadd.f32 %v5168, %v5328
      %v5330 = vpop.f32.mrb[0].mxu0
      %v5331 = vpop.f32.mrb[0].mxu0
      %v5332 = vadd.f32 %v5171, %v5331
      %v5333 = vpop.f32.mrb[0].mxu0
      %5334 = vmatprep.mubr.bf16.mxu0 %v4698
      %5335 = vmatmul.mubr.bf16.gmra.mrb[0].mxu0 %v4688
      %v5336 = vpop.f32.mrb[0].mxu0
      %v5337 = vadd.f32 %v5176, %v5336
      %v5338 = vpop.f32.mrb[0].mxu0
      %v5339 = vpop.f32.mrb[0].mxu0
      %v5340 = vadd.f32 %v5179, %v5339
      %v5341 = vpop.f32.mrb[0].mxu0
      %5342 = vmatprep.mubr.bf16.mxu0 %v4567
      %5343 = vmatmul.mubr.bf16.gmra.mrb[0].mxu0 %v4417
      %v5344 = vpop.f32.mrb[0].mxu0
      %v5345 = vadd.f32 %v5184, %v5344
      %v5346 = vpop.f32.mrb[0].mxu0
      %v5347 = vpop.f32.mrb[0].mxu0
      %v5348 = vadd.f32 %v5187, %v5347
      %v5349 = vpop.f32.mrb[0].mxu0
      %5350 = vdwg.mxu0
      %5351 = vmatprep.subr.bf16.mxu0 0
      %5352 = vmatpush1.bf16.msra.mxu0 %v1283
      %5353 = vmatprep.subr.bf16.mxu0 0
      %5354 = vmatpush1.bf16.msra.mxu0 %v1284
      %5355 = vmatprep.subr.bf16.mxu0 0
      %5356 = vmatpush1.bf16.msra.mxu0 %v1285
      %5357 = vmatprep.subr.bf16.mxu0 0
      %5358 = vmatpush1.bf16.msra.mxu0 %v1286
      %5359 = vmatprep.subr.bf16.mxu0 0
      %5360 = vmatpush1.bf16.msra.mxu0 %v1287
      %5361 = vmatprep.subr.bf16.mxu0 0
      %5362 = vmatpush1.bf16.msra.mxu0 %v1288
      %5363 = vmatprep.subr.bf16.mxu0 0
      %5364 = vmatpush1.bf16.msra.mxu0 %v1289
      %5365 = vmatprep.subr.bf16.mxu0 0
      %5366 = vmatpush1.bf16.msra.mxu0 %v1290
      %5367 = vmatprep.subr.bf16.mxu0 0
      %5368 = vmatpush1.bf16.msra.mxu0 0
      %5369 = vmatprep.subr.bf16.mxu0 0
      %5370 = vmatpush1.bf16.msra.mxu0 0
      %5371 = vmatprep.subr.bf16.mxu0 0
      %5372 = vmatpush1.bf16.msra.mxu0 0
      %5373 = vmatprep.subr.bf16.mxu0 0
      %5374 = vmatpush1.bf16.msra.mxu0 0
      %5375 = vmatprep.subr.bf16.mxu0 0
      %5376 = vmatpush1.bf16.msra.mxu0 0
      %5377 = vmatprep.subr.bf16.mxu0 0
      %5378 = vmatpush1.bf16.msra.mxu0 0
      %5379 = vmatprep.subr.bf16.mxu0 0
      %5380 = vmatpush1.bf16.msra.mxu0 0
      %5381 = vmatprep.subr.bf16.mxu0 0
      %5382 = vmatpush1.bf16.msra.mxu0 0
      %5383 = vmatprep.mubr.bf16.mxu0 0
      %5384 = vmatmul.mubr.bf16.gmra.mrb[0].mxu0 %v4673
      %v5385 = vpop.f32.mrb[0].mxu0
      %v5386 = vadd.f32 %v5225, %v5385
      %v5387 = vpop.f32.mrb[0].mxu0
      %v5388 = vpop.f32.mrb[0].mxu0
      %v5389 = vadd.f32 %v5228, %v5388
      %v5390 = vpop.f32.mrb[0].mxu0
      %5391 = vmatprep.mubr.bf16.mxu0 0
      %5392 = vmatmul.mubr.bf16.gmra.mrb[0].mxu0 %v4675
      %v5393 = vpop.f32.mrb[0].mxu0
      %v5394 = vadd.f32 %v5233, %v5393
      %v5395 = vpop.f32.mrb[0].mxu0
      %v5396 = vpop.f32.mrb[0].mxu0
      %v5397 = vadd.f32 %v5236, %v5396
      %v5398 = vpop.f32.mrb[0].mxu0
      %5399 = vmatprep.mubr.bf16.mxu0 0
      %5400 = vmatmul.mubr.bf16.gmra.mrb[0].mxu0 %v4676
      %v5401 = vpop.f32.mrb[0].mxu0
      %v5402 = vadd.f32 %v5241, %v5401
      %v5403 = vpop.f32.mrb[0].mxu0
      %v5404 = vpop.f32.mrb[0].mxu0
      %v5405 = vadd.f32 %v5244, %v5404
      %v5406 = vpop.f32.mrb[0].mxu0
      %5407 = vmatprep.mubr.bf16.mxu0 0
      %5408 = vmatmul.mubr.bf16.gmra.mrb[0].mxu0 %v4677
      %v5409 = vpop.f32.mrb[0].mxu0
      %v5410 = vadd.f32 %v5249, %v5409
      %v5411 = vpop.f32.mrb[0].mxu0
      %v5412 = vpop.f32.mrb[0].mxu0
      %v5413 = vadd.f32 %v5252, %v5412
      %v5414 = vpop.f32.mrb[0].mxu0
      %5415 = vmatprep.mubr.bf16.mxu0 0
      %5416 = vmatmul.mubr.bf16.gmra.mrb[0].mxu0 %v4678
      %v5417 = vpop.f32.mrb[0].mxu0
      %v5418 = vadd.f32 %v5257, %v5417
      %v5419 = vpop.f32.mrb[0].mxu0
      %v5420 = vpop.f32.mrb[0].mxu0
      %v5421 = vadd.f32 %v5260, %v5420
      %v5422 = vpop.f32.mrb[0].mxu0
      %5423 = vmatprep.mubr.bf16.mxu0 0
      %5424 = vmatmul.mubr.bf16.gmra.mrb[0].mxu0 %v4679
      %v5425 = vpop.f32.mrb[0].mxu0
      %v5426 = vadd.f32 %v5265, %v5425
      %v5427 = vpop.f32.mrb[0].mxu0
      %v5428 = vpop.f32.mrb[0].mxu0
      %v5429 = vadd.f32 %v5268, %v5428
      %v5430 = vpop.f32.mrb[0].mxu0
      %5431 = vmatprep.mubr.bf16.mxu0 0
      %5432 = vmatmul.mubr.bf16.gmra.mrb[0].mxu0 %v4680
      %v5433 = vpop.f32.mrb[0].mxu0
      %v5434 = vadd.f32 %v5273, %v5433
      %v5435 = vpop.f32.mrb[0].mxu0
      %v5436 = vpop.f32.mrb[0].mxu0
      %v5437 = vadd.f32 %v5276, %v5436
      %v5438 = vpop.f32.mrb[0].mxu0
      %5439 = vmatprep.mubr.bf16.mxu0 0
      %5440 = vmatmul.mubr.bf16.gmra.mrb[0].mxu0 %v4681
      %v5441 = vpop.f32.mrb[0].mxu0
      %v5442 = vadd.f32 %v5281, %v5441
      %v5443 = vpop.f32.mrb[0].mxu0
      %v5444 = vpop.f32.mrb[0].mxu0
      %v5445 = vadd.f32 %v5284, %v5444
      %v5446 = vpop.f32.mrb[0].mxu0
      %5447 = vmatprep.mubr.bf16.mxu0 0
      %5448 = vmatmul.mubr.bf16.gmra.mrb[0].mxu0 %v4682
      %v5449 = vpop.f32.mrb[0].mxu0
      %v5450 = vadd.f32 %v5289, %v5449
      %v5451 = vpop.f32.mrb[0].mxu0
      %v5452 = vpop.f32.mrb[0].mxu0
      %v5453 = vadd.f32 %v5292, %v5452
      %v5454 = vpop.f32.mrb[0].mxu0
      %5455 = vmatprep.mubr.bf16.mxu0 0
      %5456 = vmatmul.mubr.bf16.gmra.mrb[0].mxu0 %v4683
      %v5457 = vpop.f32.mrb[0].mxu0
      %v5458 = vadd.f32 %v5297, %v5457
      %v5459 = vpop.f32.mrb[0].mxu0
      %v5460 = vpop.f32.mrb[0].mxu0
      %v5461 = vadd.f32 %v5300, %v5460
      %v5462 = vpop.f32.mrb[0].mxu0
      %5463 = vmatprep.mubr.bf16.mxu0 0
      %5464 = vmatmul.mubr.bf16.gmra.mrb[0].mxu0 %v4684
      %v5465 = vpop.f32.mrb[0].mxu0
      %v5466 = vadd.f32 %v5305, %v5465
      %v5467 = vpop.f32.mrb[0].mxu0
      %v5468 = vpop.f32.mrb[0].mxu0
      %v5469 = vadd.f32 %v5308, %v5468
      %v5470 = vpop.f32.mrb[0].mxu0
      %5471 = vmatprep.mubr.bf16.mxu0 0
      %5472 = vmatmul.mubr.bf16.gmra.mrb[0].mxu0 %v4685
      %v5473 = vpop.f32.mrb[0].mxu0
      %v5474 = vadd.f32 %v5313, %v5473
      %v5475 = vpop.f32.mrb[0].mxu0
      %v5476 = vpop.f32.mrb[0].mxu0
      %v5477 = vadd.f32 %v5316, %v5476
      %v5478 = vpop.f32.mrb[0].mxu0
      %5479 = vmatprep.mubr.bf16.mxu0 0
      %5480 = vmatmul.mubr.bf16.gmra.mrb[0].mxu0 %v4686
      %v5481 = vpop.f32.mrb[0].mxu0
      %v5482 = vadd.f32 %v5321, %v5481
      %v5483 = vpop.f32.mrb[0].mxu0
      %v5484 = vpop.f32.mrb[0].mxu0
      %v5485 = vadd.f32 %v5324, %v5484
      %v5486 = vpop.f32.mrb[0].mxu0
      %5487 = vmatprep.mubr.bf16.mxu0 0
      %5488 = vmatmul.mubr.bf16.gmra.mrb[0].mxu0 %v4687
      %v5489 = vpop.f32.mrb[0].mxu0
      %v5490 = vadd.f32 %v5329, %v5489
      %v5491 = vpop.f32.mrb[0].mxu0
      %v5492 = vpop.f32.mrb[0].mxu0
      %v5493 = vadd.f32 %v5332, %v5492
      %v5494 = vpop.f32.mrb[0].mxu0
      %5495 = vmatprep.mubr.bf16.mxu0 0
      %5496 = vmatmul.mubr.bf16.gmra.mrb[0].mxu0 %v4706
      %v5497 = vpop.f32.mrb[0].mxu0
      %v5498 = vadd.f32 %v5337, %v5497
      %v5499 = vpop.f32.mrb[0].mxu0
      %v5500 = vpop.f32.mrb[0].mxu0
      %v5501 = vadd.f32 %v5340, %v5500
      %v5502 = vpop.f32.mrb[0].mxu0
      %5503 = vmatprep.mubr.bf16.mxu0 0
      %5504 = vmatmul.mubr.bf16.gmra.mrb[0].mxu0 %v4687
      %v5505 = vpop.f32.mrb[0].mxu0
      %v5506 = vadd.f32 %v5345, %v5505
      %v5507 = vpop.f32.mrb[0].mxu0
      %v5508 = vpop.f32.mrb[0].mxu0
      %v5509 = vadd.f32 %v5348, %v5508
      %v5510 = vpop.f32.mrb[0].mxu0
      %5511 = vdwg.mxu0
      %v5512 = vmax.f32 %v5386, 0.0
      %v5513 = vmax.f32 %v5389, 0.0
      %v5514 = vmax.f32 %v5394, 0.0
      %v5515 = vmax.f32 %v5397, 0.0
      %v5516 = vmax.f32 %v5402, 0.0
      %v5517 = vmax.f32 %v5405, 0.0
      %v5518 = vmax.f32 %v5410, 0.0
      %v5519 = vmax.f32 %v5413, 0.0
      %v5520 = vmax.f32 %v5418, 0.0
      %v5521 = vmax.f32 %v5421, 0.0
      %v5522 = vmax.f32 %v5426, 0.0
      %v5523 = vmax.f32 %v5429, 0.0
      %v5524 = vmax.f32 %v5434, 0.0
      %v5525 = vmax.f32 %v5437, 0.0
      %v5526 = vmax.f32 %v5442, 0.0
      %v5527 = vmax.f32 %v5445, 0.0
      %v5528 = vmax.f32 %v5450, 0.0
      %v5529 = vmax.f32 %v5453, 0.0
      %v5530 = vmax.f32 %v5458, 0.0
      %v5531 = vmax.f32 %v5461, 0.0
      %v5532 = vmax.f32 %v5466, 0.0
      %v5533 = vmax.f32 %v5469, 0.0
      %v5534 = vmax.f32 %v5474, 0.0
      %v5535 = vmax.f32 %v5477, 0.0
      %v5536 = vmax.f32 %v5482, 0.0
      %v5537 = vmax.f32 %v5485, 0.0
      %v5538 = vmax.f32 %v5490, 0.0
      %v5539 = vmax.f32 %v5493, 0.0
      %v5540 = vmax.f32 %v5498, 0.0
      %v5541 = vmax.f32 %v5501, 0.0
      %v5542 = vmax.f32 %v5506, 0.0
      %v5543 = vmax.f32 %v5509, 0.0
      %v5560 = vrot.slane %v5514, 1
      %v5561 = vrot.slane %v5512, 1
      %v5562 = vrot.slane %v5516, 1
      %v5563 = vrot.slane %v5518, 1
      %v5564 = vrot.slane %v5520, 1
      %v5565 = vrot.slane %v5522, 1
      %v5566 = vrot.slane %v5524, 1
      %v5567 = vrot.slane %v5526, 1
      %v5568 = vrot.slane %v5528, 1
      %v5569 = vrot.slane %v5530, 1
      %v5570 = vrot.slane %v5532, 1
      %v5571 = vrot.slane %v5534, 1
      %v5572 = vrot.slane %v5536, 1
      %v5573 = vrot.slane %v5538, 1
      %v5574 = vrot.slane %v5540, 1
      %v5575 = vrot.slane %v5542, 1
      %v5608 = vrot.slane %v5514, 7
      %v5609 = vrot.slane %v5515, 7
      %v5610 = vsel %vm315, %v5608, %v5609
      %v5611 = vrot.slane %v5512, 7
      %v5612 = vrot.slane %v5513, 7
      %v5613 = vsel %vm315, %v5611, %v5612
      %v5614 = vrot.slane %v5516, 7
      %v5615 = vrot.slane %v5517, 7
      %v5616 = vsel %vm315, %v5614, %v5615
      %v5617 = vrot.slane %v5518, 7
      %v5618 = vrot.slane %v5519, 7
      %v5619 = vsel %vm315, %v5617, %v5618
      %v5620 = vrot.slane %v5520, 7
      %v5621 = vrot.slane %v5521, 7
      %v5622 = vsel %vm315, %v5620, %v5621
      %v5623 = vrot.slane %v5522, 7
      %v5624 = vrot.slane %v5523, 7
      %v5625 = vsel %vm315, %v5623, %v5624
      %v5626 = vrot.slane %v5524, 7
      %v5627 = vrot.slane %v5525, 7
      %v5628 = vsel %vm315, %v5626, %v5627
      %v5629 = vrot.slane %v5526, 7
      %v5630 = vrot.slane %v5527, 7
      %v5631 = vsel %vm315, %v5629, %v5630
      %v5632 = vrot.slane %v5528, 7
      %v5633 = vrot.slane %v5529, 7
      %v5634 = vsel %vm315, %v5632, %v5633
      %v5635 = vrot.slane %v5530, 7
      %v5636 = vrot.slane %v5531, 7
      %v5637 = vsel %vm315, %v5635, %v5636
      %v5638 = vrot.slane %v5532, 7
      %v5639 = vrot.slane %v5533, 7
      %v5640 = vsel %vm315, %v5638, %v5639
      %v5641 = vrot.slane %v5534, 7
      %v5642 = vrot.slane %v5535, 7
      %v5643 = vsel %vm315, %v5641, %v5642
      %v5644 = vrot.slane %v5536, 7
      %v5645 = vrot.slane %v5537, 7
      %v5646 = vsel %vm315, %v5644, %v5645
      %v5647 = vrot.slane %v5538, 7
      %v5648 = vrot.slane %v5539, 7
      %v5649 = vsel %vm315, %v5647, %v5648
      %v5650 = vrot.slane %v5540, 7
      %v5651 = vrot.slane %v5541, 7
      %v5652 = vsel %vm315, %v5650, %v5651
      %v5653 = vrot.slane %v5542, 7
      %v5654 = vrot.slane %v5543, 7
      %v5655 = vsel %vm315, %v5653, %v5654
      %v5704 = vrot.slane %v5515, 5
      %v5705 = vrot.slane %v5513, 5
      %v5706 = vrot.slane %v5517, 5
      %v5707 = vrot.slane %v5519, 5
      %v5708 = vrot.slane %v5521, 5
      %v5709 = vrot.slane %v5523, 5
      %v5710 = vrot.slane %v5525, 5
      %v5711 = vrot.slane %v5527, 5
      %v5712 = vrot.slane %v5529, 5
      %v5713 = vrot.slane %v5531, 5
      %v5714 = vrot.slane %v5533, 5
      %v5715 = vrot.slane %v5535, 5
      %v5716 = vrot.slane %v5537, 5
      %v5717 = vrot.slane %v5539, 5
      %v5718 = vrot.slane %v5541, 5
      %v5719 = vrot.slane %v5543, 5
      %v5736 = vsel %vm315, %v5560, %v5608
      %v5737 = vsel %vm315, %v5561, %v5611
      %v5738 = vsel %vm315, %v5562, %v5614
      %v5739 = vsel %vm315, %v5563, %v5617
      %v5740 = vsel %vm315, %v5564, %v5620
      %v5741 = vsel %vm315, %v5565, %v5623
      %v5742 = vsel %vm315, %v5566, %v5626
      %v5743 = vsel %vm315, %v5567, %v5629
      %v5744 = vsel %vm315, %v5568, %v5632
      %v5745 = vsel %vm315, %v5569, %v5635
      %v5746 = vsel %vm315, %v5570, %v5638
      %v5747 = vsel %vm315, %v5571, %v5641
      %v5748 = vsel %vm315, %v5572, %v5644
      %v5749 = vsel %vm315, %v5573, %v5647
      %v5750 = vsel %vm315, %v5574, %v5650
      %v5751 = vsel %vm315, %v5575, %v5653
      %v5752 = vsel %vm315, %v5609, %v5704
      %v5753 = vsel %vm315, %v5612, %v5705
      %v5754 = vsel %vm315, %v5615, %v5706
      %v5755 = vsel %vm315, %v5618, %v5707
      %v5756 = vsel %vm315, %v5621, %v5708
      %v5757 = vsel %vm315, %v5624, %v5709
      %v5758 = vsel %vm315, %v5627, %v5710
      %v5759 = vsel %vm315, %v5630, %v5711
      %v5760 = vsel %vm315, %v5633, %v5712
      %v5761 = vsel %vm315, %v5636, %v5713
      %v5762 = vsel %vm315, %v5639, %v5714
      %v5763 = vsel %vm315, %v5642, %v5715
      %v5764 = vsel %vm315, %v5645, %v5716
      %v5765 = vsel %vm315, %v5648, %v5717
      %v5766 = vsel %vm315, %v5651, %v5718
      %v5767 = vsel %vm315, %v5654, %v5719
      %v5768 = vpack.c.bf16 %v5610, %v5736
      %v5769 = vpack.c.bf16 %v5613, %v5737
      %v5770 = vpack.c.bf16 %v5616, %v5738
      %v5771 = vpack.c.bf16 %v5619, %v5739
      %v5772 = vpack.c.bf16 %v5622, %v5740
      %v5773 = vpack.c.bf16 %v5625, %v5741
      %v5774 = vpack.c.bf16 %v5628, %v5742
      %v5775 = vpack.c.bf16 %v5631, %v5743
      %v5776 = vpack.c.bf16 %v5634, %v5744
      %v5777 = vpack.c.bf16 %v5637, %v5745
      %v5778 = vpack.c.bf16 %v5640, %v5746
      %v5779 = vpack.c.bf16 %v5643, %v5747
      %v5780 = vpack.c.bf16 %v5646, %v5748
      %v5781 = vpack.c.bf16 %v5649, %v5749
      %v5782 = vpack.c.bf16 %v5652, %v5750
      %v5813 = vrot.slane %v5736, 1
      %v5814 = vrot.slane %v5610, 1
      %v5815 = vsel %vm521, %v5813, %v5814
      %v5816 = vrot.slane %v5752, 1
      %v5817 = vsel %vm521, %v5814, %v5816
      %v5818 = vrot.slane %v5737, 1
      %v5819 = vrot.slane %v5613, 1
      %v5820 = vsel %vm521, %v5818, %v5819
      %v5821 = vrot.slane %v5753, 1
      %v5822 = vsel %vm521, %v5819, %v5821
      %v5823 = vrot.slane %v5738, 1
      %v5824 = vrot.slane %v5616, 1
      %v5825 = vsel %vm521, %v5823, %v5824
      %v5826 = vrot.slane %v5754, 1
      %v5827 = vsel %vm521, %v5824, %v5826
      %v5828 = vrot.slane %v5739, 1
      %v5829 = vrot.slane %v5619, 1
      %v5830 = vsel %vm521, %v5828, %v5829
      %v5831 = vrot.slane %v5755, 1
      %v5832 = vsel %vm521, %v5829, %v5831
      %v5833 = vrot.slane %v5740, 1
      %v5834 = vrot.slane %v5622, 1
      %v5835 = vsel %vm521, %v5833, %v5834
      %v5836 = vrot.slane %v5756, 1
      %v5837 = vsel %vm521, %v5834, %v5836
      %v5838 = vrot.slane %v5741, 1
      %v5839 = vrot.slane %v5625, 1
      %v5840 = vsel %vm521, %v5838, %v5839
      %v5841 = vrot.slane %v5757, 1
      %v5842 = vsel %vm521, %v5839, %v5841
      %v5843 = vrot.slane %v5742, 1
      %v5844 = vrot.slane %v5628, 1
      %v5845 = vsel %vm521, %v5843, %v5844
      %v5846 = vrot.slane %v5758, 1
      %v5847 = vsel %vm521, %v5844, %v5846
      %v5848 = vrot.slane %v5743, 1
      %v5849 = vrot.slane %v5631, 1
      %v5850 = vsel %vm521, %v5848, %v5849
      %v5851 = vrot.slane %v5759, 1
      %v5852 = vsel %vm521, %v5849, %v5851
      %v5853 = vrot.slane %v5744, 1
      %v5854 = vrot.slane %v5634, 1
      %v5855 = vsel %vm521, %v5853, %v5854
      %v5856 = vrot.slane %v5760, 1
      %v5857 = vsel %vm521, %v5854, %v5856
      %v5858 = vrot.slane %v5745, 1
      %v5859 = vrot.slane %v5637, 1
      %v5860 = vsel %vm521, %v5858, %v5859
      %v5861 = vrot.slane %v5761, 1
      %v5862 = vsel %vm521, %v5859, %v5861
      %v5863 = vrot.slane %v5746, 1
      %v5864 = vrot.slane %v5640, 1
      %v5865 = vsel %vm521, %v5863, %v5864
      %v5866 = vrot.slane %v5762, 1
      %v5867 = vsel %vm521, %v5864, %v5866
      %v5868 = vrot.slane %v5747, 1
      %v5869 = vrot.slane %v5643, 1
      %v5870 = vsel %vm521, %v5868, %v5869
      %v5871 = vrot.slane %v5763, 1
      %v5872 = vsel %vm521, %v5869, %v5871
      %v5873 = vrot.slane %v5748, 1
      %v5874 = vrot.slane %v5646, 1
      %v5875 = vsel %vm521, %v5873, %v5874
      %v5876 = vrot.slane %v5764, 1
      %v5877 = vsel %vm521, %v5874, %v5876
      %v5878 = vrot.slane %v5749, 1
      %v5879 = vrot.slane %v5649, 1
      %v5880 = vsel %vm521, %v5878, %v5879
      %v5881 = vrot.slane %v5765, 1
      %v5882 = vsel %vm521, %v5879, %v5881
      %v5883 = vrot.slane %v5750, 1
      %v5884 = vrot.slane %v5652, 1
      %v5885 = vsel %vm521, %v5883, %v5884
      %v5886 = vrot.slane %v5766, 1
      %v5887 = vsel %vm521, %v5884, %v5886
      %v5918 = vpack.c.bf16 %v5817, %v5815
      %v5919 = vpack.c.bf16 %v5822, %v5820
      %v5920 = vpack.c.bf16 %v5827, %v5825
      %v5921 = vpack.c.bf16 %v5832, %v5830
      %v5922 = vpack.c.bf16 %v5837, %v5835
      %v5923 = vpack.c.bf16 %v5842, %v5840
      %v5924 = vpack.c.bf16 %v5847, %v5845
      %v5925 = vpack.c.bf16 %v5852, %v5850
      %v5926 = vpack.c.bf16 %v5857, %v5855
      %v5927 = vpack.c.bf16 %v5862, %v5860
      %v5928 = vpack.c.bf16 %v5867, %v5865
      %v5929 = vpack.c.bf16 %v5872, %v5870
      %v5930 = vpack.c.bf16 %v5877, %v5875
      %v5931 = vpack.c.bf16 %v5882, %v5880
      %v5932 = vpack.c.bf16 %v5887, %v5885
      %v5933 = vrot.slane %v5736, 2
      %v5934 = vrot.slane %v5610, 2
      %v5935 = vsel %vm642, %v5933, %v5934
      %v5936 = vrot.slane %v5752, 2
      %v5937 = vsel %vm642, %v5934, %v5936
      %v5938 = vrot.slane %v5737, 2
      %v5939 = vrot.slane %v5613, 2
      %v5940 = vsel %vm642, %v5938, %v5939
      %v5941 = vrot.slane %v5753, 2
      %v5942 = vsel %vm642, %v5939, %v5941
      %v5943 = vrot.slane %v5738, 2
      %v5944 = vrot.slane %v5616, 2
      %v5945 = vsel %vm642, %v5943, %v5944
      %v5946 = vrot.slane %v5754, 2
      %v5947 = vsel %vm642, %v5944, %v5946
      %v5948 = vrot.slane %v5739, 2
      %v5949 = vrot.slane %v5619, 2
      %v5950 = vsel %vm642, %v5948, %v5949
      %v5951 = vrot.slane %v5755, 2
      %v5952 = vsel %vm642, %v5949, %v5951
      %v5953 = vrot.slane %v5740, 2
      %v5954 = vrot.slane %v5622, 2
      %v5955 = vsel %vm642, %v5953, %v5954
      %v5956 = vrot.slane %v5756, 2
      %v5957 = vsel %vm642, %v5954, %v5956
      %v5958 = vrot.slane %v5741, 2
      %v5959 = vrot.slane %v5625, 2
      %v5960 = vsel %vm642, %v5958, %v5959
      %v5961 = vrot.slane %v5757, 2
      %v5962 = vsel %vm642, %v5959, %v5961
      %v5963 = vrot.slane %v5742, 2
      %v5964 = vrot.slane %v5628, 2
      %v5965 = vsel %vm642, %v5963, %v5964
      %v5966 = vrot.slane %v5758, 2
      %v5967 = vsel %vm642, %v5964, %v5966
      %v5968 = vrot.slane %v5743, 2
      %v5969 = vrot.slane %v5631, 2
      %v5970 = vsel %vm642, %v5968, %v5969
      %v5971 = vrot.slane %v5759, 2
      %v5972 = vsel %vm642, %v5969, %v5971
      %v5973 = vrot.slane %v5744, 2
      %v5974 = vrot.slane %v5634, 2
      %v5975 = vsel %vm642, %v5973, %v5974
      %v5976 = vrot.slane %v5760, 2
      %v5977 = vsel %vm642, %v5974, %v5976
      %v5978 = vrot.slane %v5745, 2
      %v5979 = vrot.slane %v5637, 2
      %v5980 = vsel %vm642, %v5978, %v5979
      %v5981 = vrot.slane %v5761, 2
      %v5982 = vsel %vm642, %v5979, %v5981
      %v5983 = vrot.slane %v5746, 2
      %v5984 = vrot.slane %v5640, 2
      %v5985 = vsel %vm642, %v5983, %v5984
      %v5986 = vrot.slane %v5762, 2
      %v5987 = vsel %vm642, %v5984, %v5986
      %v5988 = vrot.slane %v5747, 2
      %v5989 = vrot.slane %v5643, 2
      %v5990 = vsel %vm642, %v5988, %v5989
      %v5991 = vrot.slane %v5763, 2
      %v5992 = vsel %vm642, %v5989, %v5991
      %v5993 = vrot.slane %v5748, 2
      %v5994 = vrot.slane %v5646, 2
      %v5995 = vsel %vm642, %v5993, %v5994
      %v5996 = vrot.slane %v5764, 2
      %v5997 = vsel %vm642, %v5994, %v5996
      %v5998 = vrot.slane %v5749, 2
      %v5999 = vrot.slane %v5649, 2
      %v6000 = vsel %vm642, %v5998, %v5999
      %v6001 = vrot.slane %v5765, 2
      %v6002 = vsel %vm642, %v5999, %v6001
      %v6003 = vrot.slane %v5750, 2
      %v6004 = vrot.slane %v5652, 2
      %v6005 = vsel %vm642, %v6003, %v6004
      %v6006 = vrot.slane %v5766, 2
      %v6007 = vsel %vm642, %v6004, %v6006
      %v6038 = vpack.c.bf16 %v5937, %v5935
      %v6039 = vpack.c.bf16 %v5942, %v5940
      %v6040 = vpack.c.bf16 %v5947, %v5945
      %v6041 = vpack.c.bf16 %v5952, %v5950
      %v6042 = vpack.c.bf16 %v5957, %v5955
      %v6043 = vpack.c.bf16 %v5962, %v5960
      %v6044 = vpack.c.bf16 %v5967, %v5965
      %v6045 = vpack.c.bf16 %v5972, %v5970
      %v6046 = vpack.c.bf16 %v5977, %v5975
      %v6047 = vpack.c.bf16 %v5982, %v5980
      %v6048 = vpack.c.bf16 %v5987, %v5985
      %v6049 = vpack.c.bf16 %v5992, %v5990
      %v6050 = vpack.c.bf16 %v5997, %v5995
      %v6051 = vpack.c.bf16 %v6002, %v6000
      %v6052 = vpack.c.bf16 %v6007, %v6005
      %v6053 = vpack.c.bf16 %v5655, %v5751
      %v6056 = vrot.slane %v5751, 1
      %v6057 = vrot.slane %v5655, 1
      %v6058 = vsel %vm521, %v6056, %v6057
      %v6059 = vrot.slane %v5767, 1
      %v6060 = vsel %vm521, %v6057, %v6059
      %v6063 = vpack.c.bf16 %v6060, %v6058
      %v6064 = vrot.slane %v5751, 2
      %v6065 = vrot.slane %v5655, 2
      %v6066 = vsel %vm642, %v6064, %v6065
      %v6067 = vrot.slane %v5767, 2
      %v6068 = vsel %vm642, %v6065, %v6067
      %v6071 = vpack.c.bf16 %v6068, %v6066
      %6072 = vmatprep.subr.bf16.mxu0 0
      %6073 = vmatpush1.bf16.msra.mxu0 %v3166
      %6074 = vmatprep.subr.bf16.mxu0 0
      %6075 = vmatpush1.bf16.msra.mxu0 %v3167
      %6076 = vmatprep.subr.bf16.mxu0 0
      %6077 = vmatpush1.bf16.msra.mxu0 %v3168
      %6078 = vmatprep.subr.bf16.mxu0 0
      %6079 = vmatpush1.bf16.msra.mxu0 %v3169
      %6080 = vmatprep.subr.bf16.mxu0 0
      %6081 = vmatpush1.bf16.msra.mxu0 %v3170
      %6082 = vmatprep.subr.bf16.mxu0 0
      %6083 = vmatpush1.bf16.msra.mxu0 %v3171
      %6084 = vmatprep.subr.bf16.mxu0 0
      %6085 = vmatpush1.bf16.msra.mxu0 %v3172
      %6086 = vmatprep.subr.bf16.mxu0 0
      %6087 = vmatpush1.bf16.msra.mxu0 %v3173
      %6088 = vmatprep.subr.bf16.mxu0 0
      %6089 = vmatpush1.bf16.msra.mxu0 %v3174
      %6090 = vmatprep.subr.bf16.mxu0 0
      %6091 = vmatpush1.bf16.msra.mxu0 %v3175
      %6092 = vmatprep.subr.bf16.mxu0 0
      %6093 = vmatpush1.bf16.msra.mxu0 %v3176
      %6094 = vmatprep.subr.bf16.mxu0 0
      %6095 = vmatpush1.bf16.msra.mxu0 %v3177
      %6096 = vmatprep.subr.bf16.mxu0 0
      %6097 = vmatpush1.bf16.msra.mxu0 %v3178
      %6098 = vmatprep.subr.bf16.mxu0 0
      %6099 = vmatpush1.bf16.msra.mxu0 %v3179
      %6100 = vmatprep.subr.bf16.mxu0 0
      %6101 = vmatpush1.bf16.msra.mxu0 %v3180
      %6102 = vmatprep.subr.bf16.mxu0 0
      %6103 = vmatpush1.bf16.msra.mxu0 %v3181
      %6104 = vmatprep.mubr.bf16.mxu0 %v5918
      %6105 = vmatmul.mubr.bf16.gmra.mrb[0].mxu0 %v5768
      %v6106 = vpop.f32.mrb[0].mxu0
      %v6107 = vadd.f32 %v2877, %v6106
      %v6108 = vpop.f32.mrb[0].mxu0
      %v6109 = vpop.f32.mrb[0].mxu0
      %v6110 = vadd.f32 %v2877, %v6109
      %v6111 = vpop.f32.mrb[0].mxu0
      %6112 = vmatprep.mubr.bf16.mxu0 %v5919
      %6113 = vmatmul.mubr.bf16.gmra.mrb[0].mxu0 %v5769
      %v6114 = vpop.f32.mrb[0].mxu0
      %v6115 = vadd.f32 %v2877, %v6114
      %v6116 = vpop.f32.mrb[0].mxu0
      %v6117 = vpop.f32.mrb[0].mxu0
      %v6118 = vadd.f32 %v2877, %v6117
      %v6119 = vpop.f32.mrb[0].mxu0
      %6120 = vmatprep.mubr.bf16.mxu0 %v5918
      %6121 = vmatmul.mubr.bf16.gmra.mrb[0].mxu0 %v5768
      %v6122 = vpop.f32.mrb[0].mxu0
      %v6123 = vadd.f32 %v2877, %v6122
      %v6124 = vpop.f32.mrb[0].mxu0
      %v6125 = vpop.f32.mrb[0].mxu0
      %v6126 = vadd.f32 %v2877, %v6125
      %v6127 = vpop.f32.mrb[0].mxu0
      %6128 = vmatprep.mubr.bf16.mxu0 %v5920
      %6129 = vmatmul.mubr.bf16.gmra.mrb[0].mxu0 %v5770
      %v6130 = vpop.f32.mrb[0].mxu0
      %v6131 = vadd.f32 %v2877, %v6130
      %v6132 = vpop.f32.mrb[0].mxu0
      %v6133 = vpop.f32.mrb[0].mxu0
      %v6134 = vadd.f32 %v2877, %v6133
      %v6135 = vpop.f32.mrb[0].mxu0
      %6136 = vmatprep.mubr.bf16.mxu0 %v5921
      %6137 = vmatmul.mubr.bf16.gmra.mrb[0].mxu0 %v5771
      %v6138 = vpop.f32.mrb[0].mxu0
      %v6139 = vadd.f32 %v2877, %v6138
      %v6140 = vpop.f32.mrb[0].mxu0
      %v6141 = vpop.f32.mrb[0].mxu0
      %v6142 = vadd.f32 %v2877, %v6141
      %v6143 = vpop.f32.mrb[0].mxu0
      %6144 = vmatprep.mubr.bf16.mxu0 %v5922
      %6145 = vmatmul.mubr.bf16.gmra.mrb[0].mxu0 %v5772
      %v6146 = vpop.f32.mrb[0].mxu0
      %v6147 = vadd.f32 %v2877, %v6146
      %v6148 = vpop.f32.mrb[0].mxu0
      %v6149 = vpop.f32.mrb[0].mxu0
      %v6150 = vadd.f32 %v2877, %v6149
      %v6151 = vpop.f32.mrb[0].mxu0
      %6152 = vmatprep.mubr.bf16.mxu0 %v5923
      %6153 = vmatmul.mubr.bf16.gmra.mrb[0].mxu0 %v5773
      %v6154 = vpop.f32.mrb[0].mxu0
      %v6155 = vadd.f32 %v2877, %v6154
      %v6156 = vpop.f32.mrb[0].mxu0
      %v6157 = vpop.f32.mrb[0].mxu0
      %v6158 = vadd.f32 %v2877, %v6157
      %v6159 = vpop.f32.mrb[0].mxu0
      %6160 = vmatprep.mubr.bf16.mxu0 %v5924
      %6161 = vmatmul.mubr.bf16.gmra.mrb[0].mxu0 %v5774
      %v6162 = vpop.f32.mrb[0].mxu0
      %v6163 = vadd.f32 %v2877, %v6162
      %v6164 = vpop.f32.mrb[0].mxu0
      %v6165 = vpop.f32.mrb[0].mxu0
      %v6166 = vadd.f32 %v2877, %v6165
      %v6167 = vpop.f32.mrb[0].mxu0
      %6168 = vmatprep.mubr.bf16.mxu0 %v5925
      %6169 = vmatmul.mubr.bf16.gmra.mrb[0].mxu0 %v5775
      %v6170 = vpop.f32.mrb[0].mxu0
      %v6171 = vadd.f32 %v2877, %v6170
      %v6172 = vpop.f32.mrb[0].mxu0
      %v6173 = vpop.f32.mrb[0].mxu0
      %v6174 = vadd.f32 %v2877, %v6173
      %v6175 = vpop.f32.mrb[0].mxu0
      %6176 = vmatprep.mubr.bf16.mxu0 %v5926
      %6177 = vmatmul.mubr.bf16.gmra.mrb[0].mxu0 %v5776
      %v6178 = vpop.f32.mrb[0].mxu0
      %v6179 = vadd.f32 %v2877, %v6178
      %v6180 = vpop.f32.mrb[0].mxu0
      %v6181 = vpop.f32.mrb[0].mxu0
      %v6182 = vadd.f32 %v2877, %v6181
      %v6183 = vpop.f32.mrb[0].mxu0
      %6184 = vmatprep.mubr.bf16.mxu0 %v5927
      %6185 = vmatmul.mubr.bf16.gmra.mrb[0].mxu0 %v5777
      %v6186 = vpop.f32.mrb[0].mxu0
      %v6187 = vadd.f32 %v2877, %v6186
      %v6188 = vpop.f32.mrb[0].mxu0
      %v6189 = vpop.f32.mrb[0].mxu0
      %v6190 = vadd.f32 %v2877, %v6189
      %v6191 = vpop.f32.mrb[0].mxu0
      %6192 = vmatprep.mubr.bf16.mxu0 %v5928
      %6193 = vmatmul.mubr.bf16.gmra.mrb[0].mxu0 %v5778
      %v6194 = vpop.f32.mrb[0].mxu0
      %v6195 = vadd.f32 %v2877, %v6194
      %v6196 = vpop.f32.mrb[0].mxu0
      %v6197 = vpop.f32.mrb[0].mxu0
      %v6198 = vadd.f32 %v2877, %v6197
      %v6199 = vpop.f32.mrb[0].mxu0
      %6200 = vmatprep.mubr.bf16.mxu0 %v5929
      %6201 = vmatmul.mubr.bf16.gmra.mrb[0].mxu0 %v5779
      %v6202 = vpop.f32.mrb[0].mxu0
      %v6203 = vadd.f32 %v2877, %v6202
      %v6204 = vpop.f32.mrb[0].mxu0
      %v6205 = vpop.f32.mrb[0].mxu0
      %v6206 = vadd.f32 %v2877, %v6205
      %v6207 = vpop.f32.mrb[0].mxu0
      %6208 = vmatprep.mubr.bf16.mxu0 %v5930
      %6209 = vmatmul.mubr.bf16.gmra.mrb[0].mxu0 %v5780
      %v6210 = vpop.f32.mrb[0].mxu0
      %v6211 = vadd.f32 %v2877, %v6210
      %v6212 = vpop.f32.mrb[0].mxu0
      %v6213 = vpop.f32.mrb[0].mxu0
      %v6214 = vadd.f32 %v2877, %v6213
      %v6215 = vpop.f32.mrb[0].mxu0
      %6216 = vmatprep.mubr.bf16.mxu0 %v5931
      %6217 = vmatmul.mubr.bf16.gmra.mrb[0].mxu0 %v5781
      %v6218 = vpop.f32.mrb[0].mxu0
      %v6219 = vadd.f32 %v2877, %v6218
      %v6220 = vpop.f32.mrb[0].mxu0
      %v6221 = vpop.f32.mrb[0].mxu0
      %v6222 = vadd.f32 %v2877, %v6221
      %v6223 = vpop.f32.mrb[0].mxu0
      %6224 = vmatprep.mubr.bf16.mxu0 %v5932
      %6225 = vmatmul.mubr.bf16.gmra.mrb[0].mxu0 %v5782
      %v6226 = vpop.f32.mrb[0].mxu0
      %v6227 = vadd.f32 %v2877, %v6226
      %v6228 = vpop.f32.mrb[0].mxu0
      %v6229 = vpop.f32.mrb[0].mxu0
      %v6230 = vadd.f32 %v2877, %v6229
      %v6231 = vpop.f32.mrb[0].mxu0
      %6232 = vdwg.mxu0
      %6233 = vmatprep.subr.bf16.mxu0 0
      %6234 = vmatpush1.bf16.msra.mxu0 %v3182
      %6235 = vmatprep.subr.bf16.mxu0 0
      %6236 = vmatpush1.bf16.msra.mxu0 %v3183
      %6237 = vmatprep.subr.bf16.mxu0 0
      %6238 = vmatpush1.bf16.msra.mxu0 %v3184
      %6239 = vmatprep.subr.bf16.mxu0 0
      %6240 = vmatpush1.bf16.msra.mxu0 %v3185
      %6241 = vmatprep.subr.bf16.mxu0 0
      %6242 = vmatpush1.bf16.msra.mxu0 %v3186
      %6243 = vmatprep.subr.bf16.mxu0 0
      %6244 = vmatpush1.bf16.msra.mxu0 %v3187
      %6245 = vmatprep.subr.bf16.mxu0 0
      %6246 = vmatpush1.bf16.msra.mxu0 %v3188
      %6247 = vmatprep.subr.bf16.mxu0 0
      %6248 = vmatpush1.bf16.msra.mxu0 %v3189
      %6249 = vmatprep.subr.bf16.mxu0 0
      %6250 = vmatpush1.bf16.msra.mxu0 %v3190
      %6251 = vmatprep.subr.bf16.mxu0 0
      %6252 = vmatpush1.bf16.msra.mxu0 %v3191
      %6253 = vmatprep.subr.bf16.mxu0 0
      %6254 = vmatpush1.bf16.msra.mxu0 %v3192
      %6255 = vmatprep.subr.bf16.mxu0 0
      %6256 = vmatpush1.bf16.msra.mxu0 %v3193
      %6257 = vmatprep.subr.bf16.mxu0 0
      %6258 = vmatpush1.bf16.msra.mxu0 %v3194
      %6259 = vmatprep.subr.bf16.mxu0 0
      %6260 = vmatpush1.bf16.msra.mxu0 %v3195
      %6261 = vmatprep.subr.bf16.mxu0 0
      %6262 = vmatpush1.bf16.msra.mxu0 %v3196
      %6263 = vmatprep.subr.bf16.mxu0 0
      %6264 = vmatpush1.bf16.msra.mxu0 %v3197
      %6265 = vmatprep.mubr.bf16.mxu0 %v5769
      %6266 = vmatmul.mubr.bf16.gmra.mrb[0].mxu0 %v6038
      %v6267 = vpop.f32.mrb[0].mxu0
      %v6268 = vadd.f32 %v6107, %v6267
      %v6269 = vpop.f32.mrb[0].mxu0
      %v6270 = vpop.f32.mrb[0].mxu0
      %v6271 = vadd.f32 %v6110, %v6270
      %v6272 = vpop.f32.mrb[0].mxu0
      %6273 = vmatprep.mubr.bf16.mxu0 %v5768
      %6274 = vmatmul.mubr.bf16.gmra.mrb[0].mxu0 %v6039
      %v6275 = vpop.f32.mrb[0].mxu0
      %v6276 = vadd.f32 %v6115, %v6275
      %v6277 = vpop.f32.mrb[0].mxu0
      %v6278 = vpop.f32.mrb[0].mxu0
      %v6279 = vadd.f32 %v6118, %v6278
      %v6280 = vpop.f32.mrb[0].mxu0
      %6281 = vmatprep.mubr.bf16.mxu0 %v5770
      %6282 = vmatmul.mubr.bf16.gmra.mrb[0].mxu0 %v6038
      %v6283 = vpop.f32.mrb[0].mxu0
      %v6284 = vadd.f32 %v6123, %v6283
      %v6285 = vpop.f32.mrb[0].mxu0
      %v6286 = vpop.f32.mrb[0].mxu0
      %v6287 = vadd.f32 %v6126, %v6286
      %v6288 = vpop.f32.mrb[0].mxu0
      %6289 = vmatprep.mubr.bf16.mxu0 %v5771
      %6290 = vmatmul.mubr.bf16.gmra.mrb[0].mxu0 %v6040
      %v6291 = vpop.f32.mrb[0].mxu0
      %v6292 = vadd.f32 %v6131, %v6291
      %v6293 = vpop.f32.mrb[0].mxu0
      %v6294 = vpop.f32.mrb[0].mxu0
      %v6295 = vadd.f32 %v6134, %v6294
      %v6296 = vpop.f32.mrb[0].mxu0
      %6297 = vmatprep.mubr.bf16.mxu0 %v5772
      %6298 = vmatmul.mubr.bf16.gmra.mrb[0].mxu0 %v6041
      %v6299 = vpop.f32.mrb[0].mxu0
      %v6300 = vadd.f32 %v6139, %v6299
      %v6301 = vpop.f32.mrb[0].mxu0
      %v6302 = vpop.f32.mrb[0].mxu0
      %v6303 = vadd.f32 %v6142, %v6302
      %v6304 = vpop.f32.mrb[0].mxu0
      %6305 = vmatprep.mubr.bf16.mxu0 %v5773
      %6306 = vmatmul.mubr.bf16.gmra.mrb[0].mxu0 %v6042
      %v6307 = vpop.f32.mrb[0].mxu0
      %v6308 = vadd.f32 %v6147, %v6307
      %v6309 = vpop.f32.mrb[0].mxu0
      %v6310 = vpop.f32.mrb[0].mxu0
      %v6311 = vadd.f32 %v6150, %v6310
      %v6312 = vpop.f32.mrb[0].mxu0
      %6313 = vmatprep.mubr.bf16.mxu0 %v5774
      %6314 = vmatmul.mubr.bf16.gmra.mrb[0].mxu0 %v6043
      %v6315 = vpop.f32.mrb[0].mxu0
      %v6316 = vadd.f32 %v6155, %v6315
      %v6317 = vpop.f32.mrb[0].mxu0
      %v6318 = vpop.f32.mrb[0].mxu0
      %v6319 = vadd.f32 %v6158, %v6318
      %v6320 = vpop.f32.mrb[0].mxu0
      %6321 = vmatprep.mubr.bf16.mxu0 %v5775
      %6322 = vmatmul.mubr.bf16.gmra.mrb[0].mxu0 %v6044
      %v6323 = vpop.f32.mrb[0].mxu0
      %v6324 = vadd.f32 %v6163, %v6323
      %v6325 = vpop.f32.mrb[0].mxu0
      %v6326 = vpop.f32.mrb[0].mxu0
      %v6327 = vadd.f32 %v6166, %v6326
      %v6328 = vpop.f32.mrb[0].mxu0
      %6329 = vmatprep.mubr.bf16.mxu0 %v5776
      %6330 = vmatmul.mubr.bf16.gmra.mrb[0].mxu0 %v6045
      %v6331 = vpop.f32.mrb[0].mxu0
      %v6332 = vadd.f32 %v6171, %v6331
      %v6333 = vpop.f32.mrb[0].mxu0
      %v6334 = vpop.f32.mrb[0].mxu0
      %v6335 = vadd.f32 %v6174, %v6334
      %v6336 = vpop.f32.mrb[0].mxu0
      %6337 = vmatprep.mubr.bf16.mxu0 %v5777
      %6338 = vmatmul.mubr.bf16.gmra.mrb[0].mxu0 %v6046
      %v6339 = vpop.f32.mrb[0].mxu0
      %v6340 = vadd.f32 %v6179, %v6339
      %v6341 = vpop.f32.mrb[0].mxu0
      %v6342 = vpop.f32.mrb[0].mxu0
      %v6343 = vadd.f32 %v6182, %v6342
      %v6344 = vpop.f32.mrb[0].mxu0
      %6345 = vmatprep.mubr.bf16.mxu0 %v5778
      %6346 = vmatmul.mubr.bf16.gmra.mrb[0].mxu0 %v6047
      %v6347 = vpop.f32.mrb[0].mxu0
      %v6348 = vadd.f32 %v6187, %v6347
      %v6349 = vpop.f32.mrb[0].mxu0
      %v6350 = vpop.f32.mrb[0].mxu0
      %v6351 = vadd.f32 %v6190, %v6350
      %v6352 = vpop.f32.mrb[0].mxu0
      %6353 = vmatprep.mubr.bf16.mxu0 %v5779
      %6354 = vmatmul.mubr.bf16.gmra.mrb[0].mxu0 %v6048
      %v6355 = vpop.f32.mrb[0].mxu0
      %v6356 = vadd.f32 %v6195, %v6355
      %v6357 = vpop.f32.mrb[0].mxu0
      %v6358 = vpop.f32.mrb[0].mxu0
      %v6359 = vadd.f32 %v6198, %v6358
      %v6360 = vpop.f32.mrb[0].mxu0
      %6361 = vmatprep.mubr.bf16.mxu0 %v5780
      %6362 = vmatmul.mubr.bf16.gmra.mrb[0].mxu0 %v6049
      %v6363 = vpop.f32.mrb[0].mxu0
      %v6364 = vadd.f32 %v6203, %v6363
      %v6365 = vpop.f32.mrb[0].mxu0
      %v6366 = vpop.f32.mrb[0].mxu0
      %v6367 = vadd.f32 %v6206, %v6366
      %v6368 = vpop.f32.mrb[0].mxu0
      %6369 = vmatprep.mubr.bf16.mxu0 %v5781
      %6370 = vmatmul.mubr.bf16.gmra.mrb[0].mxu0 %v6050
      %v6371 = vpop.f32.mrb[0].mxu0
      %v6372 = vadd.f32 %v6211, %v6371
      %v6373 = vpop.f32.mrb[0].mxu0
      %v6374 = vpop.f32.mrb[0].mxu0
      %v6375 = vadd.f32 %v6214, %v6374
      %v6376 = vpop.f32.mrb[0].mxu0
      %6377 = vmatprep.mubr.bf16.mxu0 %v5782
      %6378 = vmatmul.mubr.bf16.gmra.mrb[0].mxu0 %v6051
      %v6379 = vpop.f32.mrb[0].mxu0
      %v6380 = vadd.f32 %v6219, %v6379
      %v6381 = vpop.f32.mrb[0].mxu0
      %v6382 = vpop.f32.mrb[0].mxu0
      %v6383 = vadd.f32 %v6222, %v6382
      %v6384 = vpop.f32.mrb[0].mxu0
      %6385 = vmatprep.mubr.bf16.mxu0 %v6053
      %6386 = vmatmul.mubr.bf16.gmra.mrb[0].mxu0 %v6052
      %v6387 = vpop.f32.mrb[0].mxu0
      %v6388 = vadd.f32 %v6227, %v6387
      %v6389 = vpop.f32.mrb[0].mxu0
      %v6390 = vpop.f32.mrb[0].mxu0
      %v6391 = vadd.f32 %v6230, %v6390
      %v6392 = vpop.f32.mrb[0].mxu0
      %6393 = vdwg.mxu0
      %6394 = vmatprep.subr.bf16.mxu0 0
      %6395 = vmatpush1.bf16.msra.mxu0 %v3198
      %6396 = vmatprep.subr.bf16.mxu0 0
      %6397 = vmatpush1.bf16.msra.mxu0 %v3199
      %6398 = vmatprep.subr.bf16.mxu0 0
      %6399 = vmatpush1.bf16.msra.mxu0 %v3200
      %6400 = vmatprep.subr.bf16.mxu0 0
      %6401 = vmatpush1.bf16.msra.mxu0 %v3201
      %6402 = vmatprep.subr.bf16.mxu0 0
      %6403 = vmatpush1.bf16.msra.mxu0 %v3202
      %6404 = vmatprep.subr.bf16.mxu0 0
      %6405 = vmatpush1.bf16.msra.mxu0 %v3203
      %6406 = vmatprep.subr.bf16.mxu0 0
      %6407 = vmatpush1.bf16.msra.mxu0 %v3204
      %6408 = vmatprep.subr.bf16.mxu0 0
      %6409 = vmatpush1.bf16.msra.mxu0 %v3205
      %6410 = vmatprep.subr.bf16.mxu0 0
      %6411 = vmatpush1.bf16.msra.mxu0 %v3206
      %6412 = vmatprep.subr.bf16.mxu0 0
      %6413 = vmatpush1.bf16.msra.mxu0 %v3207
      %6414 = vmatprep.subr.bf16.mxu0 0
      %6415 = vmatpush1.bf16.msra.mxu0 %v3208
      %6416 = vmatprep.subr.bf16.mxu0 0
      %6417 = vmatpush1.bf16.msra.mxu0 %v3209
      %6418 = vmatprep.subr.bf16.mxu0 0
      %6419 = vmatpush1.bf16.msra.mxu0 %v3210
      %6420 = vmatprep.subr.bf16.mxu0 0
      %6421 = vmatpush1.bf16.msra.mxu0 %v3211
      %6422 = vmatprep.subr.bf16.mxu0 0
      %6423 = vmatpush1.bf16.msra.mxu0 %v3212
      %6424 = vmatprep.subr.bf16.mxu0 0
      %6425 = vmatpush1.bf16.msra.mxu0 %v3213
      %6426 = vmatprep.mubr.bf16.mxu0 %v6039
      %6427 = vmatmul.mubr.bf16.gmra.mrb[0].mxu0 %v5919
      %v6428 = vpop.f32.mrb[0].mxu0
      %v6429 = vadd.f32 %v6268, %v6428
      %v6430 = vpop.f32.mrb[0].mxu0
      %v6431 = vpop.f32.mrb[0].mxu0
      %v6432 = vadd.f32 %v6271, %v6431
      %v6433 = vpop.f32.mrb[0].mxu0
      %6434 = vmatprep.mubr.bf16.mxu0 %v6038
      %6435 = vmatmul.mubr.bf16.gmra.mrb[0].mxu0 %v5918
      %v6436 = vpop.f32.mrb[0].mxu0
      %v6437 = vadd.f32 %v6276, %v6436
      %v6438 = vpop.f32.mrb[0].mxu0
      %v6439 = vpop.f32.mrb[0].mxu0
      %v6440 = vadd.f32 %v6279, %v6439
      %v6441 = vpop.f32.mrb[0].mxu0
      %6442 = vmatprep.mubr.bf16.mxu0 %v6040
      %6443 = vmatmul.mubr.bf16.gmra.mrb[0].mxu0 %v5920
      %v6444 = vpop.f32.mrb[0].mxu0
      %v6445 = vadd.f32 %v6284, %v6444
      %v6446 = vpop.f32.mrb[0].mxu0
      %v6447 = vpop.f32.mrb[0].mxu0
      %v6448 = vadd.f32 %v6287, %v6447
      %v6449 = vpop.f32.mrb[0].mxu0
      %6450 = vmatprep.mubr.bf16.mxu0 %v6041
      %6451 = vmatmul.mubr.bf16.gmra.mrb[0].mxu0 %v5921
      %v6452 = vpop.f32.mrb[0].mxu0
      %v6453 = vadd.f32 %v6292, %v6452
      %v6454 = vpop.f32.mrb[0].mxu0
      %v6455 = vpop.f32.mrb[0].mxu0
      %v6456 = vadd.f32 %v6295, %v6455
      %v6457 = vpop.f32.mrb[0].mxu0
      %6458 = vmatprep.mubr.bf16.mxu0 %v6042
      %6459 = vmatmul.mubr.bf16.gmra.mrb[0].mxu0 %v5922
      %v6460 = vpop.f32.mrb[0].mxu0
      %v6461 = vadd.f32 %v6300, %v6460
      %v6462 = vpop.f32.mrb[0].mxu0
      %v6463 = vpop.f32.mrb[0].mxu0
      %v6464 = vadd.f32 %v6303, %v6463
      %v6465 = vpop.f32.mrb[0].mxu0
      %6466 = vmatprep.mubr.bf16.mxu0 %v6043
      %6467 = vmatmul.mubr.bf16.gmra.mrb[0].mxu0 %v5923
      %v6468 = vpop.f32.mrb[0].mxu0
      %v6469 = vadd.f32 %v6308, %v6468
      %v6470 = vpop.f32.mrb[0].mxu0
      %v6471 = vpop.f32.mrb[0].mxu0
      %v6472 = vadd.f32 %v6311, %v6471
      %v6473 = vpop.f32.mrb[0].mxu0
      %6474 = vmatprep.mubr.bf16.mxu0 %v6044
      %6475 = vmatmul.mubr.bf16.gmra.mrb[0].mxu0 %v5924
      %v6476 = vpop.f32.mrb[0].mxu0
      %v6477 = vadd.f32 %v6316, %v6476
      %v6478 = vpop.f32.mrb[0].mxu0
      %v6479 = vpop.f32.mrb[0].mxu0
      %v6480 = vadd.f32 %v6319, %v6479
      %v6481 = vpop.f32.mrb[0].mxu0
      %6482 = vmatprep.mubr.bf16.mxu0 %v6045
      %6483 = vmatmul.mubr.bf16.gmra.mrb[0].mxu0 %v5925
      %v6484 = vpop.f32.mrb[0].mxu0
      %v6485 = vadd.f32 %v6324, %v6484
      %v6486 = vpop.f32.mrb[0].mxu0
      %v6487 = vpop.f32.mrb[0].mxu0
      %v6488 = vadd.f32 %v6327, %v6487
      %v6489 = vpop.f32.mrb[0].mxu0
      %6490 = vmatprep.mubr.bf16.mxu0 %v6046
      %6491 = vmatmul.mubr.bf16.gmra.mrb[0].mxu0 %v5926
      %v6492 = vpop.f32.mrb[0].mxu0
      %v6493 = vadd.f32 %v6332, %v6492
      %v6494 = vpop.f32.mrb[0].mxu0
      %v6495 = vpop.f32.mrb[0].mxu0
      %v6496 = vadd.f32 %v6335, %v6495
      %v6497 = vpop.f32.mrb[0].mxu0
      %6498 = vmatprep.mubr.bf16.mxu0 %v6047
      %6499 = vmatmul.mubr.bf16.gmra.mrb[0].mxu0 %v5927
      %v6500 = vpop.f32.mrb[0].mxu0
      %v6501 = vadd.f32 %v6340, %v6500
      %v6502 = vpop.f32.mrb[0].mxu0
      %v6503 = vpop.f32.mrb[0].mxu0
      %v6504 = vadd.f32 %v6343, %v6503
      %v6505 = vpop.f32.mrb[0].mxu0
      %6506 = vmatprep.mubr.bf16.mxu0 %v6048
      %6507 = vmatmul.mubr.bf16.gmra.mrb[0].mxu0 %v5928
      %v6508 = vpop.f32.mrb[0].mxu0
      %v6509 = vadd.f32 %v6348, %v6508
      %v6510 = vpop.f32.mrb[0].mxu0
      %v6511 = vpop.f32.mrb[0].mxu0
      %v6512 = vadd.f32 %v6351, %v6511
      %v6513 = vpop.f32.mrb[0].mxu0
      %6514 = vmatprep.mubr.bf16.mxu0 %v6049
      %6515 = vmatmul.mubr.bf16.gmra.mrb[0].mxu0 %v5929
      %v6516 = vpop.f32.mrb[0].mxu0
      %v6517 = vadd.f32 %v6356, %v6516
      %v6518 = vpop.f32.mrb[0].mxu0
      %v6519 = vpop.f32.mrb[0].mxu0
      %v6520 = vadd.f32 %v6359, %v6519
      %v6521 = vpop.f32.mrb[0].mxu0
      %6522 = vmatprep.mubr.bf16.mxu0 %v6050
      %6523 = vmatmul.mubr.bf16.gmra.mrb[0].mxu0 %v5930
      %v6524 = vpop.f32.mrb[0].mxu0
      %v6525 = vadd.f32 %v6364, %v6524
      %v6526 = vpop.f32.mrb[0].mxu0
      %v6527 = vpop.f32.mrb[0].mxu0
      %v6528 = vadd.f32 %v6367, %v6527
      %v6529 = vpop.f32.mrb[0].mxu0
      %6530 = vmatprep.mubr.bf16.mxu0 %v6051
      %6531 = vmatmul.mubr.bf16.gmra.mrb[0].mxu0 %v5931
      %v6532 = vpop.f32.mrb[0].mxu0
      %v6533 = vadd.f32 %v6372, %v6532
      %v6534 = vpop.f32.mrb[0].mxu0
      %v6535 = vpop.f32.mrb[0].mxu0
      %v6536 = vadd.f32 %v6375, %v6535
      %v6537 = vpop.f32.mrb[0].mxu0
      %6538 = vmatprep.mubr.bf16.mxu0 %v6052
      %6539 = vmatmul.mubr.bf16.gmra.mrb[0].mxu0 %v5932
      %v6540 = vpop.f32.mrb[0].mxu0
      %v6541 = vadd.f32 %v6380, %v6540
      %v6542 = vpop.f32.mrb[0].mxu0
      %v6543 = vpop.f32.mrb[0].mxu0
      %v6544 = vadd.f32 %v6383, %v6543
      %v6545 = vpop.f32.mrb[0].mxu0
      %6546 = vmatprep.mubr.bf16.mxu0 %v6071
      %6547 = vmatmul.mubr.bf16.gmra.mrb[0].mxu0 %v6063
      %v6548 = vpop.f32.mrb[0].mxu0
      %v6549 = vadd.f32 %v6388, %v6548
      %v6550 = vpop.f32.mrb[0].mxu0
      %v6551 = vpop.f32.mrb[0].mxu0
      %v6552 = vadd.f32 %v6391, %v6551
      %v6553 = vpop.f32.mrb[0].mxu0
      %6554 = vdwg.mxu0
      %6555 = vmatprep.subr.bf16.mxu0 0
      %6556 = vmatpush1.bf16.msra.mxu0 %v3214
      %6557 = vmatprep.subr.bf16.mxu0 0
      %6558 = vmatpush1.bf16.msra.mxu0 %v3215
      %6559 = vmatprep.subr.bf16.mxu0 0
      %6560 = vmatpush1.bf16.msra.mxu0 %v3216
      %6561 = vmatprep.subr.bf16.mxu0 0
      %6562 = vmatpush1.bf16.msra.mxu0 %v3217
      %6563 = vmatprep.subr.bf16.mxu0 0
      %6564 = vmatpush1.bf16.msra.mxu0 %v3218
      %6565 = vmatprep.subr.bf16.mxu0 0
      %6566 = vmatpush1.bf16.msra.mxu0 %v3219
      %6567 = vmatprep.subr.bf16.mxu0 0
      %6568 = vmatpush1.bf16.msra.mxu0 %v3220
      %6569 = vmatprep.subr.bf16.mxu0 0
      %6570 = vmatpush1.bf16.msra.mxu0 %v3221
      %6571 = vmatprep.subr.bf16.mxu0 0
      %6572 = vmatpush1.bf16.msra.mxu0 %v3222
      %6573 = vmatprep.subr.bf16.mxu0 0
      %6574 = vmatpush1.bf16.msra.mxu0 %v3223
      %6575 = vmatprep.subr.bf16.mxu0 0
      %6576 = vmatpush1.bf16.msra.mxu0 %v3224
      %6577 = vmatprep.subr.bf16.mxu0 0
      %6578 = vmatpush1.bf16.msra.mxu0 %v3225
      %6579 = vmatprep.subr.bf16.mxu0 0
      %6580 = vmatpush1.bf16.msra.mxu0 %v3226
      %6581 = vmatprep.subr.bf16.mxu0 0
      %6582 = vmatpush1.bf16.msra.mxu0 %v3227
      %6583 = vmatprep.subr.bf16.mxu0 0
      %6584 = vmatpush1.bf16.msra.mxu0 %v3228
      %6585 = vmatprep.subr.bf16.mxu0 0
      %6586 = vmatpush1.bf16.msra.mxu0 %v3229
      %6587 = vmatprep.mubr.bf16.mxu0 %v5918
      %6588 = vmatmul.mubr.bf16.gmra.mrb[0].mxu0 %v5768
      %v6589 = vpop.f32.mrb[0].mxu0
      %v6590 = vadd.f32 %v6429, %v6589
      %v6591 = vpop.f32.mrb[0].mxu0
      %v6592 = vpop.f32.mrb[0].mxu0
      %v6593 = vadd.f32 %v6432, %v6592
      %v6594 = vpop.f32.mrb[0].mxu0
      %6595 = vmatprep.mubr.bf16.mxu0 %v5920
      %6596 = vmatmul.mubr.bf16.gmra.mrb[0].mxu0 %v5770
      %v6597 = vpop.f32.mrb[0].mxu0
      %v6598 = vadd.f32 %v6437, %v6597
      %v6599 = vpop.f32.mrb[0].mxu0
      %v6600 = vpop.f32.mrb[0].mxu0
      %v6601 = vadd.f32 %v6440, %v6600
      %v6602 = vpop.f32.mrb[0].mxu0
      %6603 = vmatprep.mubr.bf16.mxu0 %v5921
      %6604 = vmatmul.mubr.bf16.gmra.mrb[0].mxu0 %v5771
      %v6605 = vpop.f32.mrb[0].mxu0
      %v6606 = vadd.f32 %v6445, %v6605
      %v6607 = vpop.f32.mrb[0].mxu0
      %v6608 = vpop.f32.mrb[0].mxu0
      %v6609 = vadd.f32 %v6448, %v6608
      %v6610 = vpop.f32.mrb[0].mxu0
      %6611 = vmatprep.mubr.bf16.mxu0 %v5922
      %6612 = vmatmul.mubr.bf16.gmra.mrb[0].mxu0 %v5772
      %v6613 = vpop.f32.mrb[0].mxu0
      %v6614 = vadd.f32 %v6453, %v6613
      %v6615 = vpop.f32.mrb[0].mxu0
      %v6616 = vpop.f32.mrb[0].mxu0
      %v6617 = vadd.f32 %v6456, %v6616
      %v6618 = vpop.f32.mrb[0].mxu0
      %6619 = vmatprep.mubr.bf16.mxu0 %v5923
      %6620 = vmatmul.mubr.bf16.gmra.mrb[0].mxu0 %v5773
      %v6621 = vpop.f32.mrb[0].mxu0
      %v6622 = vadd.f32 %v6461, %v6621
      %v6623 = vpop.f32.mrb[0].mxu0
      %v6624 = vpop.f32.mrb[0].mxu0
      %v6625 = vadd.f32 %v6464, %v6624
      %v6626 = vpop.f32.mrb[0].mxu0
      %6627 = vmatprep.mubr.bf16.mxu0 %v5924
      %6628 = vmatmul.mubr.bf16.gmra.mrb[0].mxu0 %v5774
      %v6629 = vpop.f32.mrb[0].mxu0
      %v6630 = vadd.f32 %v6469, %v6629
      %v6631 = vpop.f32.mrb[0].mxu0
      %v6632 = vpop.f32.mrb[0].mxu0
      %v6633 = vadd.f32 %v6472, %v6632
      %v6634 = vpop.f32.mrb[0].mxu0
      %6635 = vmatprep.mubr.bf16.mxu0 %v5925
      %6636 = vmatmul.mubr.bf16.gmra.mrb[0].mxu0 %v5775
      %v6637 = vpop.f32.mrb[0].mxu0
      %v6638 = vadd.f32 %v6477, %v6637
      %v6639 = vpop.f32.mrb[0].mxu0
      %v6640 = vpop.f32.mrb[0].mxu0
      %v6641 = vadd.f32 %v6480, %v6640
      %v6642 = vpop.f32.mrb[0].mxu0
      %6643 = vmatprep.mubr.bf16.mxu0 %v5926
      %6644 = vmatmul.mubr.bf16.gmra.mrb[0].mxu0 %v5776
      %v6645 = vpop.f32.mrb[0].mxu0
      %v6646 = vadd.f32 %v6485, %v6645
      %v6647 = vpop.f32.mrb[0].mxu0
      %v6648 = vpop.f32.mrb[0].mxu0
      %v6649 = vadd.f32 %v6488, %v6648
      %v6650 = vpop.f32.mrb[0].mxu0
      %6651 = vmatprep.mubr.bf16.mxu0 %v5927
      %6652 = vmatmul.mubr.bf16.gmra.mrb[0].mxu0 %v5777
      %v6653 = vpop.f32.mrb[0].mxu0
      %v6654 = vadd.f32 %v6493, %v6653
      %v6655 = vpop.f32.mrb[0].mxu0
      %v6656 = vpop.f32.mrb[0].mxu0
      %v6657 = vadd.f32 %v6496, %v6656
      %v6658 = vpop.f32.mrb[0].mxu0
      %6659 = vmatprep.mubr.bf16.mxu0 %v5928
      %6660 = vmatmul.mubr.bf16.gmra.mrb[0].mxu0 %v5778
      %v6661 = vpop.f32.mrb[0].mxu0
      %v6662 = vadd.f32 %v6501, %v6661
      %v6663 = vpop.f32.mrb[0].mxu0
      %v6664 = vpop.f32.mrb[0].mxu0
      %v6665 = vadd.f32 %v6504, %v6664
      %v6666 = vpop.f32.mrb[0].mxu0
      %6667 = vmatprep.mubr.bf16.mxu0 %v5929
      %6668 = vmatmul.mubr.bf16.gmra.mrb[0].mxu0 %v5779
      %v6669 = vpop.f32.mrb[0].mxu0
      %v6670 = vadd.f32 %v6509, %v6669
      %v6671 = vpop.f32.mrb[0].mxu0
      %v6672 = vpop.f32.mrb[0].mxu0
      %v6673 = vadd.f32 %v6512, %v6672
      %v6674 = vpop.f32.mrb[0].mxu0
      %6675 = vmatprep.mubr.bf16.mxu0 %v5930
      %6676 = vmatmul.mubr.bf16.gmra.mrb[0].mxu0 %v5780
      %v6677 = vpop.f32.mrb[0].mxu0
      %v6678 = vadd.f32 %v6517, %v6677
      %v6679 = vpop.f32.mrb[0].mxu0
      %v6680 = vpop.f32.mrb[0].mxu0
      %v6681 = vadd.f32 %v6520, %v6680
      %v6682 = vpop.f32.mrb[0].mxu0
      %6683 = vmatprep.mubr.bf16.mxu0 %v5931
      %6684 = vmatmul.mubr.bf16.gmra.mrb[0].mxu0 %v5781
      %v6685 = vpop.f32.mrb[0].mxu0
      %v6686 = vadd.f32 %v6525, %v6685
      %v6687 = vpop.f32.mrb[0].mxu0
      %v6688 = vpop.f32.mrb[0].mxu0
      %v6689 = vadd.f32 %v6528, %v6688
      %v6690 = vpop.f32.mrb[0].mxu0
      %6691 = vmatprep.mubr.bf16.mxu0 %v5932
      %6692 = vmatmul.mubr.bf16.gmra.mrb[0].mxu0 %v5782
      %v6693 = vpop.f32.mrb[0].mxu0
      %v6694 = vadd.f32 %v6533, %v6693
      %v6695 = vpop.f32.mrb[0].mxu0
      %v6696 = vpop.f32.mrb[0].mxu0
      %v6697 = vadd.f32 %v6536, %v6696
      %v6698 = vpop.f32.mrb[0].mxu0
      %6699 = vmatprep.mubr.bf16.mxu0 %v6063
      %6700 = vmatmul.mubr.bf16.gmra.mrb[0].mxu0 %v6053
      %v6701 = vpop.f32.mrb[0].mxu0
      %v6702 = vadd.f32 %v6541, %v6701
      %v6703 = vpop.f32.mrb[0].mxu0
      %v6704 = vpop.f32.mrb[0].mxu0
      %v6705 = vadd.f32 %v6544, %v6704
      %v6706 = vpop.f32.mrb[0].mxu0
      %6707 = vmatprep.mubr.bf16.mxu0 %v5932
      %6708 = vmatmul.mubr.bf16.gmra.mrb[0].mxu0 %v5782
      %v6709 = vpop.f32.mrb[0].mxu0
      %v6710 = vadd.f32 %v6549, %v6709
      %v6711 = vpop.f32.mrb[0].mxu0
      %v6712 = vpop.f32.mrb[0].mxu0
      %v6713 = vadd.f32 %v6552, %v6712
      %v6714 = vpop.f32.mrb[0].mxu0
      %6715 = vdwg.mxu0
      %6716 = vmatprep.subr.bf16.mxu0 0
      %6717 = vmatpush1.bf16.msra.mxu0 %v3230
      %6718 = vmatprep.subr.bf16.mxu0 0
      %6719 = vmatpush1.bf16.msra.mxu0 %v3231
      %6720 = vmatprep.subr.bf16.mxu0 0
      %6721 = vmatpush1.bf16.msra.mxu0 %v3232
      %6722 = vmatprep.subr.bf16.mxu0 0
      %6723 = vmatpush1.bf16.msra.mxu0 %v3233
      %6724 = vmatprep.subr.bf16.mxu0 0
      %6725 = vmatpush1.bf16.msra.mxu0 %v3234
      %6726 = vmatprep.subr.bf16.mxu0 0
      %6727 = vmatpush1.bf16.msra.mxu0 %v3235
      %6728 = vmatprep.subr.bf16.mxu0 0
      %6729 = vmatpush1.bf16.msra.mxu0 %v3236
      %6730 = vmatprep.subr.bf16.mxu0 0
      %6731 = vmatpush1.bf16.msra.mxu0 %v3237
      %6732 = vmatprep.subr.bf16.mxu0 0
      %6733 = vmatpush1.bf16.msra.mxu0 0
      %6734 = vmatprep.subr.bf16.mxu0 0
      %6735 = vmatpush1.bf16.msra.mxu0 0
      %6736 = vmatprep.subr.bf16.mxu0 0
      %6737 = vmatpush1.bf16.msra.mxu0 0
      %6738 = vmatprep.subr.bf16.mxu0 0
      %6739 = vmatpush1.bf16.msra.mxu0 0
      %6740 = vmatprep.subr.bf16.mxu0 0
      %6741 = vmatpush1.bf16.msra.mxu0 0
      %6742 = vmatprep.subr.bf16.mxu0 0
      %6743 = vmatpush1.bf16.msra.mxu0 0
      %6744 = vmatprep.subr.bf16.mxu0 0
      %6745 = vmatpush1.bf16.msra.mxu0 0
      %6746 = vmatprep.subr.bf16.mxu0 0
      %6747 = vmatpush1.bf16.msra.mxu0 0
      %6748 = vmatprep.mubr.bf16.mxu0 0
      %6749 = vmatmul.mubr.bf16.gmra.mrb[0].mxu0 %v6038
      %v6750 = vpop.f32.mrb[0].mxu0
      %v6751 = vadd.f32 %v6590, %v6750
      %v6752 = vpop.f32.mrb[0].mxu0
      %v6753 = vpop.f32.mrb[0].mxu0
      %v6754 = vadd.f32 %v6593, %v6753
      %v6755 = vpop.f32.mrb[0].mxu0
      %6756 = vmatprep.mubr.bf16.mxu0 0
      %6757 = vmatmul.mubr.bf16.gmra.mrb[0].mxu0 %v6040
      %v6758 = vpop.f32.mrb[0].mxu0
      %v6759 = vadd.f32 %v6598, %v6758
      %v6760 = vpop.f32.mrb[0].mxu0
      %v6761 = vpop.f32.mrb[0].mxu0
      %v6762 = vadd.f32 %v6601, %v6761
      %v6763 = vpop.f32.mrb[0].mxu0
      %6764 = vmatprep.mubr.bf16.mxu0 0
      %6765 = vmatmul.mubr.bf16.gmra.mrb[0].mxu0 %v6041
      %v6766 = vpop.f32.mrb[0].mxu0
      %v6767 = vadd.f32 %v6606, %v6766
      %v6768 = vpop.f32.mrb[0].mxu0
      %v6769 = vpop.f32.mrb[0].mxu0
      %v6770 = vadd.f32 %v6609, %v6769
      %v6771 = vpop.f32.mrb[0].mxu0
      %6772 = vmatprep.mubr.bf16.mxu0 0
      %6773 = vmatmul.mubr.bf16.gmra.mrb[0].mxu0 %v6042
      %v6774 = vpop.f32.mrb[0].mxu0
      %v6775 = vadd.f32 %v6614, %v6774
      %v6776 = vpop.f32.mrb[0].mxu0
      %v6777 = vpop.f32.mrb[0].mxu0
      %v6778 = vadd.f32 %v6617, %v6777
      %v6779 = vpop.f32.mrb[0].mxu0
      %6780 = vmatprep.mubr.bf16.mxu0 0
      %6781 = vmatmul.mubr.bf16.gmra.mrb[0].mxu0 %v6043
      %v6782 = vpop.f32.mrb[0].mxu0
      %v6783 = vadd.f32 %v6622, %v6782
      %v6784 = vpop.f32.mrb[0].mxu0
      %v6785 = vpop.f32.mrb[0].mxu0
      %v6786 = vadd.f32 %v6625, %v6785
      %v6787 = vpop.f32.mrb[0].mxu0
      %6788 = vmatprep.mubr.bf16.mxu0 0
      %6789 = vmatmul.mubr.bf16.gmra.mrb[0].mxu0 %v6044
      %v6790 = vpop.f32.mrb[0].mxu0
      %v6791 = vadd.f32 %v6630, %v6790
      %v6792 = vpop.f32.mrb[0].mxu0
      %v6793 = vpop.f32.mrb[0].mxu0
      %v6794 = vadd.f32 %v6633, %v6793
      %v6795 = vpop.f32.mrb[0].mxu0
      %6796 = vmatprep.mubr.bf16.mxu0 0
      %6797 = vmatmul.mubr.bf16.gmra.mrb[0].mxu0 %v6045
      %v6798 = vpop.f32.mrb[0].mxu0
      %v6799 = vadd.f32 %v6638, %v6798
      %v6800 = vpop.f32.mrb[0].mxu0
      %v6801 = vpop.f32.mrb[0].mxu0
      %v6802 = vadd.f32 %v6641, %v6801
      %v6803 = vpop.f32.mrb[0].mxu0
      %6804 = vmatprep.mubr.bf16.mxu0 0
      %6805 = vmatmul.mubr.bf16.gmra.mrb[0].mxu0 %v6046
      %v6806 = vpop.f32.mrb[0].mxu0
      %v6807 = vadd.f32 %v6646, %v6806
      %v6808 = vpop.f32.mrb[0].mxu0
      %v6809 = vpop.f32.mrb[0].mxu0
      %v6810 = vadd.f32 %v6649, %v6809
      %v6811 = vpop.f32.mrb[0].mxu0
      %6812 = vmatprep.mubr.bf16.mxu0 0
      %6813 = vmatmul.mubr.bf16.gmra.mrb[0].mxu0 %v6047
      %v6814 = vpop.f32.mrb[0].mxu0
      %v6815 = vadd.f32 %v6654, %v6814
      %v6816 = vpop.f32.mrb[0].mxu0
      %v6817 = vpop.f32.mrb[0].mxu0
      %v6818 = vadd.f32 %v6657, %v6817
      %v6819 = vpop.f32.mrb[0].mxu0
      %6820 = vmatprep.mubr.bf16.mxu0 0
      %6821 = vmatmul.mubr.bf16.gmra.mrb[0].mxu0 %v6048
      %v6822 = vpop.f32.mrb[0].mxu0
      %v6823 = vadd.f32 %v6662, %v6822
      %v6824 = vpop.f32.mrb[0].mxu0
      %v6825 = vpop.f32.mrb[0].mxu0
      %v6826 = vadd.f32 %v6665, %v6825
      %v6827 = vpop.f32.mrb[0].mxu0
      %6828 = vmatprep.mubr.bf16.mxu0 0
      %6829 = vmatmul.mubr.bf16.gmra.mrb[0].mxu0 %v6049
      %v6830 = vpop.f32.mrb[0].mxu0
      %v6831 = vadd.f32 %v6670, %v6830
      %v6832 = vpop.f32.mrb[0].mxu0
      %v6833 = vpop.f32.mrb[0].mxu0
      %v6834 = vadd.f32 %v6673, %v6833
      %v6835 = vpop.f32.mrb[0].mxu0
      %6836 = vmatprep.mubr.bf16.mxu0 0
      %6837 = vmatmul.mubr.bf16.gmra.mrb[0].mxu0 %v6050
      %v6838 = vpop.f32.mrb[0].mxu0
      %v6839 = vadd.f32 %v6678, %v6838
      %v6840 = vpop.f32.mrb[0].mxu0
      %v6841 = vpop.f32.mrb[0].mxu0
      %v6842 = vadd.f32 %v6681, %v6841
      %v6843 = vpop.f32.mrb[0].mxu0
      %6844 = vmatprep.mubr.bf16.mxu0 0
      %6845 = vmatmul.mubr.bf16.gmra.mrb[0].mxu0 %v6051
      %v6846 = vpop.f32.mrb[0].mxu0
      %v6847 = vadd.f32 %v6686, %v6846
      %v6848 = vpop.f32.mrb[0].mxu0
      %v6849 = vpop.f32.mrb[0].mxu0
      %v6850 = vadd.f32 %v6689, %v6849
      %v6851 = vpop.f32.mrb[0].mxu0
      %6852 = vmatprep.mubr.bf16.mxu0 0
      %6853 = vmatmul.mubr.bf16.gmra.mrb[0].mxu0 %v6052
      %v6854 = vpop.f32.mrb[0].mxu0
      %v6855 = vadd.f32 %v6694, %v6854
      %v6856 = vpop.f32.mrb[0].mxu0
      %v6857 = vpop.f32.mrb[0].mxu0
      %v6858 = vadd.f32 %v6697, %v6857
      %v6859 = vpop.f32.mrb[0].mxu0
      %6860 = vmatprep.mubr.bf16.mxu0 0
      %6861 = vmatmul.mubr.bf16.gmra.mrb[0].mxu0 %v6071
      %v6862 = vpop.f32.mrb[0].mxu0
      %v6863 = vadd.f32 %v6702, %v6862
      %v6864 = vpop.f32.mrb[0].mxu0
      %v6865 = vpop.f32.mrb[0].mxu0
      %v6866 = vadd.f32 %v6705, %v6865
      %v6867 = vpop.f32.mrb[0].mxu0
      %6868 = vmatprep.mubr.bf16.mxu0 0
      %6869 = vmatmul.mubr.bf16.gmra.mrb[0].mxu0 %v6052
      %v6870 = vpop.f32.mrb[0].mxu0
      %v6871 = vadd.f32 %v6710, %v6870
      %v6872 = vpop.f32.mrb[0].mxu0
      %v6873 = vpop.f32.mrb[0].mxu0
      %v6874 = vadd.f32 %v6713, %v6873
      %v6875 = vpop.f32.mrb[0].mxu0
      %6876 = vdwg.mxu0
      %v6877 = vmax.f32 %v6751, 0.0
      %v6878 = vmax.f32 %v6754, 0.0
      %v6879 = vmax.f32 %v6759, 0.0
      %v6880 = vmax.f32 %v6762, 0.0
      %v6881 = vmax.f32 %v6767, 0.0
      %v6882 = vmax.f32 %v6770, 0.0
      %v6883 = vmax.f32 %v6775, 0.0
      %v6884 = vmax.f32 %v6778, 0.0
      %v6885 = vmax.f32 %v6783, 0.0
      %v6886 = vmax.f32 %v6786, 0.0
      %v6887 = vmax.f32 %v6791, 0.0
      %v6888 = vmax.f32 %v6794, 0.0
      %v6889 = vmax.f32 %v6799, 0.0
      %v6890 = vmax.f32 %v6802, 0.0
      %v6891 = vmax.f32 %v6807, 0.0
      %v6892 = vmax.f32 %v6810, 0.0
      %v6893 = vmax.f32 %v6815, 0.0
      %v6894 = vmax.f32 %v6818, 0.0
      %v6895 = vmax.f32 %v6823, 0.0
      %v6896 = vmax.f32 %v6826, 0.0
      %v6897 = vmax.f32 %v6831, 0.0
      %v6898 = vmax.f32 %v6834, 0.0
      %v6899 = vmax.f32 %v6839, 0.0
      %v6900 = vmax.f32 %v6842, 0.0
      %v6901 = vmax.f32 %v6847, 0.0
      %v6902 = vmax.f32 %v6850, 0.0
      %v6903 = vmax.f32 %v6855, 0.0
      %v6904 = vmax.f32 %v6858, 0.0
      %v6905 = vmax.f32 %v6863, 0.0
      %v6906 = vmax.f32 %v6866, 0.0
      %v6907 = vmax.f32 %v6871, 0.0
      %v6908 = vmax.f32 %v6874, 0.0
      %v6909 = vadd.f32 %v4115, %v4116
      %v6910 = vadd.f32 %v6909, %v4117
      %v6911 = vadd.f32 %v6910, %v4118
      %v6912 = vadd.f32 %v6911, %v4119
      %v6913 = vadd.f32 %v6912, %v4120
      %v6914 = vadd.f32 %v6913, %v4121
      %v6915 = vadd.f32 %v6914, %v4122
      %v6916 = vadd.f32 %v6915, %v4123
      %v6917 = vadd.f32 %v6916, %v4124
      %v6918 = vadd.f32 %v6917, %v4125
      %v6919 = vadd.f32 %v6918, %v4126
      %v6920 = vadd.f32 %v6919, %v4127
      %v6921 = vadd.f32 %v6920, %v4128
      %v6922 = vadd.f32 %v6921, %v4129
      %v6923 = vadd.f32 %v6922, %v4130
      %v6924 = vadd.f32 %v6923, %v4131
      %v6925 = vadd.f32 %v6924, %v4132
      %v6926 = vadd.f32 %v6925, %v4133
      %v6927 = vadd.f32 %v6926, %v4134
      %v6928 = vadd.f32 %v6927, %v4135
      %v6929 = vadd.f32 %v6928, %v4136
      %v6930 = vadd.f32 %v6929, %v4137
      %v6931 = vadd.f32 %v6930, %v4138
      %v6932 = vadd.f32 %v6931, %v4139
      %v6933 = vadd.f32 %v6932, %v4140
      %v6934 = vadd.f32 %v6933, %v4141
      %v6935 = vadd.f32 %v6934, %v4142
      %v6936 = vadd.f32 %v6935, %v4143
      %v6937 = vadd.f32 %v6936, %v4144
      %v6938 = vadd.f32 %v6937, %v4145
      %v6939 = vadd.f32 %v6938, %v4146
      %v6940 = vrot.slane %v6939, 4
      %v6941 = vadd.f32 %v6939, %v6940
      %v6942 = vrot.slane %v6941, 2
      %v6943 = vadd.f32 %v6941, %v6942
      %v6944 = vrot.slane %v6943, 1
      %v6945 = vadd.f32 %v6943, %v6944
      %v6946 = vrcp.pop 256.0
      %v6947 = vmul.f32 %v6945, %v6946
      %v6948 = vadd.f32 %v6877, %v6878
      %v6949 = vadd.f32 %v6948, %v6879
      %v6950 = vadd.f32 %v6949, %v6880
      %v6951 = vadd.f32 %v6950, %v6881
      %v6952 = vadd.f32 %v6951, %v6882
      %v6953 = vadd.f32 %v6952, %v6883
      %v6954 = vadd.f32 %v6953, %v6884
      %v6955 = vadd.f32 %v6954, %v6885
      %v6956 = vadd.f32 %v6955, %v6886
      %v6957 = vadd.f32 %v6956, %v6887
      %v6958 = vadd.f32 %v6957, %v6888
      %v6959 = vadd.f32 %v6958, %v6889
      %v6960 = vadd.f32 %v6959, %v6890
      %v6961 = vadd.f32 %v6960, %v6891
      %v6962 = vadd.f32 %v6961, %v6892
      %v6963 = vadd.f32 %v6962, %v6893
      %v6964 = vadd.f32 %v6963, %v6894
      %v6965 = vadd.f32 %v6964, %v6895
      %v6966 = vadd.f32 %v6965, %v6896
      %v6967 = vadd.f32 %v6966, %v6897
      %v6968 = vadd.f32 %v6967, %v6898
      %v6969 = vadd.f32 %v6968, %v6899
      %v6970 = vadd.f32 %v6969, %v6900
      %v6971 = vadd.f32 %v6970, %v6901
      %v6972 = vadd.f32 %v6971, %v6902
      %v6973 = vadd.f32 %v6972, %v6903
      %v6974 = vadd.f32 %v6973, %v6904
      %v6975 = vadd.f32 %v6974, %v6905
      %v6976 = vadd.f32 %v6975, %v6906
      %v6977 = vadd.f32 %v6976, %v6907
      %v6978 = vadd.f32 %v6977, %v6908
      %v6979 = vrot.slane %v6978, 4
      %v6980 = vadd.f32 %v6978, %v6979
      %v6981 = vrot.slane %v6980, 2
      %v6982 = vadd.f32 %v6980, %v6981
      %v6983 = vrot.slane %v6982, 1
      %v6984 = vadd.f32 %v6982, %v6983
      %v6985 = vmul.f32 %v6984, %v6946
      %v6986 = vsub.f32 %v4115, %v6947
      %v6987 = vsub.f32 %v4116, %v6947
      %v6988 = vsub.f32 %v4117, %v6947
      %v6989 = vsub.f32 %v4118, %v6947
      %v6990 = vsub.f32 %v4119, %v6947
      %v6991 = vsub.f32 %v4120, %v6947
      %v6992 = vsub.f32 %v4121, %v6947
      %v6993 = vsub.f32 %v4122, %v6947
      %v6994 = vsub.f32 %v4123, %v6947
      %v6995 = vsub.f32 %v4124, %v6947
      %v6996 = vsub.f32 %v4125, %v6947
      %v6997 = vsub.f32 %v4126, %v6947
      %v6998 = vsub.f32 %v4127, %v6947
      %v6999 = vsub.f32 %v4128, %v6947
      %v7000 = vsub.f32 %v4129, %v6947
      %v7001 = vsub.f32 %v4130, %v6947
      %v7002 = vsub.f32 %v4131, %v6947
      %v7003 = vsub.f32 %v4132, %v6947
      %v7004 = vsub.f32 %v4133, %v6947
      %v7005 = vsub.f32 %v4134, %v6947
      %v7006 = vsub.f32 %v4135, %v6947
      %v7007 = vsub.f32 %v4136, %v6947
      %v7008 = vsub.f32 %v4137, %v6947
      %v7009 = vsub.f32 %v4138, %v6947
      %v7010 = vsub.f32 %v4139, %v6947
      %v7011 = vsub.f32 %v4140, %v6947
      %v7012 = vsub.f32 %v4141, %v6947
      %v7013 = vsub.f32 %v4142, %v6947
      %v7014 = vsub.f32 %v4143, %v6947
      %v7015 = vsub.f32 %v4144, %v6947
      %v7016 = vsub.f32 %v4145, %v6947
      %v7017 = vsub.f32 %v4146, %v6947
      %v7018 = vmul.f32 %v6986, %v6986
      %v7019 = vmul.f32 %v6987, %v6987
      %v7020 = vmul.f32 %v6988, %v6988
      %v7021 = vmul.f32 %v6989, %v6989
      %v7022 = vmul.f32 %v6990, %v6990
      %v7023 = vmul.f32 %v6991, %v6991
      %v7024 = vmul.f32 %v6992, %v6992
      %v7025 = vmul.f32 %v6993, %v6993
      %v7026 = vmul.f32 %v6994, %v6994
      %v7027 = vmul.f32 %v6995, %v6995
      %v7028 = vmul.f32 %v6996, %v6996
      %v7029 = vmul.f32 %v6997, %v6997
      %v7030 = vmul.f32 %v6998, %v6998
      %v7031 = vmul.f32 %v6999, %v6999
      %v7032 = vmul.f32 %v7000, %v7000
      %v7033 = vmul.f32 %v7001, %v7001
      %v7034 = vmul.f32 %v7002, %v7002
      %v7035 = vmul.f32 %v7003, %v7003
      %v7036 = vmul.f32 %v7004, %v7004
      %v7037 = vmul.f32 %v7005, %v7005
      %v7038 = vmul.f32 %v7006, %v7006
      %v7039 = vmul.f32 %v7007, %v7007
      %v7040 = vmul.f32 %v7008, %v7008
      %v7041 = vmul.f32 %v7009, %v7009
      %v7042 = vmul.f32 %v7010, %v7010
      %v7043 = vmul.f32 %v7011, %v7011
      %v7044 = vmul.f32 %v7012, %v7012
      %v7045 = vmul.f32 %v7013, %v7013
      %v7046 = vmul.f32 %v7014, %v7014
      %v7047 = vmul.f32 %v7015, %v7015
      %v7048 = vmul.f32 %v7016, %v7016
      %v7049 = vmul.f32 %v7017, %v7017
      %v7050 = vadd.f32 %v7018, %v7019
      %v7051 = vadd.f32 %v7050, %v7020
      %v7052 = vadd.f32 %v7051, %v7021
      %v7053 = vadd.f32 %v7052, %v7022
      %v7054 = vadd.f32 %v7053, %v7023
      %v7055 = vadd.f32 %v7054, %v7024
      %v7056 = vadd.f32 %v7055, %v7025
      %v7057 = vadd.f32 %v7056, %v7026
      %v7058 = vadd.f32 %v7057, %v7027
      %v7059 = vadd.f32 %v7058, %v7028
      %v7060 = vadd.f32 %v7059, %v7029
      %v7061 = vadd.f32 %v7060, %v7030
      %v7062 = vadd.f32 %v7061, %v7031
      %v7063 = vadd.f32 %v7062, %v7032
      %v7064 = vadd.f32 %v7063, %v7033
      %v7065 = vadd.f32 %v7064, %v7034
      %v7066 = vadd.f32 %v7065, %v7035
      %v7067 = vadd.f32 %v7066, %v7036
      %v7068 = vadd.f32 %v7067, %v7037
      %v7069 = vadd.f32 %v7068, %v7038
      %v7070 = vadd.f32 %v7069, %v7039
      %v7071 = vadd.f32 %v7070, %v7040
      %v7072 = vadd.f32 %v7071, %v7041
      %v7073 = vadd.f32 %v7072, %v7042
      %v7074 = vadd.f32 %v7073, %v7043
      %v7075 = vadd.f32 %v7074, %v7044
      %v7076 = vadd.f32 %v7075, %v7045
      %v7077 = vadd.f32 %v7076, %v7046
      %v7078 = vadd.f32 %v7077, %v7047
      %v7079 = vadd.f32 %v7078, %v7048
      %v7080 = vadd.f32 %v7079, %v7049
      %v7081 = vrot.slane %v7080, 4
      %v7082 = vadd.f32 %v7080, %v7081
      %v7083 = vrot.slane %v7082, 2
      %v7084 = vadd.f32 %v7082, %v7083
      %v7085 = vrot.slane %v7084, 1
      %v7086 = vadd.f32 %v7084, %v7085
      %v7087 = vrcp.pop 255.0
      %v7088 = vmul.f32 %v7086, %v7087
      %v7089 = vsub.f32 %v6877, %v6985
      %v7090 = vsub.f32 %v6878, %v6985
      %v7091 = vsub.f32 %v6879, %v6985
      %v7092 = vsub.f32 %v6880, %v6985
      %v7093 = vsub.f32 %v6881, %v6985
      %v7094 = vsub.f32 %v6882, %v6985
      %v7095 = vsub.f32 %v6883, %v6985
      %v7096 = vsub.f32 %v6884, %v6985
      %v7097 = vsub.f32 %v6885, %v6985
      %v7098 = vsub.f32 %v6886, %v6985
      %v7099 = vsub.f32 %v6887, %v6985
      %v7100 = vsub.f32 %v6888, %v6985
      %v7101 = vsub.f32 %v6889, %v6985
      %v7102 = vsub.f32 %v6890, %v6985
      %v7103 = vsub.f32 %v6891, %v6985
      %v7104 = vsub.f32 %v6892, %v6985
      %v7105 = vsub.f32 %v6893, %v6985
      %v7106 = vsub.f32 %v6894, %v6985
      %v7107 = vsub.f32 %v6895, %v6985
      %v7108 = vsub.f32 %v6896, %v6985
      %v7109 = vsub.f32 %v6897, %v6985
      %v7110 = vsub.f32 %v6898, %v6985
      %v7111 = vsub.f32 %v6899, %v6985
      %v7112 = vsub.f32 %v6900, %v6985
      %v7113 = vsub.f32 %v6901, %v6985
      %v7114 = vsub.f32 %v6902, %v6985
      %v7115 = vsub.f32 %v6903, %v6985
      %v7116 = vsub.f32 %v6904, %v6985
      %v7117 = vsub.f32 %v6905, %v6985
      %v7118 = vsub.f32 %v6906, %v6985
      %v7119 = vsub.f32 %v6907, %v6985
      %v7120 = vsub.f32 %v6908, %v6985
      %v7121 = vmul.f32 %v7089, %v7089
      %v7122 = vmul.f32 %v7090, %v7090
      %v7123 = vmul.f32 %v7091, %v7091
      %v7124 = vmul.f32 %v7092, %v7092
      %v7125 = vmul.f32 %v7093, %v7093
      %v7126 = vmul.f32 %v7094, %v7094
      %v7127 = vmul.f32 %v7095, %v7095
      %v7128 = vmul.f32 %v7096, %v7096
      %v7129 = vmul.f32 %v7097, %v7097
      %v7130 = vmul.f32 %v7098, %v7098
      %v7131 = vmul.f32 %v7099, %v7099
      %v7132 = vmul.f32 %v7100, %v7100
      %v7133 = vmul.f32 %v7101, %v7101
      %v7134 = vmul.f32 %v7102, %v7102
      %v7135 = vmul.f32 %v7103, %v7103
      %v7136 = vmul.f32 %v7104, %v7104
      %v7137 = vmul.f32 %v7105, %v7105
      %v7138 = vmul.f32 %v7106, %v7106
      %v7139 = vmul.f32 %v7107, %v7107
      %v7140 = vmul.f32 %v7108, %v7108
      %v7141 = vmul.f32 %v7109, %v7109
      %v7142 = vmul.f32 %v7110, %v7110
      %v7143 = vmul.f32 %v7111, %v7111
      %v7144 = vmul.f32 %v7112, %v7112
      %v7145 = vmul.f32 %v7113, %v7113
      %v7146 = vmul.f32 %v7114, %v7114
      %v7147 = vmul.f32 %v7115, %v7115
      %v7148 = vmul.f32 %v7116, %v7116
      %v7149 = vmul.f32 %v7117, %v7117
      %v7150 = vmul.f32 %v7118, %v7118
      %v7151 = vmul.f32 %v7119, %v7119
      %v7152 = vmul.f32 %v7120, %v7120
      %v7153 = vadd.f32 %v7121, %v7122
      %v7154 = vadd.f32 %v7153, %v7123
      %v7155 = vadd.f32 %v7154, %v7124
      %v7156 = vadd.f32 %v7155, %v7125
      %v7157 = vadd.f32 %v7156, %v7126
      %v7158 = vadd.f32 %v7157, %v7127
      %v7159 = vadd.f32 %v7158, %v7128
      %v7160 = vadd.f32 %v7159, %v7129
      %v7161 = vadd.f32 %v7160, %v7130
      %v7162 = vadd.f32 %v7161, %v7131
      %v7163 = vadd.f32 %v7162, %v7132
      %v7164 = vadd.f32 %v7163, %v7133
      %v7165 = vadd.f32 %v7164, %v7134
      %v7166 = vadd.f32 %v7165, %v7135
      %v7167 = vadd.f32 %v7166, %v7136
      %v7168 = vadd.f32 %v7167, %v7137
      %v7169 = vadd.f32 %v7168, %v7138
      %v7170 = vadd.f32 %v7169, %v7139
      %v7171 = vadd.f32 %v7170, %v7140
      %v7172 = vadd.f32 %v7171, %v7141
      %v7173 = vadd.f32 %v7172, %v7142
      %v7174 = vadd.f32 %v7173, %v7143
      %v7175 = vadd.f32 %v7174, %v7144
      %v7176 = vadd.f32 %v7175, %v7145
      %v7177 = vadd.f32 %v7176, %v7146
      %v7178 = vadd.f32 %v7177, %v7147
      %v7179 = vadd.f32 %v7178, %v7148
      %v7180 = vadd.f32 %v7179, %v7149
      %v7181 = vadd.f32 %v7180, %v7150
      %v7182 = vadd.f32 %v7181, %v7151
      %v7183 = vadd.f32 %v7182, %v7152
      %v7184 = vrot.slane %v7183, 4
      %v7185 = vadd.f32 %v7183, %v7184
      %v7186 = vrot.slane %v7185, 2
      %v7187 = vadd.f32 %v7185, %v7186
      %v7188 = vrot.slane %v7187, 1
      %v7189 = vadd.f32 %v7187, %v7188
      %v7190 = vmul.f32 %v7189, %v7087
      %v7191 = vadd.f32 %v7088, 1e-05
      %v7192 = vrsqrt.pop %v7191
      %v7193 = vmul.f32 %v6986, %v7192
      %v7194 = vmul.f32 %v6987, %v7192
      %v7195 = vmul.f32 %v6988, %v7192
      %v7196 = vmul.f32 %v6989, %v7192
      %v7197 = vmul.f32 %v6990, %v7192
      %v7198 = vmul.f32 %v6991, %v7192
      %v7199 = vmul.f32 %v6992, %v7192
      %v7200 = vmul.f32 %v6993, %v7192
      %v7201 = vmul.f32 %v6994, %v7192
      %v7202 = vmul.f32 %v6995, %v7192
      %v7203 = vmul.f32 %v6996, %v7192
      %v7204 = vmul.f32 %v6997, %v7192
      %v7205 = vmul.f32 %v6998, %v7192
      %v7206 = vmul.f32 %v6999, %v7192
      %v7207 = vmul.f32 %v7000, %v7192
      %v7208 = vmul.f32 %v7001, %v7192
      %v7209 = vmul.f32 %v7002, %v7192
      %v7210 = vmul.f32 %v7003, %v7192
      %v7211 = vmul.f32 %v7004, %v7192
      %v7212 = vmul.f32 %v7005, %v7192
      %v7213 = vmul.f32 %v7006, %v7192
      %v7214 = vmul.f32 %v7007, %v7192
      %v7215 = vmul.f32 %v7008, %v7192
      %v7216 = vmul.f32 %v7009, %v7192
      %v7217 = vmul.f32 %v7010, %v7192
      %v7218 = vmul.f32 %v7011, %v7192
      %v7219 = vmul.f32 %v7012, %v7192
      %v7220 = vmul.f32 %v7013, %v7192
      %v7221 = vmul.f32 %v7014, %v7192
      %v7222 = vmul.f32 %v7015, %v7192
      %v7223 = vmul.f32 %v7016, %v7192
      %v7224 = vmul.f32 %v7017, %v7192
      %v7225 = vadd.f32 %v7190, 1e-05
      %v7226 = vrsqrt.pop %v7225
      %v7227 = vmul.f32 %v7225, %v7226
      %vm7228 = vcmp.eq.f32.partialorder %v7225, inf
      %v7229 = vsel %vm7228, %v7225, %v7227
      %vm7230 = vcmp.eq.f32.partialorder %v7225, 0.0
      %v7231 = vand.u32 %v7225, 2147483648
      %v7232 = vsel %vm7230, %v7231, %v7229
      %v7233 = vmul.f32 %v7193, %v7232
      %v7234 = vmul.f32 %v7194, %v7232
      %v7235 = vmul.f32 %v7195, %v7232
      %v7236 = vmul.f32 %v7196, %v7232
      %v7237 = vmul.f32 %v7197, %v7232
      %v7238 = vmul.f32 %v7198, %v7232
      %v7239 = vmul.f32 %v7199, %v7232
      %v7240 = vmul.f32 %v7200, %v7232
      %v7241 = vmul.f32 %v7201, %v7232
      %v7242 = vmul.f32 %v7202, %v7232
      %v7243 = vmul.f32 %v7203, %v7232
      %v7244 = vmul.f32 %v7204, %v7232
      %v7245 = vmul.f32 %v7205, %v7232
      %v7246 = vmul.f32 %v7206, %v7232
      %v7247 = vmul.f32 %v7207, %v7232
      %v7248 = vmul.f32 %v7208, %v7232
      %v7249 = vmul.f32 %v7209, %v7232
      %v7250 = vmul.f32 %v7210, %v7232
      %v7251 = vmul.f32 %v7211, %v7232
      %v7252 = vmul.f32 %v7212, %v7232
      %v7253 = vmul.f32 %v7213, %v7232
      %v7254 = vmul.f32 %v7214, %v7232
      %v7255 = vmul.f32 %v7215, %v7232
      %v7256 = vmul.f32 %v7216, %v7232
      %v7257 = vmul.f32 %v7217, %v7232
      %v7258 = vmul.f32 %v7218, %v7232
      %v7259 = vmul.f32 %v7219, %v7232
      %v7260 = vmul.f32 %v7220, %v7232
      %v7261 = vmul.f32 %v7221, %v7232
      %v7262 = vmul.f32 %v7222, %v7232
      %v7263 = vmul.f32 %v7223, %v7232
      %v7264 = vmul.f32 %v7224, %v7232
      %v7265 = vadd.f32 %v7233, %v6985
      %v7266 = vadd.f32 %v7234, %v6985
      %v7267 = vadd.f32 %v7235, %v6985
      %v7268 = vadd.f32 %v7236, %v6985
      %v7269 = vadd.f32 %v7237, %v6985
      %v7270 = vadd.f32 %v7238, %v6985
      %v7271 = vadd.f32 %v7239, %v6985
      %v7272 = vadd.f32 %v7240, %v6985
      %v7273 = vadd.f32 %v7241, %v6985
      %v7274 = vadd.f32 %v7242, %v6985
      %v7275 = vadd.f32 %v7243, %v6985
      %v7276 = vadd.f32 %v7244, %v6985
      %v7277 = vadd.f32 %v7245, %v6985
      %v7278 = vadd.f32 %v7246, %v6985
      %v7279 = vadd.f32 %v7247, %v6985
      %v7280 = vadd.f32 %v7248, %v6985
      %v7281 = vadd.f32 %v7249, %v6985
      %v7282 = vadd.f32 %v7250, %v6985
      %v7283 = vadd.f32 %v7251, %v6985
      %v7284 = vadd.f32 %v7252, %v6985
      %v7285 = vadd.f32 %v7253, %v6985
      %v7286 = vadd.f32 %v7254, %v6985
      %v7287 = vadd.f32 %v7255, %v6985
      %v7288 = vadd.f32 %v7256, %v6985
      %v7289 = vadd.f32 %v7257, %v6985
      %v7290 = vadd.f32 %v7258, %v6985
      %v7291 = vadd.f32 %v7259, %v6985
      %v7292 = vadd.f32 %v7260, %v6985
      %v7293 = vadd.f32 %v7261, %v6985
      %v7294 = vadd.f32 %v7262, %v6985
      %v7295 = vadd.f32 %v7263, %v6985
      %v7296 = vadd.f32 %v7264, %v6985
      %v7313 = vrot.slane %v7267, 1
      %v7314 = vrot.slane %v7265, 1
      %v7315 = vrot.slane %v7269, 1
      %v7316 = vrot.slane %v7271, 1
      %v7317 = vrot.slane %v7273, 1
      %v7318 = vrot.slane %v7275, 1
      %v7319 = vrot.slane %v7277, 1
      %v7320 = vrot.slane %v7279, 1
      %v7321 = vrot.slane %v7281, 1
      %v7322 = vrot.slane %v7283, 1
      %v7323 = vrot.slane %v7285, 1
      %v7324 = vrot.slane %v7287, 1
      %v7325 = vrot.slane %v7289, 1
      %v7326 = vrot.slane %v7291, 1
      %v7327 = vrot.slane %v7293, 1
      %v7328 = vrot.slane %v7295, 1
      %v7361 = vrot.slane %v7267, 7
      %v7362 = vrot.slane %v7268, 7
      %v7363 = vsel %vm315, %v7361, %v7362
      %v7364 = vrot.slane %v7265, 7
      %v7365 = vrot.slane %v7266, 7
      %v7366 = vsel %vm315, %v7364, %v7365
      %v7367 = vrot.slane %v7269, 7
      %v7368 = vrot.slane %v7270, 7
      %v7369 = vsel %vm315, %v7367, %v7368
      %v7370 = vrot.slane %v7271, 7
      %v7371 = vrot.slane %v7272, 7
      %v7372 = vsel %vm315, %v7370, %v7371
      %v7373 = vrot.slane %v7273, 7
      %v7374 = vrot.slane %v7274, 7
      %v7375 = vsel %vm315, %v7373, %v7374
      %v7376 = vrot.slane %v7275, 7
      %v7377 = vrot.slane %v7276, 7
      %v7378 = vsel %vm315, %v7376, %v7377
      %v7379 = vrot.slane %v7277, 7
      %v7380 = vrot.slane %v7278, 7
      %v7381 = vsel %vm315, %v7379, %v7380
      %v7382 = vrot.slane %v7279, 7
      %v7383 = vrot.slane %v7280, 7
      %v7384 = vsel %vm315, %v7382, %v7383
      %v7385 = vrot.slane %v7281, 7
      %v7386 = vrot.slane %v7282, 7
      %v7387 = vsel %vm315, %v7385, %v7386
      %v7388 = vrot.slane %v7283, 7
      %v7389 = vrot.slane %v7284, 7
      %v7390 = vsel %vm315, %v7388, %v7389
      %v7391 = vrot.slane %v7285, 7
      %v7392 = vrot.slane %v7286, 7
      %v7393 = vsel %vm315, %v7391, %v7392
      %v7394 = vrot.slane %v7287, 7
      %v7395 = vrot.slane %v7288, 7
      %v7396 = vsel %vm315, %v7394, %v7395
      %v7397 = vrot.slane %v7289, 7
      %v7398 = vrot.slane %v7290, 7
      %v7399 = vsel %vm315, %v7397, %v7398
      %v7400 = vrot.slane %v7291, 7
      %v7401 = vrot.slane %v7292, 7
      %v7402 = vsel %vm315, %v7400, %v7401
      %v7403 = vrot.slane %v7293, 7
      %v7404 = vrot.slane %v7294, 7
      %v7405 = vsel %vm315, %v7403, %v7404
      %v7406 = vrot.slane %v7295, 7
      %v7407 = vrot.slane %v7296, 7
      %v7408 = vsel %vm315, %v7406, %v7407
      %v7457 = vrot.slane %v7268, 5
      %v7458 = vrot.slane %v7266, 5
      %v7459 = vrot.slane %v7270, 5
      %v7460 = vrot.slane %v7272, 5
      %v7461 = vrot.slane %v7274, 5
      %v7462 = vrot.slane %v7276, 5
      %v7463 = vrot.slane %v7278, 5
      %v7464 = vrot.slane %v7280, 5
      %v7465 = vrot.slane %v7282, 5
      %v7466 = vrot.slane %v7284, 5
      %v7467 = vrot.slane %v7286, 5
      %v7468 = vrot.slane %v7288, 5
      %v7469 = vrot.slane %v7290, 5
      %v7470 = vrot.slane %v7292, 5
      %v7471 = vrot.slane %v7294, 5
      %v7472 = vrot.slane %v7296, 5
      %v7489 = vsel %vm315, %v7313, %v7361
      %v7490 = vsel %vm315, %v7314, %v7364
      %v7491 = vsel %vm315, %v7315, %v7367
      %v7492 = vsel %vm315, %v7316, %v7370
      %v7493 = vsel %vm315, %v7317, %v7373
      %v7494 = vsel %vm315, %v7318, %v7376
      %v7495 = vsel %vm315, %v7319, %v7379
      %v7496 = vsel %vm315, %v7320, %v7382
      %v7497 = vsel %vm315, %v7321, %v7385
      %v7498 = vsel %vm315, %v7322, %v7388
      %v7499 = vsel %vm315, %v7323, %v7391
      %v7500 = vsel %vm315, %v7324, %v7394
      %v7501 = vsel %vm315, %v7325, %v7397
      %v7502 = vsel %vm315, %v7326, %v7400
      %v7503 = vsel %vm315, %v7327, %v7403
      %v7504 = vsel %vm315, %v7328, %v7406
      %v7505 = vsel %vm315, %v7362, %v7457
      %v7506 = vsel %vm315, %v7365, %v7458
      %v7507 = vsel %vm315, %v7368, %v7459
      %v7508 = vsel %vm315, %v7371, %v7460
      %v7509 = vsel %vm315, %v7374, %v7461
      %v7510 = vsel %vm315, %v7377, %v7462
      %v7511 = vsel %vm315, %v7380, %v7463
      %v7512 = vsel %vm315, %v7383, %v7464
      %v7513 = vsel %vm315, %v7386, %v7465
      %v7514 = vsel %vm315, %v7389, %v7466
      %v7515 = vsel %vm315, %v7392, %v7467
      %v7516 = vsel %vm315, %v7395, %v7468
      %v7517 = vsel %vm315, %v7398, %v7469
      %v7518 = vsel %vm315, %v7401, %v7470
      %v7519 = vsel %vm315, %v7404, %v7471
      %v7520 = vsel %vm315, %v7407, %v7472
      %v7521 = vpack.c.bf16 %v7363, %v7489
      %v7522 = vpack.c.bf16 %v7366, %v7490
      %v7523 = vpack.c.bf16 %v7369, %v7491
      %v7524 = vpack.c.bf16 %v7372, %v7492
      %v7525 = vpack.c.bf16 %v7375, %v7493
      %v7526 = vpack.c.bf16 %v7378, %v7494
      %v7527 = vpack.c.bf16 %v7381, %v7495
      %v7528 = vpack.c.bf16 %v7384, %v7496
      %v7529 = vpack.c.bf16 %v7387, %v7497
      %v7530 = vpack.c.bf16 %v7390, %v7498
      %v7531 = vpack.c.bf16 %v7393, %v7499
      %v7532 = vpack.c.bf16 %v7396, %v7500
      %v7533 = vpack.c.bf16 %v7399, %v7501
      %v7534 = vpack.c.bf16 %v7402, %v7502
      %v7535 = vpack.c.bf16 %v7405, %v7503
      %v7566 = vrot.slane %v7489, 1
      %v7567 = vrot.slane %v7363, 1
      %v7568 = vsel %vm521, %v7566, %v7567
      %v7569 = vrot.slane %v7505, 1
      %v7570 = vsel %vm521, %v7567, %v7569
      %v7571 = vrot.slane %v7490, 1
      %v7572 = vrot.slane %v7366, 1
      %v7573 = vsel %vm521, %v7571, %v7572
      %v7574 = vrot.slane %v7506, 1
      %v7575 = vsel %vm521, %v7572, %v7574
      %v7576 = vrot.slane %v7491, 1
      %v7577 = vrot.slane %v7369, 1
      %v7578 = vsel %vm521, %v7576, %v7577
      %v7579 = vrot.slane %v7507, 1
      %v7580 = vsel %vm521, %v7577, %v7579
      %v7581 = vrot.slane %v7492, 1
      %v7582 = vrot.slane %v7372, 1
      %v7583 = vsel %vm521, %v7581, %v7582
      %v7584 = vrot.slane %v7508, 1
      %v7585 = vsel %vm521, %v7582, %v7584
      %v7586 = vrot.slane %v7493, 1
      %v7587 = vrot.slane %v7375, 1
      %v7588 = vsel %vm521, %v7586, %v7587
      %v7589 = vrot.slane %v7509, 1
      %v7590 = vsel %vm521, %v7587, %v7589
      %v7591 = vrot.slane %v7494, 1
      %v7592 = vrot.slane %v7378, 1
      %v7593 = vsel %vm521, %v7591, %v7592
      %v7594 = vrot.slane %v7510, 1
      %v7595 = vsel %vm521, %v7592, %v7594
      %v7596 = vrot.slane %v7495, 1
      %v7597 = vrot.slane %v7381, 1
      %v7598 = vsel %vm521, %v7596, %v7597
      %v7599 = vrot.slane %v7511, 1
      %v7600 = vsel %vm521, %v7597, %v7599
      %v7601 = vrot.slane %v7496, 1
      %v7602 = vrot.slane %v7384, 1
      %v7603 = vsel %vm521, %v7601, %v7602
      %v7604 = vrot.slane %v7512, 1
      %v7605 = vsel %vm521, %v7602, %v7604
      %v7606 = vrot.slane %v7497, 1
      %v7607 = vrot.slane %v7387, 1
      %v7608 = vsel %vm521, %v7606, %v7607
      %v7609 = vrot.slane %v7513, 1
      %v7610 = vsel %vm521, %v7607, %v7609
      %v7611 = vrot.slane %v7498, 1
      %v7612 = vrot.slane %v7390, 1
      %v7613 = vsel %vm521, %v7611, %v7612
      %v7614 = vrot.slane %v7514, 1
      %v7615 = vsel %vm521, %v7612, %v7614
      %v7616 = vrot.slane %v7499, 1
      %v7617 = vrot.slane %v7393, 1
      %v7618 = vsel %vm521, %v7616, %v7617
      %v7619 = vrot.slane %v7515, 1
      %v7620 = vsel %vm521, %v7617, %v7619
      %v7621 = vrot.slane %v7500, 1
      %v7622 = vrot.slane %v7396, 1
      %v7623 = vsel %vm521, %v7621, %v7622
      %v7624 = vrot.slane %v7516, 1
      %v7625 = vsel %vm521, %v7622, %v7624
      %v7626 = vrot.slane %v7501, 1
      %v7627 = vrot.slane %v7399, 1
      %v7628 = vsel %vm521, %v7626, %v7627
      %v7629 = vrot.slane %v7517, 1
      %v7630 = vsel %vm521, %v7627, %v7629
      %v7631 = vrot.slane %v7502, 1
      %v7632 = vrot.slane %v7402, 1
      %v7633 = vsel %vm521, %v7631, %v7632
      %v7634 = vrot.slane %v7518, 1
      %v7635 = vsel %vm521, %v7632, %v7634
      %v7636 = vrot.slane %v7503, 1
      %v7637 = vrot.slane %v7405, 1
      %v7638 = vsel %vm521, %v7636, %v7637
      %v7639 = vrot.slane %v7519, 1
      %v7640 = vsel %vm521, %v7637, %v7639
      %v7671 = vpack.c.bf16 %v7570, %v7568
      %v7672 = vpack.c.bf16 %v7575, %v7573
      %v7673 = vpack.c.bf16 %v7580, %v7578
      %v7674 = vpack.c.bf16 %v7585, %v7583
      %v7675 = vpack.c.bf16 %v7590, %v7588
      %v7676 = vpack.c.bf16 %v7595, %v7593
      %v7677 = vpack.c.bf16 %v7600, %v7598
      %v7678 = vpack.c.bf16 %v7605, %v7603
      %v7679 = vpack.c.bf16 %v7610, %v7608
      %v7680 = vpack.c.bf16 %v7615, %v7613
      %v7681 = vpack.c.bf16 %v7620, %v7618
      %v7682 = vpack.c.bf16 %v7625, %v7623
      %v7683 = vpack.c.bf16 %v7630, %v7628
      %v7684 = vpack.c.bf16 %v7635, %v7633
      %v7685 = vpack.c.bf16 %v7640, %v7638
      %v7686 = vrot.slane %v7489, 2
      %v7687 = vrot.slane %v7363, 2
      %v7688 = vsel %vm642, %v7686, %v7687
      %v7689 = vrot.slane %v7505, 2
      %v7690 = vsel %vm642, %v7687, %v7689
      %v7691 = vrot.slane %v7490, 2
      %v7692 = vrot.slane %v7366, 2
      %v7693 = vsel %vm642, %v7691, %v7692
      %v7694 = vrot.slane %v7506, 2
      %v7695 = vsel %vm642, %v7692, %v7694
      %v7696 = vrot.slane %v7491, 2
      %v7697 = vrot.slane %v7369, 2
      %v7698 = vsel %vm642, %v7696, %v7697
      %v7699 = vrot.slane %v7507, 2
      %v7700 = vsel %vm642, %v7697, %v7699
      %v7701 = vrot.slane %v7492, 2
      %v7702 = vrot.slane %v7372, 2
      %v7703 = vsel %vm642, %v7701, %v7702
      %v7704 = vrot.slane %v7508, 2
      %v7705 = vsel %vm642, %v7702, %v7704
      %v7706 = vrot.slane %v7493, 2
      %v7707 = vrot.slane %v7375, 2
      %v7708 = vsel %vm642, %v7706, %v7707
      %v7709 = vrot.slane %v7509, 2
      %v7710 = vsel %vm642, %v7707, %v7709
      %v7711 = vrot.slane %v7494, 2
      %v7712 = vrot.slane %v7378, 2
      %v7713 = vsel %vm642, %v7711, %v7712
      %v7714 = vrot.slane %v7510, 2
      %v7715 = vsel %vm642, %v7712, %v7714
      %v7716 = vrot.slane %v7495, 2
      %v7717 = vrot.slane %v7381, 2
      %v7718 = vsel %vm642, %v7716, %v7717
      %v7719 = vrot.slane %v7511, 2
      %v7720 = vsel %vm642, %v7717, %v7719
      %v7721 = vrot.slane %v7496, 2
      %v7722 = vrot.slane %v7384, 2
      %v7723 = vsel %vm642, %v7721, %v7722
      %v7724 = vrot.slane %v7512, 2
      %v7725 = vsel %vm642, %v7722, %v7724
      %v7726 = vrot.slane %v7497, 2
      %v7727 = vrot.slane %v7387, 2
      %v7728 = vsel %vm642, %v7726, %v7727
      %v7729 = vrot.slane %v7513, 2
      %v7730 = vsel %vm642, %v7727, %v7729
      %v7731 = vrot.slane %v7498, 2
      %v7732 = vrot.slane %v7390, 2
      %v7733 = vsel %vm642, %v7731, %v7732
      %v7734 = vrot.slane %v7514, 2
      %v7735 = vsel %vm642, %v7732, %v7734
      %v7736 = vrot.slane %v7499, 2
      %v7737 = vrot.slane %v7393, 2
      %v7738 = vsel %vm642, %v7736, %v7737
      %v7739 = vrot.slane %v7515, 2
      %v7740 = vsel %vm642, %v7737, %v7739
      %v7741 = vrot.slane %v7500, 2
      %v7742 = vrot.slane %v7396, 2
      %v7743 = vsel %vm642, %v7741, %v7742
      %v7744 = vrot.slane %v7516, 2
      %v7745 = vsel %vm642, %v7742, %v7744
      %v7746 = vrot.slane %v7501, 2
      %v7747 = vrot.slane %v7399, 2
      %v7748 = vsel %vm642, %v7746, %v7747
      %v7749 = vrot.slane %v7517, 2
      %v7750 = vsel %vm642, %v7747, %v7749
      %v7751 = vrot.slane %v7502, 2
      %v7752 = vrot.slane %v7402, 2
      %v7753 = vsel %vm642, %v7751, %v7752
      %v7754 = vrot.slane %v7518, 2
      %v7755 = vsel %vm642, %v7752, %v7754
      %v7756 = vrot.slane %v7503, 2
      %v7757 = vrot.slane %v7405, 2
      %v7758 = vsel %vm642, %v7756, %v7757
      %v7759 = vrot.slane %v7519, 2
      %v7760 = vsel %vm642, %v7757, %v7759
      %v7791 = vpack.c.bf16 %v7690, %v7688
      %v7792 = vpack.c.bf16 %v7695, %v7693
      %v7793 = vpack.c.bf16 %v7700, %v7698
      %v7794 = vpack.c.bf16 %v7705, %v7703
      %v7795 = vpack.c.bf16 %v7710, %v7708
      %v7796 = vpack.c.bf16 %v7715, %v7713
      %v7797 = vpack.c.bf16 %v7720, %v7718
      %v7798 = vpack.c.bf16 %v7725, %v7723
      %v7799 = vpack.c.bf16 %v7730, %v7728
      %v7800 = vpack.c.bf16 %v7735, %v7733
      %v7801 = vpack.c.bf16 %v7740, %v7738
      %v7802 = vpack.c.bf16 %v7745, %v7743
      %v7803 = vpack.c.bf16 %v7750, %v7748
      %v7804 = vpack.c.bf16 %v7755, %v7753
      %v7805 = vpack.c.bf16 %v7760, %v7758
      %v7806 = vpack.c.bf16 %v7408, %v7504
      %v7809 = vrot.slane %v7504, 1
      %v7810 = vrot.slane %v7408, 1
      %v7811 = vsel %vm521, %v7809, %v7810
      %v7812 = vrot.slane %v7520, 1
      %v7813 = vsel %vm521, %v7810, %v7812
      %v7816 = vpack.c.bf16 %v7813, %v7811
      %v7817 = vrot.slane %v7504, 2
      %v7818 = vrot.slane %v7408, 2
      %v7819 = vsel %vm642, %v7817, %v7818
      %v7820 = vrot.slane %v7520, 2
      %v7821 = vsel %vm642, %v7818, %v7820
      %v7824 = vpack.c.bf16 %v7821, %v7819
      %s7825 = scalar_lea.vmem %s2, 1152
      %v7826 = vld [vmem:[%s7825] sm:$0xf]
      %v7827 = vld [vmem:[%s7825 + $0x4] sm:$0xf]
      %v7828 = vld [vmem:[%s7825 + $0x8] sm:$0xf]
      %v7829 = vld [vmem:[%s7825 + $0xc] sm:$0xf]
      %v7830 = vld [vmem:[%s7825 + $0x10] sm:$0xf]
      %v7831 = vld [vmem:[%s7825 + $0x14] sm:$0xf]
      %v7832 = vld [vmem:[%s7825 + $0x18] sm:$0xf]
      %v7833 = vld [vmem:[%s7825 + $0x1c] sm:$0xf]
      %v7834 = vld [vmem:[%s7825 + $0x20] sm:$0xf]
      %v7835 = vld [vmem:[%s7825 + $0x24] sm:$0xf]
      %v7836 = vld [vmem:[%s7825 + $0x28] sm:$0xf]
      %v7837 = vld [vmem:[%s7825 + $0x2c] sm:$0xf]
      %v7838 = vld [vmem:[%s7825 + $0x30] sm:$0xf]
      %v7839 = vld [vmem:[%s7825 + $0x34] sm:$0xf]
      %v7840 = vld [vmem:[%s7825 + $0x38] sm:$0xf]
      %v7841 = vld [vmem:[%s7825 + $0x3c] sm:$0xf]
      %v7842 = vld [vmem:[%s7825 + $0x40] sm:$0xf]
      %v7843 = vld [vmem:[%s7825 + $0x44] sm:$0xf]
      %v7844 = vld [vmem:[%s7825 + $0x48] sm:$0xf]
      %v7845 = vld [vmem:[%s7825 + $0x4c] sm:$0xf]
      %v7846 = vld [vmem:[%s7825 + $0x50] sm:$0xf]
      %v7847 = vld [vmem:[%s7825 + $0x54] sm:$0xf]
      %v7848 = vld [vmem:[%s7825 + $0x58] sm:$0xf]
      %v7849 = vld [vmem:[%s7825 + $0x5c] sm:$0xf]
      %v7850 = vld [vmem:[%s7825 + $0x60] sm:$0xf]
      %v7851 = vld [vmem:[%s7825 + $0x64] sm:$0xf]
      %v7852 = vld [vmem:[%s7825 + $0x68] sm:$0xf]
      %v7853 = vld [vmem:[%s7825 + $0x6c] sm:$0xf]
      %v7854 = vld [vmem:[%s7825 + $0x70] sm:$0xf]
      %v7855 = vld [vmem:[%s7825 + $0x74] sm:$0xf]
      %v7856 = vld [vmem:[%s7825 + $0x78] sm:$0xf]
      %v7857 = vld [vmem:[%s7825 + $0x7c] sm:$0xf]
      %v7858 = vld [vmem:[%s7825 + $0x80] sm:$0xf]
      %v7859 = vld [vmem:[%s7825 + $0x84] sm:$0xf]
      %v7860 = vld [vmem:[%s7825 + $0x88] sm:$0xf]
      %v7861 = vld [vmem:[%s7825 + $0x8c] sm:$0xf]
      %v7862 = vld [vmem:[%s7825 + $0x90] sm:$0xf]
      %v7863 = vld [vmem:[%s7825 + $0x94] sm:$0xf]
      %v7864 = vld [vmem:[%s7825 + $0x98] sm:$0xf]
      %v7865 = vld [vmem:[%s7825 + $0x9c] sm:$0xf]
      %v7866 = vld [vmem:[%s7825 + $0xa0] sm:$0xf]
      %v7867 = vld [vmem:[%s7825 + $0xa4] sm:$0xf]
      %v7868 = vld [vmem:[%s7825 + $0xa8] sm:$0xf]
      %v7869 = vld [vmem:[%s7825 + $0xac] sm:$0xf]
      %v7870 = vld [vmem:[%s7825 + $0xb0] sm:$0xf]
      %v7871 = vld [vmem:[%s7825 + $0xb4] sm:$0xf]
      %v7872 = vld [vmem:[%s7825 + $0xb8] sm:$0xf]
      %v7873 = vld [vmem:[%s7825 + $0xbc] sm:$0xf]
      %v7874 = vld [vmem:[%s7825 + $0xc0] sm:$0xf]
      %v7875 = vld [vmem:[%s7825 + $0xc4] sm:$0xf]
      %v7876 = vld [vmem:[%s7825 + $0xc8] sm:$0xf]
      %v7877 = vld [vmem:[%s7825 + $0xcc] sm:$0xf]
      %v7878 = vld [vmem:[%s7825 + $0xd0] sm:$0xf]
      %v7879 = vld [vmem:[%s7825 + $0xd4] sm:$0xf]
      %v7880 = vld [vmem:[%s7825 + $0xd8] sm:$0xf]
      %v7881 = vld [vmem:[%s7825 + $0xdc] sm:$0xf]
      %v7882 = vld [vmem:[%s7825 + $0xe0] sm:$0xf]
      %v7883 = vld [vmem:[%s7825 + $0xe4] sm:$0xf]
      %v7884 = vld [vmem:[%s7825 + $0xe8] sm:$0xf]
      %v7885 = vld [vmem:[%s7825 + $0xec] sm:$0xf]
      %v7886 = vld [vmem:[%s7825 + $0xf0] sm:$0xf]
      %v7887 = vld [vmem:[%s7825 + $0xf4] sm:$0xf]
      %v7888 = vld [vmem:[%s7825 + $0xf8] sm:$0xf]
      %v7889 = vld [vmem:[%s7825 + $0xfc] sm:$0xf]
      %v7890 = vld [vmem:[%s7825 + $0x100] sm:$0xf]
      %v7891 = vld [vmem:[%s7825 + $0x104] sm:$0xf]
      %v7892 = vld [vmem:[%s7825 + $0x108] sm:$0xf]
      %v7893 = vld [vmem:[%s7825 + $0x10c] sm:$0xf]
      %v7894 = vld [vmem:[%s7825 + $0x110] sm:$0xf]
      %v7895 = vld [vmem:[%s7825 + $0x114] sm:$0xf]
      %v7896 = vld [vmem:[%s7825 + $0x118] sm:$0xf]
      %v7897 = vld [vmem:[%s7825 + $0x11c] sm:$0xf]
      %v7898 = vld [vmem:[%s7825 + $0x120] sm:$0xf]
      %v7899 = vld [vmem:[%s7825 + $0x124] sm:$0xf]
      %v7900 = vld [vmem:[%s7825 + $0x128] sm:$0xf]
      %v7901 = vld [vmem:[%s7825 + $0x12c] sm:$0xf]
      %v7902 = vld [vmem:[%s7825 + $0x130] sm:$0xf]
      %v7903 = vld [vmem:[%s7825 + $0x134] sm:$0xf]
      %v7904 = vld [vmem:[%s7825 + $0x138] sm:$0xf]
      %v7905 = vld [vmem:[%s7825 + $0x13c] sm:$0xf]
      %v7906 = vld [vmem:[%s7825 + $0x140] sm:$0xf]
      %v7907 = vld [vmem:[%s7825 + $0x144] sm:$0xf]
      %v7908 = vld [vmem:[%s7825 + $0x148] sm:$0xf]
      %v7909 = vld [vmem:[%s7825 + $0x14c] sm:$0xf]
      %v7910 = vld [vmem:[%s7825 + $0x150] sm:$0xf]
      %v7911 = vld [vmem:[%s7825 + $0x154] sm:$0xf]
      %v7912 = vld [vmem:[%s7825 + $0x158] sm:$0xf]
      %v7913 = vld [vmem:[%s7825 + $0x15c] sm:$0xf]
      %v7914 = vld [vmem:[%s7825 + $0x160] sm:$0xf]
      %v7915 = vld [vmem:[%s7825 + $0x164] sm:$0xf]
      %v7916 = vld [vmem:[%s7825 + $0x168] sm:$0xf]
      %v7917 = vld [vmem:[%s7825 + $0x16c] sm:$0xf]
      %v7918 = vld [vmem:[%s7825 + $0x170] sm:$0xf]
      %v7919 = vld [vmem:[%s7825 + $0x174] sm:$0xf]
      %v7920 = vld [vmem:[%s7825 + $0x178] sm:$0xf]
      %v7921 = vld [vmem:[%s7825 + $0x17c] sm:$0xf]
      %v7922 = vld [vmem:[%s7825 + $0x180] sm:$0xf]
      %v7923 = vld [vmem:[%s7825 + $0x184] sm:$0xf]
      %v7924 = vld [vmem:[%s7825 + $0x188] sm:$0xf]
      %v7925 = vld [vmem:[%s7825 + $0x18c] sm:$0xf]
      %v7926 = vld [vmem:[%s7825 + $0x190] sm:$0xf]
      %v7927 = vld [vmem:[%s7825 + $0x194] sm:$0xf]
      %v7928 = vld [vmem:[%s7825 + $0x198] sm:$0xf]
      %v7929 = vld [vmem:[%s7825 + $0x19c] sm:$0xf]
      %v7930 = vld [vmem:[%s7825 + $0x1a0] sm:$0xf]
      %v7931 = vld [vmem:[%s7825 + $0x1a4] sm:$0xf]
      %v7932 = vld [vmem:[%s7825 + $0x1a8] sm:$0xf]
      %v7933 = vld [vmem:[%s7825 + $0x1ac] sm:$0xf]
      %v7934 = vld [vmem:[%s7825 + $0x1b0] sm:$0xf]
      %v7935 = vld [vmem:[%s7825 + $0x1b4] sm:$0xf]
      %v7936 = vld [vmem:[%s7825 + $0x1b8] sm:$0xf]
      %v7937 = vld [vmem:[%s7825 + $0x1bc] sm:$0xf]
      %v7938 = vld [vmem:[%s7825 + $0x1c0] sm:$0xf]
      %v7939 = vld [vmem:[%s7825 + $0x1c4] sm:$0xf]
      %v7940 = vld [vmem:[%s7825 + $0x1c8] sm:$0xf]
      %v7941 = vld [vmem:[%s7825 + $0x1cc] sm:$0xf]
      %v7942 = vld [vmem:[%s7825 + $0x1d0] sm:$0xf]
      %v7943 = vld [vmem:[%s7825 + $0x1d4] sm:$0xf]
      %v7944 = vld [vmem:[%s7825 + $0x1d8] sm:$0xf]
      %v7945 = vld [vmem:[%s7825 + $0x1dc] sm:$0xf]
      %v7946 = vld [vmem:[%s7825 + $0x1e0] sm:$0xf]
      %v7947 = vld [vmem:[%s7825 + $0x1e4] sm:$0xf]
      %v7948 = vld [vmem:[%s7825 + $0x1e8] sm:$0xf]
      %v7949 = vld [vmem:[%s7825 + $0x1ec] sm:$0xf]
      %v7950 = vld [vmem:[%s7825 + $0x1f0] sm:$0xf]
      %v7951 = vld [vmem:[%s7825 + $0x1f4] sm:$0xf]
      %v7952 = vld [vmem:[%s7825 + $0x1f8] sm:$0xf]
      %v7953 = vld [vmem:[%s7825 + $0x1fc] sm:$0xf]
      %v7954 = vld [vmem:[%s7825 + $0x200] sm:$0xf]
      %v7955 = vld [vmem:[%s7825 + $0x204] sm:$0xf]
      %v7956 = vld [vmem:[%s7825 + $0x208] sm:$0xf]
      %v7957 = vld [vmem:[%s7825 + $0x20c] sm:$0xf]
      %v7958 = vld [vmem:[%s7825 + $0x210] sm:$0xf]
      %v7959 = vld [vmem:[%s7825 + $0x214] sm:$0xf]
      %v7960 = vld [vmem:[%s7825 + $0x218] sm:$0xf]
      %v7961 = vld [vmem:[%s7825 + $0x21c] sm:$0xf]
      %v7962 = vld [vmem:[%s7825 + $0x220] sm:$0xf]
      %v7963 = vld [vmem:[%s7825 + $0x224] sm:$0xf]
      %v7964 = vld [vmem:[%s7825 + $0x228] sm:$0xf]
      %v7965 = vld [vmem:[%s7825 + $0x22c] sm:$0xf]
      %v7966 = vld [vmem:[%s7825 + $0x230] sm:$0xf]
      %v7967 = vld [vmem:[%s7825 + $0x234] sm:$0xf]
      %v7968 = vld [vmem:[%s7825 + $0x238] sm:$0xf]
      %v7969 = vld [vmem:[%s7825 + $0x23c] sm:$0xf]
      %v7970 = vld [vmem:[%s3 + $0x2] sm:$0x1]
      %v7971 = vlaneseq
      %v7972 = vshrl.u32 %v7971, 7
      %v7973 = vsub.s32 0, %v7972
      %v7974 = vrot.slane %v7970, %v7973
      %v8119 = vunpack.c.l.b16 %v7826
      %v8120 = vunpack.c.l.b16 %v7827
      %v8121 = vunpack.c.l.b16 %v7828
      %v8122 = vunpack.c.l.b16 %v7829
      %v8123 = vunpack.c.l.b16 %v7830
      %v8124 = vunpack.c.l.b16 %v7831
      %v8125 = vunpack.c.l.b16 %v7832
      %v8126 = vunpack.c.l.b16 %v7833
      %v8127 = vunpack.c.l.b16 %v7834
      %v8128 = vunpack.c.l.b16 %v7835
      %v8129 = vunpack.c.l.b16 %v7836
      %v8130 = vunpack.c.l.b16 %v7837
      %v8131 = vunpack.c.l.b16 %v7838
      %v8132 = vunpack.c.l.b16 %v7839
      %v8133 = vunpack.c.l.b16 %v7840
      %v8134 = vunpack.c.l.b16 %v7841
      %v8135 = vunpack.c.l.b16 %v7842
      %v8136 = vunpack.c.l.b16 %v7843
      %v8137 = vunpack.c.l.b16 %v7844
      %v8138 = vunpack.c.l.b16 %v7845
      %v8139 = vunpack.c.l.b16 %v7846
      %v8140 = vunpack.c.l.b16 %v7847
      %v8141 = vunpack.c.l.b16 %v7848
      %v8142 = vunpack.c.l.b16 %v7849
      %v8143 = vunpack.c.l.b16 %v7850
      %v8144 = vunpack.c.l.b16 %v7851
      %v8145 = vunpack.c.l.b16 %v7852
      %v8146 = vunpack.c.l.b16 %v7853
      %v8147 = vunpack.c.l.b16 %v7854
      %v8148 = vunpack.c.l.b16 %v7855
      %v8149 = vunpack.c.l.b16 %v7856
      %v8150 = vunpack.c.l.b16 %v7857
      %v8151 = vunpack.c.l.b16 %v7858
      %v8152 = vunpack.c.l.b16 %v7859
      %v8153 = vunpack.c.l.b16 %v7860
      %v8154 = vunpack.c.l.b16 %v7861
      %v8155 = vunpack.c.l.b16 %v7862
      %v8156 = vunpack.c.l.b16 %v7863
      %v8157 = vunpack.c.l.b16 %v7864
      %v8158 = vunpack.c.l.b16 %v7865
      %v8159 = vunpack.c.l.b16 %v7866
      %v8160 = vunpack.c.l.b16 %v7867
      %v8161 = vunpack.c.l.b16 %v7868
      %v8162 = vunpack.c.l.b16 %v7869
      %v8163 = vunpack.c.l.b16 %v7870
      %v8164 = vunpack.c.l.b16 %v7871
      %v8165 = vunpack.c.l.b16 %v7872
      %v8166 = vunpack.c.l.b16 %v7873
      %v8167 = vunpack.c.l.b16 %v7874
      %v8168 = vunpack.c.l.b16 %v7875
      %v8169 = vunpack.c.l.b16 %v7876
      %v8170 = vunpack.c.l.b16 %v7877
      %v8171 = vunpack.c.l.b16 %v7878
      %v8172 = vunpack.c.l.b16 %v7879
      %v8173 = vunpack.c.l.b16 %v7880
      %v8174 = vunpack.c.l.b16 %v7881
      %v8175 = vunpack.c.l.b16 %v7882
      %v8176 = vunpack.c.l.b16 %v7883
      %v8177 = vunpack.c.l.b16 %v7884
      %v8178 = vunpack.c.l.b16 %v7885
      %v8179 = vunpack.c.l.b16 %v7886
      %v8180 = vunpack.c.l.b16 %v7887
      %v8181 = vunpack.c.l.b16 %v7888
      %v8182 = vunpack.c.l.b16 %v7889
      %v8183 = vunpack.c.l.b16 %v7890
      %v8184 = vunpack.c.l.b16 %v7891
      %v8185 = vunpack.c.l.b16 %v7892
      %v8186 = vunpack.c.l.b16 %v7893
      %v8187 = vunpack.c.l.b16 %v7894
      %v8188 = vunpack.c.l.b16 %v7895
      %v8189 = vunpack.c.l.b16 %v7896
      %v8190 = vunpack.c.l.b16 %v7897
      %v8191 = vunpack.c.l.b16 %v7898
      %v8192 = vunpack.c.l.b16 %v7899
      %v8193 = vunpack.c.l.b16 %v7900
      %v8194 = vunpack.c.l.b16 %v7901
      %v8195 = vunpack.c.l.b16 %v7902
      %v8196 = vunpack.c.l.b16 %v7903
      %v8197 = vunpack.c.l.b16 %v7904
      %v8198 = vunpack.c.l.b16 %v7905
      %v8199 = vunpack.c.l.b16 %v7906
      %v8200 = vunpack.c.l.b16 %v7907
      %v8201 = vunpack.c.l.b16 %v7908
      %v8202 = vunpack.c.l.b16 %v7909
      %v8203 = vunpack.c.l.b16 %v7910
      %v8204 = vunpack.c.l.b16 %v7911
      %v8205 = vunpack.c.l.b16 %v7912
      %v8206 = vunpack.c.l.b16 %v7913
      %v8207 = vunpack.c.l.b16 %v7914
      %v8208 = vunpack.c.l.b16 %v7915
      %v8209 = vunpack.c.l.b16 %v7916
      %v8210 = vunpack.c.l.b16 %v7917
      %v8211 = vunpack.c.l.b16 %v7918
      %v8212 = vunpack.c.l.b16 %v7919
      %v8213 = vunpack.c.l.b16 %v7920
      %v8214 = vunpack.c.l.b16 %v7921
      %v8215 = vunpack.c.l.b16 %v7922
      %v8216 = vunpack.c.l.b16 %v7923
      %v8217 = vunpack.c.l.b16 %v7924
      %v8218 = vunpack.c.l.b16 %v7925
      %v8219 = vunpack.c.l.b16 %v7926
      %v8220 = vunpack.c.l.b16 %v7927
      %v8221 = vunpack.c.l.b16 %v7928
      %v8222 = vunpack.c.l.b16 %v7929
      %v8223 = vunpack.c.l.b16 %v7930
      %v8224 = vunpack.c.l.b16 %v7931
      %v8225 = vunpack.c.l.b16 %v7932
      %v8226 = vunpack.c.l.b16 %v7933
      %v8227 = vunpack.c.l.b16 %v7934
      %v8228 = vunpack.c.l.b16 %v7935
      %v8229 = vunpack.c.l.b16 %v7936
      %v8230 = vunpack.c.l.b16 %v7937
      %v8231 = vunpack.c.l.b16 %v7938
      %v8232 = vunpack.c.l.b16 %v7939
      %v8233 = vunpack.c.l.b16 %v7940
      %v8234 = vunpack.c.l.b16 %v7941
      %v8235 = vunpack.c.l.b16 %v7942
      %v8236 = vunpack.c.l.b16 %v7943
      %v8237 = vunpack.c.l.b16 %v7944
      %v8238 = vunpack.c.l.b16 %v7945
      %v8239 = vunpack.c.l.b16 %v7946
      %v8240 = vunpack.c.l.b16 %v7947
      %v8241 = vunpack.c.l.b16 %v7948
      %v8242 = vunpack.c.l.b16 %v7949
      %v8243 = vunpack.c.l.b16 %v7950
      %v8244 = vunpack.c.l.b16 %v7951
      %v8245 = vunpack.c.l.b16 %v7952
      %v8246 = vunpack.c.l.b16 %v7953
      %v8247 = vunpack.c.l.b16 %v7954
      %v8248 = vunpack.c.l.b16 %v7955
      %v8249 = vunpack.c.l.b16 %v7956
      %v8250 = vunpack.c.l.b16 %v7957
      %v8251 = vunpack.c.l.b16 %v7958
      %v8252 = vunpack.c.l.b16 %v7959
      %v8253 = vunpack.c.l.b16 %v7960
      %v8254 = vunpack.c.l.b16 %v7961
      %v8255 = vunpack.c.l.b16 %v7962
      %v8256 = vunpack.c.l.b16 %v7963
      %v8257 = vunpack.c.l.b16 %v7964
      %v8258 = vunpack.c.l.b16 %v7965
      %v8259 = vunpack.c.l.b16 %v7966
      %v8260 = vunpack.c.l.b16 %v7967
      %v8261 = vunpack.c.l.b16 %v7968
      %v8262 = vunpack.c.l.b16 %v7969
      %v8263 = vpack.c.b16 %v8120, %v8119
      %v8264 = vpack.c.b16 %v8122, %v8121
      %v8265 = vpack.c.b16 %v8124, %v8123
      %v8266 = vpack.c.b16 %v8126, %v8125
      %v8267 = vpack.c.b16 %v8128, %v8127
      %v8268 = vpack.c.b16 %v8130, %v8129
      %v8269 = vpack.c.b16 %v8132, %v8131
      %v8270 = vpack.c.b16 %v8134, %v8133
      %v8271 = vpack.c.b16 %v8136, %v8135
      %v8272 = vpack.c.b16 %v8138, %v8137
      %v8273 = vpack.c.b16 %v8140, %v8139
      %v8274 = vpack.c.b16 %v8142, %v8141
      %v8275 = vpack.c.b16 %v8144, %v8143
      %v8276 = vpack.c.b16 %v8146, %v8145
      %v8277 = vpack.c.b16 %v8148, %v8147
      %v8278 = vpack.c.b16 %v8150, %v8149
      %v8279 = vpack.c.b16 %v8152, %v8151
      %v8280 = vpack.c.b16 %v8154, %v8153
      %v8281 = vpack.c.b16 %v8156, %v8155
      %v8282 = vpack.c.b16 %v8158, %v8157
      %v8283 = vpack.c.b16 %v8160, %v8159
      %v8284 = vpack.c.b16 %v8162, %v8161
      %v8285 = vpack.c.b16 %v8164, %v8163
      %v8286 = vpack.c.b16 %v8166, %v8165
      %v8287 = vpack.c.b16 %v8168, %v8167
      %v8288 = vpack.c.b16 %v8170, %v8169
      %v8289 = vpack.c.b16 %v8172, %v8171
      %v8290 = vpack.c.b16 %v8174, %v8173
      %v8291 = vpack.c.b16 %v8176, %v8175
      %v8292 = vpack.c.b16 %v8178, %v8177
      %v8293 = vpack.c.b16 %v8180, %v8179
      %v8294 = vpack.c.b16 %v8182, %v8181
      %v8295 = vpack.c.b16 %v8184, %v8183
      %v8296 = vpack.c.b16 %v8186, %v8185
      %v8297 = vpack.c.b16 %v8188, %v8187
      %v8298 = vpack.c.b16 %v8190, %v8189
      %v8299 = vpack.c.b16 %v8192, %v8191
      %v8300 = vpack.c.b16 %v8194, %v8193
      %v8301 = vpack.c.b16 %v8196, %v8195
      %v8302 = vpack.c.b16 %v8198, %v8197
      %v8303 = vpack.c.b16 %v8200, %v8199
      %v8304 = vpack.c.b16 %v8202, %v8201
      %v8305 = vpack.c.b16 %v8204, %v8203
      %v8306 = vpack.c.b16 %v8206, %v8205
      %v8307 = vpack.c.b16 %v8208, %v8207
      %v8308 = vpack.c.b16 %v8210, %v8209
      %v8309 = vpack.c.b16 %v8212, %v8211
      %v8310 = vpack.c.b16 %v8214, %v8213
      %v8311 = vpack.c.b16 %v8216, %v8215
      %v8312 = vpack.c.b16 %v8218, %v8217
      %v8313 = vpack.c.b16 %v8220, %v8219
      %v8314 = vpack.c.b16 %v8222, %v8221
      %v8315 = vpack.c.b16 %v8224, %v8223
      %v8316 = vpack.c.b16 %v8226, %v8225
      %v8317 = vpack.c.b16 %v8228, %v8227
      %v8318 = vpack.c.b16 %v8230, %v8229
      %v8319 = vpack.c.b16 %v8232, %v8231
      %v8320 = vpack.c.b16 %v8234, %v8233
      %v8321 = vpack.c.b16 %v8236, %v8235
      %v8322 = vpack.c.b16 %v8238, %v8237
      %v8323 = vpack.c.b16 %v8240, %v8239
      %v8324 = vpack.c.b16 %v8242, %v8241
      %v8325 = vpack.c.b16 %v8244, %v8243
      %v8326 = vpack.c.b16 %v8246, %v8245
      %v8327 = vpack.c.b16 %v8248, %v8247
      %v8328 = vpack.c.b16 %v8250, %v8249
      %v8329 = vpack.c.b16 %v8252, %v8251
      %v8330 = vpack.c.b16 %v8254, %v8253
      %v8331 = vpack.c.b16 %v8256, %v8255
      %v8332 = vpack.c.b16 %v8258, %v8257
      %v8333 = vpack.c.b16 %v8260, %v8259
      %v8334 = vpack.c.b16 %v8262, %v8261
      %8407 = vmatprep.subr.bf16.mxu0 0
      %8408 = vmatpush1.bf16.msra.mxu0 %v8263
      %8409 = vmatprep.subr.bf16.mxu0 0
      %8410 = vmatpush1.bf16.msra.mxu0 %v8264
      %8411 = vmatprep.subr.bf16.mxu0 0
      %8412 = vmatpush1.bf16.msra.mxu0 %v8265
      %8413 = vmatprep.subr.bf16.mxu0 0
      %8414 = vmatpush1.bf16.msra.mxu0 %v8266
      %8415 = vmatprep.subr.bf16.mxu0 0
      %8416 = vmatpush1.bf16.msra.mxu0 %v8267
      %8417 = vmatprep.subr.bf16.mxu0 0
      %8418 = vmatpush1.bf16.msra.mxu0 %v8268
      %8419 = vmatprep.subr.bf16.mxu0 0
      %8420 = vmatpush1.bf16.msra.mxu0 %v8269
      %8421 = vmatprep.subr.bf16.mxu0 0
      %8422 = vmatpush1.bf16.msra.mxu0 %v8270
      %8423 = vmatprep.subr.bf16.mxu0 0
      %8424 = vmatpush1.bf16.msra.mxu0 %v8271
      %8425 = vmatprep.subr.bf16.mxu0 0
      %8426 = vmatpush1.bf16.msra.mxu0 %v8272
      %8427 = vmatprep.subr.bf16.mxu0 0
      %8428 = vmatpush1.bf16.msra.mxu0 %v8273
      %8429 = vmatprep.subr.bf16.mxu0 0
      %8430 = vmatpush1.bf16.msra.mxu0 %v8274
      %8431 = vmatprep.subr.bf16.mxu0 0
      %8432 = vmatpush1.bf16.msra.mxu0 %v8275
      %8433 = vmatprep.subr.bf16.mxu0 0
      %8434 = vmatpush1.bf16.msra.mxu0 %v8276
      %8435 = vmatprep.subr.bf16.mxu0 0
      %8436 = vmatpush1.bf16.msra.mxu0 %v8277
      %8437 = vmatprep.subr.bf16.mxu0 0
      %8438 = vmatpush1.bf16.msra.mxu0 %v8278
      %8439 = vmatprep.mubr.bf16.mxu0 %v7671
      %8440 = vmatmul.mubr.bf16.gmra.mrb[0].mxu0 %v7521
      %v8441 = vpop.f32.mrb[0].mxu0
      %v8442 = vadd.f32 %v7974, %v8441
      %v8443 = vpop.f32.mrb[0].mxu0
      %v8444 = vpop.f32.mrb[0].mxu0
      %v8445 = vadd.f32 %v7974, %v8444
      %v8446 = vpop.f32.mrb[0].mxu0
      %8447 = vmatprep.mubr.bf16.mxu0 %v7672
      %8448 = vmatmul.mubr.bf16.gmra.mrb[0].mxu0 %v7522
      %v8449 = vpop.f32.mrb[0].mxu0
      %v8450 = vadd.f32 %v7974, %v8449
      %v8451 = vpop.f32.mrb[0].mxu0
      %v8452 = vpop.f32.mrb[0].mxu0
      %v8453 = vadd.f32 %v7974, %v8452
      %v8454 = vpop.f32.mrb[0].mxu0
      %8455 = vmatprep.mubr.bf16.mxu0 %v7671
      %8456 = vmatmul.mubr.bf16.gmra.mrb[0].mxu0 %v7521
      %v8457 = vpop.f32.mrb[0].mxu0
      %v8458 = vadd.f32 %v7974, %v8457
      %v8459 = vpop.f32.mrb[0].mxu0
      %v8460 = vpop.f32.mrb[0].mxu0
      %v8461 = vadd.f32 %v7974, %v8460
      %v8462 = vpop.f32.mrb[0].mxu0
      %8463 = vmatprep.mubr.bf16.mxu0 %v7673
      %8464 = vmatmul.mubr.bf16.gmra.mrb[0].mxu0 %v7523
      %v8465 = vpop.f32.mrb[0].mxu0
      %v8466 = vadd.f32 %v7974, %v8465
      %v8467 = vpop.f32.mrb[0].mxu0
      %v8468 = vpop.f32.mrb[0].mxu0
      %v8469 = vadd.f32 %v7974, %v8468
      %v8470 = vpop.f32.mrb[0].mxu0
      %8471 = vmatprep.mubr.bf16.mxu0 %v7674
      %8472 = vmatmul.mubr.bf16.gmra.mrb[0].mxu0 %v7524
      %v8473 = vpop.f32.mrb[0].mxu0
      %v8474 = vadd.f32 %v7974, %v8473
      %v8475 = vpop.f32.mrb[0].mxu0
      %v8476 = vpop.f32.mrb[0].mxu0
      %v8477 = vadd.f32 %v7974, %v8476
      %v8478 = vpop.f32.mrb[0].mxu0
      %8479 = vmatprep.mubr.bf16.mxu0 %v7675
      %8480 = vmatmul.mubr.bf16.gmra.mrb[0].mxu0 %v7525
      %v8481 = vpop.f32.mrb[0].mxu0
      %v8482 = vadd.f32 %v7974, %v8481
      %v8483 = vpop.f32.mrb[0].mxu0
      %v8484 = vpop.f32.mrb[0].mxu0
      %v8485 = vadd.f32 %v7974, %v8484
      %v8486 = vpop.f32.mrb[0].mxu0
      %8487 = vmatprep.mubr.bf16.mxu0 %v7676
      %8488 = vmatmul.mubr.bf16.gmra.mrb[0].mxu0 %v7526
      %v8489 = vpop.f32.mrb[0].mxu0
      %v8490 = vadd.f32 %v7974, %v8489
      %v8491 = vpop.f32.mrb[0].mxu0
      %v8492 = vpop.f32.mrb[0].mxu0
      %v8493 = vadd.f32 %v7974, %v8492
      %v8494 = vpop.f32.mrb[0].mxu0
      %8495 = vmatprep.mubr.bf16.mxu0 %v7677
      %8496 = vmatmul.mubr.bf16.gmra.mrb[0].mxu0 %v7527
      %v8497 = vpop.f32.mrb[0].mxu0
      %v8498 = vadd.f32 %v7974, %v8497
      %v8499 = vpop.f32.mrb[0].mxu0
      %v8500 = vpop.f32.mrb[0].mxu0
      %v8501 = vadd.f32 %v7974, %v8500
      %v8502 = vpop.f32.mrb[0].mxu0
      %8503 = vmatprep.mubr.bf16.mxu0 %v7678
      %8504 = vmatmul.mubr.bf16.gmra.mrb[0].mxu0 %v7528
      %v8505 = vpop.f32.mrb[0].mxu0
      %v8506 = vadd.f32 %v7974, %v8505
      %v8507 = vpop.f32.mrb[0].mxu0
      %v8508 = vpop.f32.mrb[0].mxu0
      %v8509 = vadd.f32 %v7974, %v8508
      %v8510 = vpop.f32.mrb[0].mxu0
      %8511 = vmatprep.mubr.bf16.mxu0 %v7679
      %8512 = vmatmul.mubr.bf16.gmra.mrb[0].mxu0 %v7529
      %v8513 = vpop.f32.mrb[0].mxu0
      %v8514 = vadd.f32 %v7974, %v8513
      %v8515 = vpop.f32.mrb[0].mxu0
      %v8516 = vpop.f32.mrb[0].mxu0
      %v8517 = vadd.f32 %v7974, %v8516
      %v8518 = vpop.f32.mrb[0].mxu0
      %8519 = vmatprep.mubr.bf16.mxu0 %v7680
      %8520 = vmatmul.mubr.bf16.gmra.mrb[0].mxu0 %v7530
      %v8521 = vpop.f32.mrb[0].mxu0
      %v8522 = vadd.f32 %v7974, %v8521
      %v8523 = vpop.f32.mrb[0].mxu0
      %v8524 = vpop.f32.mrb[0].mxu0
      %v8525 = vadd.f32 %v7974, %v8524
      %v8526 = vpop.f32.mrb[0].mxu0
      %8527 = vmatprep.mubr.bf16.mxu0 %v7681
      %8528 = vmatmul.mubr.bf16.gmra.mrb[0].mxu0 %v7531
      %v8529 = vpop.f32.mrb[0].mxu0
      %v8530 = vadd.f32 %v7974, %v8529
      %v8531 = vpop.f32.mrb[0].mxu0
      %v8532 = vpop.f32.mrb[0].mxu0
      %v8533 = vadd.f32 %v7974, %v8532
      %v8534 = vpop.f32.mrb[0].mxu0
      %8535 = vmatprep.mubr.bf16.mxu0 %v7682
      %8536 = vmatmul.mubr.bf16.gmra.mrb[0].mxu0 %v7532
      %v8537 = vpop.f32.mrb[0].mxu0
      %v8538 = vadd.f32 %v7974, %v8537
      %v8539 = vpop.f32.mrb[0].mxu0
      %v8540 = vpop.f32.mrb[0].mxu0
      %v8541 = vadd.f32 %v7974, %v8540
      %v8542 = vpop.f32.mrb[0].mxu0
      %8543 = vmatprep.mubr.bf16.mxu0 %v7683
      %8544 = vmatmul.mubr.bf16.gmra.mrb[0].mxu0 %v7533
      %v8545 = vpop.f32.mrb[0].mxu0
      %v8546 = vadd.f32 %v7974, %v8545
      %v8547 = vpop.f32.mrb[0].mxu0
      %v8548 = vpop.f32.mrb[0].mxu0
      %v8549 = vadd.f32 %v7974, %v8548
      %v8550 = vpop.f32.mrb[0].mxu0
      %8551 = vmatprep.mubr.bf16.mxu0 %v7684
      %8552 = vmatmul.mubr.bf16.gmra.mrb[0].mxu0 %v7534
      %v8553 = vpop.f32.mrb[0].mxu0
      %v8554 = vadd.f32 %v7974, %v8553
      %v8555 = vpop.f32.mrb[0].mxu0
      %v8556 = vpop.f32.mrb[0].mxu0
      %v8557 = vadd.f32 %v7974, %v8556
      %v8558 = vpop.f32.mrb[0].mxu0
      %8559 = vmatprep.mubr.bf16.mxu0 %v7685
      %8560 = vmatmul.mubr.bf16.gmra.mrb[0].mxu0 %v7535
      %v8561 = vpop.f32.mrb[0].mxu0
      %v8562 = vadd.f32 %v7974, %v8561
      %v8563 = vpop.f32.mrb[0].mxu0
      %v8564 = vpop.f32.mrb[0].mxu0
      %v8565 = vadd.f32 %v7974, %v8564
      %v8566 = vpop.f32.mrb[0].mxu0
      %8567 = vdwg.mxu0
      %8568 = vmatprep.subr.bf16.mxu0 0
      %8569 = vmatpush1.bf16.msra.mxu0 %v8279
      %8570 = vmatprep.subr.bf16.mxu0 0
      %8571 = vmatpush1.bf16.msra.mxu0 %v8280
      %8572 = vmatprep.subr.bf16.mxu0 0
      %8573 = vmatpush1.bf16.msra.mxu0 %v8281
      %8574 = vmatprep.subr.bf16.mxu0 0
      %8575 = vmatpush1.bf16.msra.mxu0 %v8282
      %8576 = vmatprep.subr.bf16.mxu0 0
      %8577 = vmatpush1.bf16.msra.mxu0 %v8283
      %8578 = vmatprep.subr.bf16.mxu0 0
      %8579 = vmatpush1.bf16.msra.mxu0 %v8284
      %8580 = vmatprep.subr.bf16.mxu0 0
      %8581 = vmatpush1.bf16.msra.mxu0 %v8285
      %8582 = vmatprep.subr.bf16.mxu0 0
      %8583 = vmatpush1.bf16.msra.mxu0 %v8286
      %8584 = vmatprep.subr.bf16.mxu0 0
      %8585 = vmatpush1.bf16.msra.mxu0 %v8287
      %8586 = vmatprep.subr.bf16.mxu0 0
      %8587 = vmatpush1.bf16.msra.mxu0 %v8288
      %8588 = vmatprep.subr.bf16.mxu0 0
      %8589 = vmatpush1.bf16.msra.mxu0 %v8289
      %8590 = vmatprep.subr.bf16.mxu0 0
      %8591 = vmatpush1.bf16.msra.mxu0 %v8290
      %8592 = vmatprep.subr.bf16.mxu0 0
      %8593 = vmatpush1.bf16.msra.mxu0 %v8291
      %8594 = vmatprep.subr.bf16.mxu0 0
      %8595 = vmatpush1.bf16.msra.mxu0 %v8292
      %8596 = vmatprep.subr.bf16.mxu0 0
      %8597 = vmatpush1.bf16.msra.mxu0 %v8293
      %8598 = vmatprep.subr.bf16.mxu0 0
      %8599 = vmatpush1.bf16.msra.mxu0 %v8294
      %8600 = vmatprep.mubr.bf16.mxu0 %v7522
      %8601 = vmatmul.mubr.bf16.gmra.mrb[0].mxu0 %v7791
      %v8602 = vpop.f32.mrb[0].mxu0
      %v8603 = vadd.f32 %v8442, %v8602
      %v8604 = vpop.f32.mrb[0].mxu0
      %v8605 = vpop.f32.mrb[0].mxu0
      %v8606 = vadd.f32 %v8445, %v8605
      %v8607 = vpop.f32.mrb[0].mxu0
      %8608 = vmatprep.mubr.bf16.mxu0 %v7521
      %8609 = vmatmul.mubr.bf16.gmra.mrb[0].mxu0 %v7792
      %v8610 = vpop.f32.mrb[0].mxu0
      %v8611 = vadd.f32 %v8450, %v8610
      %v8612 = vpop.f32.mrb[0].mxu0
      %v8613 = vpop.f32.mrb[0].mxu0
      %v8614 = vadd.f32 %v8453, %v8613
      %v8615 = vpop.f32.mrb[0].mxu0
      %8616 = vmatprep.mubr.bf16.mxu0 %v7523
      %8617 = vmatmul.mubr.bf16.gmra.mrb[0].mxu0 %v7791
      %v8618 = vpop.f32.mrb[0].mxu0
      %v8619 = vadd.f32 %v8458, %v8618
      %v8620 = vpop.f32.mrb[0].mxu0
      %v8621 = vpop.f32.mrb[0].mxu0
      %v8622 = vadd.f32 %v8461, %v8621
      %v8623 = vpop.f32.mrb[0].mxu0
      %8624 = vmatprep.mubr.bf16.mxu0 %v7524
      %8625 = vmatmul.mubr.bf16.gmra.mrb[0].mxu0 %v7793
      %v8626 = vpop.f32.mrb[0].mxu0
      %v8627 = vadd.f32 %v8466, %v8626
      %v8628 = vpop.f32.mrb[0].mxu0
      %v8629 = vpop.f32.mrb[0].mxu0
      %v8630 = vadd.f32 %v8469, %v8629
      %v8631 = vpop.f32.mrb[0].mxu0
      %8632 = vmatprep.mubr.bf16.mxu0 %v7525
      %8633 = vmatmul.mubr.bf16.gmra.mrb[0].mxu0 %v7794
      %v8634 = vpop.f32.mrb[0].mxu0
      %v8635 = vadd.f32 %v8474, %v8634
      %v8636 = vpop.f32.mrb[0].mxu0
      %v8637 = vpop.f32.mrb[0].mxu0
      %v8638 = vadd.f32 %v8477, %v8637
      %v8639 = vpop.f32.mrb[0].mxu0
      %8640 = vmatprep.mubr.bf16.mxu0 %v7526
      %8641 = vmatmul.mubr.bf16.gmra.mrb[0].mxu0 %v7795
      %v8642 = vpop.f32.mrb[0].mxu0
      %v8643 = vadd.f32 %v8482, %v8642
      %v8644 = vpop.f32.mrb[0].mxu0
      %v8645 = vpop.f32.mrb[0].mxu0
      %v8646 = vadd.f32 %v8485, %v8645
      %v8647 = vpop.f32.mrb[0].mxu0
      %8648 = vmatprep.mubr.bf16.mxu0 %v7527
      %8649 = vmatmul.mubr.bf16.gmra.mrb[0].mxu0 %v7796
      %v8650 = vpop.f32.mrb[0].mxu0
      %v8651 = vadd.f32 %v8490, %v8650
      %v8652 = vpop.f32.mrb[0].mxu0
      %v8653 = vpop.f32.mrb[0].mxu0
      %v8654 = vadd.f32 %v8493, %v8653
      %v8655 = vpop.f32.mrb[0].mxu0
      %8656 = vmatprep.mubr.bf16.mxu0 %v7528
      %8657 = vmatmul.mubr.bf16.gmra.mrb[0].mxu0 %v7797
      %v8658 = vpop.f32.mrb[0].mxu0
      %v8659 = vadd.f32 %v8498, %v8658
      %v8660 = vpop.f32.mrb[0].mxu0
      %v8661 = vpop.f32.mrb[0].mxu0
      %v8662 = vadd.f32 %v8501, %v8661
      %v8663 = vpop.f32.mrb[0].mxu0
      %8664 = vmatprep.mubr.bf16.mxu0 %v7529
      %8665 = vmatmul.mubr.bf16.gmra.mrb[0].mxu0 %v7798
      %v8666 = vpop.f32.mrb[0].mxu0
      %v8667 = vadd.f32 %v8506, %v8666
      %v8668 = vpop.f32.mrb[0].mxu0
      %v8669 = vpop.f32.mrb[0].mxu0
      %v8670 = vadd.f32 %v8509, %v8669
      %v8671 = vpop.f32.mrb[0].mxu0
      %8672 = vmatprep.mubr.bf16.mxu0 %v7530
      %8673 = vmatmul.mubr.bf16.gmra.mrb[0].mxu0 %v7799
      %v8674 = vpop.f32.mrb[0].mxu0
      %v8675 = vadd.f32 %v8514, %v8674
      %v8676 = vpop.f32.mrb[0].mxu0
      %v8677 = vpop.f32.mrb[0].mxu0
      %v8678 = vadd.f32 %v8517, %v8677
      %v8679 = vpop.f32.mrb[0].mxu0
      %8680 = vmatprep.mubr.bf16.mxu0 %v7531
      %8681 = vmatmul.mubr.bf16.gmra.mrb[0].mxu0 %v7800
      %v8682 = vpop.f32.mrb[0].mxu0
      %v8683 = vadd.f32 %v8522, %v8682
      %v8684 = vpop.f32.mrb[0].mxu0
      %v8685 = vpop.f32.mrb[0].mxu0
      %v8686 = vadd.f32 %v8525, %v8685
      %v8687 = vpop.f32.mrb[0].mxu0
      %8688 = vmatprep.mubr.bf16.mxu0 %v7532
      %8689 = vmatmul.mubr.bf16.gmra.mrb[0].mxu0 %v7801
      %v8690 = vpop.f32.mrb[0].mxu0
      %v8691 = vadd.f32 %v8530, %v8690
      %v8692 = vpop.f32.mrb[0].mxu0
      %v8693 = vpop.f32.mrb[0].mxu0
      %v8694 = vadd.f32 %v8533, %v8693
      %v8695 = vpop.f32.mrb[0].mxu0
      %8696 = vmatprep.mubr.bf16.mxu0 %v7533
      %8697 = vmatmul.mubr.bf16.gmra.mrb[0].mxu0 %v7802
      %v8698 = vpop.f32.mrb[0].mxu0
      %v8699 = vadd.f32 %v8538, %v8698
      %v8700 = vpop.f32.mrb[0].mxu0
      %v8701 = vpop.f32.mrb[0].mxu0
      %v8702 = vadd.f32 %v8541, %v8701
      %v8703 = vpop.f32.mrb[0].mxu0
      %8704 = vmatprep.mubr.bf16.mxu0 %v7534
      %8705 = vmatmul.mubr.bf16.gmra.mrb[0].mxu0 %v7803
      %v8706 = vpop.f32.mrb[0].mxu0
      %v8707 = vadd.f32 %v8546, %v8706
      %v8708 = vpop.f32.mrb[0].mxu0
      %v8709 = vpop.f32.mrb[0].mxu0
      %v8710 = vadd.f32 %v8549, %v8709
      %v8711 = vpop.f32.mrb[0].mxu0
      %8712 = vmatprep.mubr.bf16.mxu0 %v7535
      %8713 = vmatmul.mubr.bf16.gmra.mrb[0].mxu0 %v7804
      %v8714 = vpop.f32.mrb[0].mxu0
      %v8715 = vadd.f32 %v8554, %v8714
      %v8716 = vpop.f32.mrb[0].mxu0
      %v8717 = vpop.f32.mrb[0].mxu0
      %v8718 = vadd.f32 %v8557, %v8717
      %v8719 = vpop.f32.mrb[0].mxu0
      %8720 = vmatprep.mubr.bf16.mxu0 %v7806
      %8721 = vmatmul.mubr.bf16.gmra.mrb[0].mxu0 %v7805
      %v8722 = vpop.f32.mrb[0].mxu0
      %v8723 = vadd.f32 %v8562, %v8722
      %v8724 = vpop.f32.mrb[0].mxu0
      %v8725 = vpop.f32.mrb[0].mxu0
      %v8726 = vadd.f32 %v8565, %v8725
      %v8727 = vpop.f32.mrb[0].mxu0
      %8728 = vdwg.mxu0
      %8729 = vmatprep.subr.bf16.mxu0 0
      %8730 = vmatpush1.bf16.msra.mxu0 %v8295
      %8731 = vmatprep.subr.bf16.mxu0 0
      %8732 = vmatpush1.bf16.msra.mxu0 %v8296
      %8733 = vmatprep.subr.bf16.mxu0 0
      %8734 = vmatpush1.bf16.msra.mxu0 %v8297
      %8735 = vmatprep.subr.bf16.mxu0 0
      %8736 = vmatpush1.bf16.msra.mxu0 %v8298
      %8737 = vmatprep.subr.bf16.mxu0 0
      %8738 = vmatpush1.bf16.msra.mxu0 %v8299
      %8739 = vmatprep.subr.bf16.mxu0 0
      %8740 = vmatpush1.bf16.msra.mxu0 %v8300
      %8741 = vmatprep.subr.bf16.mxu0 0
      %8742 = vmatpush1.bf16.msra.mxu0 %v8301
      %8743 = vmatprep.subr.bf16.mxu0 0
      %8744 = vmatpush1.bf16.msra.mxu0 %v8302
      %8745 = vmatprep.subr.bf16.mxu0 0
      %8746 = vmatpush1.bf16.msra.mxu0 %v8303
      %8747 = vmatprep.subr.bf16.mxu0 0
      %8748 = vmatpush1.bf16.msra.mxu0 %v8304
      %8749 = vmatprep.subr.bf16.mxu0 0
      %8750 = vmatpush1.bf16.msra.mxu0 %v8305
      %8751 = vmatprep.subr.bf16.mxu0 0
      %8752 = vmatpush1.bf16.msra.mxu0 %v8306
      %8753 = vmatprep.subr.bf16.mxu0 0
      %8754 = vmatpush1.bf16.msra.mxu0 %v8307
      %8755 = vmatprep.subr.bf16.mxu0 0
      %8756 = vmatpush1.bf16.msra.mxu0 %v8308
      %8757 = vmatprep.subr.bf16.mxu0 0
      %8758 = vmatpush1.bf16.msra.mxu0 %v8309
      %8759 = vmatprep.subr.bf16.mxu0 0
      %8760 = vmatpush1.bf16.msra.mxu0 %v8310
      %8761 = vmatprep.mubr.bf16.mxu0 %v7792
      %8762 = vmatmul.mubr.bf16.gmra.mrb[0].mxu0 %v7672
      %v8763 = vpop.f32.mrb[0].mxu0
      %v8764 = vadd.f32 %v8603, %v8763
      %v8765 = vpop.f32.mrb[0].mxu0
      %v8766 = vpop.f32.mrb[0].mxu0
      %v8767 = vadd.f32 %v8606, %v8766
      %v8768 = vpop.f32.mrb[0].mxu0
      %8769 = vmatprep.mubr.bf16.mxu0 %v7791
      %8770 = vmatmul.mubr.bf16.gmra.mrb[0].mxu0 %v7671
      %v8771 = vpop.f32.mrb[0].mxu0
      %v8772 = vadd.f32 %v8611, %v8771
      %v8773 = vpop.f32.mrb[0].mxu0
      %v8774 = vpop.f32.mrb[0].mxu0
      %v8775 = vadd.f32 %v8614, %v8774
      %v8776 = vpop.f32.mrb[0].mxu0
      %8777 = vmatprep.mubr.bf16.mxu0 %v7793
      %8778 = vmatmul.mubr.bf16.gmra.mrb[0].mxu0 %v7673
      %v8779 = vpop.f32.mrb[0].mxu0
      %v8780 = vadd.f32 %v8619, %v8779
      %v8781 = vpop.f32.mrb[0].mxu0
      %v8782 = vpop.f32.mrb[0].mxu0
      %v8783 = vadd.f32 %v8622, %v8782
      %v8784 = vpop.f32.mrb[0].mxu0
      %8785 = vmatprep.mubr.bf16.mxu0 %v7794
      %8786 = vmatmul.mubr.bf16.gmra.mrb[0].mxu0 %v7674
      %v8787 = vpop.f32.mrb[0].mxu0
      %v8788 = vadd.f32 %v8627, %v8787
      %v8789 = vpop.f32.mrb[0].mxu0
      %v8790 = vpop.f32.mrb[0].mxu0
      %v8791 = vadd.f32 %v8630, %v8790
      %v8792 = vpop.f32.mrb[0].mxu0
      %8793 = vmatprep.mubr.bf16.mxu0 %v7795
      %8794 = vmatmul.mubr.bf16.gmra.mrb[0].mxu0 %v7675
      %v8795 = vpop.f32.mrb[0].mxu0
      %v8796 = vadd.f32 %v8635, %v8795
      %v8797 = vpop.f32.mrb[0].mxu0
      %v8798 = vpop.f32.mrb[0].mxu0
      %v8799 = vadd.f32 %v8638, %v8798
      %v8800 = vpop.f32.mrb[0].mxu0
      %8801 = vmatprep.mubr.bf16.mxu0 %v7796
      %8802 = vmatmul.mubr.bf16.gmra.mrb[0].mxu0 %v7676
      %v8803 = vpop.f32.mrb[0].mxu0
      %v8804 = vadd.f32 %v8643, %v8803
      %v8805 = vpop.f32.mrb[0].mxu0
      %v8806 = vpop.f32.mrb[0].mxu0
      %v8807 = vadd.f32 %v8646, %v8806
      %v8808 = vpop.f32.mrb[0].mxu0
      %8809 = vmatprep.mubr.bf16.mxu0 %v7797
      %8810 = vmatmul.mubr.bf16.gmra.mrb[0].mxu0 %v7677
      %v8811 = vpop.f32.mrb[0].mxu0
      %v8812 = vadd.f32 %v8651, %v8811
      %v8813 = vpop.f32.mrb[0].mxu0
      %v8814 = vpop.f32.mrb[0].mxu0
      %v8815 = vadd.f32 %v8654, %v8814
      %v8816 = vpop.f32.mrb[0].mxu0
      %8817 = vmatprep.mubr.bf16.mxu0 %v7798
      %8818 = vmatmul.mubr.bf16.gmra.mrb[0].mxu0 %v7678
      %v8819 = vpop.f32.mrb[0].mxu0
      %v8820 = vadd.f32 %v8659, %v8819
      %v8821 = vpop.f32.mrb[0].mxu0
      %v8822 = vpop.f32.mrb[0].mxu0
      %v8823 = vadd.f32 %v8662, %v8822
      %v8824 = vpop.f32.mrb[0].mxu0
      %8825 = vmatprep.mubr.bf16.mxu0 %v7799
      %8826 = vmatmul.mubr.bf16.gmra.mrb[0].mxu0 %v7679
      %v8827 = vpop.f32.mrb[0].mxu0
      %v8828 = vadd.f32 %v8667, %v8827
      %v8829 = vpop.f32.mrb[0].mxu0
      %v8830 = vpop.f32.mrb[0].mxu0
      %v8831 = vadd.f32 %v8670, %v8830
      %v8832 = vpop.f32.mrb[0].mxu0
      %8833 = vmatprep.mubr.bf16.mxu0 %v7800
      %8834 = vmatmul.mubr.bf16.gmra.mrb[0].mxu0 %v7680
      %v8835 = vpop.f32.mrb[0].mxu0
      %v8836 = vadd.f32 %v8675, %v8835
      %v8837 = vpop.f32.mrb[0].mxu0
      %v8838 = vpop.f32.mrb[0].mxu0
      %v8839 = vadd.f32 %v8678, %v8838
      %v8840 = vpop.f32.mrb[0].mxu0
      %8841 = vmatprep.mubr.bf16.mxu0 %v7801
      %8842 = vmatmul.mubr.bf16.gmra.mrb[0].mxu0 %v7681
      %v8843 = vpop.f32.mrb[0].mxu0
      %v8844 = vadd.f32 %v8683, %v8843
      %v8845 = vpop.f32.mrb[0].mxu0
      %v8846 = vpop.f32.mrb[0].mxu0
      %v8847 = vadd.f32 %v8686, %v8846
      %v8848 = vpop.f32.mrb[0].mxu0
      %8849 = vmatprep.mubr.bf16.mxu0 %v7802
      %8850 = vmatmul.mubr.bf16.gmra.mrb[0].mxu0 %v7682
      %v8851 = vpop.f32.mrb[0].mxu0
      %v8852 = vadd.f32 %v8691, %v8851
      %v8853 = vpop.f32.mrb[0].mxu0
      %v8854 = vpop.f32.mrb[0].mxu0
      %v8855 = vadd.f32 %v8694, %v8854
      %v8856 = vpop.f32.mrb[0].mxu0
      %8857 = vmatprep.mubr.bf16.mxu0 %v7803
      %8858 = vmatmul.mubr.bf16.gmra.mrb[0].mxu0 %v7683
      %v8859 = vpop.f32.mrb[0].mxu0
      %v8860 = vadd.f32 %v8699, %v8859
      %v8861 = vpop.f32.mrb[0].mxu0
      %v8862 = vpop.f32.mrb[0].mxu0
      %v8863 = vadd.f32 %v8702, %v8862
      %v8864 = vpop.f32.mrb[0].mxu0
      %8865 = vmatprep.mubr.bf16.mxu0 %v7804
      %8866 = vmatmul.mubr.bf16.gmra.mrb[0].mxu0 %v7684
      %v8867 = vpop.f32.mrb[0].mxu0
      %v8868 = vadd.f32 %v8707, %v8867
      %v8869 = vpop.f32.mrb[0].mxu0
      %v8870 = vpop.f32.mrb[0].mxu0
      %v8871 = vadd.f32 %v8710, %v8870
      %v8872 = vpop.f32.mrb[0].mxu0
      %8873 = vmatprep.mubr.bf16.mxu0 %v7805
      %8874 = vmatmul.mubr.bf16.gmra.mrb[0].mxu0 %v7685
      %v8875 = vpop.f32.mrb[0].mxu0
      %v8876 = vadd.f32 %v8715, %v8875
      %v8877 = vpop.f32.mrb[0].mxu0
      %v8878 = vpop.f32.mrb[0].mxu0
      %v8879 = vadd.f32 %v8718, %v8878
      %v8880 = vpop.f32.mrb[0].mxu0
      %8881 = vmatprep.mubr.bf16.mxu0 %v7824
      %8882 = vmatmul.mubr.bf16.gmra.mrb[0].mxu0 %v7816
      %v8883 = vpop.f32.mrb[0].mxu0
      %v8884 = vadd.f32 %v8723, %v8883
      %v8885 = vpop.f32.mrb[0].mxu0
      %v8886 = vpop.f32.mrb[0].mxu0
      %v8887 = vadd.f32 %v8726, %v8886
      %v8888 = vpop.f32.mrb[0].mxu0
      %8889 = vdwg.mxu0
      %8890 = vmatprep.subr.bf16.mxu0 0
      %8891 = vmatpush1.bf16.msra.mxu0 %v8311
      %8892 = vmatprep.subr.bf16.mxu0 0
      %8893 = vmatpush1.bf16.msra.mxu0 %v8312
      %8894 = vmatprep.subr.bf16.mxu0 0
      %8895 = vmatpush1.bf16.msra.mxu0 %v8313
      %8896 = vmatprep.subr.bf16.mxu0 0
      %8897 = vmatpush1.bf16.msra.mxu0 %v8314
      %8898 = vmatprep.subr.bf16.mxu0 0
      %8899 = vmatpush1.bf16.msra.mxu0 %v8315
      %8900 = vmatprep.subr.bf16.mxu0 0
      %8901 = vmatpush1.bf16.msra.mxu0 %v8316
      %8902 = vmatprep.subr.bf16.mxu0 0
      %8903 = vmatpush1.bf16.msra.mxu0 %v8317
      %8904 = vmatprep.subr.bf16.mxu0 0
      %8905 = vmatpush1.bf16.msra.mxu0 %v8318
      %8906 = vmatprep.subr.bf16.mxu0 0
      %8907 = vmatpush1.bf16.msra.mxu0 %v8319
      %8908 = vmatprep.subr.bf16.mxu0 0
      %8909 = vmatpush1.bf16.msra.mxu0 %v8320
      %8910 = vmatprep.subr.bf16.mxu0 0
      %8911 = vmatpush1.bf16.msra.mxu0 %v8321
      %8912 = vmatprep.subr.bf16.mxu0 0
      %8913 = vmatpush1.bf16.msra.mxu0 %v8322
      %8914 = vmatprep.subr.bf16.mxu0 0
      %8915 = vmatpush1.bf16.msra.mxu0 %v8323
      %8916 = vmatprep.subr.bf16.mxu0 0
      %8917 = vmatpush1.bf16.msra.mxu0 %v8324
      %8918 = vmatprep.subr.bf16.mxu0 0
      %8919 = vmatpush1.bf16.msra.mxu0 %v8325
      %8920 = vmatprep.subr.bf16.mxu0 0
      %8921 = vmatpush1.bf16.msra.mxu0 %v8326
      %8922 = vmatprep.mubr.bf16.mxu0 %v7671
      %8923 = vmatmul.mubr.bf16.gmra.mrb[0].mxu0 %v7521
      %v8924 = vpop.f32.mrb[0].mxu0
      %v8925 = vadd.f32 %v8764, %v8924
      %v8926 = vpop.f32.mrb[0].mxu0
      %v8927 = vpop.f32.mrb[0].mxu0
      %v8928 = vadd.f32 %v8767, %v8927
      %v8929 = vpop.f32.mrb[0].mxu0
      %8930 = vmatprep.mubr.bf16.mxu0 %v7673
      %8931 = vmatmul.mubr.bf16.gmra.mrb[0].mxu0 %v7523
      %v8932 = vpop.f32.mrb[0].mxu0
      %v8933 = vadd.f32 %v8772, %v8932
      %v8934 = vpop.f32.mrb[0].mxu0
      %v8935 = vpop.f32.mrb[0].mxu0
      %v8936 = vadd.f32 %v8775, %v8935
      %v8937 = vpop.f32.mrb[0].mxu0
      %8938 = vmatprep.mubr.bf16.mxu0 %v7674
      %8939 = vmatmul.mubr.bf16.gmra.mrb[0].mxu0 %v7524
      %v8940 = vpop.f32.mrb[0].mxu0
      %v8941 = vadd.f32 %v8780, %v8940
      %v8942 = vpop.f32.mrb[0].mxu0
      %v8943 = vpop.f32.mrb[0].mxu0
      %v8944 = vadd.f32 %v8783, %v8943
      %v8945 = vpop.f32.mrb[0].mxu0
      %8946 = vmatprep.mubr.bf16.mxu0 %v7675
      %8947 = vmatmul.mubr.bf16.gmra.mrb[0].mxu0 %v7525
      %v8948 = vpop.f32.mrb[0].mxu0
      %v8949 = vadd.f32 %v8788, %v8948
      %v8950 = vpop.f32.mrb[0].mxu0
      %v8951 = vpop.f32.mrb[0].mxu0
      %v8952 = vadd.f32 %v8791, %v8951
      %v8953 = vpop.f32.mrb[0].mxu0
      %8954 = vmatprep.mubr.bf16.mxu0 %v7676
      %8955 = vmatmul.mubr.bf16.gmra.mrb[0].mxu0 %v7526
      %v8956 = vpop.f32.mrb[0].mxu0
      %v8957 = vadd.f32 %v8796, %v8956
      %v8958 = vpop.f32.mrb[0].mxu0
      %v8959 = vpop.f32.mrb[0].mxu0
      %v8960 = vadd.f32 %v8799, %v8959
      %v8961 = vpop.f32.mrb[0].mxu0
      %8962 = vmatprep.mubr.bf16.mxu0 %v7677
      %8963 = vmatmul.mubr.bf16.gmra.mrb[0].mxu0 %v7527
      %v8964 = vpop.f32.mrb[0].mxu0
      %v8965 = vadd.f32 %v8804, %v8964
      %v8966 = vpop.f32.mrb[0].mxu0
      %v8967 = vpop.f32.mrb[0].mxu0
      %v8968 = vadd.f32 %v8807, %v8967
      %v8969 = vpop.f32.mrb[0].mxu0
      %8970 = vmatprep.mubr.bf16.mxu0 %v7678
      %8971 = vmatmul.mubr.bf16.gmra.mrb[0].mxu0 %v7528
      %v8972 = vpop.f32.mrb[0].mxu0
      %v8973 = vadd.f32 %v8812, %v8972
      %v8974 = vpop.f32.mrb[0].mxu0
      %v8975 = vpop.f32.mrb[0].mxu0
      %v8976 = vadd.f32 %v8815, %v8975
      %v8977 = vpop.f32.mrb[0].mxu0
      %8978 = vmatprep.mubr.bf16.mxu0 %v7679
      %8979 = vmatmul.mubr.bf16.gmra.mrb[0].mxu0 %v7529
      %v8980 = vpop.f32.mrb[0].mxu0
      %v8981 = vadd.f32 %v8820, %v8980
      %v8982 = vpop.f32.mrb[0].mxu0
      %v8983 = vpop.f32.mrb[0].mxu0
      %v8984 = vadd.f32 %v8823, %v8983
      %v8985 = vpop.f32.mrb[0].mxu0
      %8986 = vmatprep.mubr.bf16.mxu0 %v7680
      %8987 = vmatmul.mubr.bf16.gmra.mrb[0].mxu0 %v7530
      %v8988 = vpop.f32.mrb[0].mxu0
      %v8989 = vadd.f32 %v8828, %v8988
      %v8990 = vpop.f32.mrb[0].mxu0
      %v8991 = vpop.f32.mrb[0].mxu0
      %v8992 = vadd.f32 %v8831, %v8991
      %v8993 = vpop.f32.mrb[0].mxu0
      %8994 = vmatprep.mubr.bf16.mxu0 %v7681
      %8995 = vmatmul.mubr.bf16.gmra.mrb[0].mxu0 %v7531
      %v8996 = vpop.f32.mrb[0].mxu0
      %v8997 = vadd.f32 %v8836, %v8996
      %v8998 = vpop.f32.mrb[0].mxu0
      %v8999 = vpop.f32.mrb[0].mxu0
      %v9000 = vadd.f32 %v8839, %v8999
      %v9001 = vpop.f32.mrb[0].mxu0
      %9002 = vmatprep.mubr.bf16.mxu0 %v7682
      %9003 = vmatmul.mubr.bf16.gmra.mrb[0].mxu0 %v7532
      %v9004 = vpop.f32.mrb[0].mxu0
      %v9005 = vadd.f32 %v8844, %v9004
      %v9006 = vpop.f32.mrb[0].mxu0
      %v9007 = vpop.f32.mrb[0].mxu0
      %v9008 = vadd.f32 %v8847, %v9007
      %v9009 = vpop.f32.mrb[0].mxu0
      %9010 = vmatprep.mubr.bf16.mxu0 %v7683
      %9011 = vmatmul.mubr.bf16.gmra.mrb[0].mxu0 %v7533
      %v9012 = vpop.f32.mrb[0].mxu0
      %v9013 = vadd.f32 %v8852, %v9012
      %v9014 = vpop.f32.mrb[0].mxu0
      %v9015 = vpop.f32.mrb[0].mxu0
      %v9016 = vadd.f32 %v8855, %v9015
      %v9017 = vpop.f32.mrb[0].mxu0
      %9018 = vmatprep.mubr.bf16.mxu0 %v7684
      %9019 = vmatmul.mubr.bf16.gmra.mrb[0].mxu0 %v7534
      %v9020 = vpop.f32.mrb[0].mxu0
      %v9021 = vadd.f32 %v8860, %v9020
      %v9022 = vpop.f32.mrb[0].mxu0
      %v9023 = vpop.f32.mrb[0].mxu0
      %v9024 = vadd.f32 %v8863, %v9023
      %v9025 = vpop.f32.mrb[0].mxu0
      %9026 = vmatprep.mubr.bf16.mxu0 %v7685
      %9027 = vmatmul.mubr.bf16.gmra.mrb[0].mxu0 %v7535
      %v9028 = vpop.f32.mrb[0].mxu0
      %v9029 = vadd.f32 %v8868, %v9028
      %v9030 = vpop.f32.mrb[0].mxu0
      %v9031 = vpop.f32.mrb[0].mxu0
      %v9032 = vadd.f32 %v8871, %v9031
      %v9033 = vpop.f32.mrb[0].mxu0
      %9034 = vmatprep.mubr.bf16.mxu0 %v7816
      %9035 = vmatmul.mubr.bf16.gmra.mrb[0].mxu0 %v7806
      %v9036 = vpop.f32.mrb[0].mxu0
      %v9037 = vadd.f32 %v8876, %v9036
      %v9038 = vpop.f32.mrb[0].mxu0
      %v9039 = vpop.f32.mrb[0].mxu0
      %v9040 = vadd.f32 %v8879, %v9039
      %v9041 = vpop.f32.mrb[0].mxu0
      %9042 = vmatprep.mubr.bf16.mxu0 %v7685
      %9043 = vmatmul.mubr.bf16.gmra.mrb[0].mxu0 %v7535
      %v9044 = vpop.f32.mrb[0].mxu0
      %v9045 = vadd.f32 %v8884, %v9044
      %v9046 = vpop.f32.mrb[0].mxu0
      %v9047 = vpop.f32.mrb[0].mxu0
      %v9048 = vadd.f32 %v8887, %v9047
      %v9049 = vpop.f32.mrb[0].mxu0
      %9050 = vdwg.mxu0
      %9051 = vmatprep.subr.bf16.mxu0 0
      %9052 = vmatpush1.bf16.msra.mxu0 %v8327
      %9053 = vmatprep.subr.bf16.mxu0 0
      %9054 = vmatpush1.bf16.msra.mxu0 %v8328
      %9055 = vmatprep.subr.bf16.mxu0 0
      %9056 = vmatpush1.bf16.msra.mxu0 %v8329
      %9057 = vmatprep.subr.bf16.mxu0 0
      %9058 = vmatpush1.bf16.msra.mxu0 %v8330
      %9059 = vmatprep.subr.bf16.mxu0 0
      %9060 = vmatpush1.bf16.msra.mxu0 %v8331
      %9061 = vmatprep.subr.bf16.mxu0 0
      %9062 = vmatpush1.bf16.msra.mxu0 %v8332
      %9063 = vmatprep.subr.bf16.mxu0 0
      %9064 = vmatpush1.bf16.msra.mxu0 %v8333
      %9065 = vmatprep.subr.bf16.mxu0 0
      %9066 = vmatpush1.bf16.msra.mxu0 %v8334
      %9067 = vmatprep.subr.bf16.mxu0 0
      %9068 = vmatpush1.bf16.msra.mxu0 0
      %9069 = vmatprep.subr.bf16.mxu0 0
      %9070 = vmatpush1.bf16.msra.mxu0 0
      %9071 = vmatprep.subr.bf16.mxu0 0
      %9072 = vmatpush1.bf16.msra.mxu0 0
      %9073 = vmatprep.subr.bf16.mxu0 0
      %9074 = vmatpush1.bf16.msra.mxu0 0
      %9075 = vmatprep.subr.bf16.mxu0 0
      %9076 = vmatpush1.bf16.msra.mxu0 0
      %9077 = vmatprep.subr.bf16.mxu0 0
      %9078 = vmatpush1.bf16.msra.mxu0 0
      %9079 = vmatprep.subr.bf16.mxu0 0
      %9080 = vmatpush1.bf16.msra.mxu0 0
      %9081 = vmatprep.subr.bf16.mxu0 0
      %9082 = vmatpush1.bf16.msra.mxu0 0
      %9083 = vmatprep.mubr.bf16.mxu0 0
      %9084 = vmatmul.mubr.bf16.gmra.mrb[0].mxu0 %v7791
      %v9085 = vpop.f32.mrb[0].mxu0
      %v9086 = vadd.f32 %v8925, %v9085
      %v9087 = vpop.f32.mrb[0].mxu0
      %v9088 = vpop.f32.mrb[0].mxu0
      %v9089 = vadd.f32 %v8928, %v9088
      %v9090 = vpop.f32.mrb[0].mxu0
      %9091 = vmatprep.mubr.bf16.mxu0 0
      %9092 = vmatmul.mubr.bf16.gmra.mrb[0].mxu0 %v7793
      %v9093 = vpop.f32.mrb[0].mxu0
      %v9094 = vadd.f32 %v8933, %v9093
      %v9095 = vpop.f32.mrb[0].mxu0
      %v9096 = vpop.f32.mrb[0].mxu0
      %v9097 = vadd.f32 %v8936, %v9096
      %v9098 = vpop.f32.mrb[0].mxu0
      %9099 = vmatprep.mubr.bf16.mxu0 0
      %9100 = vmatmul.mubr.bf16.gmra.mrb[0].mxu0 %v7794
      %v9101 = vpop.f32.mrb[0].mxu0
      %v9102 = vadd.f32 %v8941, %v9101
      %v9103 = vpop.f32.mrb[0].mxu0
      %v9104 = vpop.f32.mrb[0].mxu0
      %v9105 = vadd.f32 %v8944, %v9104
      %v9106 = vpop.f32.mrb[0].mxu0
      %9107 = vmatprep.mubr.bf16.mxu0 0
      %9108 = vmatmul.mubr.bf16.gmra.mrb[0].mxu0 %v7795
      %v9109 = vpop.f32.mrb[0].mxu0
      %v9110 = vadd.f32 %v8949, %v9109
      %v9111 = vpop.f32.mrb[0].mxu0
      %v9112 = vpop.f32.mrb[0].mxu0
      %v9113 = vadd.f32 %v8952, %v9112
      %v9114 = vpop.f32.mrb[0].mxu0
      %9115 = vmatprep.mubr.bf16.mxu0 0
      %9116 = vmatmul.mubr.bf16.gmra.mrb[0].mxu0 %v7796
      %v9117 = vpop.f32.mrb[0].mxu0
      %v9118 = vadd.f32 %v8957, %v9117
      %v9119 = vpop.f32.mrb[0].mxu0
      %v9120 = vpop.f32.mrb[0].mxu0
      %v9121 = vadd.f32 %v8960, %v9120
      %v9122 = vpop.f32.mrb[0].mxu0
      %9123 = vmatprep.mubr.bf16.mxu0 0
      %9124 = vmatmul.mubr.bf16.gmra.mrb[0].mxu0 %v7797
      %v9125 = vpop.f32.mrb[0].mxu0
      %v9126 = vadd.f32 %v8965, %v9125
      %v9127 = vpop.f32.mrb[0].mxu0
      %v9128 = vpop.f32.mrb[0].mxu0
      %v9129 = vadd.f32 %v8968, %v9128
      %v9130 = vpop.f32.mrb[0].mxu0
      %9131 = vmatprep.mubr.bf16.mxu0 0
      %9132 = vmatmul.mubr.bf16.gmra.mrb[0].mxu0 %v7798
      %v9133 = vpop.f32.mrb[0].mxu0
      %v9134 = vadd.f32 %v8973, %v9133
      %v9135 = vpop.f32.mrb[0].mxu0
      %v9136 = vpop.f32.mrb[0].mxu0
      %v9137 = vadd.f32 %v8976, %v9136
      %v9138 = vpop.f32.mrb[0].mxu0
      %9139 = vmatprep.mubr.bf16.mxu0 0
      %9140 = vmatmul.mubr.bf16.gmra.mrb[0].mxu0 %v7799
      %v9141 = vpop.f32.mrb[0].mxu0
      %v9142 = vadd.f32 %v8981, %v9141
      %v9143 = vpop.f32.mrb[0].mxu0
      %v9144 = vpop.f32.mrb[0].mxu0
      %v9145 = vadd.f32 %v8984, %v9144
      %v9146 = vpop.f32.mrb[0].mxu0
      %9147 = vmatprep.mubr.bf16.mxu0 0
      %9148 = vmatmul.mubr.bf16.gmra.mrb[0].mxu0 %v7800
      %v9149 = vpop.f32.mrb[0].mxu0
      %v9150 = vadd.f32 %v8989, %v9149
      %v9151 = vpop.f32.mrb[0].mxu0
      %v9152 = vpop.f32.mrb[0].mxu0
      %v9153 = vadd.f32 %v8992, %v9152
      %v9154 = vpop.f32.mrb[0].mxu0
      %9155 = vmatprep.mubr.bf16.mxu0 0
      %9156 = vmatmul.mubr.bf16.gmra.mrb[0].mxu0 %v7801
      %v9157 = vpop.f32.mrb[0].mxu0
      %v9158 = vadd.f32 %v8997, %v9157
      %v9159 = vpop.f32.mrb[0].mxu0
      %v9160 = vpop.f32.mrb[0].mxu0
      %v9161 = vadd.f32 %v9000, %v9160
      %v9162 = vpop.f32.mrb[0].mxu0
      %9163 = vmatprep.mubr.bf16.mxu0 0
      %9164 = vmatmul.mubr.bf16.gmra.mrb[0].mxu0 %v7802
      %v9165 = vpop.f32.mrb[0].mxu0
      %v9166 = vadd.f32 %v9005, %v9165
      %v9167 = vpop.f32.mrb[0].mxu0
      %v9168 = vpop.f32.mrb[0].mxu0
      %v9169 = vadd.f32 %v9008, %v9168
      %v9170 = vpop.f32.mrb[0].mxu0
      %9171 = vmatprep.mubr.bf16.mxu0 0
      %9172 = vmatmul.mubr.bf16.gmra.mrb[0].mxu0 %v7803
      %v9173 = vpop.f32.mrb[0].mxu0
      %v9174 = vadd.f32 %v9013, %v9173
      %v9175 = vpop.f32.mrb[0].mxu0
      %v9176 = vpop.f32.mrb[0].mxu0
      %v9177 = vadd.f32 %v9016, %v9176
      %v9178 = vpop.f32.mrb[0].mxu0
      %9179 = vmatprep.mubr.bf16.mxu0 0
      %9180 = vmatmul.mubr.bf16.gmra.mrb[0].mxu0 %v7804
      %v9181 = vpop.f32.mrb[0].mxu0
      %v9182 = vadd.f32 %v9021, %v9181
      %v9183 = vpop.f32.mrb[0].mxu0
      %v9184 = vpop.f32.mrb[0].mxu0
      %v9185 = vadd.f32 %v9024, %v9184
      %v9186 = vpop.f32.mrb[0].mxu0
      %9187 = vmatprep.mubr.bf16.mxu0 0
      %9188 = vmatmul.mubr.bf16.gmra.mrb[0].mxu0 %v7805
      %v9189 = vpop.f32.mrb[0].mxu0
      %v9190 = vadd.f32 %v9029, %v9189
      %v9191 = vpop.f32.mrb[0].mxu0
      %v9192 = vpop.f32.mrb[0].mxu0
      %v9193 = vadd.f32 %v9032, %v9192
      %v9194 = vpop.f32.mrb[0].mxu0
      %9195 = vmatprep.mubr.bf16.mxu0 0
      %9196 = vmatmul.mubr.bf16.gmra.mrb[0].mxu0 %v7824
      %v9197 = vpop.f32.mrb[0].mxu0
      %v9198 = vadd.f32 %v9037, %v9197
      %v9199 = vpop.f32.mrb[0].mxu0
      %v9200 = vpop.f32.mrb[0].mxu0
      %v9201 = vadd.f32 %v9040, %v9200
      %v9202 = vpop.f32.mrb[0].mxu0
      %9203 = vmatprep.mubr.bf16.mxu0 0
      %9204 = vmatmul.mubr.bf16.gmra.mrb[0].mxu0 %v7805
      %v9205 = vpop.f32.mrb[0].mxu0
      %v9206 = vadd.f32 %v9045, %v9205
      %v9207 = vpop.f32.mrb[0].mxu0
      %v9208 = vpop.f32.mrb[0].mxu0
      %v9209 = vadd.f32 %v9048, %v9208
      %v9210 = vpop.f32.mrb[0].mxu0
      %9211 = vdwg.mxu0
      %v9212 = vmax.f32 %v9086, 0.0
      %v9213 = vmax.f32 %v9089, 0.0
      %v9214 = vmax.f32 %v9094, 0.0
      %v9215 = vmax.f32 %v9097, 0.0
      %v9216 = vmax.f32 %v9102, 0.0
      %v9217 = vmax.f32 %v9105, 0.0
      %v9218 = vmax.f32 %v9110, 0.0
      %v9219 = vmax.f32 %v9113, 0.0
      %v9220 = vmax.f32 %v9118, 0.0
      %v9221 = vmax.f32 %v9121, 0.0
      %v9222 = vmax.f32 %v9126, 0.0
      %v9223 = vmax.f32 %v9129, 0.0
      %v9224 = vmax.f32 %v9134, 0.0
      %v9225 = vmax.f32 %v9137, 0.0
      %v9226 = vmax.f32 %v9142, 0.0
      %v9227 = vmax.f32 %v9145, 0.0
      %v9228 = vmax.f32 %v9150, 0.0
      %v9229 = vmax.f32 %v9153, 0.0
      %v9230 = vmax.f32 %v9158, 0.0
      %v9231 = vmax.f32 %v9161, 0.0
      %v9232 = vmax.f32 %v9166, 0.0
      %v9233 = vmax.f32 %v9169, 0.0
      %v9234 = vmax.f32 %v9174, 0.0
      %v9235 = vmax.f32 %v9177, 0.0
      %v9236 = vmax.f32 %v9182, 0.0
      %v9237 = vmax.f32 %v9185, 0.0
      %v9238 = vmax.f32 %v9190, 0.0
      %v9239 = vmax.f32 %v9193, 0.0
      %v9240 = vmax.f32 %v9198, 0.0
      %v9241 = vmax.f32 %v9201, 0.0
      %v9242 = vmax.f32 %v9206, 0.0
      %v9243 = vmax.f32 %v9209, 0.0
      %v9260 = vrot.slane %v9214, 1
      %v9261 = vrot.slane %v9212, 1
      %v9262 = vrot.slane %v9216, 1
      %v9263 = vrot.slane %v9218, 1
      %v9264 = vrot.slane %v9220, 1
      %v9265 = vrot.slane %v9222, 1
      %v9266 = vrot.slane %v9224, 1
      %v9267 = vrot.slane %v9226, 1
      %v9268 = vrot.slane %v9228, 1
      %v9269 = vrot.slane %v9230, 1
      %v9270 = vrot.slane %v9232, 1
      %v9271 = vrot.slane %v9234, 1
      %v9272 = vrot.slane %v9236, 1
      %v9273 = vrot.slane %v9238, 1
      %v9274 = vrot.slane %v9240, 1
      %v9275 = vrot.slane %v9242, 1
      %v9308 = vrot.slane %v9214, 7
      %v9309 = vrot.slane %v9215, 7
      %v9310 = vsel %vm315, %v9308, %v9309
      %v9311 = vrot.slane %v9212, 7
      %v9312 = vrot.slane %v9213, 7
      %v9313 = vsel %vm315, %v9311, %v9312
      %v9314 = vrot.slane %v9216, 7
      %v9315 = vrot.slane %v9217, 7
      %v9316 = vsel %vm315, %v9314, %v9315
      %v9317 = vrot.slane %v9218, 7
      %v9318 = vrot.slane %v9219, 7
      %v9319 = vsel %vm315, %v9317, %v9318
      %v9320 = vrot.slane %v9220, 7
      %v9321 = vrot.slane %v9221, 7
      %v9322 = vsel %vm315, %v9320, %v9321
      %v9323 = vrot.slane %v9222, 7
      %v9324 = vrot.slane %v9223, 7
      %v9325 = vsel %vm315, %v9323, %v9324
      %v9326 = vrot.slane %v9224, 7
      %v9327 = vrot.slane %v9225, 7
      %v9328 = vsel %vm315, %v9326, %v9327
      %v9329 = vrot.slane %v9226, 7
      %v9330 = vrot.slane %v9227, 7
      %v9331 = vsel %vm315, %v9329, %v9330
      %v9332 = vrot.slane %v9228, 7
      %v9333 = vrot.slane %v9229, 7
      %v9334 = vsel %vm315, %v9332, %v9333
      %v9335 = vrot.slane %v9230, 7
      %v9336 = vrot.slane %v9231, 7
      %v9337 = vsel %vm315, %v9335, %v9336
      %v9338 = vrot.slane %v9232, 7
      %v9339 = vrot.slane %v9233, 7
      %v9340 = vsel %vm315, %v9338, %v9339
      %v9341 = vrot.slane %v9234, 7
      %v9342 = vrot.slane %v9235, 7
      %v9343 = vsel %vm315, %v9341, %v9342
      %v9344 = vrot.slane %v9236, 7
      %v9345 = vrot.slane %v9237, 7
      %v9346 = vsel %vm315, %v9344, %v9345
      %v9347 = vrot.slane %v9238, 7
      %v9348 = vrot.slane %v9239, 7
      %v9349 = vsel %vm315, %v9347, %v9348
      %v9350 = vrot.slane %v9240, 7
      %v9351 = vrot.slane %v9241, 7
      %v9352 = vsel %vm315, %v9350, %v9351
      %v9353 = vrot.slane %v9242, 7
      %v9354 = vrot.slane %v9243, 7
      %v9355 = vsel %vm315, %v9353, %v9354
      %v9404 = vrot.slane %v9215, 5
      %v9405 = vrot.slane %v9213, 5
      %v9406 = vrot.slane %v9217, 5
      %v9407 = vrot.slane %v9219, 5
      %v9408 = vrot.slane %v9221, 5
      %v9409 = vrot.slane %v9223, 5
      %v9410 = vrot.slane %v9225, 5
      %v9411 = vrot.slane %v9227, 5
      %v9412 = vrot.slane %v9229, 5
      %v9413 = vrot.slane %v9231, 5
      %v9414 = vrot.slane %v9233, 5
      %v9415 = vrot.slane %v9235, 5
      %v9416 = vrot.slane %v9237, 5
      %v9417 = vrot.slane %v9239, 5
      %v9418 = vrot.slane %v9241, 5
      %v9419 = vrot.slane %v9243, 5
      %v9436 = vsel %vm315, %v9260, %v9308
      %v9437 = vsel %vm315, %v9261, %v9311
      %v9438 = vsel %vm315, %v9262, %v9314
      %v9439 = vsel %vm315, %v9263, %v9317
      %v9440 = vsel %vm315, %v9264, %v9320
      %v9441 = vsel %vm315, %v9265, %v9323
      %v9442 = vsel %vm315, %v9266, %v9326
      %v9443 = vsel %vm315, %v9267, %v9329
      %v9444 = vsel %vm315, %v9268, %v9332
      %v9445 = vsel %vm315, %v9269, %v9335
      %v9446 = vsel %vm315, %v9270, %v9338
      %v9447 = vsel %vm315, %v9271, %v9341
      %v9448 = vsel %vm315, %v9272, %v9344
      %v9449 = vsel %vm315, %v9273, %v9347
      %v9450 = vsel %vm315, %v9274, %v9350
      %v9451 = vsel %vm315, %v9275, %v9353
      %v9452 = vsel %vm315, %v9309, %v9404
      %v9453 = vsel %vm315, %v9312, %v9405
      %v9454 = vsel %vm315, %v9315, %v9406
      %v9455 = vsel %vm315, %v9318, %v9407
      %v9456 = vsel %vm315, %v9321, %v9408
      %v9457 = vsel %vm315, %v9324, %v9409
      %v9458 = vsel %vm315, %v9327, %v9410
      %v9459 = vsel %vm315, %v9330, %v9411
      %v9460 = vsel %vm315, %v9333, %v9412
      %v9461 = vsel %vm315, %v9336, %v9413
      %v9462 = vsel %vm315, %v9339, %v9414
      %v9463 = vsel %vm315, %v9342, %v9415
      %v9464 = vsel %vm315, %v9345, %v9416
      %v9465 = vsel %vm315, %v9348, %v9417
      %v9466 = vsel %vm315, %v9351, %v9418
      %v9467 = vsel %vm315, %v9354, %v9419
      %v9468 = vpack.c.bf16 %v9310, %v9436
      %v9469 = vpack.c.bf16 %v9313, %v9437
      %v9470 = vpack.c.bf16 %v9316, %v9438
      %v9471 = vpack.c.bf16 %v9319, %v9439
      %v9472 = vpack.c.bf16 %v9322, %v9440
      %v9473 = vpack.c.bf16 %v9325, %v9441
      %v9474 = vpack.c.bf16 %v9328, %v9442
      %v9475 = vpack.c.bf16 %v9331, %v9443
      %v9476 = vpack.c.bf16 %v9334, %v9444
      %v9477 = vpack.c.bf16 %v9337, %v9445
      %v9478 = vpack.c.bf16 %v9340, %v9446
      %v9479 = vpack.c.bf16 %v9343, %v9447
      %v9480 = vpack.c.bf16 %v9346, %v9448
      %v9481 = vpack.c.bf16 %v9349, %v9449
      %v9482 = vpack.c.bf16 %v9352, %v9450
      %v9513 = vrot.slane %v9436, 1
      %v9514 = vrot.slane %v9310, 1
      %v9515 = vsel %vm521, %v9513, %v9514
      %v9516 = vrot.slane %v9452, 1
      %v9517 = vsel %vm521, %v9514, %v9516
      %v9518 = vrot.slane %v9437, 1
      %v9519 = vrot.slane %v9313, 1
      %v9520 = vsel %vm521, %v9518, %v9519
      %v9521 = vrot.slane %v9453, 1
      %v9522 = vsel %vm521, %v9519, %v9521
      %v9523 = vrot.slane %v9438, 1
      %v9524 = vrot.slane %v9316, 1
      %v9525 = vsel %vm521, %v9523, %v9524
      %v9526 = vrot.slane %v9454, 1
      %v9527 = vsel %vm521, %v9524, %v9526
      %v9528 = vrot.slane %v9439, 1
      %v9529 = vrot.slane %v9319, 1
      %v9530 = vsel %vm521, %v9528, %v9529
      %v9531 = vrot.slane %v9455, 1
      %v9532 = vsel %vm521, %v9529, %v9531
      %v9533 = vrot.slane %v9440, 1
      %v9534 = vrot.slane %v9322, 1
      %v9535 = vsel %vm521, %v9533, %v9534
      %v9536 = vrot.slane %v9456, 1
      %v9537 = vsel %vm521, %v9534, %v9536
      %v9538 = vrot.slane %v9441, 1
      %v9539 = vrot.slane %v9325, 1
      %v9540 = vsel %vm521, %v9538, %v9539
      %v9541 = vrot.slane %v9457, 1
      %v9542 = vsel %vm521, %v9539, %v9541
      %v9543 = vrot.slane %v9442, 1
      %v9544 = vrot.slane %v9328, 1
      %v9545 = vsel %vm521, %v9543, %v9544
      %v9546 = vrot.slane %v9458, 1
      %v9547 = vsel %vm521, %v9544, %v9546
      %v9548 = vrot.slane %v9443, 1
      %v9549 = vrot.slane %v9331, 1
      %v9550 = vsel %vm521, %v9548, %v9549
      %v9551 = vrot.slane %v9459, 1
      %v9552 = vsel %vm521, %v9549, %v9551
      %v9553 = vrot.slane %v9444, 1
      %v9554 = vrot.slane %v9334, 1
      %v9555 = vsel %vm521, %v9553, %v9554
      %v9556 = vrot.slane %v9460, 1
      %v9557 = vsel %vm521, %v9554, %v9556
      %v9558 = vrot.slane %v9445, 1
      %v9559 = vrot.slane %v9337, 1
      %v9560 = vsel %vm521, %v9558, %v9559
      %v9561 = vrot.slane %v9461, 1
      %v9562 = vsel %vm521, %v9559, %v9561
      %v9563 = vrot.slane %v9446, 1
      %v9564 = vrot.slane %v9340, 1
      %v9565 = vsel %vm521, %v9563, %v9564
      %v9566 = vrot.slane %v9462, 1
      %v9567 = vsel %vm521, %v9564, %v9566
      %v9568 = vrot.slane %v9447, 1
      %v9569 = vrot.slane %v9343, 1
      %v9570 = vsel %vm521, %v9568, %v9569
      %v9571 = vrot.slane %v9463, 1
      %v9572 = vsel %vm521, %v9569, %v9571
      %v9573 = vrot.slane %v9448, 1
      %v9574 = vrot.slane %v9346, 1
      %v9575 = vsel %vm521, %v9573, %v9574
      %v9576 = vrot.slane %v9464, 1
      %v9577 = vsel %vm521, %v9574, %v9576
      %v9578 = vrot.slane %v9449, 1
      %v9579 = vrot.slane %v9349, 1
      %v9580 = vsel %vm521, %v9578, %v9579
      %v9581 = vrot.slane %v9465, 1
      %v9582 = vsel %vm521, %v9579, %v9581
      %v9583 = vrot.slane %v9450, 1
      %v9584 = vrot.slane %v9352, 1
      %v9585 = vsel %vm521, %v9583, %v9584
      %v9586 = vrot.slane %v9466, 1
      %v9587 = vsel %vm521, %v9584, %v9586
      %v9618 = vpack.c.bf16 %v9517, %v9515
      %v9619 = vpack.c.bf16 %v9522, %v9520
      %v9620 = vpack.c.bf16 %v9527, %v9525
      %v9621 = vpack.c.bf16 %v9532, %v9530
      %v9622 = vpack.c.bf16 %v9537, %v9535
      %v9623 = vpack.c.bf16 %v9542, %v9540
      %v9624 = vpack.c.bf16 %v9547, %v9545
      %v9625 = vpack.c.bf16 %v9552, %v9550
      %v9626 = vpack.c.bf16 %v9557, %v9555
      %v9627 = vpack.c.bf16 %v9562, %v9560
      %v9628 = vpack.c.bf16 %v9567, %v9565
      %v9629 = vpack.c.bf16 %v9572, %v9570
      %v9630 = vpack.c.bf16 %v9577, %v9575
      %v9631 = vpack.c.bf16 %v9582, %v9580
      %v9632 = vpack.c.bf16 %v9587, %v9585
      %v9633 = vrot.slane %v9436, 2
      %v9634 = vrot.slane %v9310, 2
      %v9635 = vsel %vm642, %v9633, %v9634
      %v9636 = vrot.slane %v9452, 2
      %v9637 = vsel %vm642, %v9634, %v9636
      %v9638 = vrot.slane %v9437, 2
      %v9639 = vrot.slane %v9313, 2
      %v9640 = vsel %vm642, %v9638, %v9639
      %v9641 = vrot.slane %v9453, 2
      %v9642 = vsel %vm642, %v9639, %v9641
      %v9643 = vrot.slane %v9438, 2
      %v9644 = vrot.slane %v9316, 2
      %v9645 = vsel %vm642, %v9643, %v9644
      %v9646 = vrot.slane %v9454, 2
      %v9647 = vsel %vm642, %v9644, %v9646
      %v9648 = vrot.slane %v9439, 2
      %v9649 = vrot.slane %v9319, 2
      %v9650 = vsel %vm642, %v9648, %v9649
      %v9651 = vrot.slane %v9455, 2
      %v9652 = vsel %vm642, %v9649, %v9651
      %v9653 = vrot.slane %v9440, 2
      %v9654 = vrot.slane %v9322, 2
      %v9655 = vsel %vm642, %v9653, %v9654
      %v9656 = vrot.slane %v9456, 2
      %v9657 = vsel %vm642, %v9654, %v9656
      %v9658 = vrot.slane %v9441, 2
      %v9659 = vrot.slane %v9325, 2
      %v9660 = vsel %vm642, %v9658, %v9659
      %v9661 = vrot.slane %v9457, 2
      %v9662 = vsel %vm642, %v9659, %v9661
      %v9663 = vrot.slane %v9442, 2
      %v9664 = vrot.slane %v9328, 2
      %v9665 = vsel %vm642, %v9663, %v9664
      %v9666 = vrot.slane %v9458, 2
      %v9667 = vsel %vm642, %v9664, %v9666
      %v9668 = vrot.slane %v9443, 2
      %v9669 = vrot.slane %v9331, 2
      %v9670 = vsel %vm642, %v9668, %v9669
      %v9671 = vrot.slane %v9459, 2
      %v9672 = vsel %vm642, %v9669, %v9671
      %v9673 = vrot.slane %v9444, 2
      %v9674 = vrot.slane %v9334, 2
      %v9675 = vsel %vm642, %v9673, %v9674
      %v9676 = vrot.slane %v9460, 2
      %v9677 = vsel %vm642, %v9674, %v9676
      %v9678 = vrot.slane %v9445, 2
      %v9679 = vrot.slane %v9337, 2
      %v9680 = vsel %vm642, %v9678, %v9679
      %v9681 = vrot.slane %v9461, 2
      %v9682 = vsel %vm642, %v9679, %v9681
      %v9683 = vrot.slane %v9446, 2
      %v9684 = vrot.slane %v9340, 2
      %v9685 = vsel %vm642, %v9683, %v9684
      %v9686 = vrot.slane %v9462, 2
      %v9687 = vsel %vm642, %v9684, %v9686
      %v9688 = vrot.slane %v9447, 2
      %v9689 = vrot.slane %v9343, 2
      %v9690 = vsel %vm642, %v9688, %v9689
      %v9691 = vrot.slane %v9463, 2
      %v9692 = vsel %vm642, %v9689, %v9691
      %v9693 = vrot.slane %v9448, 2
      %v9694 = vrot.slane %v9346, 2
      %v9695 = vsel %vm642, %v9693, %v9694
      %v9696 = vrot.slane %v9464, 2
      %v9697 = vsel %vm642, %v9694, %v9696
      %v9698 = vrot.slane %v9449, 2
      %v9699 = vrot.slane %v9349, 2
      %v9700 = vsel %vm642, %v9698, %v9699
      %v9701 = vrot.slane %v9465, 2
      %v9702 = vsel %vm642, %v9699, %v9701
      %v9703 = vrot.slane %v9450, 2
      %v9704 = vrot.slane %v9352, 2
      %v9705 = vsel %vm642, %v9703, %v9704
      %v9706 = vrot.slane %v9466, 2
      %v9707 = vsel %vm642, %v9704, %v9706
      %v9738 = vpack.c.bf16 %v9637, %v9635
      %v9739 = vpack.c.bf16 %v9642, %v9640
      %v9740 = vpack.c.bf16 %v9647, %v9645
      %v9741 = vpack.c.bf16 %v9652, %v9650
      %v9742 = vpack.c.bf16 %v9657, %v9655
      %v9743 = vpack.c.bf16 %v9662, %v9660
      %v9744 = vpack.c.bf16 %v9667, %v9665
      %v9745 = vpack.c.bf16 %v9672, %v9670
      %v9746 = vpack.c.bf16 %v9677, %v9675
      %v9747 = vpack.c.bf16 %v9682, %v9680
      %v9748 = vpack.c.bf16 %v9687, %v9685
      %v9749 = vpack.c.bf16 %v9692, %v9690
      %v9750 = vpack.c.bf16 %v9697, %v9695
      %v9751 = vpack.c.bf16 %v9702, %v9700
      %v9752 = vpack.c.bf16 %v9707, %v9705
      %v9753 = vpack.c.bf16 %v9355, %v9451
      %v9756 = vrot.slane %v9451, 1
      %v9757 = vrot.slane %v9355, 1
      %v9758 = vsel %vm521, %v9756, %v9757
      %v9759 = vrot.slane %v9467, 1
      %v9760 = vsel %vm521, %v9757, %v9759
      %v9763 = vpack.c.bf16 %v9760, %v9758
      %v9764 = vrot.slane %v9451, 2
      %v9765 = vrot.slane %v9355, 2
      %v9766 = vsel %vm642, %v9764, %v9765
      %v9767 = vrot.slane %v9467, 2
      %v9768 = vsel %vm642, %v9765, %v9767
      %v9771 = vpack.c.bf16 %v9768, %v9766
      %s9772 = scalar_lea.vmem %s2, 1728
      %v9773 = vld [vmem:[%s9772] sm:$0xf]
      %v9774 = vld [vmem:[%s9772 + $0x4] sm:$0xf]
      %v9775 = vld [vmem:[%s9772 + $0x8] sm:$0xf]
      %v9776 = vld [vmem:[%s9772 + $0xc] sm:$0xf]
      %v9777 = vld [vmem:[%s9772 + $0x10] sm:$0xf]
      %v9778 = vld [vmem:[%s9772 + $0x14] sm:$0xf]
      %v9779 = vld [vmem:[%s9772 + $0x18] sm:$0xf]
      %v9780 = vld [vmem:[%s9772 + $0x1c] sm:$0xf]
      %v9781 = vld [vmem:[%s9772 + $0x20] sm:$0xf]
      %v9782 = vld [vmem:[%s9772 + $0x24] sm:$0xf]
      %v9783 = vld [vmem:[%s9772 + $0x28] sm:$0xf]
      %v9784 = vld [vmem:[%s9772 + $0x2c] sm:$0xf]
      %v9785 = vld [vmem:[%s9772 + $0x30] sm:$0xf]
      %v9786 = vld [vmem:[%s9772 + $0x34] sm:$0xf]
      %v9787 = vld [vmem:[%s9772 + $0x38] sm:$0xf]
      %v9788 = vld [vmem:[%s9772 + $0x3c] sm:$0xf]
      %v9789 = vld [vmem:[%s9772 + $0x40] sm:$0xf]
      %v9790 = vld [vmem:[%s9772 + $0x44] sm:$0xf]
      %v9791 = vld [vmem:[%s9772 + $0x48] sm:$0xf]
      %v9792 = vld [vmem:[%s9772 + $0x4c] sm:$0xf]
      %v9793 = vld [vmem:[%s9772 + $0x50] sm:$0xf]
      %v9794 = vld [vmem:[%s9772 + $0x54] sm:$0xf]
      %v9795 = vld [vmem:[%s9772 + $0x58] sm:$0xf]
      %v9796 = vld [vmem:[%s9772 + $0x5c] sm:$0xf]
      %v9797 = vld [vmem:[%s9772 + $0x60] sm:$0xf]
      %v9798 = vld [vmem:[%s9772 + $0x64] sm:$0xf]
      %v9799 = vld [vmem:[%s9772 + $0x68] sm:$0xf]
      %v9800 = vld [vmem:[%s9772 + $0x6c] sm:$0xf]
      %v9801 = vld [vmem:[%s9772 + $0x70] sm:$0xf]
      %v9802 = vld [vmem:[%s9772 + $0x74] sm:$0xf]
      %v9803 = vld [vmem:[%s9772 + $0x78] sm:$0xf]
      %v9804 = vld [vmem:[%s9772 + $0x7c] sm:$0xf]
      %v9805 = vld [vmem:[%s9772 + $0x80] sm:$0xf]
      %v9806 = vld [vmem:[%s9772 + $0x84] sm:$0xf]
      %v9807 = vld [vmem:[%s9772 + $0x88] sm:$0xf]
      %v9808 = vld [vmem:[%s9772 + $0x8c] sm:$0xf]
      %v9809 = vld [vmem:[%s9772 + $0x90] sm:$0xf]
      %v9810 = vld [vmem:[%s9772 + $0x94] sm:$0xf]
      %v9811 = vld [vmem:[%s9772 + $0x98] sm:$0xf]
      %v9812 = vld [vmem:[%s9772 + $0x9c] sm:$0xf]
      %v9813 = vld [vmem:[%s9772 + $0xa0] sm:$0xf]
      %v9814 = vld [vmem:[%s9772 + $0xa4] sm:$0xf]
      %v9815 = vld [vmem:[%s9772 + $0xa8] sm:$0xf]
      %v9816 = vld [vmem:[%s9772 + $0xac] sm:$0xf]
      %v9817 = vld [vmem:[%s9772 + $0xb0] sm:$0xf]
      %v9818 = vld [vmem:[%s9772 + $0xb4] sm:$0xf]
      %v9819 = vld [vmem:[%s9772 + $0xb8] sm:$0xf]
      %v9820 = vld [vmem:[%s9772 + $0xbc] sm:$0xf]
      %v9821 = vld [vmem:[%s9772 + $0xc0] sm:$0xf]
      %v9822 = vld [vmem:[%s9772 + $0xc4] sm:$0xf]
      %v9823 = vld [vmem:[%s9772 + $0xc8] sm:$0xf]
      %v9824 = vld [vmem:[%s9772 + $0xcc] sm:$0xf]
      %v9825 = vld [vmem:[%s9772 + $0xd0] sm:$0xf]
      %v9826 = vld [vmem:[%s9772 + $0xd4] sm:$0xf]
      %v9827 = vld [vmem:[%s9772 + $0xd8] sm:$0xf]
      %v9828 = vld [vmem:[%s9772 + $0xdc] sm:$0xf]
      %v9829 = vld [vmem:[%s9772 + $0xe0] sm:$0xf]
      %v9830 = vld [vmem:[%s9772 + $0xe4] sm:$0xf]
      %v9831 = vld [vmem:[%s9772 + $0xe8] sm:$0xf]
      %v9832 = vld [vmem:[%s9772 + $0xec] sm:$0xf]
      %v9833 = vld [vmem:[%s9772 + $0xf0] sm:$0xf]
      %v9834 = vld [vmem:[%s9772 + $0xf4] sm:$0xf]
      %v9835 = vld [vmem:[%s9772 + $0xf8] sm:$0xf]
      %v9836 = vld [vmem:[%s9772 + $0xfc] sm:$0xf]
      %v9837 = vld [vmem:[%s9772 + $0x100] sm:$0xf]
      %v9838 = vld [vmem:[%s9772 + $0x104] sm:$0xf]
      %v9839 = vld [vmem:[%s9772 + $0x108] sm:$0xf]
      %v9840 = vld [vmem:[%s9772 + $0x10c] sm:$0xf]
      %v9841 = vld [vmem:[%s9772 + $0x110] sm:$0xf]
      %v9842 = vld [vmem:[%s9772 + $0x114] sm:$0xf]
      %v9843 = vld [vmem:[%s9772 + $0x118] sm:$0xf]
      %v9844 = vld [vmem:[%s9772 + $0x11c] sm:$0xf]
      %v9845 = vld [vmem:[%s9772 + $0x120] sm:$0xf]
      %v9846 = vld [vmem:[%s9772 + $0x124] sm:$0xf]
      %v9847 = vld [vmem:[%s9772 + $0x128] sm:$0xf]
      %v9848 = vld [vmem:[%s9772 + $0x12c] sm:$0xf]
      %v9849 = vld [vmem:[%s9772 + $0x130] sm:$0xf]
      %v9850 = vld [vmem:[%s9772 + $0x134] sm:$0xf]
      %v9851 = vld [vmem:[%s9772 + $0x138] sm:$0xf]
      %v9852 = vld [vmem:[%s9772 + $0x13c] sm:$0xf]
      %v9853 = vld [vmem:[%s9772 + $0x140] sm:$0xf]
      %v9854 = vld [vmem:[%s9772 + $0x144] sm:$0xf]
      %v9855 = vld [vmem:[%s9772 + $0x148] sm:$0xf]
      %v9856 = vld [vmem:[%s9772 + $0x14c] sm:$0xf]
      %v9857 = vld [vmem:[%s9772 + $0x150] sm:$0xf]
      %v9858 = vld [vmem:[%s9772 + $0x154] sm:$0xf]
      %v9859 = vld [vmem:[%s9772 + $0x158] sm:$0xf]
      %v9860 = vld [vmem:[%s9772 + $0x15c] sm:$0xf]
      %v9861 = vld [vmem:[%s9772 + $0x160] sm:$0xf]
      %v9862 = vld [vmem:[%s9772 + $0x164] sm:$0xf]
      %v9863 = vld [vmem:[%s9772 + $0x168] sm:$0xf]
      %v9864 = vld [vmem:[%s9772 + $0x16c] sm:$0xf]
      %v9865 = vld [vmem:[%s9772 + $0x170] sm:$0xf]
      %v9866 = vld [vmem:[%s9772 + $0x174] sm:$0xf]
      %v9867 = vld [vmem:[%s9772 + $0x178] sm:$0xf]
      %v9868 = vld [vmem:[%s9772 + $0x17c] sm:$0xf]
      %v9869 = vld [vmem:[%s9772 + $0x180] sm:$0xf]
      %v9870 = vld [vmem:[%s9772 + $0x184] sm:$0xf]
      %v9871 = vld [vmem:[%s9772 + $0x188] sm:$0xf]
      %v9872 = vld [vmem:[%s9772 + $0x18c] sm:$0xf]
      %v9873 = vld [vmem:[%s9772 + $0x190] sm:$0xf]
      %v9874 = vld [vmem:[%s9772 + $0x194] sm:$0xf]
      %v9875 = vld [vmem:[%s9772 + $0x198] sm:$0xf]
      %v9876 = vld [vmem:[%s9772 + $0x19c] sm:$0xf]
      %v9877 = vld [vmem:[%s9772 + $0x1a0] sm:$0xf]
      %v9878 = vld [vmem:[%s9772 + $0x1a4] sm:$0xf]
      %v9879 = vld [vmem:[%s9772 + $0x1a8] sm:$0xf]
      %v9880 = vld [vmem:[%s9772 + $0x1ac] sm:$0xf]
      %v9881 = vld [vmem:[%s9772 + $0x1b0] sm:$0xf]
      %v9882 = vld [vmem:[%s9772 + $0x1b4] sm:$0xf]
      %v9883 = vld [vmem:[%s9772 + $0x1b8] sm:$0xf]
      %v9884 = vld [vmem:[%s9772 + $0x1bc] sm:$0xf]
      %v9885 = vld [vmem:[%s9772 + $0x1c0] sm:$0xf]
      %v9886 = vld [vmem:[%s9772 + $0x1c4] sm:$0xf]
      %v9887 = vld [vmem:[%s9772 + $0x1c8] sm:$0xf]
      %v9888 = vld [vmem:[%s9772 + $0x1cc] sm:$0xf]
      %v9889 = vld [vmem:[%s9772 + $0x1d0] sm:$0xf]
      %v9890 = vld [vmem:[%s9772 + $0x1d4] sm:$0xf]
      %v9891 = vld [vmem:[%s9772 + $0x1d8] sm:$0xf]
      %v9892 = vld [vmem:[%s9772 + $0x1dc] sm:$0xf]
      %v9893 = vld [vmem:[%s9772 + $0x1e0] sm:$0xf]
      %v9894 = vld [vmem:[%s9772 + $0x1e4] sm:$0xf]
      %v9895 = vld [vmem:[%s9772 + $0x1e8] sm:$0xf]
      %v9896 = vld [vmem:[%s9772 + $0x1ec] sm:$0xf]
      %v9897 = vld [vmem:[%s9772 + $0x1f0] sm:$0xf]
      %v9898 = vld [vmem:[%s9772 + $0x1f4] sm:$0xf]
      %v9899 = vld [vmem:[%s9772 + $0x1f8] sm:$0xf]
      %v9900 = vld [vmem:[%s9772 + $0x1fc] sm:$0xf]
      %v9901 = vld [vmem:[%s9772 + $0x200] sm:$0xf]
      %v9902 = vld [vmem:[%s9772 + $0x204] sm:$0xf]
      %v9903 = vld [vmem:[%s9772 + $0x208] sm:$0xf]
      %v9904 = vld [vmem:[%s9772 + $0x20c] sm:$0xf]
      %v9905 = vld [vmem:[%s9772 + $0x210] sm:$0xf]
      %v9906 = vld [vmem:[%s9772 + $0x214] sm:$0xf]
      %v9907 = vld [vmem:[%s9772 + $0x218] sm:$0xf]
      %v9908 = vld [vmem:[%s9772 + $0x21c] sm:$0xf]
      %v9909 = vld [vmem:[%s9772 + $0x220] sm:$0xf]
      %v9910 = vld [vmem:[%s9772 + $0x224] sm:$0xf]
      %v9911 = vld [vmem:[%s9772 + $0x228] sm:$0xf]
      %v9912 = vld [vmem:[%s9772 + $0x22c] sm:$0xf]
      %v9913 = vld [vmem:[%s9772 + $0x230] sm:$0xf]
      %v9914 = vld [vmem:[%s9772 + $0x234] sm:$0xf]
      %v9915 = vld [vmem:[%s9772 + $0x238] sm:$0xf]
      %v9916 = vld [vmem:[%s9772 + $0x23c] sm:$0xf]
      %v9917 = vld [vmem:[%s3 + $0x3] sm:$0x1]
      %v9918 = vlaneseq
      %v9919 = vshrl.u32 %v9918, 7
      %v9920 = vsub.s32 0, %v9919
      %v9921 = vrot.slane %v9917, %v9920
      %v10066 = vunpack.c.l.b16 %v9773
      %v10067 = vunpack.c.l.b16 %v9774
      %v10068 = vunpack.c.l.b16 %v9775
      %v10069 = vunpack.c.l.b16 %v9776
      %v10070 = vunpack.c.l.b16 %v9777
      %v10071 = vunpack.c.l.b16 %v9778
      %v10072 = vunpack.c.l.b16 %v9779
      %v10073 = vunpack.c.l.b16 %v9780
      %v10074 = vunpack.c.l.b16 %v9781
      %v10075 = vunpack.c.l.b16 %v9782
      %v10076 = vunpack.c.l.b16 %v9783
      %v10077 = vunpack.c.l.b16 %v9784
      %v10078 = vunpack.c.l.b16 %v9785
      %v10079 = vunpack.c.l.b16 %v9786
      %v10080 = vunpack.c.l.b16 %v9787
      %v10081 = vunpack.c.l.b16 %v9788
      %v10082 = vunpack.c.l.b16 %v9789
      %v10083 = vunpack.c.l.b16 %v9790
      %v10084 = vunpack.c.l.b16 %v9791
      %v10085 = vunpack.c.l.b16 %v9792
      %v10086 = vunpack.c.l.b16 %v9793
      %v10087 = vunpack.c.l.b16 %v9794
      %v10088 = vunpack.c.l.b16 %v9795
      %v10089 = vunpack.c.l.b16 %v9796
      %v10090 = vunpack.c.l.b16 %v9797
      %v10091 = vunpack.c.l.b16 %v9798
      %v10092 = vunpack.c.l.b16 %v9799
      %v10093 = vunpack.c.l.b16 %v9800
      %v10094 = vunpack.c.l.b16 %v9801
      %v10095 = vunpack.c.l.b16 %v9802
      %v10096 = vunpack.c.l.b16 %v9803
      %v10097 = vunpack.c.l.b16 %v9804
      %v10098 = vunpack.c.l.b16 %v9805
      %v10099 = vunpack.c.l.b16 %v9806
      %v10100 = vunpack.c.l.b16 %v9807
      %v10101 = vunpack.c.l.b16 %v9808
      %v10102 = vunpack.c.l.b16 %v9809
      %v10103 = vunpack.c.l.b16 %v9810
      %v10104 = vunpack.c.l.b16 %v9811
      %v10105 = vunpack.c.l.b16 %v9812
      %v10106 = vunpack.c.l.b16 %v9813
      %v10107 = vunpack.c.l.b16 %v9814
      %v10108 = vunpack.c.l.b16 %v9815
      %v10109 = vunpack.c.l.b16 %v9816
      %v10110 = vunpack.c.l.b16 %v9817
      %v10111 = vunpack.c.l.b16 %v9818
      %v10112 = vunpack.c.l.b16 %v9819
      %v10113 = vunpack.c.l.b16 %v9820
      %v10114 = vunpack.c.l.b16 %v9821
      %v10115 = vunpack.c.l.b16 %v9822
      %v10116 = vunpack.c.l.b16 %v9823
      %v10117 = vunpack.c.l.b16 %v9824
      %v10118 = vunpack.c.l.b16 %v9825
      %v10119 = vunpack.c.l.b16 %v9826
      %v10120 = vunpack.c.l.b16 %v9827
      %v10121 = vunpack.c.l.b16 %v9828
      %v10122 = vunpack.c.l.b16 %v9829
      %v10123 = vunpack.c.l.b16 %v9830
      %v10124 = vunpack.c.l.b16 %v9831
      %v10125 = vunpack.c.l.b16 %v9832
      %v10126 = vunpack.c.l.b16 %v9833
      %v10127 = vunpack.c.l.b16 %v9834
      %v10128 = vunpack.c.l.b16 %v9835
      %v10129 = vunpack.c.l.b16 %v9836
      %v10130 = vunpack.c.l.b16 %v9837
      %v10131 = vunpack.c.l.b16 %v9838
      %v10132 = vunpack.c.l.b16 %v9839
      %v10133 = vunpack.c.l.b16 %v9840
      %v10134 = vunpack.c.l.b16 %v9841
      %v10135 = vunpack.c.l.b16 %v9842
      %v10136 = vunpack.c.l.b16 %v9843
      %v10137 = vunpack.c.l.b16 %v9844
      %v10138 = vunpack.c.l.b16 %v9845
      %v10139 = vunpack.c.l.b16 %v9846
      %v10140 = vunpack.c.l.b16 %v9847
      %v10141 = vunpack.c.l.b16 %v9848
      %v10142 = vunpack.c.l.b16 %v9849
      %v10143 = vunpack.c.l.b16 %v9850
      %v10144 = vunpack.c.l.b16 %v9851
      %v10145 = vunpack.c.l.b16 %v9852
      %v10146 = vunpack.c.l.b16 %v9853
      %v10147 = vunpack.c.l.b16 %v9854
      %v10148 = vunpack.c.l.b16 %v9855
      %v10149 = vunpack.c.l.b16 %v9856
      %v10150 = vunpack.c.l.b16 %v9857
      %v10151 = vunpack.c.l.b16 %v9858
      %v10152 = vunpack.c.l.b16 %v9859
      %v10153 = vunpack.c.l.b16 %v9860
      %v10154 = vunpack.c.l.b16 %v9861
      %v10155 = vunpack.c.l.b16 %v9862
      %v10156 = vunpack.c.l.b16 %v9863
      %v10157 = vunpack.c.l.b16 %v9864
      %v10158 = vunpack.c.l.b16 %v9865
      %v10159 = vunpack.c.l.b16 %v9866
      %v10160 = vunpack.c.l.b16 %v9867
      %v10161 = vunpack.c.l.b16 %v9868
      %v10162 = vunpack.c.l.b16 %v9869
      %v10163 = vunpack.c.l.b16 %v9870
      %v10164 = vunpack.c.l.b16 %v9871
      %v10165 = vunpack.c.l.b16 %v9872
      %v10166 = vunpack.c.l.b16 %v9873
      %v10167 = vunpack.c.l.b16 %v9874
      %v10168 = vunpack.c.l.b16 %v9875
      %v10169 = vunpack.c.l.b16 %v9876
      %v10170 = vunpack.c.l.b16 %v9877
      %v10171 = vunpack.c.l.b16 %v9878
      %v10172 = vunpack.c.l.b16 %v9879
      %v10173 = vunpack.c.l.b16 %v9880
      %v10174 = vunpack.c.l.b16 %v9881
      %v10175 = vunpack.c.l.b16 %v9882
      %v10176 = vunpack.c.l.b16 %v9883
      %v10177 = vunpack.c.l.b16 %v9884
      %v10178 = vunpack.c.l.b16 %v9885
      %v10179 = vunpack.c.l.b16 %v9886
      %v10180 = vunpack.c.l.b16 %v9887
      %v10181 = vunpack.c.l.b16 %v9888
      %v10182 = vunpack.c.l.b16 %v9889
      %v10183 = vunpack.c.l.b16 %v9890
      %v10184 = vunpack.c.l.b16 %v9891
      %v10185 = vunpack.c.l.b16 %v9892
      %v10186 = vunpack.c.l.b16 %v9893
      %v10187 = vunpack.c.l.b16 %v9894
      %v10188 = vunpack.c.l.b16 %v9895
      %v10189 = vunpack.c.l.b16 %v9896
      %v10190 = vunpack.c.l.b16 %v9897
      %v10191 = vunpack.c.l.b16 %v9898
      %v10192 = vunpack.c.l.b16 %v9899
      %v10193 = vunpack.c.l.b16 %v9900
      %v10194 = vunpack.c.l.b16 %v9901
      %v10195 = vunpack.c.l.b16 %v9902
      %v10196 = vunpack.c.l.b16 %v9903
      %v10197 = vunpack.c.l.b16 %v9904
      %v10198 = vunpack.c.l.b16 %v9905
      %v10199 = vunpack.c.l.b16 %v9906
      %v10200 = vunpack.c.l.b16 %v9907
      %v10201 = vunpack.c.l.b16 %v9908
      %v10202 = vunpack.c.l.b16 %v9909
      %v10203 = vunpack.c.l.b16 %v9910
      %v10204 = vunpack.c.l.b16 %v9911
      %v10205 = vunpack.c.l.b16 %v9912
      %v10206 = vunpack.c.l.b16 %v9913
      %v10207 = vunpack.c.l.b16 %v9914
      %v10208 = vunpack.c.l.b16 %v9915
      %v10209 = vunpack.c.l.b16 %v9916
      %v10210 = vpack.c.b16 %v10067, %v10066
      %v10211 = vpack.c.b16 %v10069, %v10068
      %v10212 = vpack.c.b16 %v10071, %v10070
      %v10213 = vpack.c.b16 %v10073, %v10072
      %v10214 = vpack.c.b16 %v10075, %v10074
      %v10215 = vpack.c.b16 %v10077, %v10076
      %v10216 = vpack.c.b16 %v10079, %v10078
      %v10217 = vpack.c.b16 %v10081, %v10080
      %v10218 = vpack.c.b16 %v10083, %v10082
      %v10219 = vpack.c.b16 %v10085, %v10084
      %v10220 = vpack.c.b16 %v10087, %v10086
      %v10221 = vpack.c.b16 %v10089, %v10088
      %v10222 = vpack.c.b16 %v10091, %v10090
      %v10223 = vpack.c.b16 %v10093, %v10092
      %v10224 = vpack.c.b16 %v10095, %v10094
      %v10225 = vpack.c.b16 %v10097, %v10096
      %v10226 = vpack.c.b16 %v10099, %v10098
      %v10227 = vpack.c.b16 %v10101, %v10100
      %v10228 = vpack.c.b16 %v10103, %v10102
      %v10229 = vpack.c.b16 %v10105, %v10104
      %v10230 = vpack.c.b16 %v10107, %v10106
      %v10231 = vpack.c.b16 %v10109, %v10108
      %v10232 = vpack.c.b16 %v10111, %v10110
      %v10233 = vpack.c.b16 %v10113, %v10112
      %v10234 = vpack.c.b16 %v10115, %v10114
      %v10235 = vpack.c.b16 %v10117, %v10116
      %v10236 = vpack.c.b16 %v10119, %v10118
      %v10237 = vpack.c.b16 %v10121, %v10120
      %v10238 = vpack.c.b16 %v10123, %v10122
      %v10239 = vpack.c.b16 %v10125, %v10124
      %v10240 = vpack.c.b16 %v10127, %v10126
      %v10241 = vpack.c.b16 %v10129, %v10128
      %v10242 = vpack.c.b16 %v10131, %v10130
      %v10243 = vpack.c.b16 %v10133, %v10132
      %v10244 = vpack.c.b16 %v10135, %v10134
      %v10245 = vpack.c.b16 %v10137, %v10136
      %v10246 = vpack.c.b16 %v10139, %v10138
      %v10247 = vpack.c.b16 %v10141, %v10140
      %v10248 = vpack.c.b16 %v10143, %v10142
      %v10249 = vpack.c.b16 %v10145, %v10144
      %v10250 = vpack.c.b16 %v10147, %v10146
      %v10251 = vpack.c.b16 %v10149, %v10148
      %v10252 = vpack.c.b16 %v10151, %v10150
      %v10253 = vpack.c.b16 %v10153, %v10152
      %v10254 = vpack.c.b16 %v10155, %v10154
      %v10255 = vpack.c.b16 %v10157, %v10156
      %v10256 = vpack.c.b16 %v10159, %v10158
      %v10257 = vpack.c.b16 %v10161, %v10160
      %v10258 = vpack.c.b16 %v10163, %v10162
      %v10259 = vpack.c.b16 %v10165, %v10164
      %v10260 = vpack.c.b16 %v10167, %v10166
      %v10261 = vpack.c.b16 %v10169, %v10168
      %v10262 = vpack.c.b16 %v10171, %v10170
      %v10263 = vpack.c.b16 %v10173, %v10172
      %v10264 = vpack.c.b16 %v10175, %v10174
      %v10265 = vpack.c.b16 %v10177, %v10176
      %v10266 = vpack.c.b16 %v10179, %v10178
      %v10267 = vpack.c.b16 %v10181, %v10180
      %v10268 = vpack.c.b16 %v10183, %v10182
      %v10269 = vpack.c.b16 %v10185, %v10184
      %v10270 = vpack.c.b16 %v10187, %v10186
      %v10271 = vpack.c.b16 %v10189, %v10188
      %v10272 = vpack.c.b16 %v10191, %v10190
      %v10273 = vpack.c.b16 %v10193, %v10192
      %v10274 = vpack.c.b16 %v10195, %v10194
      %v10275 = vpack.c.b16 %v10197, %v10196
      %v10276 = vpack.c.b16 %v10199, %v10198
      %v10277 = vpack.c.b16 %v10201, %v10200
      %v10278 = vpack.c.b16 %v10203, %v10202
      %v10279 = vpack.c.b16 %v10205, %v10204
      %v10280 = vpack.c.b16 %v10207, %v10206
      %v10281 = vpack.c.b16 %v10209, %v10208
      %10354 = vmatprep.subr.bf16.mxu0 0
      %10355 = vmatpush1.bf16.msra.mxu0 %v10210
      %10356 = vmatprep.subr.bf16.mxu0 0
      %10357 = vmatpush1.bf16.msra.mxu0 %v10211
      %10358 = vmatprep.subr.bf16.mxu0 0
      %10359 = vmatpush1.bf16.msra.mxu0 %v10212
      %10360 = vmatprep.subr.bf16.mxu0 0
      %10361 = vmatpush1.bf16.msra.mxu0 %v10213
      %10362 = vmatprep.subr.bf16.mxu0 0
      %10363 = vmatpush1.bf16.msra.mxu0 %v10214
      %10364 = vmatprep.subr.bf16.mxu0 0
      %10365 = vmatpush1.bf16.msra.mxu0 %v10215
      %10366 = vmatprep.subr.bf16.mxu0 0
      %10367 = vmatpush1.bf16.msra.mxu0 %v10216
      %10368 = vmatprep.subr.bf16.mxu0 0
      %10369 = vmatpush1.bf16.msra.mxu0 %v10217
      %10370 = vmatprep.subr.bf16.mxu0 0
      %10371 = vmatpush1.bf16.msra.mxu0 %v10218
      %10372 = vmatprep.subr.bf16.mxu0 0
      %10373 = vmatpush1.bf16.msra.mxu0 %v10219
      %10374 = vmatprep.subr.bf16.mxu0 0
      %10375 = vmatpush1.bf16.msra.mxu0 %v10220
      %10376 = vmatprep.subr.bf16.mxu0 0
      %10377 = vmatpush1.bf16.msra.mxu0 %v10221
      %10378 = vmatprep.subr.bf16.mxu0 0
      %10379 = vmatpush1.bf16.msra.mxu0 %v10222
      %10380 = vmatprep.subr.bf16.mxu0 0
      %10381 = vmatpush1.bf16.msra.mxu0 %v10223
      %10382 = vmatprep.subr.bf16.mxu0 0
      %10383 = vmatpush1.bf16.msra.mxu0 %v10224
      %10384 = vmatprep.subr.bf16.mxu0 0
      %10385 = vmatpush1.bf16.msra.mxu0 %v10225
      %10386 = vmatprep.mubr.bf16.mxu0 %v9618
      %10387 = vmatmul.mubr.bf16.gmra.mrb[0].mxu0 %v9468
      %v10388 = vpop.f32.mrb[0].mxu0
      %v10389 = vadd.f32 %v9921, %v10388
      %v10390 = vpop.f32.mrb[0].mxu0
      %v10391 = vpop.f32.mrb[0].mxu0
      %v10392 = vadd.f32 %v9921, %v10391
      %v10393 = vpop.f32.mrb[0].mxu0
      %10394 = vmatprep.mubr.bf16.mxu0 %v9619
      %10395 = vmatmul.mubr.bf16.gmra.mrb[0].mxu0 %v9469
      %v10396 = vpop.f32.mrb[0].mxu0
      %v10397 = vadd.f32 %v9921, %v10396
      %v10398 = vpop.f32.mrb[0].mxu0
      %v10399 = vpop.f32.mrb[0].mxu0
      %v10400 = vadd.f32 %v9921, %v10399
      %v10401 = vpop.f32.mrb[0].mxu0
      %10402 = vmatprep.mubr.bf16.mxu0 %v9618
      %10403 = vmatmul.mubr.bf16.gmra.mrb[0].mxu0 %v9468
      %v10404 = vpop.f32.mrb[0].mxu0
      %v10405 = vadd.f32 %v9921, %v10404
      %v10406 = vpop.f32.mrb[0].mxu0
      %v10407 = vpop.f32.mrb[0].mxu0
      %v10408 = vadd.f32 %v9921, %v10407
      %v10409 = vpop.f32.mrb[0].mxu0
      %10410 = vmatprep.mubr.bf16.mxu0 %v9620
      %10411 = vmatmul.mubr.bf16.gmra.mrb[0].mxu0 %v9470
      %v10412 = vpop.f32.mrb[0].mxu0
      %v10413 = vadd.f32 %v9921, %v10412
      %v10414 = vpop.f32.mrb[0].mxu0
      %v10415 = vpop.f32.mrb[0].mxu0
      %v10416 = vadd.f32 %v9921, %v10415
      %v10417 = vpop.f32.mrb[0].mxu0
      %10418 = vmatprep.mubr.bf16.mxu0 %v9621
      %10419 = vmatmul.mubr.bf16.gmra.mrb[0].mxu0 %v9471
      %v10420 = vpop.f32.mrb[0].mxu0
      %v10421 = vadd.f32 %v9921, %v10420
      %v10422 = vpop.f32.mrb[0].mxu0
      %v10423 = vpop.f32.mrb[0].mxu0
      %v10424 = vadd.f32 %v9921, %v10423
      %v10425 = vpop.f32.mrb[0].mxu0
      %10426 = vmatprep.mubr.bf16.mxu0 %v9622
      %10427 = vmatmul.mubr.bf16.gmra.mrb[0].mxu0 %v9472
      %v10428 = vpop.f32.mrb[0].mxu0
      %v10429 = vadd.f32 %v9921, %v10428
      %v10430 = vpop.f32.mrb[0].mxu0
      %v10431 = vpop.f32.mrb[0].mxu0
      %v10432 = vadd.f32 %v9921, %v10431
      %v10433 = vpop.f32.mrb[0].mxu0
      %10434 = vmatprep.mubr.bf16.mxu0 %v9623
      %10435 = vmatmul.mubr.bf16.gmra.mrb[0].mxu0 %v9473
      %v10436 = vpop.f32.mrb[0].mxu0
      %v10437 = vadd.f32 %v9921, %v10436
      %v10438 = vpop.f32.mrb[0].mxu0
      %v10439 = vpop.f32.mrb[0].mxu0
      %v10440 = vadd.f32 %v9921, %v10439
      %v10441 = vpop.f32.mrb[0].mxu0
      %10442 = vmatprep.mubr.bf16.mxu0 %v9624
      %10443 = vmatmul.mubr.bf16.gmra.mrb[0].mxu0 %v9474
      %v10444 = vpop.f32.mrb[0].mxu0
      %v10445 = vadd.f32 %v9921, %v10444
      %v10446 = vpop.f32.mrb[0].mxu0
      %v10447 = vpop.f32.mrb[0].mxu0
      %v10448 = vadd.f32 %v9921, %v10447
      %v10449 = vpop.f32.mrb[0].mxu0
      %10450 = vmatprep.mubr.bf16.mxu0 %v9625
      %10451 = vmatmul.mubr.bf16.gmra.mrb[0].mxu0 %v9475
      %v10452 = vpop.f32.mrb[0].mxu0
      %v10453 = vadd.f32 %v9921, %v10452
      %v10454 = vpop.f32.mrb[0].mxu0
      %v10455 = vpop.f32.mrb[0].mxu0
      %v10456 = vadd.f32 %v9921, %v10455
      %v10457 = vpop.f32.mrb[0].mxu0
      %10458 = vmatprep.mubr.bf16.mxu0 %v9626
      %10459 = vmatmul.mubr.bf16.gmra.mrb[0].mxu0 %v9476
      %v10460 = vpop.f32.mrb[0].mxu0
      %v10461 = vadd.f32 %v9921, %v10460
      %v10462 = vpop.f32.mrb[0].mxu0
      %v10463 = vpop.f32.mrb[0].mxu0
      %v10464 = vadd.f32 %v9921, %v10463
      %v10465 = vpop.f32.mrb[0].mxu0
      %10466 = vmatprep.mubr.bf16.mxu0 %v9627
      %10467 = vmatmul.mubr.bf16.gmra.mrb[0].mxu0 %v9477
      %v10468 = vpop.f32.mrb[0].mxu0
      %v10469 = vadd.f32 %v9921, %v10468
      %v10470 = vpop.f32.mrb[0].mxu0
      %v10471 = vpop.f32.mrb[0].mxu0
      %v10472 = vadd.f32 %v9921, %v10471
      %v10473 = vpop.f32.mrb[0].mxu0
      %10474 = vmatprep.mubr.bf16.mxu0 %v9628
      %10475 = vmatmul.mubr.bf16.gmra.mrb[0].mxu0 %v9478
      %v10476 = vpop.f32.mrb[0].mxu0
      %v10477 = vadd.f32 %v9921, %v10476
      %v10478 = vpop.f32.mrb[0].mxu0
      %v10479 = vpop.f32.mrb[0].mxu0
      %v10480 = vadd.f32 %v9921, %v10479
      %v10481 = vpop.f32.mrb[0].mxu0
      %10482 = vmatprep.mubr.bf16.mxu0 %v9629
      %10483 = vmatmul.mubr.bf16.gmra.mrb[0].mxu0 %v9479
      %v10484 = vpop.f32.mrb[0].mxu0
      %v10485 = vadd.f32 %v9921, %v10484
      %v10486 = vpop.f32.mrb[0].mxu0
      %v10487 = vpop.f32.mrb[0].mxu0
      %v10488 = vadd.f32 %v9921, %v10487
      %v10489 = vpop.f32.mrb[0].mxu0
      %10490 = vmatprep.mubr.bf16.mxu0 %v9630
      %10491 = vmatmul.mubr.bf16.gmra.mrb[0].mxu0 %v9480
      %v10492 = vpop.f32.mrb[0].mxu0
      %v10493 = vadd.f32 %v9921, %v10492
      %v10494 = vpop.f32.mrb[0].mxu0
      %v10495 = vpop.f32.mrb[0].mxu0
      %v10496 = vadd.f32 %v9921, %v10495
      %v10497 = vpop.f32.mrb[0].mxu0
      %10498 = vmatprep.mubr.bf16.mxu0 %v9631
      %10499 = vmatmul.mubr.bf16.gmra.mrb[0].mxu0 %v9481
      %v10500 = vpop.f32.mrb[0].mxu0
      %v10501 = vadd.f32 %v9921, %v10500
      %v10502 = vpop.f32.mrb[0].mxu0
      %v10503 = vpop.f32.mrb[0].mxu0
      %v10504 = vadd.f32 %v9921, %v10503
      %v10505 = vpop.f32.mrb[0].mxu0
      %10506 = vmatprep.mubr.bf16.mxu0 %v9632
      %10507 = vmatmul.mubr.bf16.gmra.mrb[0].mxu0 %v9482
      %v10508 = vpop.f32.mrb[0].mxu0
      %v10509 = vadd.f32 %v9921, %v10508
      %v10510 = vpop.f32.mrb[0].mxu0
      %v10511 = vpop.f32.mrb[0].mxu0
      %v10512 = vadd.f32 %v9921, %v10511
      %v10513 = vpop.f32.mrb[0].mxu0
      %10514 = vdwg.mxu0
      %10515 = vmatprep.subr.bf16.mxu0 0
      %10516 = vmatpush1.bf16.msra.mxu0 %v10226
      %10517 = vmatprep.subr.bf16.mxu0 0
      %10518 = vmatpush1.bf16.msra.mxu0 %v10227
      %10519 = vmatprep.subr.bf16.mxu0 0
      %10520 = vmatpush1.bf16.msra.mxu0 %v10228
      %10521 = vmatprep.subr.bf16.mxu0 0
      %10522 = vmatpush1.bf16.msra.mxu0 %v10229
      %10523 = vmatprep.subr.bf16.mxu0 0
      %10524 = vmatpush1.bf16.msra.mxu0 %v10230
      %10525 = vmatprep.subr.bf16.mxu0 0
      %10526 = vmatpush1.bf16.msra.mxu0 %v10231
      %10527 = vmatprep.subr.bf16.mxu0 0
      %10528 = vmatpush1.bf16.msra.mxu0 %v10232
      %10529 = vmatprep.subr.bf16.mxu0 0
      %10530 = vmatpush1.bf16.msra.mxu0 %v10233
      %10531 = vmatprep.subr.bf16.mxu0 0
      %10532 = vmatpush1.bf16.msra.mxu0 %v10234
      %10533 = vmatprep.subr.bf16.mxu0 0
      %10534 = vmatpush1.bf16.msra.mxu0 %v10235
      %10535 = vmatprep.subr.bf16.mxu0 0
      %10536 = vmatpush1.bf16.msra.mxu0 %v10236
      %10537 = vmatprep.subr.bf16.mxu0 0
      %10538 = vmatpush1.bf16.msra.mxu0 %v10237
      %10539 = vmatprep.subr.bf16.mxu0 0
      %10540 = vmatpush1.bf16.msra.mxu0 %v10238
      %10541 = vmatprep.subr.bf16.mxu0 0
      %10542 = vmatpush1.bf16.msra.mxu0 %v10239
      %10543 = vmatprep.subr.bf16.mxu0 0
      %10544 = vmatpush1.bf16.msra.mxu0 %v10240
      %10545 = vmatprep.subr.bf16.mxu0 0
      %10546 = vmatpush1.bf16.msra.mxu0 %v10241
      %10547 = vmatprep.mubr.bf16.mxu0 %v9469
      %10548 = vmatmul.mubr.bf16.gmra.mrb[0].mxu0 %v9738
      %v10549 = vpop.f32.mrb[0].mxu0
      %v10550 = vadd.f32 %v10389, %v10549
      %v10551 = vpop.f32.mrb[0].mxu0
      %v10552 = vpop.f32.mrb[0].mxu0
      %v10553 = vadd.f32 %v10392, %v10552
      %v10554 = vpop.f32.mrb[0].mxu0
      %10555 = vmatprep.mubr.bf16.mxu0 %v9468
      %10556 = vmatmul.mubr.bf16.gmra.mrb[0].mxu0 %v9739
      %v10557 = vpop.f32.mrb[0].mxu0
      %v10558 = vadd.f32 %v10397, %v10557
      %v10559 = vpop.f32.mrb[0].mxu0
      %v10560 = vpop.f32.mrb[0].mxu0
      %v10561 = vadd.f32 %v10400, %v10560
      %v10562 = vpop.f32.mrb[0].mxu0
      %10563 = vmatprep.mubr.bf16.mxu0 %v9470
      %10564 = vmatmul.mubr.bf16.gmra.mrb[0].mxu0 %v9738
      %v10565 = vpop.f32.mrb[0].mxu0
      %v10566 = vadd.f32 %v10405, %v10565
      %v10567 = vpop.f32.mrb[0].mxu0
      %v10568 = vpop.f32.mrb[0].mxu0
      %v10569 = vadd.f32 %v10408, %v10568
      %v10570 = vpop.f32.mrb[0].mxu0
      %10571 = vmatprep.mubr.bf16.mxu0 %v9471
      %10572 = vmatmul.mubr.bf16.gmra.mrb[0].mxu0 %v9740
      %v10573 = vpop.f32.mrb[0].mxu0
      %v10574 = vadd.f32 %v10413, %v10573
      %v10575 = vpop.f32.mrb[0].mxu0
      %v10576 = vpop.f32.mrb[0].mxu0
      %v10577 = vadd.f32 %v10416, %v10576
      %v10578 = vpop.f32.mrb[0].mxu0
      %10579 = vmatprep.mubr.bf16.mxu0 %v9472
      %10580 = vmatmul.mubr.bf16.gmra.mrb[0].mxu0 %v9741
      %v10581 = vpop.f32.mrb[0].mxu0
      %v10582 = vadd.f32 %v10421, %v10581
      %v10583 = vpop.f32.mrb[0].mxu0
      %v10584 = vpop.f32.mrb[0].mxu0
      %v10585 = vadd.f32 %v10424, %v10584
      %v10586 = vpop.f32.mrb[0].mxu0
      %10587 = vmatprep.mubr.bf16.mxu0 %v9473
      %10588 = vmatmul.mubr.bf16.gmra.mrb[0].mxu0 %v9742
      %v10589 = vpop.f32.mrb[0].mxu0
      %v10590 = vadd.f32 %v10429, %v10589
      %v10591 = vpop.f32.mrb[0].mxu0
      %v10592 = vpop.f32.mrb[0].mxu0
      %v10593 = vadd.f32 %v10432, %v10592
      %v10594 = vpop.f32.mrb[0].mxu0
      %10595 = vmatprep.mubr.bf16.mxu0 %v9474
      %10596 = vmatmul.mubr.bf16.gmra.mrb[0].mxu0 %v9743
      %v10597 = vpop.f32.mrb[0].mxu0
      %v10598 = vadd.f32 %v10437, %v10597
      %v10599 = vpop.f32.mrb[0].mxu0
      %v10600 = vpop.f32.mrb[0].mxu0
      %v10601 = vadd.f32 %v10440, %v10600
      %v10602 = vpop.f32.mrb[0].mxu0
      %10603 = vmatprep.mubr.bf16.mxu0 %v9475
      %10604 = vmatmul.mubr.bf16.gmra.mrb[0].mxu0 %v9744
      %v10605 = vpop.f32.mrb[0].mxu0
      %v10606 = vadd.f32 %v10445, %v10605
      %v10607 = vpop.f32.mrb[0].mxu0
      %v10608 = vpop.f32.mrb[0].mxu0
      %v10609 = vadd.f32 %v10448, %v10608
      %v10610 = vpop.f32.mrb[0].mxu0
      %10611 = vmatprep.mubr.bf16.mxu0 %v9476
      %10612 = vmatmul.mubr.bf16.gmra.mrb[0].mxu0 %v9745
      %v10613 = vpop.f32.mrb[0].mxu0
      %v10614 = vadd.f32 %v10453, %v10613
      %v10615 = vpop.f32.mrb[0].mxu0
      %v10616 = vpop.f32.mrb[0].mxu0
      %v10617 = vadd.f32 %v10456, %v10616
      %v10618 = vpop.f32.mrb[0].mxu0
      %10619 = vmatprep.mubr.bf16.mxu0 %v9477
      %10620 = vmatmul.mubr.bf16.gmra.mrb[0].mxu0 %v9746
      %v10621 = vpop.f32.mrb[0].mxu0
      %v10622 = vadd.f32 %v10461, %v10621
      %v10623 = vpop.f32.mrb[0].mxu0
      %v10624 = vpop.f32.mrb[0].mxu0
      %v10625 = vadd.f32 %v10464, %v10624
      %v10626 = vpop.f32.mrb[0].mxu0
      %10627 = vmatprep.mubr.bf16.mxu0 %v9478
      %10628 = vmatmul.mubr.bf16.gmra.mrb[0].mxu0 %v9747
      %v10629 = vpop.f32.mrb[0].mxu0
      %v10630 = vadd.f32 %v10469, %v10629
      %v10631 = vpop.f32.mrb[0].mxu0
      %v10632 = vpop.f32.mrb[0].mxu0
      %v10633 = vadd.f32 %v10472, %v10632
      %v10634 = vpop.f32.mrb[0].mxu0
      %10635 = vmatprep.mubr.bf16.mxu0 %v9479
      %10636 = vmatmul.mubr.bf16.gmra.mrb[0].mxu0 %v9748
      %v10637 = vpop.f32.mrb[0].mxu0
      %v10638 = vadd.f32 %v10477, %v10637
      %v10639 = vpop.f32.mrb[0].mxu0
      %v10640 = vpop.f32.mrb[0].mxu0
      %v10641 = vadd.f32 %v10480, %v10640
      %v10642 = vpop.f32.mrb[0].mxu0
      %10643 = vmatprep.mubr.bf16.mxu0 %v9480
      %10644 = vmatmul.mubr.bf16.gmra.mrb[0].mxu0 %v9749
      %v10645 = vpop.f32.mrb[0].mxu0
      %v10646 = vadd.f32 %v10485, %v10645
      %v10647 = vpop.f32.mrb[0].mxu0
      %v10648 = vpop.f32.mrb[0].mxu0
      %v10649 = vadd.f32 %v10488, %v10648
      %v10650 = vpop.f32.mrb[0].mxu0
      %10651 = vmatprep.mubr.bf16.mxu0 %v9481
      %10652 = vmatmul.mubr.bf16.gmra.mrb[0].mxu0 %v9750
      %v10653 = vpop.f32.mrb[0].mxu0
      %v10654 = vadd.f32 %v10493, %v10653
      %v10655 = vpop.f32.mrb[0].mxu0
      %v10656 = vpop.f32.mrb[0].mxu0
      %v10657 = vadd.f32 %v10496, %v10656
      %v10658 = vpop.f32.mrb[0].mxu0
      %10659 = vmatprep.mubr.bf16.mxu0 %v9482
      %10660 = vmatmul.mubr.bf16.gmra.mrb[0].mxu0 %v9751
      %v10661 = vpop.f32.mrb[0].mxu0
      %v10662 = vadd.f32 %v10501, %v10661
      %v10663 = vpop.f32.mrb[0].mxu0
      %v10664 = vpop.f32.mrb[0].mxu0
      %v10665 = vadd.f32 %v10504, %v10664
      %v10666 = vpop.f32.mrb[0].mxu0
      %10667 = vmatprep.mubr.bf16.mxu0 %v9753
      %10668 = vmatmul.mubr.bf16.gmra.mrb[0].mxu0 %v9752
      %v10669 = vpop.f32.mrb[0].mxu0
      %v10670 = vadd.f32 %v10509, %v10669
      %v10671 = vpop.f32.mrb[0].mxu0
      %v10672 = vpop.f32.mrb[0].mxu0
      %v10673 = vadd.f32 %v10512, %v10672
      %v10674 = vpop.f32.mrb[0].mxu0
      %10675 = vdwg.mxu0
      %10676 = vmatprep.subr.bf16.mxu0 0
      %10677 = vmatpush1.bf16.msra.mxu0 %v10242
      %10678 = vmatprep.subr.bf16.mxu0 0
      %10679 = vmatpush1.bf16.msra.mxu0 %v10243
      %10680 = vmatprep.subr.bf16.mxu0 0
      %10681 = vmatpush1.bf16.msra.mxu0 %v10244
      %10682 = vmatprep.subr.bf16.mxu0 0
      %10683 = vmatpush1.bf16.msra.mxu0 %v10245
      %10684 = vmatprep.subr.bf16.mxu0 0
      %10685 = vmatpush1.bf16.msra.mxu0 %v10246
      %10686 = vmatprep.subr.bf16.mxu0 0
      %10687 = vmatpush1.bf16.msra.mxu0 %v10247
      %10688 = vmatprep.subr.bf16.mxu0 0
      %10689 = vmatpush1.bf16.msra.mxu0 %v10248
      %10690 = vmatprep.subr.bf16.mxu0 0
      %10691 = vmatpush1.bf16.msra.mxu0 %v10249
      %10692 = vmatprep.subr.bf16.mxu0 0
      %10693 = vmatpush1.bf16.msra.mxu0 %v10250
      %10694 = vmatprep.subr.bf16.mxu0 0
      %10695 = vmatpush1.bf16.msra.mxu0 %v10251
      %10696 = vmatprep.subr.bf16.mxu0 0
      %10697 = vmatpush1.bf16.msra.mxu0 %v10252
      %10698 = vmatprep.subr.bf16.mxu0 0
      %10699 = vmatpush1.bf16.msra.mxu0 %v10253
      %10700 = vmatprep.subr.bf16.mxu0 0
      %10701 = vmatpush1.bf16.msra.mxu0 %v10254
      %10702 = vmatprep.subr.bf16.mxu0 0
      %10703 = vmatpush1.bf16.msra.mxu0 %v10255
      %10704 = vmatprep.subr.bf16.mxu0 0
      %10705 = vmatpush1.bf16.msra.mxu0 %v10256
      %10706 = vmatprep.subr.bf16.mxu0 0
      %10707 = vmatpush1.bf16.msra.mxu0 %v10257
      %10708 = vmatprep.mubr.bf16.mxu0 %v9739
      %10709 = vmatmul.mubr.bf16.gmra.mrb[0].mxu0 %v9619
      %v10710 = vpop.f32.mrb[0].mxu0
      %v10711 = vadd.f32 %v10550, %v10710
      %v10712 = vpop.f32.mrb[0].mxu0
      %v10713 = vpop.f32.mrb[0].mxu0
      %v10714 = vadd.f32 %v10553, %v10713
      %v10715 = vpop.f32.mrb[0].mxu0
      %10716 = vmatprep.mubr.bf16.mxu0 %v9738
      %10717 = vmatmul.mubr.bf16.gmra.mrb[0].mxu0 %v9618
      %v10718 = vpop.f32.mrb[0].mxu0
      %v10719 = vadd.f32 %v10558, %v10718
      %v10720 = vpop.f32.mrb[0].mxu0
      %v10721 = vpop.f32.mrb[0].mxu0
      %v10722 = vadd.f32 %v10561, %v10721
      %v10723 = vpop.f32.mrb[0].mxu0
      %10724 = vmatprep.mubr.bf16.mxu0 %v9740
      %10725 = vmatmul.mubr.bf16.gmra.mrb[0].mxu0 %v9620
      %v10726 = vpop.f32.mrb[0].mxu0
      %v10727 = vadd.f32 %v10566, %v10726
      %v10728 = vpop.f32.mrb[0].mxu0
      %v10729 = vpop.f32.mrb[0].mxu0
      %v10730 = vadd.f32 %v10569, %v10729
      %v10731 = vpop.f32.mrb[0].mxu0
      %10732 = vmatprep.mubr.bf16.mxu0 %v9741
      %10733 = vmatmul.mubr.bf16.gmra.mrb[0].mxu0 %v9621
      %v10734 = vpop.f32.mrb[0].mxu0
      %v10735 = vadd.f32 %v10574, %v10734
      %v10736 = vpop.f32.mrb[0].mxu0
      %v10737 = vpop.f32.mrb[0].mxu0
      %v10738 = vadd.f32 %v10577, %v10737
      %v10739 = vpop.f32.mrb[0].mxu0
      %10740 = vmatprep.mubr.bf16.mxu0 %v9742
      %10741 = vmatmul.mubr.bf16.gmra.mrb[0].mxu0 %v9622
      %v10742 = vpop.f32.mrb[0].mxu0
      %v10743 = vadd.f32 %v10582, %v10742
      %v10744 = vpop.f32.mrb[0].mxu0
      %v10745 = vpop.f32.mrb[0].mxu0
      %v10746 = vadd.f32 %v10585, %v10745
      %v10747 = vpop.f32.mrb[0].mxu0
      %10748 = vmatprep.mubr.bf16.mxu0 %v9743
      %10749 = vmatmul.mubr.bf16.gmra.mrb[0].mxu0 %v9623
      %v10750 = vpop.f32.mrb[0].mxu0
      %v10751 = vadd.f32 %v10590, %v10750
      %v10752 = vpop.f32.mrb[0].mxu0
      %v10753 = vpop.f32.mrb[0].mxu0
      %v10754 = vadd.f32 %v10593, %v10753
      %v10755 = vpop.f32.mrb[0].mxu0
      %10756 = vmatprep.mubr.bf16.mxu0 %v9744
      %10757 = vmatmul.mubr.bf16.gmra.mrb[0].mxu0 %v9624
      %v10758 = vpop.f32.mrb[0].mxu0
      %v10759 = vadd.f32 %v10598, %v10758
      %v10760 = vpop.f32.mrb[0].mxu0
      %v10761 = vpop.f32.mrb[0].mxu0
      %v10762 = vadd.f32 %v10601, %v10761
      %v10763 = vpop.f32.mrb[0].mxu0
      %10764 = vmatprep.mubr.bf16.mxu0 %v9745
      %10765 = vmatmul.mubr.bf16.gmra.mrb[0].mxu0 %v9625
      %v10766 = vpop.f32.mrb[0].mxu0
      %v10767 = vadd.f32 %v10606, %v10766
      %v10768 = vpop.f32.mrb[0].mxu0
      %v10769 = vpop.f32.mrb[0].mxu0
      %v10770 = vadd.f32 %v10609, %v10769
      %v10771 = vpop.f32.mrb[0].mxu0
      %10772 = vmatprep.mubr.bf16.mxu0 %v9746
      %10773 = vmatmul.mubr.bf16.gmra.mrb[0].mxu0 %v9626
      %v10774 = vpop.f32.mrb[0].mxu0
      %v10775 = vadd.f32 %v10614, %v10774
      %v10776 = vpop.f32.mrb[0].mxu0
      %v10777 = vpop.f32.mrb[0].mxu0
      %v10778 = vadd.f32 %v10617, %v10777
      %v10779 = vpop.f32.mrb[0].mxu0
      %10780 = vmatprep.mubr.bf16.mxu0 %v9747
      %10781 = vmatmul.mubr.bf16.gmra.mrb[0].mxu0 %v9627
      %v10782 = vpop.f32.mrb[0].mxu0
      %v10783 = vadd.f32 %v10622, %v10782
      %v10784 = vpop.f32.mrb[0].mxu0
      %v10785 = vpop.f32.mrb[0].mxu0
      %v10786 = vadd.f32 %v10625, %v10785
      %v10787 = vpop.f32.mrb[0].mxu0
      %10788 = vmatprep.mubr.bf16.mxu0 %v9748
      %10789 = vmatmul.mubr.bf16.gmra.mrb[0].mxu0 %v9628
      %v10790 = vpop.f32.mrb[0].mxu0
      %v10791 = vadd.f32 %v10630, %v10790
      %v10792 = vpop.f32.mrb[0].mxu0
      %v10793 = vpop.f32.mrb[0].mxu0
      %v10794 = vadd.f32 %v10633, %v10793
      %v10795 = vpop.f32.mrb[0].mxu0
      %10796 = vmatprep.mubr.bf16.mxu0 %v9749
      %10797 = vmatmul.mubr.bf16.gmra.mrb[0].mxu0 %v9629
      %v10798 = vpop.f32.mrb[0].mxu0
      %v10799 = vadd.f32 %v10638, %v10798
      %v10800 = vpop.f32.mrb[0].mxu0
      %v10801 = vpop.f32.mrb[0].mxu0
      %v10802 = vadd.f32 %v10641, %v10801
      %v10803 = vpop.f32.mrb[0].mxu0
      %10804 = vmatprep.mubr.bf16.mxu0 %v9750
      %10805 = vmatmul.mubr.bf16.gmra.mrb[0].mxu0 %v9630
      %v10806 = vpop.f32.mrb[0].mxu0
      %v10807 = vadd.f32 %v10646, %v10806
      %v10808 = vpop.f32.mrb[0].mxu0
      %v10809 = vpop.f32.mrb[0].mxu0
      %v10810 = vadd.f32 %v10649, %v10809
      %v10811 = vpop.f32.mrb[0].mxu0
      %10812 = vmatprep.mubr.bf16.mxu0 %v9751
      %10813 = vmatmul.mubr.bf16.gmra.mrb[0].mxu0 %v9631
      %v10814 = vpop.f32.mrb[0].mxu0
      %v10815 = vadd.f32 %v10654, %v10814
      %v10816 = vpop.f32.mrb[0].mxu0
      %v10817 = vpop.f32.mrb[0].mxu0
      %v10818 = vadd.f32 %v10657, %v10817
      %v10819 = vpop.f32.mrb[0].mxu0
      %10820 = vmatprep.mubr.bf16.mxu0 %v9752
      %10821 = vmatmul.mubr.bf16.gmra.mrb[0].mxu0 %v9632
      %v10822 = vpop.f32.mrb[0].mxu0
      %v10823 = vadd.f32 %v10662, %v10822
      %v10824 = vpop.f32.mrb[0].mxu0
      %v10825 = vpop.f32.mrb[0].mxu0
      %v10826 = vadd.f32 %v10665, %v10825
      %v10827 = vpop.f32.mrb[0].mxu0
      %10828 = vmatprep.mubr.bf16.mxu0 %v9771
      %10829 = vmatmul.mubr.bf16.gmra.mrb[0].mxu0 %v9763
      %v10830 = vpop.f32.mrb[0].mxu0
      %v10831 = vadd.f32 %v10670, %v10830
      %v10832 = vpop.f32.mrb[0].mxu0
      %v10833 = vpop.f32.mrb[0].mxu0
      %v10834 = vadd.f32 %v10673, %v10833
      %v10835 = vpop.f32.mrb[0].mxu0
      %10836 = vdwg.mxu0
      %10837 = vmatprep.subr.bf16.mxu0 0
      %10838 = vmatpush1.bf16.msra.mxu0 %v10258
      %10839 = vmatprep.subr.bf16.mxu0 0
      %10840 = vmatpush1.bf16.msra.mxu0 %v10259
      %10841 = vmatprep.subr.bf16.mxu0 0
      %10842 = vmatpush1.bf16.msra.mxu0 %v10260
      %10843 = vmatprep.subr.bf16.mxu0 0
      %10844 = vmatpush1.bf16.msra.mxu0 %v10261
      %10845 = vmatprep.subr.bf16.mxu0 0
      %10846 = vmatpush1.bf16.msra.mxu0 %v10262
      %10847 = vmatprep.subr.bf16.mxu0 0
      %10848 = vmatpush1.bf16.msra.mxu0 %v10263
      %10849 = vmatprep.subr.bf16.mxu0 0
      %10850 = vmatpush1.bf16.msra.mxu0 %v10264
      %10851 = vmatprep.subr.bf16.mxu0 0
      %10852 = vmatpush1.bf16.msra.mxu0 %v10265
      %10853 = vmatprep.subr.bf16.mxu0 0
      %10854 = vmatpush1.bf16.msra.mxu0 %v10266
      %10855 = vmatprep.subr.bf16.mxu0 0
      %10856 = vmatpush1.bf16.msra.mxu0 %v10267
      %10857 = vmatprep.subr.bf16.mxu0 0
      %10858 = vmatpush1.bf16.msra.mxu0 %v10268
      %10859 = vmatprep.subr.bf16.mxu0 0
      %10860 = vmatpush1.bf16.msra.mxu0 %v10269
      %10861 = vmatprep.subr.bf16.mxu0 0
      %10862 = vmatpush1.bf16.msra.mxu0 %v10270
      %10863 = vmatprep.subr.bf16.mxu0 0
      %10864 = vmatpush1.bf16.msra.mxu0 %v10271
      %10865 = vmatprep.subr.bf16.mxu0 0
      %10866 = vmatpush1.bf16.msra.mxu0 %v10272
      %10867 = vmatprep.subr.bf16.mxu0 0
      %10868 = vmatpush1.bf16.msra.mxu0 %v10273
      %10869 = vmatprep.mubr.bf16.mxu0 %v9618
      %10870 = vmatmul.mubr.bf16.gmra.mrb[0].mxu0 %v9468
      %v10871 = vpop.f32.mrb[0].mxu0
      %v10872 = vadd.f32 %v10711, %v10871
      %v10873 = vpop.f32.mrb[0].mxu0
      %v10874 = vpop.f32.mrb[0].mxu0
      %v10875 = vadd.f32 %v10714, %v10874
      %v10876 = vpop.f32.mrb[0].mxu0
      %10877 = vmatprep.mubr.bf16.mxu0 %v9620
      %10878 = vmatmul.mubr.bf16.gmra.mrb[0].mxu0 %v9470
      %v10879 = vpop.f32.mrb[0].mxu0
      %v10880 = vadd.f32 %v10719, %v10879
      %v10881 = vpop.f32.mrb[0].mxu0
      %v10882 = vpop.f32.mrb[0].mxu0
      %v10883 = vadd.f32 %v10722, %v10882
      %v10884 = vpop.f32.mrb[0].mxu0
      %10885 = vmatprep.mubr.bf16.mxu0 %v9621
      %10886 = vmatmul.mubr.bf16.gmra.mrb[0].mxu0 %v9471
      %v10887 = vpop.f32.mrb[0].mxu0
      %v10888 = vadd.f32 %v10727, %v10887
      %v10889 = vpop.f32.mrb[0].mxu0
      %v10890 = vpop.f32.mrb[0].mxu0
      %v10891 = vadd.f32 %v10730, %v10890
      %v10892 = vpop.f32.mrb[0].mxu0
      %10893 = vmatprep.mubr.bf16.mxu0 %v9622
      %10894 = vmatmul.mubr.bf16.gmra.mrb[0].mxu0 %v9472
      %v10895 = vpop.f32.mrb[0].mxu0
      %v10896 = vadd.f32 %v10735, %v10895
      %v10897 = vpop.f32.mrb[0].mxu0
      %v10898 = vpop.f32.mrb[0].mxu0
      %v10899 = vadd.f32 %v10738, %v10898
      %v10900 = vpop.f32.mrb[0].mxu0
      %10901 = vmatprep.mubr.bf16.mxu0 %v9623
      %10902 = vmatmul.mubr.bf16.gmra.mrb[0].mxu0 %v9473
      %v10903 = vpop.f32.mrb[0].mxu0
      %v10904 = vadd.f32 %v10743, %v10903
      %v10905 = vpop.f32.mrb[0].mxu0
      %v10906 = vpop.f32.mrb[0].mxu0
      %v10907 = vadd.f32 %v10746, %v10906
      %v10908 = vpop.f32.mrb[0].mxu0
      %10909 = vmatprep.mubr.bf16.mxu0 %v9624
      %10910 = vmatmul.mubr.bf16.gmra.mrb[0].mxu0 %v9474
      %v10911 = vpop.f32.mrb[0].mxu0
      %v10912 = vadd.f32 %v10751, %v10911
      %v10913 = vpop.f32.mrb[0].mxu0
      %v10914 = vpop.f32.mrb[0].mxu0
      %v10915 = vadd.f32 %v10754, %v10914
      %v10916 = vpop.f32.mrb[0].mxu0
      %10917 = vmatprep.mubr.bf16.mxu0 %v9625
      %10918 = vmatmul.mubr.bf16.gmra.mrb[0].mxu0 %v9475
      %v10919 = vpop.f32.mrb[0].mxu0
      %v10920 = vadd.f32 %v10759, %v10919
      %v10921 = vpop.f32.mrb[0].mxu0
      %v10922 = vpop.f32.mrb[0].mxu0
      %v10923 = vadd.f32 %v10762, %v10922
      %v10924 = vpop.f32.mrb[0].mxu0
      %10925 = vmatprep.mubr.bf16.mxu0 %v9626
      %10926 = vmatmul.mubr.bf16.gmra.mrb[0].mxu0 %v9476
      %v10927 = vpop.f32.mrb[0].mxu0
      %v10928 = vadd.f32 %v10767, %v10927
      %v10929 = vpop.f32.mrb[0].mxu0
      %v10930 = vpop.f32.mrb[0].mxu0
      %v10931 = vadd.f32 %v10770, %v10930
      %v10932 = vpop.f32.mrb[0].mxu0
      %10933 = vmatprep.mubr.bf16.mxu0 %v9627
      %10934 = vmatmul.mubr.bf16.gmra.mrb[0].mxu0 %v9477
      %v10935 = vpop.f32.mrb[0].mxu0
      %v10936 = vadd.f32 %v10775, %v10935
      %v10937 = vpop.f32.mrb[0].mxu0
      %v10938 = vpop.f32.mrb[0].mxu0
      %v10939 = vadd.f32 %v10778, %v10938
      %v10940 = vpop.f32.mrb[0].mxu0
      %10941 = vmatprep.mubr.bf16.mxu0 %v9628
      %10942 = vmatmul.mubr.bf16.gmra.mrb[0].mxu0 %v9478
      %v10943 = vpop.f32.mrb[0].mxu0
      %v10944 = vadd.f32 %v10783, %v10943
      %v10945 = vpop.f32.mrb[0].mxu0
      %v10946 = vpop.f32.mrb[0].mxu0
      %v10947 = vadd.f32 %v10786, %v10946
      %v10948 = vpop.f32.mrb[0].mxu0
      %10949 = vmatprep.mubr.bf16.mxu0 %v9629
      %10950 = vmatmul.mubr.bf16.gmra.mrb[0].mxu0 %v9479
      %v10951 = vpop.f32.mrb[0].mxu0
      %v10952 = vadd.f32 %v10791, %v10951
      %v10953 = vpop.f32.mrb[0].mxu0
      %v10954 = vpop.f32.mrb[0].mxu0
      %v10955 = vadd.f32 %v10794, %v10954
      %v10956 = vpop.f32.mrb[0].mxu0
      %10957 = vmatprep.mubr.bf16.mxu0 %v9630
      %10958 = vmatmul.mubr.bf16.gmra.mrb[0].mxu0 %v9480
      %v10959 = vpop.f32.mrb[0].mxu0
      %v10960 = vadd.f32 %v10799, %v10959
      %v10961 = vpop.f32.mrb[0].mxu0
      %v10962 = vpop.f32.mrb[0].mxu0
      %v10963 = vadd.f32 %v10802, %v10962
      %v10964 = vpop.f32.mrb[0].mxu0
      %10965 = vmatprep.mubr.bf16.mxu0 %v9631
      %10966 = vmatmul.mubr.bf16.gmra.mrb[0].mxu0 %v9481
      %v10967 = vpop.f32.mrb[0].mxu0
      %v10968 = vadd.f32 %v10807, %v10967
      %v10969 = vpop.f32.mrb[0].mxu0
      %v10970 = vpop.f32.mrb[0].mxu0
      %v10971 = vadd.f32 %v10810, %v10970
      %v10972 = vpop.f32.mrb[0].mxu0
      %10973 = vmatprep.mubr.bf16.mxu0 %v9632
      %10974 = vmatmul.mubr.bf16.gmra.mrb[0].mxu0 %v9482
      %v10975 = vpop.f32.mrb[0].mxu0
      %v10976 = vadd.f32 %v10815, %v10975
      %v10977 = vpop.f32.mrb[0].mxu0
      %v10978 = vpop.f32.mrb[0].mxu0
      %v10979 = vadd.f32 %v10818, %v10978
      %v10980 = vpop.f32.mrb[0].mxu0
      %10981 = vmatprep.mubr.bf16.mxu0 %v9763
      %10982 = vmatmul.mubr.bf16.gmra.mrb[0].mxu0 %v9753
      %v10983 = vpop.f32.mrb[0].mxu0
      %v10984 = vadd.f32 %v10823, %v10983
      %v10985 = vpop.f32.mrb[0].mxu0
      %v10986 = vpop.f32.mrb[0].mxu0
      %v10987 = vadd.f32 %v10826, %v10986
      %v10988 = vpop.f32.mrb[0].mxu0
      %10989 = vmatprep.mubr.bf16.mxu0 %v9632
      %10990 = vmatmul.mubr.bf16.gmra.mrb[0].mxu0 %v9482
      %v10991 = vpop.f32.mrb[0].mxu0
      %v10992 = vadd.f32 %v10831, %v10991
      %v10993 = vpop.f32.mrb[0].mxu0
      %v10994 = vpop.f32.mrb[0].mxu0
      %v10995 = vadd.f32 %v10834, %v10994
      %v10996 = vpop.f32.mrb[0].mxu0
      %10997 = vdwg.mxu0
      %10998 = vmatprep.subr.bf16.mxu0 0
      %10999 = vmatpush1.bf16.msra.mxu0 %v10274
      %11000 = vmatprep.subr.bf16.mxu0 0
      %11001 = vmatpush1.bf16.msra.mxu0 %v10275
      %11002 = vmatprep.subr.bf16.mxu0 0
      %11003 = vmatpush1.bf16.msra.mxu0 %v10276
      %11004 = vmatprep.subr.bf16.mxu0 0
      %11005 = vmatpush1.bf16.msra.mxu0 %v10277
      %11006 = vmatprep.subr.bf16.mxu0 0
      %11007 = vmatpush1.bf16.msra.mxu0 %v10278
      %11008 = vmatprep.subr.bf16.mxu0 0
      %11009 = vmatpush1.bf16.msra.mxu0 %v10279
      %11010 = vmatprep.subr.bf16.mxu0 0
      %11011 = vmatpush1.bf16.msra.mxu0 %v10280
      %11012 = vmatprep.subr.bf16.mxu0 0
      %11013 = vmatpush1.bf16.msra.mxu0 %v10281
      %11014 = vmatprep.subr.bf16.mxu0 0
      %11015 = vmatpush1.bf16.msra.mxu0 0
      %11016 = vmatprep.subr.bf16.mxu0 0
      %11017 = vmatpush1.bf16.msra.mxu0 0
      %11018 = vmatprep.subr.bf16.mxu0 0
      %11019 = vmatpush1.bf16.msra.mxu0 0
      %11020 = vmatprep.subr.bf16.mxu0 0
      %11021 = vmatpush1.bf16.msra.mxu0 0
      %11022 = vmatprep.subr.bf16.mxu0 0
      %11023 = vmatpush1.bf16.msra.mxu0 0
      %11024 = vmatprep.subr.bf16.mxu0 0
      %11025 = vmatpush1.bf16.msra.mxu0 0
      %11026 = vmatprep.subr.bf16.mxu0 0
      %11027 = vmatpush1.bf16.msra.mxu0 0
      %11028 = vmatprep.subr.bf16.mxu0 0
      %11029 = vmatpush1.bf16.msra.mxu0 0
      %11030 = vmatprep.mubr.bf16.mxu0 0
      %11031 = vmatmul.mubr.bf16.gmra.mrb[0].mxu0 %v9738
      %v11032 = vpop.f32.mrb[0].mxu0
      %v11033 = vadd.f32 %v10872, %v11032
      %v11034 = vpop.f32.mrb[0].mxu0
      %v11035 = vpop.f32.mrb[0].mxu0
      %v11036 = vadd.f32 %v10875, %v11035
      %v11037 = vpop.f32.mrb[0].mxu0
      %11038 = vmatprep.mubr.bf16.mxu0 0
      %11039 = vmatmul.mubr.bf16.gmra.mrb[0].mxu0 %v9740
      %v11040 = vpop.f32.mrb[0].mxu0
      %v11041 = vadd.f32 %v10880, %v11040
      %v11042 = vpop.f32.mrb[0].mxu0
      %v11043 = vpop.f32.mrb[0].mxu0
      %v11044 = vadd.f32 %v10883, %v11043
      %v11045 = vpop.f32.mrb[0].mxu0
      %11046 = vmatprep.mubr.bf16.mxu0 0
      %11047 = vmatmul.mubr.bf16.gmra.mrb[0].mxu0 %v9741
      %v11048 = vpop.f32.mrb[0].mxu0
      %v11049 = vadd.f32 %v10888, %v11048
      %v11050 = vpop.f32.mrb[0].mxu0
      %v11051 = vpop.f32.mrb[0].mxu0
      %v11052 = vadd.f32 %v10891, %v11051
      %v11053 = vpop.f32.mrb[0].mxu0
      %11054 = vmatprep.mubr.bf16.mxu0 0
      %11055 = vmatmul.mubr.bf16.gmra.mrb[0].mxu0 %v9742
      %v11056 = vpop.f32.mrb[0].mxu0
      %v11057 = vadd.f32 %v10896, %v11056
      %v11058 = vpop.f32.mrb[0].mxu0
      %v11059 = vpop.f32.mrb[0].mxu0
      %v11060 = vadd.f32 %v10899, %v11059
      %v11061 = vpop.f32.mrb[0].mxu0
      %11062 = vmatprep.mubr.bf16.mxu0 0
      %11063 = vmatmul.mubr.bf16.gmra.mrb[0].mxu0 %v9743
      %v11064 = vpop.f32.mrb[0].mxu0
      %v11065 = vadd.f32 %v10904, %v11064
      %v11066 = vpop.f32.mrb[0].mxu0
      %v11067 = vpop.f32.mrb[0].mxu0
      %v11068 = vadd.f32 %v10907, %v11067
      %v11069 = vpop.f32.mrb[0].mxu0
      %11070 = vmatprep.mubr.bf16.mxu0 0
      %11071 = vmatmul.mubr.bf16.gmra.mrb[0].mxu0 %v9744
      %v11072 = vpop.f32.mrb[0].mxu0
      %v11073 = vadd.f32 %v10912, %v11072
      %v11074 = vpop.f32.mrb[0].mxu0
      %v11075 = vpop.f32.mrb[0].mxu0
      %v11076 = vadd.f32 %v10915, %v11075
      %v11077 = vpop.f32.mrb[0].mxu0
      %11078 = vmatprep.mubr.bf16.mxu0 0
      %11079 = vmatmul.mubr.bf16.gmra.mrb[0].mxu0 %v9745
      %v11080 = vpop.f32.mrb[0].mxu0
      %v11081 = vadd.f32 %v10920, %v11080
      %v11082 = vpop.f32.mrb[0].mxu0
      %v11083 = vpop.f32.mrb[0].mxu0
      %v11084 = vadd.f32 %v10923, %v11083
      %v11085 = vpop.f32.mrb[0].mxu0
      %11086 = vmatprep.mubr.bf16.mxu0 0
      %11087 = vmatmul.mubr.bf16.gmra.mrb[0].mxu0 %v9746
      %v11088 = vpop.f32.mrb[0].mxu0
      %v11089 = vadd.f32 %v10928, %v11088
      %v11090 = vpop.f32.mrb[0].mxu0
      %v11091 = vpop.f32.mrb[0].mxu0
      %v11092 = vadd.f32 %v10931, %v11091
      %v11093 = vpop.f32.mrb[0].mxu0
      %11094 = vmatprep.mubr.bf16.mxu0 0
      %11095 = vmatmul.mubr.bf16.gmra.mrb[0].mxu0 %v9747
      %v11096 = vpop.f32.mrb[0].mxu0
      %v11097 = vadd.f32 %v10936, %v11096
      %v11098 = vpop.f32.mrb[0].mxu0
      %v11099 = vpop.f32.mrb[0].mxu0
      %v11100 = vadd.f32 %v10939, %v11099
      %v11101 = vpop.f32.mrb[0].mxu0
      %11102 = vmatprep.mubr.bf16.mxu0 0
      %11103 = vmatmul.mubr.bf16.gmra.mrb[0].mxu0 %v9748
      %v11104 = vpop.f32.mrb[0].mxu0
      %v11105 = vadd.f32 %v10944, %v11104
      %v11106 = vpop.f32.mrb[0].mxu0
      %v11107 = vpop.f32.mrb[0].mxu0
      %v11108 = vadd.f32 %v10947, %v11107
      %v11109 = vpop.f32.mrb[0].mxu0
      %11110 = vmatprep.mubr.bf16.mxu0 0
      %11111 = vmatmul.mubr.bf16.gmra.mrb[0].mxu0 %v9749
      %v11112 = vpop.f32.mrb[0].mxu0
      %v11113 = vadd.f32 %v10952, %v11112
      %v11114 = vpop.f32.mrb[0].mxu0
      %v11115 = vpop.f32.mrb[0].mxu0
      %v11116 = vadd.f32 %v10955, %v11115
      %v11117 = vpop.f32.mrb[0].mxu0
      %11118 = vmatprep.mubr.bf16.mxu0 0
      %11119 = vmatmul.mubr.bf16.gmra.mrb[0].mxu0 %v9750
      %v11120 = vpop.f32.mrb[0].mxu0
      %v11121 = vadd.f32 %v10960, %v11120
      %v11122 = vpop.f32.mrb[0].mxu0
      %v11123 = vpop.f32.mrb[0].mxu0
      %v11124 = vadd.f32 %v10963, %v11123
      %v11125 = vpop.f32.mrb[0].mxu0
      %11126 = vmatprep.mubr.bf16.mxu0 0
      %11127 = vmatmul.mubr.bf16.gmra.mrb[0].mxu0 %v9751
      %v11128 = vpop.f32.mrb[0].mxu0
      %v11129 = vadd.f32 %v10968, %v11128
      %v11130 = vpop.f32.mrb[0].mxu0
      %v11131 = vpop.f32.mrb[0].mxu0
      %v11132 = vadd.f32 %v10971, %v11131
      %v11133 = vpop.f32.mrb[0].mxu0
      %11134 = vmatprep.mubr.bf16.mxu0 0
      %11135 = vmatmul.mubr.bf16.gmra.mrb[0].mxu0 %v9752
      %v11136 = vpop.f32.mrb[0].mxu0
      %v11137 = vadd.f32 %v10976, %v11136
      %v11138 = vpop.f32.mrb[0].mxu0
      %v11139 = vpop.f32.mrb[0].mxu0
      %v11140 = vadd.f32 %v10979, %v11139
      %v11141 = vpop.f32.mrb[0].mxu0
      %11142 = vmatprep.mubr.bf16.mxu0 0
      %11143 = vmatmul.mubr.bf16.gmra.mrb[0].mxu0 %v9771
      %v11144 = vpop.f32.mrb[0].mxu0
      %v11145 = vadd.f32 %v10984, %v11144
      %v11146 = vpop.f32.mrb[0].mxu0
      %v11147 = vpop.f32.mrb[0].mxu0
      %v11148 = vadd.f32 %v10987, %v11147
      %v11149 = vpop.f32.mrb[0].mxu0
      %11150 = vmatprep.mubr.bf16.mxu0 0
      %11151 = vmatmul.mubr.bf16.gmra.mrb[0].mxu0 %v9752
      %v11152 = vpop.f32.mrb[0].mxu0
      %v11153 = vadd.f32 %v10992, %v11152
      %v11154 = vpop.f32.mrb[0].mxu0
      %v11155 = vpop.f32.mrb[0].mxu0
      %v11156 = vadd.f32 %v10995, %v11155
      %v11157 = vpop.f32.mrb[0].mxu0
      %11158 = vdwg.mxu0
      %11159 = vxpose.xlu0.b32.start [1/16] %v11033, 128
      %11160 = vxpose.xlu0.b32.cont [2/16] %v11036, 128
      %11161 = vxpose.xlu0.b32.cont [3/16] %v11041, 128
      %11162 = vxpose.xlu0.b32.cont [4/16] %v11044, 128
      %11163 = vxpose.xlu0.b32.cont [5/16] %v11049, 128
      %11164 = vxpose.xlu0.b32.cont [6/16] %v11052, 128
      %11165 = vxpose.xlu0.b32.cont [7/16] %v11057, 128
      %11166 = vxpose.xlu0.b32.cont [8/16] %v11060, 128
      %11167 = vxpose.xlu0.b32.cont [9/16] %v11065, 128
      %11168 = vxpose.xlu0.b32.cont [10/16] %v11068, 128
      %11169 = vxpose.xlu0.b32.cont [11/16] %v11073, 128
      %11170 = vxpose.xlu0.b32.cont [12/16] %v11076, 128
      %11171 = vxpose.xlu0.b32.cont [13/16] %v11081, 128
      %11172 = vxpose.xlu0.b32.cont [14/16] %v11084, 128
      %11173 = vxpose.xlu0.b32.cont [15/16] %v11089, 128
      %11174 = vxpose.xlu0.b32.end [16/16] %v11092, 128
      %v11175 = vpop.trf.xlu0
      %v11176 = vpop.trf.xlu0
      %v11177 = vpop.trf.xlu0
      %v11178 = vpop.trf.xlu0
      %v11179 = vpop.trf.xlu0
      %v11180 = vpop.trf.xlu0
      %v11181 = vpop.trf.xlu0
      %v11182 = vpop.trf.xlu0
      %v11183 = vpop.trf.xlu0
      %v11184 = vpop.trf.xlu0
      %v11185 = vpop.trf.xlu0
      %v11186 = vpop.trf.xlu0
      %v11187 = vpop.trf.xlu0
      %v11188 = vpop.trf.xlu0
      %v11189 = vpop.trf.xlu0
      %v11190 = vpop.trf.xlu0
      %11191 = vxpose.xlu0.b32.start [1/16] %v11097, 128
      %11192 = vxpose.xlu0.b32.cont [2/16] %v11100, 128
      %11193 = vxpose.xlu0.b32.cont [3/16] %v11105, 128
      %11194 = vxpose.xlu0.b32.cont [4/16] %v11108, 128
      %11195 = vxpose.xlu0.b32.cont [5/16] %v11113, 128
      %11196 = vxpose.xlu0.b32.cont [6/16] %v11116, 128
      %11197 = vxpose.xlu0.b32.cont [7/16] %v11121, 128
      %11198 = vxpose.xlu0.b32.cont [8/16] %v11124, 128
      %11199 = vxpose.xlu0.b32.cont [9/16] %v11129, 128
      %11200 = vxpose.xlu0.b32.cont [10/16] %v11132, 128
      %11201 = vxpose.xlu0.b32.cont [11/16] %v11137, 128
      %11202 = vxpose.xlu0.b32.cont [12/16] %v11140, 128
      %11203 = vxpose.xlu0.b32.cont [13/16] %v11145, 128
      %11204 = vxpose.xlu0.b32.cont [14/16] %v11148, 128
      %11205 = vxpose.xlu0.b32.cont [15/16] %v11153, 128
      %11206 = vxpose.xlu0.b32.end [16/16] %v11156, 128
      %v11207 = vpop.trf.xlu0
      %v11208 = vpop.trf.xlu0
      %v11209 = vpop.trf.xlu0
      %v11210 = vpop.trf.xlu0
      %v11211 = vpop.trf.xlu0
      %v11212 = vpop.trf.xlu0
      %v11213 = vpop.trf.xlu0
      %v11214 = vpop.trf.xlu0
      %v11215 = vpop.trf.xlu0
      %v11216 = vpop.trf.xlu0
      %v11217 = vpop.trf.xlu0
      %v11218 = vpop.trf.xlu0
      %v11219 = vpop.trf.xlu0
      %v11220 = vpop.trf.xlu0
      %v11221 = vpop.trf.xlu0
      %v11222 = vpop.trf.xlu0
      %v11225 = vcombine.low %v11175, %v11207
      %11227 = vst [vmem:[%s217] sm:$0x77] %v11225
      %p11228 = scmp.lt.s32.totalorder %s15, 1
      %s11229 = scalar_select %p11228, %s15, 1
      %s11230 = smul.addr %s11229, 2
      %s11231 = smul.addr %s11230, 4
      %s11232 = scalar_lea.vmem %s4, %s11231
      // Predicated region
      $region37: #{adain_wrapper_forward.1} parent=35 // pred_check
        %p11233 = pneg %p127
      $region38: #{adain_wrapper_forward.1} parent=35 // pred_check_branch
        %11235 = sbr.rel (%p11233) target = $region40
      $region39: #{adain_wrapper_forward.1} parent=35 // pred_region
        _
      $region40: #{adain_wrapper_forward.1} parent=35 // pred_fallthru
        _
    $region36: #{adain_wrapper_forward.1} parent=5 // pred_fallthru
      _
    %p11236 = scmp.le.s32.totalorder 2, %s10
    // Predicated region
    $region41: #{adain_wrapper_forward.1} parent=5 // pred_check
      %p11237 = pneg %p11236
    $region42: #{adain_wrapper_forward.1} parent=5 // pred_check_branch
      %11239 = sbr.rel (%p11237) target = $region44
    $region43: #{adain_wrapper_forward.1} parent=5 // pred_region
      %s11240 = ssub.s32 %s10, 2
      // Predicated region
      $region45: #{adain_wrapper_forward.1} parent=43 // pred_check
        %p11241 = pneg %p133
      $region46: #{adain_wrapper_forward.1} parent=43 // pred_check_branch
        %11243 = sbr.rel (%p11241) target = $region48
      $region47: #{adain_wrapper_forward.1} parent=43 // pred_region
        %p11244 = scmp.lt.s32.totalorder %s16, 1
        %s11245 = scalar_select %p11244, %s16, 1
        %s11246 = smul.addr %s11245, 2
        %s11247 = smul.addr %s11246, 4
        %s11248 = scalar_lea.vmem %s4, %s11247
      $region48: #{adain_wrapper_forward.1} parent=43 // pred_fallthru
        _
    $region44: #{adain_wrapper_forward.1} parent=5 // pred_fallthru
      _
  $region6: #{adain_wrapper_forward.1} parent=0 // loop_footer
    %s14 = sadd.s32 1, %s10
  $region7: #{adain_wrapper_forward.1} parent=0 // loop_footer_branch
    %9 = sbr.rel target = $region3
  $region8: #{adain_wrapper_forward.1} parent=0 // loop_exit
    _

</llo_original>
